<compile_context>
chip_gen: v5e
topology: v5e:2x2
jax: 0.10.0
libtpu: 0.0.40
codegen_flags: <defaults>
</compile_context>

<pallas_src>
import functools

import jax
import jax.numpy as jnp
from jax.experimental import pallas as pl
from jax.experimental.pallas import tpu as pltpu


# --------------------------------------------------------------------------- #
# Generic fused matmul + bias [+ ReLU], M-tiled and K-tiled (conv1-im2col, fc1)
# --------------------------------------------------------------------------- #

def _matmul_bias_kernel(a_ref, w_ref, b_ref, o_ref, acc_ref, *, relu):
    k = pl.program_id(1)

    @pl.when(k == 0)
    def _init():
        acc_ref[...] = jnp.zeros_like(acc_ref)

    acc_ref[...] += jnp.dot(a_ref[...], w_ref[...],
                            preferred_element_type=jnp.float32)

    @pl.when(k == pl.num_programs(1) - 1)
    def _finalize():
        out = acc_ref[...] + b_ref[...]
        if relu:
            out = jnp.maximum(out, 0.0)
        o_ref[...] = out.astype(o_ref.dtype)


def matmul_bias(a, w, b, *, relu, out_dtype=jnp.float32, tm=512, tk=None):
    """(M,K)@(K,N) + bias [+ReLU]; bf16 MXU inputs, f32 accumulation in VMEM scratch."""
    M, K = a.shape
    K2, N = w.shape
    assert K == K2
    tm = min(tm, M)
    if tk is None or tk >= K:
        tk = K
    assert K % tk == 0, (K, tk)
    n_m = pl.cdiv(M, tm)
    n_k = K // tk

    a = a.astype(jnp.bfloat16)
    w = w.astype(jnp.bfloat16)
    b2d = b.reshape(1, N).astype(jnp.float32)

    cost = pl.CostEstimate(
        flops=2 * M * K * N,
        transcendentals=0,
        bytes_accessed=2 * M * K + 2 * K * N + 4 * N
                       + M * N * jnp.dtype(out_dtype).itemsize,
    )
    return pl.pallas_call(
        functools.partial(_matmul_bias_kernel, relu=relu),
        out_shape=jax.ShapeDtypeStruct((M, N), out_dtype),
        grid_spec=pltpu.PrefetchScalarGridSpec(
            num_scalar_prefetch=0,
            grid=(n_m, n_k),
            in_specs=[
                pl.BlockSpec((tm, tk), lambda i, k: (i, k)),
                pl.BlockSpec((tk, N), lambda i, k: (k, 0)),
                pl.BlockSpec((1, N), lambda i, k: (0, 0)),
            ],
            out_specs=pl.BlockSpec((tm, N), lambda i, k: (i, 0)),
            scratch_shapes=[pltpu.VMEM((tm, N), jnp.float32)],
        ),
        compiler_params=pltpu.CompilerParams(
            dimension_semantics=("parallel", "arbitrary"),
            vmem_limit_bytes=32 * 1024 * 1024,
        ),
        cost_estimate=cost,
    )(a, w, b2d)


# --------------------------------------------------------------------------- #
# Fused conv2 (3x3, 32->64) + bias + ReLU + row half of the 2x2 max-pool.
# Reads the conv1 activation tile directly: no 9x im2col materialization in HBM.
# --------------------------------------------------------------------------- #

def _conv2_relu_rowpool_kernel(y1_ref, w2_ref, b2_ref, o_ref):
    # y1_ref: (1, 26, 26, 32) f32   one sample of conv1 activations (NHWC)
    # w2_ref: (9, 32, 64)     bf16  conv2 taps, t = 3*di + dj
    # b2_ref: (1, 64)         f32
    # o_ref : (1, 12, 24, 64) bf16  conv2+ReLU, rows already max-pooled 2:1
    y = y1_ref[0]                                              # (26, 26, 32)
    acc = jnp.zeros((24 * 24, 64), jnp.float32)
    for t in range(9):
        di, dj = divmod(t, 3)
        patch = y[di:di + 24, dj:dj + 24, :]                   # (24, 24, 32)
        patch = patch.reshape(24 * 24, 32).astype(jnp.bfloat16)
        acc = acc + jnp.dot(patch, w2_ref[t],
                            preferred_element_type=jnp.float32)
    z = jnp.maximum(acc + b2_ref[...], 0.0)                    # bias + ReLU (f32)
    z = jnp.max(z.reshape(12, 2, 24, 64), axis=1)              # pool adjacent rows
    o_ref[0] = z.astype(o_ref.dtype)


def conv2_relu_rowpool(y1, w2, b2):
    B = y1.shape[0]
    cost = pl.CostEstimate(
        flops=2 * B * 576 * 288 * 64,
        transcendentals=0,
        bytes_accessed=4 * y1.size + 2 * w2.size + 4 * 64 + 2 * B * 12 * 24 * 64,
    )
    return pl.pallas_call(
        _conv2_relu_rowpool_kernel,
        out_shape=jax.ShapeDtypeStruct((B, 12, 24, 64), jnp.bfloat16),
        grid_spec=pltpu.PrefetchScalarGridSpec(
            num_scalar_prefetch=0,
            grid=(B,),
            in_specs=[
                pl.BlockSpec((1, 26, 26, 32), lambda b: (b, 0, 0, 0)),
                pl.BlockSpec((9, 32, 64), lambda b: (0, 0, 0)),
                pl.BlockSpec((1, 64), lambda b: (0, 0)),
            ],
            out_specs=pl.BlockSpec((1, 12, 24, 64), lambda b: (b, 0, 0, 0)),
        ),
        compiler_params=pltpu.CompilerParams(
            dimension_semantics=("parallel",),
            vmem_limit_bytes=32 * 1024 * 1024,
        ),
        cost_estimate=cost,
    )(y1, w2.astype(jnp.bfloat16), b2.reshape(1, 64).astype(jnp.float32))


# --------------------------------------------------------------------------- #
# fc2 (128 -> 10) + log_softmax, fused.
# --------------------------------------------------------------------------- #

def _fc2_logsoftmax_kernel(a_ref, w_ref, b_ref, o_ref):
    logits = jnp.dot(a_ref[...], w_ref[...],
                     preferred_element_type=jnp.float32) + b_ref[...]
    m = jnp.max(logits, axis=-1, keepdims=True)
    s = logits - m
    lse = jnp.log(jnp.sum(jnp.exp(s), axis=-1, keepdims=True))
    o_ref[...] = (s - lse).astype(o_ref.dtype)


def fc2_logsoftmax(a, w, b, *, tm=512):
    M, K = a.shape
    _, N = w.shape
    tm = min(tm, M)
    return pl.pallas_call(
        _fc2_logsoftmax_kernel,
        out_shape=jax.ShapeDtypeStruct((M, N), jnp.float32),
        grid_spec=pltpu.PrefetchScalarGridSpec(
            num_scalar_prefetch=0,
            grid=(pl.cdiv(M, tm),),
            in_specs=[
                pl.BlockSpec((tm, K), lambda i: (i, 0)),
                pl.BlockSpec((K, N), lambda i: (0, 0)),
                pl.BlockSpec((1, N), lambda i: (0, 0)),
            ],
            out_specs=pl.BlockSpec((tm, N), lambda i: (i, 0)),
        ),
        compiler_params=pltpu.CompilerParams(
            dimension_semantics=("parallel",)),
    )(a.astype(jnp.bfloat16), w.astype(jnp.bfloat16),
      b.reshape(1, N).astype(jnp.float32))


# ------------------------------- JAX glue ---------------------------------- #

def im2col3x3(x):
    # x: (B, H, W, C) -> (B, H-2, W-2, 9*C); patch columns ordered (di, dj, C).
    B, H, W, C = x.shape
    Ho, Wo = H - 2, W - 2
    cols = []
    for di in range(3):
        for dj in range(3):
            cols.append(x[:, di:di + Ho, dj:dj + Wo, :])
    return jnp.concatenate(cols, axis=-1)


def net_forward(x_nchw, params):
    x = jnp.transpose(x_nchw, (0, 2, 3, 1)).astype(jnp.float32)   # NCHW -> NHWC
    B = x.shape[0]

    # conv1 (1->32, 3x3) + ReLU: K=9 im2col matmul (tiny, single-channel input).
    w1, b1 = params["conv1"]
    p1 = im2col3x3(x).reshape(B * 26 * 26, 9)
    y1 = matmul_bias(p1, w1, b1, relu=True, out_dtype=jnp.float32,
                     tm=512).reshape(B, 26, 26, 32)

    # conv2 (32->64, 3x3) + ReLU + row half of max_pool2d(2), fused in one kernel.
    w2, b2 = params["conv2"]
    zr = conv2_relu_rowpool(y1, w2, b2)                           # (B, 12, 24, 64)

    # Column half of the 2x2 max-pool: one tiny XLA strided-slice max.
    # TODO(synk): fold into the conv2 kernel via strided pl.ds sublane loads.
    pooled = jnp.maximum(zr[:, :, 0::2, :], zr[:, :, 1::2, :])    # (B, 12, 12, 64)

    # dropout1: identity at inference.

    # Flatten in (H, W, C) order; fc1 weight rows are stored in the same order,
    # so no runtime transpose is needed (torch's (C,H,W) flatten corresponds to a
    # fixed one-time permutation of fc1.weight rows).
    flat = pooled.reshape(B, 12 * 12 * 64)

    # fc1 (9216 -> 128) + ReLU, K split into 8 steps so weight DMA overlaps MXU.
    wf1, bf1 = params["fc1"]
    h = matmul_bias(flat, wf1, bf1, relu=True, out_dtype=jnp.float32,
                    tm=512, tk=1152)

    # dropout2: identity at inference.

    # fc2 (128 -> 10) + log_softmax(dim=1)
    wf2, bf2 = params["fc2"]
    return fc2_logsoftmax(h, wf2, bf2)


def init_params(key):
    # Deterministic synthetic init, PyTorch-style U(-1/sqrt(fan_in), 1/sqrt(fan_in)).
    ks = jax.random.split(key, 8)

    def u(k, shape, fan_in):
        bound = 1.0 / float(fan_in) ** 0.5
        return jax.random.uniform(k, shape, jnp.float32, -bound, bound)

    # conv weights stored as (KH*KW, Cin, Cout) == torch weight.permute(2,3,1,0).
    w1 = u(ks[0], (3, 3, 1, 32), 9).reshape(9, 32)
    b1 = u(ks[1], (32,), 9)
    w2 = u(ks[2], (3, 3, 32, 64), 288).reshape(9, 32, 64)
    b2 = u(ks[3], (64,), 288)
    # fc1 weight rows in (H=12, W=12, C=64) order to match the NHWC pooled flatten
    # (== torch fc1.weight.T with input features permuted from (C,H,W) to (H,W,C)).
    wf1 = u(ks[4], (12, 12, 64, 128), 9216).reshape(9216, 128)
    bf1 = u(ks[5], (128,), 9216)
    wf2 = u(ks[6], (128, 10), 128)
    bf2 = u(ks[7], (10,), 128)
    return {"conv1": (w1, b1), "conv2": (w2, b2),
            "fc1": (wf1, bf1), "fc2": (wf2, bf2)}


def net_reference(x_nchw, params):
    # Pure-JAX f32 reference with the identical weight layout (for validation).
    x = jnp.transpose(x_nchw, (0, 2, 3, 1)).astype(jnp.float32)
    B = x.shape[0]
    w1, b1 = params["conv1"]
    w2, b2 = params["conv2"]
    wf1, bf1 = params["fc1"]
    wf2, bf2 = params["fc2"]
    dn = ("NHWC", "HWIO", "NHWC")
    y1 = jax.lax.conv_general_dilated(x, w1.reshape(3, 3, 1, 32), (1, 1), "VALID",
                                      dimension_numbers=dn) + b1
    y1 = jax.nn.relu(y1)
    y2 = jax.lax.conv_general_dilated(y1, w2.reshape(3, 3, 32, 64), (1, 1), "VALID",
                                      dimension_numbers=dn) + b2
    y2 = jax.nn.relu(y2)
    pooled = jnp.max(y2.reshape(B, 12, 2, 12, 2, 64), axis=(2, 4))
    h = jax.nn.relu(pooled.reshape(B, 9216) @ wf1 + bf1)
    return jax.nn.log_softmax(h @ wf2 + bf2, axis=-1)


if __name__ == "__main__":
    key = jax.random.PRNGKey(0)
    kx, kp = jax.random.split(key)

    # Net's fc1 (9216 = 64*12*12) pins the input to (B, 1, 28, 28).
    x = jax.random.normal(kx, (2, 1, 28, 28), dtype=jnp.float32)
    params = init_params(kp)

    out = jax.jit(net_forward)(x, params)
    out = jax.block_until_ready(out)

    assert out.shape == (2, 10), out.shape
    # log_softmax rows must exponentiate to ~1
    row_sums = jnp.exp(out).sum(axis=1)
    assert bool(jnp.all(jnp.abs(row_sums - 1.0) < 1e-4)), row_sums
    # agreement with a pure-JAX f32 reference (bf16 MXU inputs, f32 accumulation)
    ref = net_reference(x, params)
    max_err = float(jnp.max(jnp.abs(out - ref)))
    assert max_err < 5e-2, max_err
    print("KERNEL_OK")
</pallas_src>

<mosaic_0001>
module attributes {stable_mosaic.version = 11 : i64} {
  func.func @_matmul_bias_kernel(%arg0: i32, %arg1: i32, %arg2: memref<512x9xbf16, #tpu.memory_space<vmem>>, %arg3: memref<9x32xbf16, #tpu.memory_space<vmem>>, %arg4: memref<1x32xf32, #tpu.memory_space<vmem>>, %arg5: memref<512x32xf32, #tpu.memory_space<vmem>>, %arg6: memref<512x32xf32, #tpu.memory_space<vmem>>) attributes {dimension_semantics = [#tpu.dimension_semantics<parallel>, #tpu.dimension_semantics<arbitrary>], iteration_bounds = array<i64: 3, 1>, scalar_prefetch = 0 : i64, scratch_operands = 1 : i64, tpu.core_type = #tpu.core_type<tc>, window_params = [{transform_indices = @transform_0, window_bounds = array<i64: 512, 9>}, {transform_indices = @transform_1, window_bounds = array<i64: 9, 32>}, {pipeline_mode = #tpu.pipeline_mode<synchronous>, transform_indices = @transform_2, window_bounds = array<i64: 1, 32>}, {transform_indices = @transform_3, window_bounds = array<i64: 512, 32>}]} {
    %c0_i32 = arith.constant 0 : i32
    %0 = arith.cmpi eq, %arg1, %c0_i32 : i32
    %1 = arith.extui %0 : i1 to i32
    %c0_i32_0 = arith.constant 0 : i32
    %2 = arith.cmpi ne, %1, %c0_i32_0 : i32
    scf.if %2 {
      %cst_10 = arith.constant 0.000000e+00 : f32
      %12 = vector.broadcast %cst_10 : f32 to vector<512x32xf32>
      %c0_11 = arith.constant 0 : index
      %c0_12 = arith.constant 0 : index
      %13 = vector.load %arg6[%c0_11, %c0_12] : memref<512x32xf32, #tpu.memory_space<vmem>>, vector<512x32xf32>
      tpu.vector_store %arg6[%c0_11, %c0_12], %12 {strides = array<i32>} : memref<512x32xf32, #tpu.memory_space<vmem>>, vector<512x32xf32>,
    } else {
    }
    %c0 = arith.constant 0 : index
    %c0_1 = arith.constant 0 : index
    %3 = vector.load %arg6[%c0, %c0_1] : memref<512x32xf32, #tpu.memory_space<vmem>>, vector<512x32xf32>
    %c0_2 = arith.constant 0 : index
    %c0_3 = arith.constant 0 : index
    %4 = vector.load %arg2[%c0_2, %c0_3] : memref<512x9xbf16, #tpu.memory_space<vmem>>, vector<512x9xbf16>
    %c0_4 = arith.constant 0 : index
    %c0_5 = arith.constant 0 : index
    %5 = vector.load %arg3[%c0_4, %c0_5] : memref<9x32xbf16, #tpu.memory_space<vmem>>, vector<9x32xbf16>
    %cst = arith.constant dense<0.000000e+00> : vector<512x32xf32>
    %6 = tpu.matmul %4, %5, %cst {dimension_numbers = #tpu.dot_dimension_numbers<[1], [0], [0], [1], [0, 0, 1, 1], [], []>} : vector<512x9xbf16>, vector<9x32xbf16>, vector<512x32xf32> -> vector<512x32xf32>
    %7 = arith.addf %3, %6 : vector<512x32xf32>
    %c0_6 = arith.constant 0 : index
    %c0_7 = arith.constant 0 : index
    %8 = vector.load %arg6[%c0_6, %c0_7] : memref<512x32xf32, #tpu.memory_space<vmem>>, vector<512x32xf32>
    tpu.vector_store %arg6[%c0_6, %c0_7], %7 {strides = array<i32>} : memref<512x32xf32, #tpu.memory_space<vmem>>, vector<512x32xf32>,
    %c0_i32_8 = arith.constant 0 : i32
    %9 = arith.cmpi eq, %arg1, %c0_i32_8 : i32
    %10 = arith.extui %9 : i1 to i32
    %c0_i32_9 = arith.constant 0 : i32
    %11 = arith.cmpi ne, %10, %c0_i32_9 : i32
    scf.if %11 {
      %c0_10 = arith.constant 0 : index
      %c0_11 = arith.constant 0 : index
      %12 = vector.load %arg6[%c0_10, %c0_11] : memref<512x32xf32, #tpu.memory_space<vmem>>, vector<512x32xf32>
      %c0_12 = arith.constant 0 : index
      %c0_13 = arith.constant 0 : index
      %13 = vector.load %arg4[%c0_12, %c0_13] : memref<1x32xf32, #tpu.memory_space<vmem>>, vector<1x32xf32>
      %14 = vector.broadcast %13 : vector<1x32xf32> to vector<512x32xf32>
      %15 = arith.addf %12, %14 : vector<512x32xf32>
      %cst_14 = arith.constant 0.000000e+00 : f32
      %16 = vector.broadcast %cst_14 : f32 to vector<512x32xf32>
      %17 = arith.maximumf %15, %16 : vector<512x32xf32>
      %c0_15 = arith.constant 0 : index
      %c0_16 = arith.constant 0 : index
      %18 = vector.load %arg5[%c0_15, %c0_16] : memref<512x32xf32, #tpu.memory_space<vmem>>, vector<512x32xf32>
      tpu.vector_store %arg5[%c0_15, %c0_16], %17 {strides = array<i32>} : memref<512x32xf32, #tpu.memory_space<vmem>>, vector<512x32xf32>,
    } else {
    }
    return
  }
  func.func @transform_0(%arg0: i32, %arg1: i32) -> (i32, i32) {
    %c0_i32 = arith.constant 0 : i32
    return %arg0, %arg1 : i32, i32
  }
  func.func @transform_1(%arg0: i32, %arg1: i32) -> (i32, i32) {
    %c0_i32 = arith.constant 0 : i32
    %c0_i32_0 = arith.constant 0 : i32
    return %arg1, %c0_i32 : i32, i32
  }
  func.func @transform_2(%arg0: i32, %arg1: i32) -> (i32, i32) {
    %c0_i32 = arith.constant 0 : i32
    %c0_i32_0 = arith.constant 0 : i32
    %c0_i32_1 = arith.constant 0 : i32
    return %c0_i32, %c0_i32_0 : i32, i32
  }
  func.func @transform_3(%arg0: i32, %arg1: i32) -> (i32, i32) {
    %c0_i32 = arith.constant 0 : i32
    %c0_i32_0 = arith.constant 0 : i32
    return %arg0, %c0_i32 : i32, i32
  }
}

module attributes {stable_mosaic.version = 11 : i64} {
  func.func @_conv2_relu_rowpool_kernel(%arg0: i32, %arg1: memref<1x26x26x32xf32, #tpu.memory_space<vmem>>, %arg2: memref<9x32x64xbf16, #tpu.memory_space<vmem>>, %arg3: memref<1x64xf32, #tpu.memory_space<vmem>>, %arg4: memref<1x12x24x64xbf16, #tpu.memory_space<vmem>>) attributes {dimension_semantics = [#tpu.dimension_semantics<parallel>], iteration_bounds = array<i64: 2>, scalar_prefetch = 0 : i64, scratch_operands = 0 : i64, tpu.core_type = #tpu.core_type<tc>, window_params = [{transform_indices = @transform_0, window_bounds = array<i64: 1, 26, 26, 32>}, {pipeline_mode = #tpu.pipeline_mode<synchronous>, transform_indices = @transform_1, window_bounds = array<i64: 9, 32, 64>}, {pipeline_mode = #tpu.pipeline_mode<synchronous>, transform_indices = @transform_2, window_bounds = array<i64: 1, 64>}, {transform_indices = @transform_3, window_bounds = array<i64: 1, 12, 24, 64>}]} {
    %c0 = arith.constant 0 : index
    %c0_0 = arith.constant 0 : index
    %c0_1 = arith.constant 0 : index
    %c0_2 = arith.constant 0 : index
    %0 = vector.load %arg1[%c0, %c0_0, %c0_1, %c0_2] : memref<1x26x26x32xf32, #tpu.memory_space<vmem>>, vector<1x26x26x32xf32>
    %1 = vector.shape_cast %0 : vector<1x26x26x32xf32> to vector<26x26x32xf32>
    %cst = arith.constant 0.000000e+00 : f32
    %2 = vector.broadcast %cst : f32 to vector<576x64xf32>
    %3 = vector.extract_strided_slice %1 {offsets = [0, 0, 0], sizes = [24, 24, 32], strides = [1, 1, 1]} : vector<26x26x32xf32> to vector<24x24x32xf32>
    %4 = vector.shape_cast %3 : vector<24x24x32xf32> to vector<576x32xf32>
    %5 = arith.truncf %4 : vector<576x32xf32> to vector<576x32xbf16>
    %c0_3 = arith.constant 0 : index
    %c0_4 = arith.constant 0 : index
    %c0_5 = arith.constant 0 : index
    %6 = vector.load %arg2[%c0_3, %c0_4, %c0_5] : memref<9x32x64xbf16, #tpu.memory_space<vmem>>, vector<1x32x64xbf16>
    %7 = vector.shape_cast %6 : vector<1x32x64xbf16> to vector<32x64xbf16>
    %cst_6 = arith.constant dense<0.000000e+00> : vector<576x64xf32>
    %8 = tpu.matmul %5, %7, %cst_6 {dimension_numbers = #tpu.dot_dimension_numbers<[1], [0], [0], [1], [0, 0, 1, 1], [], []>} : vector<576x32xbf16>, vector<32x64xbf16>, vector<576x64xf32> -> vector<576x64xf32>
    %9 = arith.addf %2, %8 : vector<576x64xf32>
    %10 = vector.extract_strided_slice %1 {offsets = [0, 1, 0], sizes = [24, 24, 32], strides = [1, 1, 1]} : vector<26x26x32xf32> to vector<24x24x32xf32>
    %11 = vector.shape_cast %10 : vector<24x24x32xf32> to vector<576x32xf32>
    %12 = arith.truncf %11 : vector<576x32xf32> to vector<576x32xbf16>
    %c1 = arith.constant 1 : index
    %c0_7 = arith.constant 0 : index
    %c0_8 = arith.constant 0 : index
    %13 = vector.load %arg2[%c1, %c0_7, %c0_8] : memref<9x32x64xbf16, #tpu.memory_space<vmem>>, vector<1x32x64xbf16>
    %14 = vector.shape_cast %13 : vector<1x32x64xbf16> to vector<32x64xbf16>
    %cst_9 = arith.constant dense<0.000000e+00> : vector<576x64xf32>
    %15 = tpu.matmul %12, %14, %cst_9 {dimension_numbers = #tpu.dot_dimension_numbers<[1], [0], [0], [1], [0, 0, 1, 1], [], []>} : vector<576x32xbf16>, vector<32x64xbf16>, vector<576x64xf32> -> vector<576x64xf32>
    %16 = arith.addf %9, %15 : vector<576x64xf32>
    %17 = vector.extract_strided_slice %1 {offsets = [0, 2, 0], sizes = [24, 24, 32], strides = [1, 1, 1]} : vector<26x26x32xf32> to vector<24x24x32xf32>
    %18 = vector.shape_cast %17 : vector<24x24x32xf32> to vector<576x32xf32>
    %19 = arith.truncf %18 : vector<576x32xf32> to vector<576x32xbf16>
    %c2 = arith.constant 2 : index
    %c0_10 = arith.constant 0 : index
    %c0_11 = arith.constant 0 : index
    %20 = vector.load %arg2[%c2, %c0_10, %c0_11] : memref<9x32x64xbf16, #tpu.memory_space<vmem>>, vector<1x32x64xbf16>
    %21 = vector.shape_cast %20 : vector<1x32x64xbf16> to vector<32x64xbf16>
    %cst_12 = arith.constant dense<0.000000e+00> : vector<576x64xf32>
    %22 = tpu.matmul %19, %21, %cst_12 {dimension_numbers = #tpu.dot_dimension_numbers<[1], [0], [0], [1], [0, 0, 1, 1], [], []>} : vector<576x32xbf16>, vector<32x64xbf16>, vector<576x64xf32> -> vector<576x64xf32>
    %23 = arith.addf %16, %22 : vector<576x64xf32>
    %24 = vector.extract_strided_slice %1 {offsets = [1, 0, 0], sizes = [24, 24, 32], strides = [1, 1, 1]} : vector<26x26x32xf32> to vector<24x24x32xf32>
    %25 = vector.shape_cast %24 : vector<24x24x32xf32> to vector<576x32xf32>
    %26 = arith.truncf %25 : vector<576x32xf32> to vector<576x32xbf16>
    %c3 = arith.constant 3 : index
    %c0_13 = arith.constant 0 : index
    %c0_14 = arith.constant 0 : index
    %27 = vector.load %arg2[%c3, %c0_13, %c0_14] : memref<9x32x64xbf16, #tpu.memory_space<vmem>>, vector<1x32x64xbf16>
    %28 = vector.shape_cast %27 : vector<1x32x64xbf16> to vector<32x64xbf16>
    %cst_15 = arith.constant dense<0.000000e+00> : vector<576x64xf32>
    %29 = tpu.matmul %26, %28, %cst_15 {dimension_numbers = #tpu.dot_dimension_numbers<[1], [0], [0], [1], [0, 0, 1, 1], [], []>} : vector<576x32xbf16>, vector<32x64xbf16>, vector<576x64xf32> -> vector<576x64xf32>
    %30 = arith.addf %23, %29 : vector<576x64xf32>
    %31 = vector.extract_strided_slice %1 {offsets = [1, 1, 0], sizes = [24, 24, 32], strides = [1, 1, 1]} : vector<26x26x32xf32> to vector<24x24x32xf32>
    %32 = vector.shape_cast %31 : vector<24x24x32xf32> to vector<576x32xf32>
    %33 = arith.truncf %32 : vector<576x32xf32> to vector<576x32xbf16>
    %c4 = arith.constant 4 : index
    %c0_16 = arith.constant 0 : index
    %c0_17 = arith.constant 0 : index
    %34 = vector.load %arg2[%c4, %c0_16, %c0_17] : memref<9x32x64xbf16, #tpu.memory_space<vmem>>, vector<1x32x64xbf16>
    %35 = vector.shape_cast %34 : vector<1x32x64xbf16> to vector<32x64xbf16>
    %cst_18 = arith.constant dense<0.000000e+00> : vector<576x64xf32>
    %36 = tpu.matmul %33, %35, %cst_18 {dimension_numbers = #tpu.dot_dimension_numbers<[1], [0], [0], [1], [0, 0, 1, 1], [], []>} : vector<576x32xbf16>, vector<32x64xbf16>, vector<576x64xf32> -> vector<576x64xf32>
    %37 = arith.addf %30, %36 : vector<576x64xf32>
    %38 = vector.extract_strided_slice %1 {offsets = [1, 2, 0], sizes = [24, 24, 32], strides = [1, 1, 1]} : vector<26x26x32xf32> to vector<24x24x32xf32>
    %39 = vector.shape_cast %38 : vector<24x24x32xf32> to vector<576x32xf32>
    %40 = arith.truncf %39 : vector<576x32xf32> to vector<576x32xbf16>
    %c5 = arith.constant 5 : index
    %c0_19 = arith.constant 0 : index
    %c0_20 = arith.constant 0 : index
    %41 = vector.load %arg2[%c5, %c0_19, %c0_20] : memref<9x32x64xbf16, #tpu.memory_space<vmem>>, vector<1x32x64xbf16>
    %42 = vector.shape_cast %41 : vector<1x32x64xbf16> to vector<32x64xbf16>
    %cst_21 = arith.constant dense<0.000000e+00> : vector<576x64xf32>
    %43 = tpu.matmul %40, %42, %cst_21 {dimension_numbers = #tpu.dot_dimension_numbers<[1], [0], [0], [1], [0, 0, 1, 1], [], []>} : vector<576x32xbf16>, vector<32x64xbf16>, vector<576x64xf32> -> vector<576x64xf32>
    %44 = arith.addf %37, %43 : vector<576x64xf32>
    %45 = vector.extract_strided_slice %1 {offsets = [2, 0, 0], sizes = [24, 24, 32], strides = [1, 1, 1]} : vector<26x26x32xf32> to vector<24x24x32xf32>
    %46 = vector.shape_cast %45 : vector<24x24x32xf32> to vector<576x32xf32>
    %47 = arith.truncf %46 : vector<576x32xf32> to vector<576x32xbf16>
    %c6 = arith.constant 6 : index
    %c0_22 = arith.constant 0 : index
    %c0_23 = arith.constant 0 : index
    %48 = vector.load %arg2[%c6, %c0_22, %c0_23] : memref<9x32x64xbf16, #tpu.memory_space<vmem>>, vector<1x32x64xbf16>
    %49 = vector.shape_cast %48 : vector<1x32x64xbf16> to vector<32x64xbf16>
    %cst_24 = arith.constant dense<0.000000e+00> : vector<576x64xf32>
    %50 = tpu.matmul %47, %49, %cst_24 {dimension_numbers = #tpu.dot_dimension_numbers<[1], [0], [0], [1], [0, 0, 1, 1], [], []>} : vector<576x32xbf16>, vector<32x64xbf16>, vector<576x64xf32> -> vector<576x64xf32>
    %51 = arith.addf %44, %50 : vector<576x64xf32>
    %52 = vector.extract_strided_slice %1 {offsets = [2, 1, 0], sizes = [24, 24, 32], strides = [1, 1, 1]} : vector<26x26x32xf32> to vector<24x24x32xf32>
    %53 = vector.shape_cast %52 : vector<24x24x32xf32> to vector<576x32xf32>
    %54 = arith.truncf %53 : vector<576x32xf32> to vector<576x32xbf16>
    %c7 = arith.constant 7 : index
    %c0_25 = arith.constant 0 : index
    %c0_26 = arith.constant 0 : index
    %55 = vector.load %arg2[%c7, %c0_25, %c0_26] : memref<9x32x64xbf16, #tpu.memory_space<vmem>>, vector<1x32x64xbf16>
    %56 = vector.shape_cast %55 : vector<1x32x64xbf16> to vector<32x64xbf16>
    %cst_27 = arith.constant dense<0.000000e+00> : vector<576x64xf32>
    %57 = tpu.matmul %54, %56, %cst_27 {dimension_numbers = #tpu.dot_dimension_numbers<[1], [0], [0], [1], [0, 0, 1, 1], [], []>} : vector<576x32xbf16>, vector<32x64xbf16>, vector<576x64xf32> -> vector<576x64xf32>
    %58 = arith.addf %51, %57 : vector<576x64xf32>
    %59 = vector.extract_strided_slice %1 {offsets = [2, 2, 0], sizes = [24, 24, 32], strides = [1, 1, 1]} : vector<26x26x32xf32> to vector<24x24x32xf32>
    %60 = vector.shape_cast %59 : vector<24x24x32xf32> to vector<576x32xf32>
    %61 = arith.truncf %60 : vector<576x32xf32> to vector<576x32xbf16>
    %c8 = arith.constant 8 : index
    %c0_28 = arith.constant 0 : index
    %c0_29 = arith.constant 0 : index
    %62 = vector.load %arg2[%c8, %c0_28, %c0_29] : memref<9x32x64xbf16, #tpu.memory_space<vmem>>, vector<1x32x64xbf16>
    %63 = vector.shape_cast %62 : vector<1x32x64xbf16> to vector<32x64xbf16>
    %cst_30 = arith.constant dense<0.000000e+00> : vector<576x64xf32>
    %64 = tpu.matmul %61, %63, %cst_30 {dimension_numbers = #tpu.dot_dimension_numbers<[1], [0], [0], [1], [0, 0, 1, 1], [], []>} : vector<576x32xbf16>, vector<32x64xbf16>, vector<576x64xf32> -> vector<576x64xf32>
    %65 = arith.addf %58, %64 : vector<576x64xf32>
    %c0_31 = arith.constant 0 : index
    %c0_32 = arith.constant 0 : index
    %66 = vector.load %arg3[%c0_31, %c0_32] : memref<1x64xf32, #tpu.memory_space<vmem>>, vector<1x64xf32>
    %67 = vector.broadcast %66 : vector<1x64xf32> to vector<576x64xf32>
    %68 = arith.addf %65, %67 : vector<576x64xf32>
    %cst_33 = arith.constant 0.000000e+00 : f32
    %69 = vector.broadcast %cst_33 : f32 to vector<576x64xf32>
    %70 = arith.maximumf %68, %69 : vector<576x64xf32>
    %71 = vector.shape_cast %70 : vector<576x64xf32> to vector<12x2x24x64xf32>
    %cst_34 = arith.constant dense<0xFF800000> : vector<12x24x64xf32>
    %72 = vector.multi_reduction <maximumf>, %71, %cst_34 [1] : vector<12x2x24x64xf32> to vector<12x24x64xf32>
    %73 = arith.truncf %72 : vector<12x24x64xf32> to vector<12x24x64xbf16>
    %c0_35 = arith.constant 0 : index
    %c0_36 = arith.constant 0 : index
    %c0_37 = arith.constant 0 : index
    %c0_38 = arith.constant 0 : index
    %74 = vector.load %arg4[%c0_35, %c0_36, %c0_37, %c0_38] : memref<1x12x24x64xbf16, #tpu.memory_space<vmem>>, vector<1x12x24x64xbf16>
    %75 = vector.shape_cast %74 : vector<1x12x24x64xbf16> to vector<12x24x64xbf16>
    %76 = vector.shape_cast %73 : vector<12x24x64xbf16> to vector<1x12x24x64xbf16>
    tpu.vector_store %arg4[%c0_35, %c0_36, %c0_37, %c0_38], %76 {strides = array<i32>} : memref<1x12x24x64xbf16, #tpu.memory_space<vmem>>, vector<1x12x24x64xbf16>,
    return
  }
  func.func @transform_0(%arg0: i32) -> (i32, i32, i32, i32) {
    %c0_i32 = arith.constant 0 : i32
    %c0_i32_0 = arith.constant 0 : i32
    %c0_i32_1 = arith.constant 0 : i32
    %c0_i32_2 = arith.constant 0 : i32
    return %arg0, %c0_i32, %c0_i32_0, %c0_i32_1 : i32, i32, i32, i32
  }
  func.func @transform_1(%arg0: i32) -> (i32, i32, i32) {
    %c0_i32 = arith.constant 0 : i32
    %c0_i32_0 = arith.constant 0 : i32
    %c0_i32_1 = arith.constant 0 : i32
    %c0_i32_2 = arith.constant 0 : i32
    return %c0_i32, %c0_i32_0, %c0_i32_1 : i32, i32, i32
  }
  func.func @transform_2(%arg0: i32) -> (i32, i32) {
    %c0_i32 = arith.constant 0 : i32
    %c0_i32_0 = arith.constant 0 : i32
    %c0_i32_1 = arith.constant 0 : i32
    return %c0_i32, %c0_i32_0 : i32, i32
  }
  func.func @transform_3(%arg0: i32) -> (i32, i32, i32, i32) {
    %c0_i32 = arith.constant 0 : i32
    %c0_i32_0 = arith.constant 0 : i32
    %c0_i32_1 = arith.constant 0 : i32
    %c0_i32_2 = arith.constant 0 : i32
    return %arg0, %c0_i32, %c0_i32_0, %c0_i32_1 : i32, i32, i32, i32
  }
}

module attributes {stable_mosaic.version = 11 : i64} {
  func.func @_matmul_bias_kernel(%arg0: i32, %arg1: i32, %arg2: memref<2x1152xbf16, #tpu.memory_space<vmem>>, %arg3: memref<1152x128xbf16, #tpu.memory_space<vmem>>, %arg4: memref<1x128xf32, #tpu.memory_space<vmem>>, %arg5: memref<2x128xf32, #tpu.memory_space<vmem>>, %arg6: memref<2x128xf32, #tpu.memory_space<vmem>>) attributes {dimension_semantics = [#tpu.dimension_semantics<parallel>, #tpu.dimension_semantics<arbitrary>], iteration_bounds = array<i64: 1, 8>, scalar_prefetch = 0 : i64, scratch_operands = 1 : i64, tpu.core_type = #tpu.core_type<tc>, window_params = [{transform_indices = @transform_0, window_bounds = array<i64: 2, 1152>}, {transform_indices = @transform_1, window_bounds = array<i64: 1152, 128>}, {pipeline_mode = #tpu.pipeline_mode<synchronous>, transform_indices = @transform_2, window_bounds = array<i64: 1, 128>}, {transform_indices = @transform_3, window_bounds = array<i64: 2, 128>}]} {
    %c0_i32 = arith.constant 0 : i32
    %0 = arith.cmpi eq, %arg1, %c0_i32 : i32
    %1 = arith.extui %0 : i1 to i32
    %c0_i32_0 = arith.constant 0 : i32
    %2 = arith.cmpi ne, %1, %c0_i32_0 : i32
    scf.if %2 {
      %cst_9 = arith.constant 0.000000e+00 : f32
      %12 = vector.broadcast %cst_9 : f32 to vector<2x128xf32>
      %c0_10 = arith.constant 0 : index
      %c0_11 = arith.constant 0 : index
      %13 = vector.load %arg6[%c0_10, %c0_11] : memref<2x128xf32, #tpu.memory_space<vmem>>, vector<2x128xf32>
      tpu.vector_store %arg6[%c0_10, %c0_11], %12 {strides = array<i32>} : memref<2x128xf32, #tpu.memory_space<vmem>>, vector<2x128xf32>,
    } else {
    }
    %c0 = arith.constant 0 : index
    %c0_1 = arith.constant 0 : index
    %3 = vector.load %arg6[%c0, %c0_1] : memref<2x128xf32, #tpu.memory_space<vmem>>, vector<2x128xf32>
    %c0_2 = arith.constant 0 : index
    %c0_3 = arith.constant 0 : index
    %4 = vector.load %arg2[%c0_2, %c0_3] : memref<2x1152xbf16, #tpu.memory_space<vmem>>, vector<2x1152xbf16>
    %c0_4 = arith.constant 0 : index
    %c0_5 = arith.constant 0 : index
    %5 = vector.load %arg3[%c0_4, %c0_5] : memref<1152x128xbf16, #tpu.memory_space<vmem>>, vector<1152x128xbf16>
    %cst = arith.constant dense<0.000000e+00> : vector<2x128xf32>
    %6 = tpu.matmul %4, %5, %cst {dimension_numbers = #tpu.dot_dimension_numbers<[1], [0], [0], [1], [0, 0, 1, 1], [], []>} : vector<2x1152xbf16>, vector<1152x128xbf16>, vector<2x128xf32> -> vector<2x128xf32>
    %7 = arith.addf %3, %6 : vector<2x128xf32>
    %c0_6 = arith.constant 0 : index
    %c0_7 = arith.constant 0 : index
    %8 = vector.load %arg6[%c0_6, %c0_7] : memref<2x128xf32, #tpu.memory_space<vmem>>, vector<2x128xf32>
    tpu.vector_store %arg6[%c0_6, %c0_7], %7 {strides = array<i32>} : memref<2x128xf32, #tpu.memory_space<vmem>>, vector<2x128xf32>,
    %c7_i32 = arith.constant 7 : i32
    %9 = arith.cmpi eq, %arg1, %c7_i32 : i32
    %10 = arith.extui %9 : i1 to i32
    %c0_i32_8 = arith.constant 0 : i32
    %11 = arith.cmpi ne, %10, %c0_i32_8 : i32
    scf.if %11 {
      %c0_9 = arith.constant 0 : index
      %c0_10 = arith.constant 0 : index
      %12 = vector.load %arg6[%c0_9, %c0_10] : memref<2x128xf32, #tpu.memory_space<vmem>>, vector<2x128xf32>
      %c0_11 = arith.constant 0 : index
      %c0_12 = arith.constant 0 : index
      %13 = vector.load %arg4[%c0_11, %c0_12] : memref<1x128xf32, #tpu.memory_space<vmem>>, vector<1x128xf32>
      %14 = vector.broadcast %13 : vector<1x128xf32> to vector<2x128xf32>
      %15 = arith.addf %12, %14 : vector<2x128xf32>
      %cst_13 = arith.constant 0.000000e+00 : f32
      %16 = vector.broadcast %cst_13 : f32 to vector<2x128xf32>
      %17 = arith.maximumf %15, %16 : vector<2x128xf32>
      %c0_14 = arith.constant 0 : index
      %c0_15 = arith.constant 0 : index
      %18 = vector.load %arg5[%c0_14, %c0_15] : memref<2x128xf32, #tpu.memory_space<vmem>>, vector<2x128xf32>
      tpu.vector_store %arg5[%c0_14, %c0_15], %17 {strides = array<i32>} : memref<2x128xf32, #tpu.memory_space<vmem>>, vector<2x128xf32>,
    } else {
    }
    return
  }
  func.func @transform_0(%arg0: i32, %arg1: i32) -> (i32, i32) {
    %c0_i32 = arith.constant 0 : i32
    return %arg0, %arg1 : i32, i32
  }
  func.func @transform_1(%arg0: i32, %arg1: i32) -> (i32, i32) {
    %c0_i32 = arith.constant 0 : i32
    %c0_i32_0 = arith.constant 0 : i32
    return %arg1, %c0_i32 : i32, i32
  }
  func.func @transform_2(%arg0: i32, %arg1: i32) -> (i32, i32) {
    %c0_i32 = arith.constant 0 : i32
    %c0_i32_0 = arith.constant 0 : i32
    %c0_i32_1 = arith.constant 0 : i32
    return %c0_i32, %c0_i32_0 : i32, i32
  }
  func.func @transform_3(%arg0: i32, %arg1: i32) -> (i32, i32) {
    %c0_i32 = arith.constant 0 : i32
    %c0_i32_0 = arith.constant 0 : i32
    return %arg0, %c0_i32 : i32, i32
  }
}

module attributes {stable_mosaic.version = 11 : i64} {
  func.func @_fc2_logsoftmax_kernel(%arg0: i32, %arg1: memref<2x128xbf16, #tpu.memory_space<vmem>>, %arg2: memref<128x10xbf16, #tpu.memory_space<vmem>>, %arg3: memref<1x10xf32, #tpu.memory_space<vmem>>, %arg4: memref<2x10xf32, #tpu.memory_space<vmem>>) attributes {dimension_semantics = [#tpu.dimension_semantics<parallel>], iteration_bounds = array<i64: 1>, scalar_prefetch = 0 : i64, scratch_operands = 0 : i64, tpu.core_type = #tpu.core_type<tc>, window_params = [{transform_indices = @transform_0, window_bounds = array<i64: 2, 128>}, {pipeline_mode = #tpu.pipeline_mode<synchronous>, transform_indices = @transform_1, window_bounds = array<i64: 128, 10>}, {pipeline_mode = #tpu.pipeline_mode<synchronous>, transform_indices = @transform_2, window_bounds = array<i64: 1, 10>}, {transform_indices = @transform_3, window_bounds = array<i64: 2, 10>}]} {
    %c0 = arith.constant 0 : index
    %c0_0 = arith.constant 0 : index
    %0 = vector.load %arg1[%c0, %c0_0] : memref<2x128xbf16, #tpu.memory_space<vmem>>, vector<2x128xbf16>
    %c0_1 = arith.constant 0 : index
    %c0_2 = arith.constant 0 : index
    %1 = vector.load %arg2[%c0_1, %c0_2] : memref<128x10xbf16, #tpu.memory_space<vmem>>, vector<128x10xbf16>
    %cst = arith.constant dense<0.000000e+00> : vector<2x10xf32>
    %2 = tpu.matmul %0, %1, %cst {dimension_numbers = #tpu.dot_dimension_numbers<[1], [0], [0], [1], [0, 0, 1, 1], [], []>} : vector<2x128xbf16>, vector<128x10xbf16>, vector<2x10xf32> -> vector<2x10xf32>
    %c0_3 = arith.constant 0 : index
    %c0_4 = arith.constant 0 : index
    %3 = vector.load %arg3[%c0_3, %c0_4] : memref<1x10xf32, #tpu.memory_space<vmem>>, vector<1x10xf32>
    %4 = vector.broadcast %3 : vector<1x10xf32> to vector<2x10xf32>
    %5 = arith.addf %2, %4 : vector<2x10xf32>
    %cst_5 = arith.constant dense<0xFF800000> : vector<2xf32>
    %6 = vector.multi_reduction <maximumf>, %5, %cst_5 [1] : vector<2x10xf32> to vector<2xf32>
    %7 = vector.shape_cast %6 : vector<2xf32> to vector<2x1xf32>
    %8 = vector.broadcast %7 : vector<2x1xf32> to vector<2x10xf32>
    %9 = arith.subf %5, %8 : vector<2x10xf32>
    %10 = math.exp %9 : vector<2x10xf32>
    %cst_6 = arith.constant dense<0.000000e+00> : vector<2xf32>
    %11 = vector.multi_reduction <add>, %10, %cst_6 [1] : vector<2x10xf32> to vector<2xf32>
    %12 = vector.shape_cast %11 : vector<2xf32> to vector<2x1xf32>
    %13 = math.log %12 : vector<2x1xf32>
    %14 = vector.broadcast %13 : vector<2x1xf32> to vector<2x10xf32>
    %15 = arith.subf %9, %14 : vector<2x10xf32>
    %c0_7 = arith.constant 0 : index
    %c0_8 = arith.constant 0 : index
    %16 = vector.load %arg4[%c0_7, %c0_8] : memref<2x10xf32, #tpu.memory_space<vmem>>, vector<2x10xf32>
    tpu.vector_store %arg4[%c0_7, %c0_8], %15 {strides = array<i32>} : memref<2x10xf32, #tpu.memory_space<vmem>>, vector<2x10xf32>,
    return
  }
  func.func @transform_0(%arg0: i32) -> (i32, i32) {
    %c0_i32 = arith.constant 0 : i32
    %c0_i32_0 = arith.constant 0 : i32
    return %arg0, %c0_i32 : i32, i32
  }
  func.func @transform_1(%arg0: i32) -> (i32, i32) {
    %c0_i32 = arith.constant 0 : i32
    %c0_i32_0 = arith.constant 0 : i32
    %c0_i32_1 = arith.constant 0 : i32
    return %c0_i32, %c0_i32_0 : i32, i32
  }
  func.func @transform_2(%arg0: i32) -> (i32, i32) {
    %c0_i32 = arith.constant 0 : i32
    %c0_i32_0 = arith.constant 0 : i32
    %c0_i32_1 = arith.constant 0 : i32
    return %c0_i32, %c0_i32_0 : i32, i32
  }
  func.func @transform_3(%arg0: i32) -> (i32, i32) {
    %c0_i32 = arith.constant 0 : i32
    %c0_i32_0 = arith.constant 0 : i32
    return %arg0, %c0_i32 : i32, i32
  }
}

</mosaic_0001>

<llo_original>
// kernel: net_forward.4
$region0: #{net_forward.4}
  #allocation0 [shape = 'u32[]', space=smem, size = 0x4, offset = 0x4, fixed_abs, tag = 'smem constant byte address 0x4 - core index']
  #allocation1 [shape = 'u32[72,128]{1,0:T(1,128)}', space=vmem, size = 0x9000, scoped, tag = 'internal scratch']
  #allocation2 [shape = 'f32[512,32]{1,0:T(8,128)}', space=vmem, size = 0x40000, scoped, tag = 'scratch operand']
  %s0 = inlined_call_operand.vmem [shape: bf16[1352,9], index: 0, kind: input, shape index: {}]
  %s1 = inlined_call_operand.vmem [shape: bf16[9,32], index: 1, kind: input, shape index: {}]
  %s2 = inlined_call_operand.hbm [shape: f32[1,32], index: 2, kind: input, shape index: {}]
  %s3 = inlined_call_operand.vmem [shape: f32[1352,32], index: 3, kind: output, shape index: {}]
  %s4 = sld [smem:[#allocation0]]
  $region105: #{net_forward.4} parent=0
    _
  %s6 = ssub.s32 1, %s4
  %s7 = scalar_select 0, %s6, %s4
  $region1: #{net_forward.4} parent=0
    #allocation3 [shape = 'u8[512]{0}', space=vmem, size = 0x400, scoped, tag = 'input window, operand 2, single buffered']
    #allocation4 [shape = 's32[2]{0}', space=sflag, size = 0x8, scoped, tag = 'scoped memory for net_forward.4']
    #allocation5 [shape = 'u8[524288]{0}', space=vmem, size = 0x80000, scoped, tag = 'output window, operand 0']
    %8 = vsyncpa [#allocation4], 0
    loop: start=0, step=1, limit=5
    $region2: #{net_forward.4} parent=1 // loop_pre_header
      _
    $region3: #{net_forward.4} parent=1 // loop_header
      %s10 = sphi 0, %s14
      %p11 = scmp.ge.s32.totalorder %s10, 5
      %s17 = sphi 0, %s29
      %s18 = sphi 0, %s25
      %s19 = sphi 0, %s17
      %s20 = sphi 0, %s18
      %s21 = sphi 0, %s19
      %s22 = sphi 0, %s20
      %s34 = sphi 0, %s36
      %s37 = sphi 0, %s34
      %s38 = sphi 0, %s37
      %s54 = sphi 0, %s38
      %s60 = sphi 0, %s62
      %s63 = sphi 0, %s60
      %s64 = sphi 0, %s63
      %s80 = sphi 0, %s64
      %s84 = sphi 0, %s84
      %s86 = sphi 0, %s84
      %s87 = sphi 0, %s86
      %s101 = sphi 0, %s87
      %s107 = sphi 0, %s109
      %s110 = sphi 0, %s107
      %s111 = sphi 0, %s110
      %s127 = sphi 0, %s111
    $region4: #{net_forward.4} parent=1 // loop_header_branch
      %13 = sbr.rel (%p11) target = $region8
    $region5: #{net_forward.4} parent=1 // loop_body
      %s15 = ssub.s32 %s10, 1
      %s16 = ssub.s32 %s10, 2
      %s23 = sadd.s32 1, %s18
      %p24 = scmp.ge.s32.totalorder %s23, 1
      %s25 = scalar_select %p24, 0, %s23
      %s26 = sadd.s32 1, %s17
      %s27 = scalar_select %p24, %s26, %s17
      %p28 = scmp.ge.s32.totalorder %s27, 3
      %s29 = scalar_select %p28, 0, %s27
      %s30 = ssub.s32 %s17, %s29
      %s31 = ssub.s32 %s18, %s25
      %s32 = sor.u32 %s30, %s31
      %p33 = scmp.eq.s32.totalorder %s32, 0
      %s35 = sadd.s32 %s34, 1
      %s36 = scalar_select %p33, %s34, %s35
      %p39 = pneg %p33
      %p40 = scmp.eq.s32.totalorder %s10, 2
      %p41 = por %p39, %p40
      %p42 = scmp.ne.s32.totalorder %s34, %s37
      %p43 = scmp.eq.s32.totalorder %s10, 0
      %p44 = por %p42, %p43
      %p45 = scmp.ne.s32.totalorder %s34, %s37
      %p46 = scmp.eq.s32.totalorder %s15, 2
      %p47 = por %p45, %p46
      %p48 = scmp.ne.s32.totalorder %s37, %s38
      %p49 = scmp.eq.s32.totalorder %s15, 0
      %p50 = por %p48, %p49
      %p51 = scmp.ne.s32.totalorder %s37, %s38
      %p52 = scmp.eq.s32.totalorder %s16, 2
      %p53 = por %p51, %p52
      %p55 = scmp.ne.s32.totalorder %s38, %s54
      %p56 = scmp.eq.s32.totalorder %s16, 0
      %p57 = por %p55, %p56
      %s58 = ssub.s32 %s18, %s25
      %p59 = scmp.eq.s32.totalorder %s58, 0
      %s61 = sadd.s32 %s60, 1
      %s62 = scalar_select %p59, %s60, %s61
      %p65 = pneg %p59
      %p66 = scmp.eq.s32.totalorder %s10, 2
      %p67 = por %p65, %p66
      %p68 = scmp.ne.s32.totalorder %s60, %s63
      %p69 = scmp.eq.s32.totalorder %s10, 0
      %p70 = por %p68, %p69
      %p71 = scmp.ne.s32.totalorder %s60, %s63
      %p72 = scmp.eq.s32.totalorder %s15, 2
      %p73 = por %p71, %p72
      %p74 = scmp.ne.s32.totalorder %s63, %s64
      %p75 = scmp.eq.s32.totalorder %s15, 0
      %p76 = por %p74, %p75
      %p77 = scmp.ne.s32.totalorder %s63, %s64
      %p78 = scmp.eq.s32.totalorder %s16, 2
      %p79 = por %p77, %p78
      %p81 = scmp.ne.s32.totalorder %s64, %s80
      %p82 = scmp.eq.s32.totalorder %s16, 0
      %p83 = por %p81, %p82
      %s85 = sadd.s32 %s84, 1
      %p88 = scmp.eq.s32.totalorder %s10, 2
      %p89 = scmp.ne.s32.totalorder %s84, %s86
      %p90 = scmp.eq.s32.totalorder %s10, 0
      %p91 = por %p89, %p90
      %p92 = scmp.ne.s32.totalorder %s84, %s86
      %p93 = scmp.eq.s32.totalorder %s15, 2
      %p94 = por %p92, %p93
      %p95 = scmp.ne.s32.totalorder %s86, %s87
      %p96 = scmp.eq.s32.totalorder %s15, 0
      %p97 = por %p95, %p96
      %p98 = scmp.ne.s32.totalorder %s86, %s87
      %p99 = scmp.eq.s32.totalorder %s16, 2
      %p100 = por %p98, %p99
      %p102 = scmp.ne.s32.totalorder %s87, %s101
      %p103 = scmp.eq.s32.totalorder %s16, 0
      %p104 = por %p102, %p103
      %s105 = ssub.s32 %s17, %s29
      %p106 = scmp.eq.s32.totalorder %s105, 0
      %s108 = sadd.s32 %s107, 1
      %s109 = scalar_select %p106, %s107, %s108
      %p112 = pneg %p106
      %p113 = scmp.eq.s32.totalorder %s10, 2
      %p114 = por %p112, %p113
      %p115 = scmp.ne.s32.totalorder %s107, %s110
      %p116 = scmp.eq.s32.totalorder %s10, 0
      %p117 = por %p115, %p116
      %p118 = scmp.ne.s32.totalorder %s107, %s110
      %p119 = scmp.eq.s32.totalorder %s15, 2
      %p120 = por %p118, %p119
      %p121 = scmp.ne.s32.totalorder %s110, %s111
      %p122 = scmp.eq.s32.totalorder %s15, 0
      %p123 = por %p121, %p122
      %p124 = scmp.ne.s32.totalorder %s110, %s111
      %p125 = scmp.eq.s32.totalorder %s16, 2
      %p126 = por %p124, %p125
      %p128 = scmp.ne.s32.totalorder %s111, %s127
      %p129 = scmp.eq.s32.totalorder %s16, 0
      %p130 = por %p128, %p129
      %p131 = scmp.le.s32.totalorder 1, %s10
      %p132 = scmp.lt.s32.totalorder %s10, 4
      %p133 = pnand %p131, %p132
      %p134 = pneg %p133
      // Predicated region
      $region9: #{net_forward.4} parent=5 // pred_check
        _
      $region10: #{net_forward.4} parent=5 // pred_check_branch
        %136 = sbr.rel (%p133) target = $region12
      $region11: #{net_forward.4} parent=5 // pred_region
        %s137 = ssub.s32 %s10, 1
        // Predicated region
        $region13: #{net_forward.4} parent=11 // pred_check
          %p138 = pneg %p76
        $region14: #{net_forward.4} parent=11 // pred_check_branch
          %140 = sbr.rel (%p138) target = $region16
        $region15: #{net_forward.4} parent=11 // pred_region
          %s141 = smul.u32 2, %s20
          %p142 = scmp.lt.s32.totalorder %s141, 1
          %s143 = scalar_select %p142, %s141, 1
          %s144 = smul.addr %s143, 4
          %s145 = scalar_lea.vmem %s1, %s144
          %s146 = smul.u32 2, %s20
        $region16: #{net_forward.4} parent=11 // pred_fallthru
          _
        // Predicated region
        $region17: #{net_forward.4} parent=11 // pred_check
          %p147 = pneg %p97
        $region18: #{net_forward.4} parent=11 // pred_check_branch
          %149 = sbr.rel (%p147) target = $region20
        $region19: #{net_forward.4} parent=11 // pred_region
          %151 = vsyncadd [#allocation4], 0
          %s153 = sshll.u32 %s2, 4
          %s154 = int_to_ptr.hbm [resolvable:$true] %s153
          %s155 = sshll.u32 [#allocation3], 4
          %s156 = int_to_ptr.vmem [resolvable:$true] %s155
          %158 = dma.hbm_to_vmem [thread:$0]  %s154, 16, %s156, [#allocation4]
        $region20: #{net_forward.4} parent=11 // pred_fallthru
          _
      $region12: #{net_forward.4} parent=5 // pred_fallthru
        _
      %p159 = scmp.lt.s32.totalorder %s10, 3
      // Predicated region
      $region21: #{net_forward.4} parent=5 // pred_check
        %p160 = pneg %p159
      $region22: #{net_forward.4} parent=5 // pred_check_branch
        %162 = sbr.rel (%p160) target = $region24
      $region23: #{net_forward.4} parent=5 // pred_region
        // Predicated region
        $region25: #{net_forward.4} parent=23 // pred_check
          %p163 = pneg %p44
        $region26: #{net_forward.4} parent=23 // pred_check_branch
          %165 = sbr.rel (%p163) target = $region28
        $region27: #{net_forward.4} parent=23 // pred_region
          %s166 = smul.u32 64, %s17
          %s167 = ssub.s32 169, %s166
          %p168 = scmp.lt.s32.totalorder %s167, 64
          %s169 = scalar_select %p168, %s167, 64
          %s170 = smul.u32 4, %s169
          %p171 = scmp.lt.s32.totalorder %s166, 168
          %s172 = scalar_select %p171, %s166, 168
          %p173 = scmp.lt.s32.totalorder %s18, 0
          %s174 = scalar_select %p173, %s18, 0
          %s175 = sadd.s32 %s174, %s172
          %s176 = smul.addr %s175, 4
          %s177 = scalar_lea.vmem %s0, %s176
          %s178 = smul.u32 64, %s17
          %s179 = ssub.s32 169, %s178
          %p180 = scmp.lt.s32.totalorder %s179, 64
          %s181 = scalar_select %p180, %s179, 64
          %s182 = smul.u32 4, %s181
        $region28: #{net_forward.4} parent=23 // pred_fallthru
          _
      $region24: #{net_forward.4} parent=5 // pred_fallthru
        _
      %p183 = scmp.le.s32.totalorder 1, %s10
      %p184 = scmp.lt.s32.totalorder %s10, 4
      %p185 = pnand %p183, %p184
      %p186 = pneg %p185
      // Predicated region
      $region29: #{net_forward.4} parent=5 // pred_check
        _
      $region30: #{net_forward.4} parent=5 // pred_check_branch
        %188 = sbr.rel (%p185) target = $region32
      $region31: #{net_forward.4} parent=5 // pred_region
        %s189 = ssub.s32 %s10, 1
        // Predicated region
        $region33: #{net_forward.4} parent=31 // pred_check
          %p190 = pneg %p97
        $region34: #{net_forward.4} parent=31 // pred_check_branch
          %192 = sbr.rel (%p190) target = $region36
        $region35: #{net_forward.4} parent=31 // pred_region
          %194 = dma.done [#allocation4], 16
        $region36: #{net_forward.4} parent=31 // pred_fallthru
          _
        %s195 = smul.u32 64, %s19
        %s196 = ssub.s32 169, %s195
        %p197 = scmp.lt.s32.totalorder %s196, 64
        %s198 = scalar_select %p197, %s196, 64
        %s199 = smul.u32 4, %s198
        %p200 = scmp.lt.s32.totalorder %s195, 168
        %s201 = scalar_select %p200, %s195, 168
        %p202 = scmp.lt.s32.totalorder %s20, 0
        %s203 = scalar_select %p202, %s20, 0
        %s204 = sadd.s32 %s203, %s201
        %s205 = smul.addr %s204, 4
        %s206 = scalar_lea.vmem %s0, %s205
        %p207 = pneg %p50
        %p208 = pneg %p47
        %s209 = smul.u32 2, %s20
        %p210 = scmp.lt.s32.totalorder %s209, 1
        %s211 = scalar_select %p210, %s209, 1
        %s212 = smul.addr %s211, 4
        %s213 = scalar_lea.vmem %s1, %s212
        %p214 = pneg %p76
        %p215 = pneg %p73
        %p216 = pneg %p97
        %p217 = pneg %p94
        %p218 = pneg %p123
        %p219 = pneg %p120
        %s220 = sand.u32 %s110, 1
        %s221 = sand.u32 %s110, 1
        %s222 = smul.addr %s221, 512
        %s223 = scalar_lea.vmem [#allocation5], %s222
        %s224 = smul.u32 64, %s19
        %s225 = ssub.s32 169, %s224
        %p226 = scmp.lt.s32.totalorder %s225, 64
        %s227 = scalar_select %p226, %s225, 64
        %s228 = smul.u32 4, %s227
        %p229 = scmp.lt.s32.totalorder %s224, 168
        %s230 = scalar_select %p229, %s224, 168
        %p231 = scmp.lt.s32.totalorder %s20, 0
        %s232 = scalar_select %p231, %s20, 0
        %s233 = sadd.s32 %s232, %s230
        %s234 = smul.addr %s233, 4
        %s235 = scalar_lea.vmem %s0, %s234
        %s236 = smul.u32 64, %s19
        %s237 = ssub.s32 169, %s236
        %p238 = scmp.lt.s32.totalorder %s237, 64
        %s239 = scalar_select %p238, %s237, 64
        %s240 = smul.u32 4, %s239
        %s241 = smul.u32 2, %s20
        %p242 = scmp.lt.s32.totalorder %s241, 1
        %s243 = scalar_select %p242, %s241, 1
        %s244 = smul.addr %s243, 4
        %s245 = scalar_lea.vmem %s1, %s244
        %s246 = smul.u32 2, %s20
        %s247 = smul.u32 64, %s19
        %s248 = ssub.s32 169, %s247
        %p249 = scmp.lt.s32.totalorder %s248, 64
        %s250 = scalar_select %p249, %s248, 64
        %s251 = smul.u32 8, %s250
        %p253 = scmp.eq.s32.totalorder %s20, 0
        // Predicated region
        $region37: #{net_forward.4} parent=31 // pred_check
          %p254 = pneg %p253
        $region38: #{net_forward.4} parent=31 // pred_check_branch
          %256 = sbr.rel (%p254) target = $region40
        $region39: #{net_forward.4} parent=31 // pred_region
          %vm257 = vcmask 261120
          %258 = vst.msk [vmem:[#allocation2] sm:$0xff] %vm257, 0.0
          %259 = vst.msk [vmem:[#allocation2 + $0x8] sm:$0xff] %vm257, 0.0
          %260 = vst.msk [vmem:[#allocation2 + $0x10] sm:$0xff] %vm257, 0.0
          %261 = vst.msk [vmem:[#allocation2 + $0x18] sm:$0xff] %vm257, 0.0
          %262 = vst.msk [vmem:[#allocation2 + $0x20] sm:$0xff] %vm257, 0.0
          %263 = vst.msk [vmem:[#allocation2 + $0x28] sm:$0xff] %vm257, 0.0
          %264 = vst.msk [vmem:[#allocation2 + $0x30] sm:$0xff] %vm257, 0.0
          %265 = vst.msk [vmem:[#allocation2 + $0x38] sm:$0xff] %vm257, 0.0
          %266 = vst.msk [vmem:[#allocation2 + $0x40] sm:$0xff] %vm257, 0.0
          %267 = vst.msk [vmem:[#allocation2 + $0x48] sm:$0xff] %vm257, 0.0
          %268 = vst.msk [vmem:[#allocation2 + $0x50] sm:$0xff] %vm257, 0.0
          %269 = vst.msk [vmem:[#allocation2 + $0x58] sm:$0xff] %vm257, 0.0
          %270 = vst.msk [vmem:[#allocation2 + $0x60] sm:$0xff] %vm257, 0.0
          %271 = vst.msk [vmem:[#allocation2 + $0x68] sm:$0xff] %vm257, 0.0
          %272 = vst.msk [vmem:[#allocation2 + $0x70] sm:$0xff] %vm257, 0.0
          %273 = vst.msk [vmem:[#allocation2 + $0x78] sm:$0xff] %vm257, 0.0
          %274 = vst.msk [vmem:[#allocation2 + $0x80] sm:$0xff] %vm257, 0.0
          %275 = vst.msk [vmem:[#allocation2 + $0x88] sm:$0xff] %vm257, 0.0
          %276 = vst.msk [vmem:[#allocation2 + $0x90] sm:$0xff] %vm257, 0.0
          %277 = vst.msk [vmem:[#allocation2 + $0x98] sm:$0xff] %vm257, 0.0
          %278 = vst.msk [vmem:[#allocation2 + $0xa0] sm:$0xff] %vm257, 0.0
          %279 = vst.msk [vmem:[#allocation2 + $0xa8] sm:$0xff] %vm257, 0.0
          %280 = vst.msk [vmem:[#allocation2 + $0xb0] sm:$0xff] %vm257, 0.0
          %281 = vst.msk [vmem:[#allocation2 + $0xb8] sm:$0xff] %vm257, 0.0
          %282 = vst.msk [vmem:[#allocation2 + $0xc0] sm:$0xff] %vm257, 0.0
          %283 = vst.msk [vmem:[#allocation2 + $0xc8] sm:$0xff] %vm257, 0.0
          %284 = vst.msk [vmem:[#allocation2 + $0xd0] sm:$0xff] %vm257, 0.0
          %285 = vst.msk [vmem:[#allocation2 + $0xd8] sm:$0xff] %vm257, 0.0
          %286 = vst.msk [vmem:[#allocation2 + $0xe0] sm:$0xff] %vm257, 0.0
          %287 = vst.msk [vmem:[#allocation2 + $0xe8] sm:$0xff] %vm257, 0.0
          %288 = vst.msk [vmem:[#allocation2 + $0xf0] sm:$0xff] %vm257, 0.0
          %289 = vst.msk [vmem:[#allocation2 + $0xf8] sm:$0xff] %vm257, 0.0
          %290 = vst.msk [vmem:[#allocation2 + $0x100] sm:$0xff] %vm257, 0.0
          %291 = vst.msk [vmem:[#allocation2 + $0x108] sm:$0xff] %vm257, 0.0
          %292 = vst.msk [vmem:[#allocation2 + $0x110] sm:$0xff] %vm257, 0.0
          %293 = vst.msk [vmem:[#allocation2 + $0x118] sm:$0xff] %vm257, 0.0
          %294 = vst.msk [vmem:[#allocation2 + $0x120] sm:$0xff] %vm257, 0.0
          %295 = vst.msk [vmem:[#allocation2 + $0x128] sm:$0xff] %vm257, 0.0
          %296 = vst.msk [vmem:[#allocation2 + $0x130] sm:$0xff] %vm257, 0.0
          %297 = vst.msk [vmem:[#allocation2 + $0x138] sm:$0xff] %vm257, 0.0
          %298 = vst.msk [vmem:[#allocation2 + $0x140] sm:$0xff] %vm257, 0.0
          %299 = vst.msk [vmem:[#allocation2 + $0x148] sm:$0xff] %vm257, 0.0
          %300 = vst.msk [vmem:[#allocation2 + $0x150] sm:$0xff] %vm257, 0.0
          %301 = vst.msk [vmem:[#allocation2 + $0x158] sm:$0xff] %vm257, 0.0
          %302 = vst.msk [vmem:[#allocation2 + $0x160] sm:$0xff] %vm257, 0.0
          %303 = vst.msk [vmem:[#allocation2 + $0x168] sm:$0xff] %vm257, 0.0
          %304 = vst.msk [vmem:[#allocation2 + $0x170] sm:$0xff] %vm257, 0.0
          %305 = vst.msk [vmem:[#allocation2 + $0x178] sm:$0xff] %vm257, 0.0
          %306 = vst.msk [vmem:[#allocation2 + $0x180] sm:$0xff] %vm257, 0.0
          %307 = vst.msk [vmem:[#allocation2 + $0x188] sm:$0xff] %vm257, 0.0
          %308 = vst.msk [vmem:[#allocation2 + $0x190] sm:$0xff] %vm257, 0.0
          %309 = vst.msk [vmem:[#allocation2 + $0x198] sm:$0xff] %vm257, 0.0
          %310 = vst.msk [vmem:[#allocation2 + $0x1a0] sm:$0xff] %vm257, 0.0
          %311 = vst.msk [vmem:[#allocation2 + $0x1a8] sm:$0xff] %vm257, 0.0
          %312 = vst.msk [vmem:[#allocation2 + $0x1b0] sm:$0xff] %vm257, 0.0
          %313 = vst.msk [vmem:[#allocation2 + $0x1b8] sm:$0xff] %vm257, 0.0
          %314 = vst.msk [vmem:[#allocation2 + $0x1c0] sm:$0xff] %vm257, 0.0
          %315 = vst.msk [vmem:[#allocation2 + $0x1c8] sm:$0xff] %vm257, 0.0
          %316 = vst.msk [vmem:[#allocation2 + $0x1d0] sm:$0xff] %vm257, 0.0
          %317 = vst.msk [vmem:[#allocation2 + $0x1d8] sm:$0xff] %vm257, 0.0
          %318 = vst.msk [vmem:[#allocation2 + $0x1e0] sm:$0xff] %vm257, 0.0
          %319 = vst.msk [vmem:[#allocation2 + $0x1e8] sm:$0xff] %vm257, 0.0
          %320 = vst.msk [vmem:[#allocation2 + $0x1f0] sm:$0xff] %vm257, 0.0
          %321 = vst.msk [vmem:[#allocation2 + $0x1f8] sm:$0xff] %vm257, 0.0
        $region40: #{net_forward.4} parent=31 // pred_fallthru
          _
        %v322 = vld [vmem:[#allocation2] sm:$0xff]
        %v323 = vld [vmem:[#allocation2 + $0x8] sm:$0xff]
        %v324 = vld [vmem:[#allocation2 + $0x10] sm:$0xff]
        %v325 = vld [vmem:[#allocation2 + $0x18] sm:$0xff]
        %v326 = vld [vmem:[#allocation2 + $0x20] sm:$0xff]
        %v327 = vld [vmem:[#allocation2 + $0x28] sm:$0xff]
        %v328 = vld [vmem:[#allocation2 + $0x30] sm:$0xff]
        %v329 = vld [vmem:[#allocation2 + $0x38] sm:$0xff]
        %v330 = vld [vmem:[#allocation2 + $0x40] sm:$0xff]
        %v331 = vld [vmem:[#allocation2 + $0x48] sm:$0xff]
        %v332 = vld [vmem:[#allocation2 + $0x50] sm:$0xff]
        %v333 = vld [vmem:[#allocation2 + $0x58] sm:$0xff]
        %v334 = vld [vmem:[#allocation2 + $0x60] sm:$0xff]
        %v335 = vld [vmem:[#allocation2 + $0x68] sm:$0xff]
        %v336 = vld [vmem:[#allocation2 + $0x70] sm:$0xff]
        %v337 = vld [vmem:[#allocation2 + $0x78] sm:$0xff]
        %v338 = vld [vmem:[#allocation2 + $0x80] sm:$0xff]
        %v339 = vld [vmem:[#allocation2 + $0x88] sm:$0xff]
        %v340 = vld [vmem:[#allocation2 + $0x90] sm:$0xff]
        %v341 = vld [vmem:[#allocation2 + $0x98] sm:$0xff]
        %v342 = vld [vmem:[#allocation2 + $0xa0] sm:$0xff]
        %v343 = vld [vmem:[#allocation2 + $0xa8] sm:$0xff]
        %v344 = vld [vmem:[#allocation2 + $0xb0] sm:$0xff]
        %v345 = vld [vmem:[#allocation2 + $0xb8] sm:$0xff]
        %v346 = vld [vmem:[#allocation2 + $0xc0] sm:$0xff]
        %v347 = vld [vmem:[#allocation2 + $0xc8] sm:$0xff]
        %v348 = vld [vmem:[#allocation2 + $0xd0] sm:$0xff]
        %v349 = vld [vmem:[#allocation2 + $0xd8] sm:$0xff]
        %v350 = vld [vmem:[#allocation2 + $0xe0] sm:$0xff]
        %v351 = vld [vmem:[#allocation2 + $0xe8] sm:$0xff]
        %v352 = vld [vmem:[#allocation2 + $0xf0] sm:$0xff]
        %v353 = vld [vmem:[#allocation2 + $0xf8] sm:$0xff]
        %v354 = vld [vmem:[#allocation2 + $0x100] sm:$0xff]
        %v355 = vld [vmem:[#allocation2 + $0x108] sm:$0xff]
        %v356 = vld [vmem:[#allocation2 + $0x110] sm:$0xff]
        %v357 = vld [vmem:[#allocation2 + $0x118] sm:$0xff]
        %v358 = vld [vmem:[#allocation2 + $0x120] sm:$0xff]
        %v359 = vld [vmem:[#allocation2 + $0x128] sm:$0xff]
        %v360 = vld [vmem:[#allocation2 + $0x130] sm:$0xff]
        %v361 = vld [vmem:[#allocation2 + $0x138] sm:$0xff]
        %v362 = vld [vmem:[#allocation2 + $0x140] sm:$0xff]
        %v363 = vld [vmem:[#allocation2 + $0x148] sm:$0xff]
        %v364 = vld [vmem:[#allocation2 + $0x150] sm:$0xff]
        %v365 = vld [vmem:[#allocation2 + $0x158] sm:$0xff]
        %v366 = vld [vmem:[#allocation2 + $0x160] sm:$0xff]
        %v367 = vld [vmem:[#allocation2 + $0x168] sm:$0xff]
        %v368 = vld [vmem:[#allocation2 + $0x170] sm:$0xff]
        %v369 = vld [vmem:[#allocation2 + $0x178] sm:$0xff]
        %v370 = vld [vmem:[#allocation2 + $0x180] sm:$0xff]
        %v371 = vld [vmem:[#allocation2 + $0x188] sm:$0xff]
        %v372 = vld [vmem:[#allocation2 + $0x190] sm:$0xff]
        %v373 = vld [vmem:[#allocation2 + $0x198] sm:$0xff]
        %v374 = vld [vmem:[#allocation2 + $0x1a0] sm:$0xff]
        %v375 = vld [vmem:[#allocation2 + $0x1a8] sm:$0xff]
        %v376 = vld [vmem:[#allocation2 + $0x1b0] sm:$0xff]
        %v377 = vld [vmem:[#allocation2 + $0x1b8] sm:$0xff]
        %v378 = vld [vmem:[#allocation2 + $0x1c0] sm:$0xff]
        %v379 = vld [vmem:[#allocation2 + $0x1c8] sm:$0xff]
        %v380 = vld [vmem:[#allocation2 + $0x1d0] sm:$0xff]
        %v381 = vld [vmem:[#allocation2 + $0x1d8] sm:$0xff]
        %v382 = vld [vmem:[#allocation2 + $0x1e0] sm:$0xff]
        %v383 = vld [vmem:[#allocation2 + $0x1e8] sm:$0xff]
        %v384 = vld [vmem:[#allocation2 + $0x1f0] sm:$0xff]
        %v385 = vld [vmem:[#allocation2 + $0x1f8] sm:$0xff]
        %v386 = vld [vmem:[%s235] sm:$0xf]
        %v387 = vld [vmem:[%s235 + $0x4] sm:$0xf]
        %v388 = vld [vmem:[%s235 + $0x8] sm:$0xf]
        %v389 = vld [vmem:[%s235 + $0xc] sm:$0xf]
        %v390 = vld [vmem:[%s235 + $0x10] sm:$0xf]
        %v391 = vld [vmem:[%s235 + $0x14] sm:$0xf]
        %v392 = vld [vmem:[%s235 + $0x18] sm:$0xf]
        %v393 = vld [vmem:[%s235 + $0x1c] sm:$0xf]
        %v394 = vld [vmem:[%s235 + $0x20] sm:$0xf]
        %v395 = vld [vmem:[%s235 + $0x24] sm:$0xf]
        %v396 = vld [vmem:[%s235 + $0x28] sm:$0xf]
        %v397 = vld [vmem:[%s235 + $0x2c] sm:$0xf]
        %v398 = vld [vmem:[%s235 + $0x30] sm:$0xf]
        %v399 = vld [vmem:[%s235 + $0x34] sm:$0xf]
        %v400 = vld [vmem:[%s235 + $0x38] sm:$0xf]
        %v401 = vld [vmem:[%s235 + $0x3c] sm:$0xf]
        %v402 = vld [vmem:[%s235 + $0x40] sm:$0xf]
        %v403 = vld [vmem:[%s235 + $0x44] sm:$0xf]
        %v404 = vld [vmem:[%s235 + $0x48] sm:$0xf]
        %v405 = vld [vmem:[%s235 + $0x4c] sm:$0xf]
        %v406 = vld [vmem:[%s235 + $0x50] sm:$0xf]
        %v407 = vld [vmem:[%s235 + $0x54] sm:$0xf]
        %v408 = vld [vmem:[%s235 + $0x58] sm:$0xf]
        %v409 = vld [vmem:[%s235 + $0x5c] sm:$0xf]
        %v410 = vld [vmem:[%s235 + $0x60] sm:$0xf]
        %v411 = vld [vmem:[%s235 + $0x64] sm:$0xf]
        %v412 = vld [vmem:[%s235 + $0x68] sm:$0xf]
        %v413 = vld [vmem:[%s235 + $0x6c] sm:$0xf]
        %v414 = vld [vmem:[%s235 + $0x70] sm:$0xf]
        %v415 = vld [vmem:[%s235 + $0x74] sm:$0xf]
        %v416 = vld [vmem:[%s235 + $0x78] sm:$0xf]
        %v417 = vld [vmem:[%s235 + $0x7c] sm:$0xf]
        %v418 = vld [vmem:[%s235 + $0x80] sm:$0xf]
        %v419 = vld [vmem:[%s235 + $0x84] sm:$0xf]
        %v420 = vld [vmem:[%s235 + $0x88] sm:$0xf]
        %v421 = vld [vmem:[%s235 + $0x8c] sm:$0xf]
        %v422 = vld [vmem:[%s235 + $0x90] sm:$0xf]
        %v423 = vld [vmem:[%s235 + $0x94] sm:$0xf]
        %v424 = vld [vmem:[%s235 + $0x98] sm:$0xf]
        %v425 = vld [vmem:[%s235 + $0x9c] sm:$0xf]
        %v426 = vld [vmem:[%s235 + $0xa0] sm:$0xf]
        %v427 = vld [vmem:[%s235 + $0xa4] sm:$0xf]
        %v428 = vld [vmem:[%s235 + $0xa8] sm:$0xf]
        %v429 = vld [vmem:[%s235 + $0xac] sm:$0xf]
        %v430 = vld [vmem:[%s235 + $0xb0] sm:$0xf]
        %v431 = vld [vmem:[%s235 + $0xb4] sm:$0xf]
        %v432 = vld [vmem:[%s235 + $0xb8] sm:$0xf]
        %v433 = vld [vmem:[%s235 + $0xbc] sm:$0xf]
        %v434 = vld [vmem:[%s235 + $0xc0] sm:$0xf]
        %v435 = vld [vmem:[%s235 + $0xc4] sm:$0xf]
        %v436 = vld [vmem:[%s235 + $0xc8] sm:$0xf]
        %v437 = vld [vmem:[%s235 + $0xcc] sm:$0xf]
        %v438 = vld [vmem:[%s235 + $0xd0] sm:$0xf]
        %v439 = vld [vmem:[%s235 + $0xd4] sm:$0xf]
        %v440 = vld [vmem:[%s235 + $0xd8] sm:$0xf]
        %v441 = vld [vmem:[%s235 + $0xdc] sm:$0xf]
        %v442 = vld [vmem:[%s235 + $0xe0] sm:$0xf]
        %v443 = vld [vmem:[%s235 + $0xe4] sm:$0xf]
        %v444 = vld [vmem:[%s235 + $0xe8] sm:$0xf]
        %v445 = vld [vmem:[%s235 + $0xec] sm:$0xf]
        %v446 = vld [vmem:[%s235 + $0xf0] sm:$0xf]
        %v447 = vld [vmem:[%s235 + $0xf4] sm:$0xf]
        %v448 = vld [vmem:[%s235 + $0xf8] sm:$0xf]
        %v449 = vld [vmem:[%s235 + $0xfc] sm:$0xf]
        %v450 = vld [vmem:[%s245] sm:$0xf]
        %v451 = vld [vmem:[%s245 + $0x4] sm:$0x1]
        %v516 = vunpack.c.l.b16 %v386
        %v517 = vunpack.c.l.b16 %v387
        %v518 = vunpack.c.l.b16 %v388
        %v519 = vunpack.c.l.b16 %v389
        %v520 = vunpack.c.l.b16 %v390
        %v521 = vunpack.c.l.b16 %v391
        %v522 = vunpack.c.l.b16 %v392
        %v523 = vunpack.c.l.b16 %v393
        %v524 = vunpack.c.l.b16 %v394
        %v525 = vunpack.c.l.b16 %v395
        %v526 = vunpack.c.l.b16 %v396
        %v527 = vunpack.c.l.b16 %v397
        %v528 = vunpack.c.l.b16 %v398
        %v529 = vunpack.c.l.b16 %v399
        %v530 = vunpack.c.l.b16 %v400
        %v531 = vunpack.c.l.b16 %v401
        %v532 = vunpack.c.l.b16 %v402
        %v533 = vunpack.c.l.b16 %v403
        %v534 = vunpack.c.l.b16 %v404
        %v535 = vunpack.c.l.b16 %v405
        %v536 = vunpack.c.l.b16 %v406
        %v537 = vunpack.c.l.b16 %v407
        %v538 = vunpack.c.l.b16 %v408
        %v539 = vunpack.c.l.b16 %v409
        %v540 = vunpack.c.l.b16 %v410
        %v541 = vunpack.c.l.b16 %v411
        %v542 = vunpack.c.l.b16 %v412
        %v543 = vunpack.c.l.b16 %v413
        %v544 = vunpack.c.l.b16 %v414
        %v545 = vunpack.c.l.b16 %v415
        %v546 = vunpack.c.l.b16 %v416
        %v547 = vunpack.c.l.b16 %v417
        %v548 = vunpack.c.l.b16 %v418
        %v549 = vunpack.c.l.b16 %v419
        %v550 = vunpack.c.l.b16 %v420
        %v551 = vunpack.c.l.b16 %v421
        %v552 = vunpack.c.l.b16 %v422
        %v553 = vunpack.c.l.b16 %v423
        %v554 = vunpack.c.l.b16 %v424
        %v555 = vunpack.c.l.b16 %v425
        %v556 = vunpack.c.l.b16 %v426
        %v557 = vunpack.c.l.b16 %v427
        %v558 = vunpack.c.l.b16 %v428
        %v559 = vunpack.c.l.b16 %v429
        %v560 = vunpack.c.l.b16 %v430
        %v561 = vunpack.c.l.b16 %v431
        %v562 = vunpack.c.l.b16 %v432
        %v563 = vunpack.c.l.b16 %v433
        %v564 = vunpack.c.l.b16 %v434
        %v565 = vunpack.c.l.b16 %v435
        %v566 = vunpack.c.l.b16 %v436
        %v567 = vunpack.c.l.b16 %v437
        %v568 = vunpack.c.l.b16 %v438
        %v569 = vunpack.c.l.b16 %v439
        %v570 = vunpack.c.l.b16 %v440
        %v571 = vunpack.c.l.b16 %v441
        %v572 = vunpack.c.l.b16 %v442
        %v573 = vunpack.c.l.b16 %v443
        %v574 = vunpack.c.l.b16 %v444
        %v575 = vunpack.c.l.b16 %v445
        %v576 = vunpack.c.l.b16 %v446
        %v577 = vunpack.c.l.b16 %v447
        %v578 = vunpack.c.l.b16 %v448
        %v579 = vunpack.c.l.b16 %v449
        %v580 = vpack.c.b16 %v517, %v516
        %v581 = vpack.c.b16 %v519, %v518
        %v582 = vpack.c.b16 %v521, %v520
        %v583 = vpack.c.b16 %v523, %v522
        %v584 = vpack.c.b16 %v525, %v524
        %v585 = vpack.c.b16 %v527, %v526
        %v586 = vpack.c.b16 %v529, %v528
        %v587 = vpack.c.b16 %v531, %v530
        %v588 = vpack.c.b16 %v533, %v532
        %v589 = vpack.c.b16 %v535, %v534
        %v590 = vpack.c.b16 %v537, %v536
        %v591 = vpack.c.b16 %v539, %v538
        %v592 = vpack.c.b16 %v541, %v540
        %v593 = vpack.c.b16 %v543, %v542
        %v594 = vpack.c.b16 %v545, %v544
        %v595 = vpack.c.b16 %v547, %v546
        %v596 = vpack.c.b16 %v549, %v548
        %v597 = vpack.c.b16 %v551, %v550
        %v598 = vpack.c.b16 %v553, %v552
        %v599 = vpack.c.b16 %v555, %v554
        %v600 = vpack.c.b16 %v557, %v556
        %v601 = vpack.c.b16 %v559, %v558
        %v602 = vpack.c.b16 %v561, %v560
        %v603 = vpack.c.b16 %v563, %v562
        %v604 = vpack.c.b16 %v565, %v564
        %v605 = vpack.c.b16 %v567, %v566
        %v606 = vpack.c.b16 %v569, %v568
        %v607 = vpack.c.b16 %v571, %v570
        %v608 = vpack.c.b16 %v573, %v572
        %v609 = vpack.c.b16 %v575, %v574
        %v610 = vpack.c.b16 %v577, %v576
        %v611 = vpack.c.b16 %v579, %v578
        %v614 = vunpack.c.l.b16 %v450
        %v615 = vunpack.c.l.b16 %v451
        %v616 = vpack.c.b16 %v615, %v614
        %vm617 = vcmask 72704
        %v619 = vsel %vm617, %v580, 0
        %v622 = vsel %vm617, %v581, 0
        %v625 = vsel %vm617, %v582, 0
        %v628 = vsel %vm617, %v583, 0
        %v631 = vsel %vm617, %v584, 0
        %v634 = vsel %vm617, %v585, 0
        %v637 = vsel %vm617, %v586, 0
        %v640 = vsel %vm617, %v587, 0
        %v643 = vsel %vm617, %v588, 0
        %v646 = vsel %vm617, %v589, 0
        %v649 = vsel %vm617, %v590, 0
        %v652 = vsel %vm617, %v591, 0
        %v655 = vsel %vm617, %v592, 0
        %v658 = vsel %vm617, %v593, 0
        %v661 = vsel %vm617, %v594, 0
        %v664 = vsel %vm617, %v595, 0
        %v667 = vsel %vm617, %v596, 0
        %v670 = vsel %vm617, %v597, 0
        %v673 = vsel %vm617, %v598, 0
        %v676 = vsel %vm617, %v599, 0
        %v679 = vsel %vm617, %v600, 0
        %v682 = vsel %vm617, %v601, 0
        %v685 = vsel %vm617, %v602, 0
        %v688 = vsel %vm617, %v603, 0
        %v691 = vsel %vm617, %v604, 0
        %v694 = vsel %vm617, %v605, 0
        %v697 = vsel %vm617, %v606, 0
        %v700 = vsel %vm617, %v607, 0
        %v703 = vsel %vm617, %v608, 0
        %v706 = vsel %vm617, %v609, 0
        %v709 = vsel %vm617, %v610, 0
        %v712 = vsel %vm617, %v611, 0
        %vm714 = vcmask 1043456
        %vm715 = vcmask 1044480
        %v716 = vsel %vm714, 4294967295, 65535
        %v717 = vsel %vm715, %v716, 0
        %v719 = vand.u32 %v616, %v717
        %721 = vmatpush.bf16.msra.mxu0 0
        %722 = vmatpush.bf16.msra.mxu0 0
        %723 = vmatpush.bf16.msra.mxu0 0
        %724 = vmatpush.bf16.msra.mxu0 0
        %725 = vmatpush.bf16.msra.mxu0 0
        %726 = vmatpush.bf16.msra.mxu0 0
        %727 = vmatpush.bf16.msra.mxu0 0
        %728 = vmatpush.bf16.msra.mxu0 %v719
        %729 = vmatmul.bf16.gmra.mxu0 %v619
        %v730 = vpop.f32.mrf.mxu0
        %v731 = vadd.f32 0.0, %v730
        %v732 = vpop.f32.mrf.mxu0
        %v733 = vadd.f32 0.0, %v732
        %734 = vmatmul.bf16.gmra.mxu0 %v622
        %v735 = vpop.f32.mrf.mxu0
        %v736 = vadd.f32 0.0, %v735
        %v737 = vpop.f32.mrf.mxu0
        %v738 = vadd.f32 0.0, %v737
        %739 = vmatmul.bf16.gmra.mxu0 %v625
        %v740 = vpop.f32.mrf.mxu0
        %v741 = vadd.f32 0.0, %v740
        %v742 = vpop.f32.mrf.mxu0
        %v743 = vadd.f32 0.0, %v742
        %744 = vmatmul.bf16.gmra.mxu0 %v628
        %v745 = vpop.f32.mrf.mxu0
        %v746 = vadd.f32 0.0, %v745
        %v747 = vpop.f32.mrf.mxu0
        %v748 = vadd.f32 0.0, %v747
        %749 = vmatmul.bf16.gmra.mxu0 %v631
        %v750 = vpop.f32.mrf.mxu0
        %v751 = vadd.f32 0.0, %v750
        %v752 = vpop.f32.mrf.mxu0
        %v753 = vadd.f32 0.0, %v752
        %754 = vmatmul.bf16.gmra.mxu0 %v634
        %v755 = vpop.f32.mrf.mxu0
        %v756 = vadd.f32 0.0, %v755
        %v757 = vpop.f32.mrf.mxu0
        %v758 = vadd.f32 0.0, %v757
        %759 = vmatmul.bf16.gmra.mxu0 %v637
        %v760 = vpop.f32.mrf.mxu0
        %v761 = vadd.f32 0.0, %v760
        %v762 = vpop.f32.mrf.mxu0
        %v763 = vadd.f32 0.0, %v762
        %764 = vmatmul.bf16.gmra.mxu0 %v640
        %v765 = vpop.f32.mrf.mxu0
        %v766 = vadd.f32 0.0, %v765
        %v767 = vpop.f32.mrf.mxu0
        %v768 = vadd.f32 0.0, %v767
        %769 = vmatmul.bf16.gmra.mxu0 %v643
        %v770 = vpop.f32.mrf.mxu0
        %v771 = vadd.f32 0.0, %v770
        %v772 = vpop.f32.mrf.mxu0
        %v773 = vadd.f32 0.0, %v772
        %774 = vmatmul.bf16.gmra.mxu0 %v646
        %v775 = vpop.f32.mrf.mxu0
        %v776 = vadd.f32 0.0, %v775
        %v777 = vpop.f32.mrf.mxu0
        %v778 = vadd.f32 0.0, %v777
        %779 = vmatmul.bf16.gmra.mxu0 %v649
        %v780 = vpop.f32.mrf.mxu0
        %v781 = vadd.f32 0.0, %v780
        %v782 = vpop.f32.mrf.mxu0
        %v783 = vadd.f32 0.0, %v782
        %784 = vmatmul.bf16.gmra.mxu0 %v652
        %v785 = vpop.f32.mrf.mxu0
        %v786 = vadd.f32 0.0, %v785
        %v787 = vpop.f32.mrf.mxu0
        %v788 = vadd.f32 0.0, %v787
        %789 = vmatmul.bf16.gmra.mxu0 %v655
        %v790 = vpop.f32.mrf.mxu0
        %v791 = vadd.f32 0.0, %v790
        %v792 = vpop.f32.mrf.mxu0
        %v793 = vadd.f32 0.0, %v792
        %794 = vmatmul.bf16.gmra.mxu0 %v658
        %v795 = vpop.f32.mrf.mxu0
        %v796 = vadd.f32 0.0, %v795
        %v797 = vpop.f32.mrf.mxu0
        %v798 = vadd.f32 0.0, %v797
        %799 = vmatmul.bf16.gmra.mxu0 %v661
        %v800 = vpop.f32.mrf.mxu0
        %v801 = vadd.f32 0.0, %v800
        %v802 = vpop.f32.mrf.mxu0
        %v803 = vadd.f32 0.0, %v802
        %804 = vmatmul.bf16.gmra.mxu0 %v664
        %v805 = vpop.f32.mrf.mxu0
        %v806 = vadd.f32 0.0, %v805
        %v807 = vpop.f32.mrf.mxu0
        %v808 = vadd.f32 0.0, %v807
        %809 = vmatmul.bf16.gmra.mxu0 %v667
        %v810 = vpop.f32.mrf.mxu0
        %v811 = vadd.f32 0.0, %v810
        %v812 = vpop.f32.mrf.mxu0
        %v813 = vadd.f32 0.0, %v812
        %814 = vmatmul.bf16.gmra.mxu0 %v670
        %v815 = vpop.f32.mrf.mxu0
        %v816 = vadd.f32 0.0, %v815
        %v817 = vpop.f32.mrf.mxu0
        %v818 = vadd.f32 0.0, %v817
        %819 = vmatmul.bf16.gmra.mxu0 %v673
        %v820 = vpop.f32.mrf.mxu0
        %v821 = vadd.f32 0.0, %v820
        %v822 = vpop.f32.mrf.mxu0
        %v823 = vadd.f32 0.0, %v822
        %824 = vmatmul.bf16.gmra.mxu0 %v676
        %v825 = vpop.f32.mrf.mxu0
        %v826 = vadd.f32 0.0, %v825
        %v827 = vpop.f32.mrf.mxu0
        %v828 = vadd.f32 0.0, %v827
        %829 = vmatmul.bf16.gmra.mxu0 %v679
        %v830 = vpop.f32.mrf.mxu0
        %v831 = vadd.f32 0.0, %v830
        %v832 = vpop.f32.mrf.mxu0
        %v833 = vadd.f32 0.0, %v832
        %834 = vmatmul.bf16.gmra.mxu0 %v682
        %v835 = vpop.f32.mrf.mxu0
        %v836 = vadd.f32 0.0, %v835
        %v837 = vpop.f32.mrf.mxu0
        %v838 = vadd.f32 0.0, %v837
        %839 = vmatmul.bf16.gmra.mxu0 %v685
        %v840 = vpop.f32.mrf.mxu0
        %v841 = vadd.f32 0.0, %v840
        %v842 = vpop.f32.mrf.mxu0
        %v843 = vadd.f32 0.0, %v842
        %844 = vmatmul.bf16.gmra.mxu0 %v688
        %v845 = vpop.f32.mrf.mxu0
        %v846 = vadd.f32 0.0, %v845
        %v847 = vpop.f32.mrf.mxu0
        %v848 = vadd.f32 0.0, %v847
        %849 = vmatmul.bf16.gmra.mxu0 %v691
        %v850 = vpop.f32.mrf.mxu0
        %v851 = vadd.f32 0.0, %v850
        %v852 = vpop.f32.mrf.mxu0
        %v853 = vadd.f32 0.0, %v852
        %854 = vmatmul.bf16.gmra.mxu0 %v694
        %v855 = vpop.f32.mrf.mxu0
        %v856 = vadd.f32 0.0, %v855
        %v857 = vpop.f32.mrf.mxu0
        %v858 = vadd.f32 0.0, %v857
        %859 = vmatmul.bf16.gmra.mxu0 %v697
        %v860 = vpop.f32.mrf.mxu0
        %v861 = vadd.f32 0.0, %v860
        %v862 = vpop.f32.mrf.mxu0
        %v863 = vadd.f32 0.0, %v862
        %864 = vmatmul.bf16.gmra.mxu0 %v700
        %v865 = vpop.f32.mrf.mxu0
        %v866 = vadd.f32 0.0, %v865
        %v867 = vpop.f32.mrf.mxu0
        %v868 = vadd.f32 0.0, %v867
        %869 = vmatmul.bf16.gmra.mxu0 %v703
        %v870 = vpop.f32.mrf.mxu0
        %v871 = vadd.f32 0.0, %v870
        %v872 = vpop.f32.mrf.mxu0
        %v873 = vadd.f32 0.0, %v872
        %874 = vmatmul.bf16.gmra.mxu0 %v706
        %v875 = vpop.f32.mrf.mxu0
        %v876 = vadd.f32 0.0, %v875
        %v877 = vpop.f32.mrf.mxu0
        %v878 = vadd.f32 0.0, %v877
        %879 = vmatmul.bf16.gmra.mxu0 %v709
        %v880 = vpop.f32.mrf.mxu0
        %v881 = vadd.f32 0.0, %v880
        %v882 = vpop.f32.mrf.mxu0
        %v883 = vadd.f32 0.0, %v882
        %884 = vmatmul.bf16.gmra.mxu0 %v712
        %v885 = vpop.f32.mrf.mxu0
        %v886 = vadd.f32 0.0, %v885
        %v887 = vpop.f32.mrf.mxu0
        %v888 = vadd.f32 0.0, %v887
        %889 = vdwg.mxu0
        %v890 = vadd.f32 %v322, %v731
        %v891 = vadd.f32 %v323, %v733
        %v892 = vadd.f32 %v324, %v736
        %v893 = vadd.f32 %v325, %v738
        %v894 = vadd.f32 %v326, %v741
        %v895 = vadd.f32 %v327, %v743
        %v896 = vadd.f32 %v328, %v746
        %v897 = vadd.f32 %v329, %v748
        %v898 = vadd.f32 %v330, %v751
        %v899 = vadd.f32 %v331, %v753
        %v900 = vadd.f32 %v332, %v756
        %v901 = vadd.f32 %v333, %v758
        %v902 = vadd.f32 %v334, %v761
        %v903 = vadd.f32 %v335, %v763
        %v904 = vadd.f32 %v336, %v766
        %v905 = vadd.f32 %v337, %v768
        %v906 = vadd.f32 %v338, %v771
        %v907 = vadd.f32 %v339, %v773
        %v908 = vadd.f32 %v340, %v776
        %v909 = vadd.f32 %v341, %v778
        %v910 = vadd.f32 %v342, %v781
        %v911 = vadd.f32 %v343, %v783
        %v912 = vadd.f32 %v344, %v786
        %v913 = vadd.f32 %v345, %v788
        %v914 = vadd.f32 %v346, %v791
        %v915 = vadd.f32 %v347, %v793
        %v916 = vadd.f32 %v348, %v796
        %v917 = vadd.f32 %v349, %v798
        %v918 = vadd.f32 %v350, %v801
        %v919 = vadd.f32 %v351, %v803
        %v920 = vadd.f32 %v352, %v806
        %v921 = vadd.f32 %v353, %v808
        %v922 = vadd.f32 %v354, %v811
        %v923 = vadd.f32 %v355, %v813
        %v924 = vadd.f32 %v356, %v816
        %v925 = vadd.f32 %v357, %v818
        %v926 = vadd.f32 %v358, %v821
        %v927 = vadd.f32 %v359, %v823
        %v928 = vadd.f32 %v360, %v826
        %v929 = vadd.f32 %v361, %v828
        %v930 = vadd.f32 %v362, %v831
        %v931 = vadd.f32 %v363, %v833
        %v932 = vadd.f32 %v364, %v836
        %v933 = vadd.f32 %v365, %v838
        %v934 = vadd.f32 %v366, %v841
        %v935 = vadd.f32 %v367, %v843
        %v936 = vadd.f32 %v368, %v846
        %v937 = vadd.f32 %v369, %v848
        %v938 = vadd.f32 %v370, %v851
        %v939 = vadd.f32 %v371, %v853
        %v940 = vadd.f32 %v372, %v856
        %v941 = vadd.f32 %v373, %v858
        %v942 = vadd.f32 %v374, %v861
        %v943 = vadd.f32 %v375, %v863
        %v944 = vadd.f32 %v376, %v866
        %v945 = vadd.f32 %v377, %v868
        %v946 = vadd.f32 %v378, %v871
        %v947 = vadd.f32 %v379, %v873
        %v948 = vadd.f32 %v380, %v876
        %v949 = vadd.f32 %v381, %v878
        %v950 = vadd.f32 %v382, %v881
        %v951 = vadd.f32 %v383, %v883
        %v952 = vadd.f32 %v384, %v886
        %v953 = vadd.f32 %v385, %v888
        %vm954 = vcmask 261120
        %955 = vst.msk [vmem:[#allocation2] sm:$0xff] %vm954, %v890
        %956 = vst.msk [vmem:[#allocation2 + $0x8] sm:$0xff] %vm954, %v891
        %957 = vst.msk [vmem:[#allocation2 + $0x10] sm:$0xff] %vm954, %v892
        %958 = vst.msk [vmem:[#allocation2 + $0x18] sm:$0xff] %vm954, %v893
        %959 = vst.msk [vmem:[#allocation2 + $0x20] sm:$0xff] %vm954, %v894
        %960 = vst.msk [vmem:[#allocation2 + $0x28] sm:$0xff] %vm954, %v895
        %961 = vst.msk [vmem:[#allocation2 + $0x30] sm:$0xff] %vm954, %v896
        %962 = vst.msk [vmem:[#allocation2 + $0x38] sm:$0xff] %vm954, %v897
        %963 = vst.msk [vmem:[#allocation2 + $0x40] sm:$0xff] %vm954, %v898
        %964 = vst.msk [vmem:[#allocation2 + $0x48] sm:$0xff] %vm954, %v899
        %965 = vst.msk [vmem:[#allocation2 + $0x50] sm:$0xff] %vm954, %v900
        %966 = vst.msk [vmem:[#allocation2 + $0x58] sm:$0xff] %vm954, %v901
        %967 = vst.msk [vmem:[#allocation2 + $0x60] sm:$0xff] %vm954, %v902
        %968 = vst.msk [vmem:[#allocation2 + $0x68] sm:$0xff] %vm954, %v903
        %969 = vst.msk [vmem:[#allocation2 + $0x70] sm:$0xff] %vm954, %v904
        %970 = vst.msk [vmem:[#allocation2 + $0x78] sm:$0xff] %vm954, %v905
        %971 = vst.msk [vmem:[#allocation2 + $0x80] sm:$0xff] %vm954, %v906
        %972 = vst.msk [vmem:[#allocation2 + $0x88] sm:$0xff] %vm954, %v907
        %973 = vst.msk [vmem:[#allocation2 + $0x90] sm:$0xff] %vm954, %v908
        %974 = vst.msk [vmem:[#allocation2 + $0x98] sm:$0xff] %vm954, %v909
        %975 = vst.msk [vmem:[#allocation2 + $0xa0] sm:$0xff] %vm954, %v910
        %976 = vst.msk [vmem:[#allocation2 + $0xa8] sm:$0xff] %vm954, %v911
        %977 = vst.msk [vmem:[#allocation2 + $0xb0] sm:$0xff] %vm954, %v912
        %978 = vst.msk [vmem:[#allocation2 + $0xb8] sm:$0xff] %vm954, %v913
        %979 = vst.msk [vmem:[#allocation2 + $0xc0] sm:$0xff] %vm954, %v914
        %980 = vst.msk [vmem:[#allocation2 + $0xc8] sm:$0xff] %vm954, %v915
        %981 = vst.msk [vmem:[#allocation2 + $0xd0] sm:$0xff] %vm954, %v916
        %982 = vst.msk [vmem:[#allocation2 + $0xd8] sm:$0xff] %vm954, %v917
        %983 = vst.msk [vmem:[#allocation2 + $0xe0] sm:$0xff] %vm954, %v918
        %984 = vst.msk [vmem:[#allocation2 + $0xe8] sm:$0xff] %vm954, %v919
        %985 = vst.msk [vmem:[#allocation2 + $0xf0] sm:$0xff] %vm954, %v920
        %986 = vst.msk [vmem:[#allocation2 + $0xf8] sm:$0xff] %vm954, %v921
        %987 = vst.msk [vmem:[#allocation2 + $0x100] sm:$0xff] %vm954, %v922
        %988 = vst.msk [vmem:[#allocation2 + $0x108] sm:$0xff] %vm954, %v923
        %989 = vst.msk [vmem:[#allocation2 + $0x110] sm:$0xff] %vm954, %v924
        %990 = vst.msk [vmem:[#allocation2 + $0x118] sm:$0xff] %vm954, %v925
        %991 = vst.msk [vmem:[#allocation2 + $0x120] sm:$0xff] %vm954, %v926
        %992 = vst.msk [vmem:[#allocation2 + $0x128] sm:$0xff] %vm954, %v927
        %993 = vst.msk [vmem:[#allocation2 + $0x130] sm:$0xff] %vm954, %v928
        %994 = vst.msk [vmem:[#allocation2 + $0x138] sm:$0xff] %vm954, %v929
        %995 = vst.msk [vmem:[#allocation2 + $0x140] sm:$0xff] %vm954, %v930
        %996 = vst.msk [vmem:[#allocation2 + $0x148] sm:$0xff] %vm954, %v931
        %997 = vst.msk [vmem:[#allocation2 + $0x150] sm:$0xff] %vm954, %v932
        %998 = vst.msk [vmem:[#allocation2 + $0x158] sm:$0xff] %vm954, %v933
        %999 = vst.msk [vmem:[#allocation2 + $0x160] sm:$0xff] %vm954, %v934
        %1000 = vst.msk [vmem:[#allocation2 + $0x168] sm:$0xff] %vm954, %v935
        %1001 = vst.msk [vmem:[#allocation2 + $0x170] sm:$0xff] %vm954, %v936
        %1002 = vst.msk [vmem:[#allocation2 + $0x178] sm:$0xff] %vm954, %v937
        %1003 = vst.msk [vmem:[#allocation2 + $0x180] sm:$0xff] %vm954, %v938
        %1004 = vst.msk [vmem:[#allocation2 + $0x188] sm:$0xff] %vm954, %v939
        %1005 = vst.msk [vmem:[#allocation2 + $0x190] sm:$0xff] %vm954, %v940
        %1006 = vst.msk [vmem:[#allocation2 + $0x198] sm:$0xff] %vm954, %v941
        %1007 = vst.msk [vmem:[#allocation2 + $0x1a0] sm:$0xff] %vm954, %v942
        %1008 = vst.msk [vmem:[#allocation2 + $0x1a8] sm:$0xff] %vm954, %v943
        %1009 = vst.msk [vmem:[#allocation2 + $0x1b0] sm:$0xff] %vm954, %v944
        %1010 = vst.msk [vmem:[#allocation2 + $0x1b8] sm:$0xff] %vm954, %v945
        %1011 = vst.msk [vmem:[#allocation2 + $0x1c0] sm:$0xff] %vm954, %v946
        %1012 = vst.msk [vmem:[#allocation2 + $0x1c8] sm:$0xff] %vm954, %v947
        %1013 = vst.msk [vmem:[#allocation2 + $0x1d0] sm:$0xff] %vm954, %v948
        %1014 = vst.msk [vmem:[#allocation2 + $0x1d8] sm:$0xff] %vm954, %v949
        %1015 = vst.msk [vmem:[#allocation2 + $0x1e0] sm:$0xff] %vm954, %v950
        %1016 = vst.msk [vmem:[#allocation2 + $0x1e8] sm:$0xff] %vm954, %v951
        %1017 = vst.msk [vmem:[#allocation2 + $0x1f0] sm:$0xff] %vm954, %v952
        %1018 = vst.msk [vmem:[#allocation2 + $0x1f8] sm:$0xff] %vm954, %v953
        // Predicated region
        $region41: #{net_forward.4} parent=31 // pred_check
          %p1019 = pneg %p253
        $region42: #{net_forward.4} parent=31 // pred_check_branch
          %1021 = sbr.rel (%p1019) target = $region44
        $region43: #{net_forward.4} parent=31 // pred_region
          %v1022 = vld [vmem:[#allocation2] sm:$0xff]
          %v1023 = vld [vmem:[#allocation2 + $0x8] sm:$0xff]
          %v1024 = vld [vmem:[#allocation2 + $0x10] sm:$0xff]
          %v1025 = vld [vmem:[#allocation2 + $0x18] sm:$0xff]
          %v1026 = vld [vmem:[#allocation2 + $0x20] sm:$0xff]
          %v1027 = vld [vmem:[#allocation2 + $0x28] sm:$0xff]
          %v1028 = vld [vmem:[#allocation2 + $0x30] sm:$0xff]
          %v1029 = vld [vmem:[#allocation2 + $0x38] sm:$0xff]
          %v1030 = vld [vmem:[#allocation2 + $0x40] sm:$0xff]
          %v1031 = vld [vmem:[#allocation2 + $0x48] sm:$0xff]
          %v1032 = vld [vmem:[#allocation2 + $0x50] sm:$0xff]
          %v1033 = vld [vmem:[#allocation2 + $0x58] sm:$0xff]
          %v1034 = vld [vmem:[#allocation2 + $0x60] sm:$0xff]
          %v1035 = vld [vmem:[#allocation2 + $0x68] sm:$0xff]
          %v1036 = vld [vmem:[#allocation2 + $0x70] sm:$0xff]
          %v1037 = vld [vmem:[#allocation2 + $0x78] sm:$0xff]
          %v1038 = vld [vmem:[#allocation2 + $0x80] sm:$0xff]
          %v1039 = vld [vmem:[#allocation2 + $0x88] sm:$0xff]
          %v1040 = vld [vmem:[#allocation2 + $0x90] sm:$0xff]
          %v1041 = vld [vmem:[#allocation2 + $0x98] sm:$0xff]
          %v1042 = vld [vmem:[#allocation2 + $0xa0] sm:$0xff]
          %v1043 = vld [vmem:[#allocation2 + $0xa8] sm:$0xff]
          %v1044 = vld [vmem:[#allocation2 + $0xb0] sm:$0xff]
          %v1045 = vld [vmem:[#allocation2 + $0xb8] sm:$0xff]
          %v1046 = vld [vmem:[#allocation2 + $0xc0] sm:$0xff]
          %v1047 = vld [vmem:[#allocation2 + $0xc8] sm:$0xff]
          %v1048 = vld [vmem:[#allocation2 + $0xd0] sm:$0xff]
          %v1049 = vld [vmem:[#allocation2 + $0xd8] sm:$0xff]
          %v1050 = vld [vmem:[#allocation2 + $0xe0] sm:$0xff]
          %v1051 = vld [vmem:[#allocation2 + $0xe8] sm:$0xff]
          %v1052 = vld [vmem:[#allocation2 + $0xf0] sm:$0xff]
          %v1053 = vld [vmem:[#allocation2 + $0xf8] sm:$0xff]
          %v1054 = vld [vmem:[#allocation2 + $0x100] sm:$0xff]
          %v1055 = vld [vmem:[#allocation2 + $0x108] sm:$0xff]
          %v1056 = vld [vmem:[#allocation2 + $0x110] sm:$0xff]
          %v1057 = vld [vmem:[#allocation2 + $0x118] sm:$0xff]
          %v1058 = vld [vmem:[#allocation2 + $0x120] sm:$0xff]
          %v1059 = vld [vmem:[#allocation2 + $0x128] sm:$0xff]
          %v1060 = vld [vmem:[#allocation2 + $0x130] sm:$0xff]
          %v1061 = vld [vmem:[#allocation2 + $0x138] sm:$0xff]
          %v1062 = vld [vmem:[#allocation2 + $0x140] sm:$0xff]
          %v1063 = vld [vmem:[#allocation2 + $0x148] sm:$0xff]
          %v1064 = vld [vmem:[#allocation2 + $0x150] sm:$0xff]
          %v1065 = vld [vmem:[#allocation2 + $0x158] sm:$0xff]
          %v1066 = vld [vmem:[#allocation2 + $0x160] sm:$0xff]
          %v1067 = vld [vmem:[#allocation2 + $0x168] sm:$0xff]
          %v1068 = vld [vmem:[#allocation2 + $0x170] sm:$0xff]
          %v1069 = vld [vmem:[#allocation2 + $0x178] sm:$0xff]
          %v1070 = vld [vmem:[#allocation2 + $0x180] sm:$0xff]
          %v1071 = vld [vmem:[#allocation2 + $0x188] sm:$0xff]
          %v1072 = vld [vmem:[#allocation2 + $0x190] sm:$0xff]
          %v1073 = vld [vmem:[#allocation2 + $0x198] sm:$0xff]
          %v1074 = vld [vmem:[#allocation2 + $0x1a0] sm:$0xff]
          %v1075 = vld [vmem:[#allocation2 + $0x1a8] sm:$0xff]
          %v1076 = vld [vmem:[#allocation2 + $0x1b0] sm:$0xff]
          %v1077 = vld [vmem:[#allocation2 + $0x1b8] sm:$0xff]
          %v1078 = vld [vmem:[#allocation2 + $0x1c0] sm:$0xff]
          %v1079 = vld [vmem:[#allocation2 + $0x1c8] sm:$0xff]
          %v1080 = vld [vmem:[#allocation2 + $0x1d0] sm:$0xff]
          %v1081 = vld [vmem:[#allocation2 + $0x1d8] sm:$0xff]
          %v1082 = vld [vmem:[#allocation2 + $0x1e0] sm:$0xff]
          %v1083 = vld [vmem:[#allocation2 + $0x1e8] sm:$0xff]
          %v1084 = vld [vmem:[#allocation2 + $0x1f0] sm:$0xff]
          %v1085 = vld [vmem:[#allocation2 + $0x1f8] sm:$0xff]
          %v1086 = vld [vmem:[#allocation3] sm:$0x1]
          %v1088 = vperm.slane %v1086, 0
          %v1090 = vadd.f32 %v1022, %v1088
          %v1091 = vadd.f32 %v1023, %v1088
          %v1092 = vadd.f32 %v1024, %v1088
          %v1093 = vadd.f32 %v1025, %v1088
          %v1094 = vadd.f32 %v1026, %v1088
          %v1095 = vadd.f32 %v1027, %v1088
          %v1096 = vadd.f32 %v1028, %v1088
          %v1097 = vadd.f32 %v1029, %v1088
          %v1098 = vadd.f32 %v1030, %v1088
          %v1099 = vadd.f32 %v1031, %v1088
          %v1100 = vadd.f32 %v1032, %v1088
          %v1101 = vadd.f32 %v1033, %v1088
          %v1102 = vadd.f32 %v1034, %v1088
          %v1103 = vadd.f32 %v1035, %v1088
          %v1104 = vadd.f32 %v1036, %v1088
          %v1105 = vadd.f32 %v1037, %v1088
          %v1106 = vadd.f32 %v1038, %v1088
          %v1107 = vadd.f32 %v1039, %v1088
          %v1108 = vadd.f32 %v1040, %v1088
          %v1109 = vadd.f32 %v1041, %v1088
          %v1110 = vadd.f32 %v1042, %v1088
          %v1111 = vadd.f32 %v1043, %v1088
          %v1112 = vadd.f32 %v1044, %v1088
          %v1113 = vadd.f32 %v1045, %v1088
          %v1114 = vadd.f32 %v1046, %v1088
          %v1115 = vadd.f32 %v1047, %v1088
          %v1116 = vadd.f32 %v1048, %v1088
          %v1117 = vadd.f32 %v1049, %v1088
          %v1118 = vadd.f32 %v1050, %v1088
          %v1119 = vadd.f32 %v1051, %v1088
          %v1120 = vadd.f32 %v1052, %v1088
          %v1121 = vadd.f32 %v1053, %v1088
          %v1122 = vadd.f32 %v1054, %v1088
          %v1123 = vadd.f32 %v1055, %v1088
          %v1124 = vadd.f32 %v1056, %v1088
          %v1125 = vadd.f32 %v1057, %v1088
          %v1126 = vadd.f32 %v1058, %v1088
          %v1127 = vadd.f32 %v1059, %v1088
          %v1128 = vadd.f32 %v1060, %v1088
          %v1129 = vadd.f32 %v1061, %v1088
          %v1130 = vadd.f32 %v1062, %v1088
          %v1131 = vadd.f32 %v1063, %v1088
          %v1132 = vadd.f32 %v1064, %v1088
          %v1133 = vadd.f32 %v1065, %v1088
          %v1134 = vadd.f32 %v1066, %v1088
          %v1135 = vadd.f32 %v1067, %v1088
          %v1136 = vadd.f32 %v1068, %v1088
          %v1137 = vadd.f32 %v1069, %v1088
          %v1138 = vadd.f32 %v1070, %v1088
          %v1139 = vadd.f32 %v1071, %v1088
          %v1140 = vadd.f32 %v1072, %v1088
          %v1141 = vadd.f32 %v1073, %v1088
          %v1142 = vadd.f32 %v1074, %v1088
          %v1143 = vadd.f32 %v1075, %v1088
          %v1144 = vadd.f32 %v1076, %v1088
          %v1145 = vadd.f32 %v1077, %v1088
          %v1146 = vadd.f32 %v1078, %v1088
          %v1147 = vadd.f32 %v1079, %v1088
          %v1148 = vadd.f32 %v1080, %v1088
          %v1149 = vadd.f32 %v1081, %v1088
          %v1150 = vadd.f32 %v1082, %v1088
          %v1151 = vadd.f32 %v1083, %v1088
          %v1152 = vadd.f32 %v1084, %v1088
          %v1153 = vadd.f32 %v1085, %v1088
          %v1154 = vmax.f32 %v1090, 0.0
          %v1155 = vmax.f32 %v1091, 0.0
          %v1156 = vmax.f32 %v1092, 0.0
          %v1157 = vmax.f32 %v1093, 0.0
          %v1158 = vmax.f32 %v1094, 0.0
          %v1159 = vmax.f32 %v1095, 0.0
          %v1160 = vmax.f32 %v1096, 0.0
          %v1161 = vmax.f32 %v1097, 0.0
          %v1162 = vmax.f32 %v1098, 0.0
          %v1163 = vmax.f32 %v1099, 0.0
          %v1164 = vmax.f32 %v1100, 0.0
          %v1165 = vmax.f32 %v1101, 0.0
          %v1166 = vmax.f32 %v1102, 0.0
          %v1167 = vmax.f32 %v1103, 0.0
          %v1168 = vmax.f32 %v1104, 0.0
          %v1169 = vmax.f32 %v1105, 0.0
          %v1170 = vmax.f32 %v1106, 0.0
          %v1171 = vmax.f32 %v1107, 0.0
          %v1172 = vmax.f32 %v1108, 0.0
          %v1173 = vmax.f32 %v1109, 0.0
          %v1174 = vmax.f32 %v1110, 0.0
          %v1175 = vmax.f32 %v1111, 0.0
          %v1176 = vmax.f32 %v1112, 0.0
          %v1177 = vmax.f32 %v1113, 0.0
          %v1178 = vmax.f32 %v1114, 0.0
          %v1179 = vmax.f32 %v1115, 0.0
          %v1180 = vmax.f32 %v1116, 0.0
          %v1181 = vmax.f32 %v1117, 0.0
          %v1182 = vmax.f32 %v1118, 0.0
          %v1183 = vmax.f32 %v1119, 0.0
          %v1184 = vmax.f32 %v1120, 0.0
          %v1185 = vmax.f32 %v1121, 0.0
          %v1186 = vmax.f32 %v1122, 0.0
          %v1187 = vmax.f32 %v1123, 0.0
          %v1188 = vmax.f32 %v1124, 0.0
          %v1189 = vmax.f32 %v1125, 0.0
          %v1190 = vmax.f32 %v1126, 0.0
          %v1191 = vmax.f32 %v1127, 0.0
          %v1192 = vmax.f32 %v1128, 0.0
          %v1193 = vmax.f32 %v1129, 0.0
          %v1194 = vmax.f32 %v1130, 0.0
          %v1195 = vmax.f32 %v1131, 0.0
          %v1196 = vmax.f32 %v1132, 0.0
          %v1197 = vmax.f32 %v1133, 0.0
          %v1198 = vmax.f32 %v1134, 0.0
          %v1199 = vmax.f32 %v1135, 0.0
          %v1200 = vmax.f32 %v1136, 0.0
          %v1201 = vmax.f32 %v1137, 0.0
          %v1202 = vmax.f32 %v1138, 0.0
          %v1203 = vmax.f32 %v1139, 0.0
          %v1204 = vmax.f32 %v1140, 0.0
          %v1205 = vmax.f32 %v1141, 0.0
          %v1206 = vmax.f32 %v1142, 0.0
          %v1207 = vmax.f32 %v1143, 0.0
          %v1208 = vmax.f32 %v1144, 0.0
          %v1209 = vmax.f32 %v1145, 0.0
          %v1210 = vmax.f32 %v1146, 0.0
          %v1211 = vmax.f32 %v1147, 0.0
          %v1212 = vmax.f32 %v1148, 0.0
          %v1213 = vmax.f32 %v1149, 0.0
          %v1214 = vmax.f32 %v1150, 0.0
          %v1215 = vmax.f32 %v1151, 0.0
          %v1216 = vmax.f32 %v1152, 0.0
          %v1217 = vmax.f32 %v1153, 0.0
          %1218 = vst.msk [vmem:[%s223] sm:$0xff] %vm954, %v1154
          %1219 = vst.msk [vmem:[%s223 + $0x8] sm:$0xff] %vm954, %v1155
          %1220 = vst.msk [vmem:[%s223 + $0x10] sm:$0xff] %vm954, %v1156
          %1221 = vst.msk [vmem:[%s223 + $0x18] sm:$0xff] %vm954, %v1157
          %1222 = vst.msk [vmem:[%s223 + $0x20] sm:$0xff] %vm954, %v1158
          %1223 = vst.msk [vmem:[%s223 + $0x28] sm:$0xff] %vm954, %v1159
          %1224 = vst.msk [vmem:[%s223 + $0x30] sm:$0xff] %vm954, %v1160
          %1225 = vst.msk [vmem:[%s223 + $0x38] sm:$0xff] %vm954, %v1161
          %1226 = vst.msk [vmem:[%s223 + $0x40] sm:$0xff] %vm954, %v1162
          %1227 = vst.msk [vmem:[%s223 + $0x48] sm:$0xff] %vm954, %v1163
          %1228 = vst.msk [vmem:[%s223 + $0x50] sm:$0xff] %vm954, %v1164
          %1229 = vst.msk [vmem:[%s223 + $0x58] sm:$0xff] %vm954, %v1165
          %1230 = vst.msk [vmem:[%s223 + $0x60] sm:$0xff] %vm954, %v1166
          %1231 = vst.msk [vmem:[%s223 + $0x68] sm:$0xff] %vm954, %v1167
          %1232 = vst.msk [vmem:[%s223 + $0x70] sm:$0xff] %vm954, %v1168
          %1233 = vst.msk [vmem:[%s223 + $0x78] sm:$0xff] %vm954, %v1169
          %1234 = vst.msk [vmem:[%s223 + $0x80] sm:$0xff] %vm954, %v1170
          %1235 = vst.msk [vmem:[%s223 + $0x88] sm:$0xff] %vm954, %v1171
          %1236 = vst.msk [vmem:[%s223 + $0x90] sm:$0xff] %vm954, %v1172
          %1237 = vst.msk [vmem:[%s223 + $0x98] sm:$0xff] %vm954, %v1173
          %1238 = vst.msk [vmem:[%s223 + $0xa0] sm:$0xff] %vm954, %v1174
          %1239 = vst.msk [vmem:[%s223 + $0xa8] sm:$0xff] %vm954, %v1175
          %1240 = vst.msk [vmem:[%s223 + $0xb0] sm:$0xff] %vm954, %v1176
          %1241 = vst.msk [vmem:[%s223 + $0xb8] sm:$0xff] %vm954, %v1177
          %1242 = vst.msk [vmem:[%s223 + $0xc0] sm:$0xff] %vm954, %v1178
          %1243 = vst.msk [vmem:[%s223 + $0xc8] sm:$0xff] %vm954, %v1179
          %1244 = vst.msk [vmem:[%s223 + $0xd0] sm:$0xff] %vm954, %v1180
          %1245 = vst.msk [vmem:[%s223 + $0xd8] sm:$0xff] %vm954, %v1181
          %1246 = vst.msk [vmem:[%s223 + $0xe0] sm:$0xff] %vm954, %v1182
          %1247 = vst.msk [vmem:[%s223 + $0xe8] sm:$0xff] %vm954, %v1183
          %1248 = vst.msk [vmem:[%s223 + $0xf0] sm:$0xff] %vm954, %v1184
          %1249 = vst.msk [vmem:[%s223 + $0xf8] sm:$0xff] %vm954, %v1185
          %1250 = vst.msk [vmem:[%s223 + $0x100] sm:$0xff] %vm954, %v1186
          %1251 = vst.msk [vmem:[%s223 + $0x108] sm:$0xff] %vm954, %v1187
          %1252 = vst.msk [vmem:[%s223 + $0x110] sm:$0xff] %vm954, %v1188
          %1253 = vst.msk [vmem:[%s223 + $0x118] sm:$0xff] %vm954, %v1189
          %1254 = vst.msk [vmem:[%s223 + $0x120] sm:$0xff] %vm954, %v1190
          %1255 = vst.msk [vmem:[%s223 + $0x128] sm:$0xff] %vm954, %v1191
          %1256 = vst.msk [vmem:[%s223 + $0x130] sm:$0xff] %vm954, %v1192
          %1257 = vst.msk [vmem:[%s223 + $0x138] sm:$0xff] %vm954, %v1193
          %1258 = vst.msk [vmem:[%s223 + $0x140] sm:$0xff] %vm954, %v1194
          %1259 = vst.msk [vmem:[%s223 + $0x148] sm:$0xff] %vm954, %v1195
          %1260 = vst.msk [vmem:[%s223 + $0x150] sm:$0xff] %vm954, %v1196
          %1261 = vst.msk [vmem:[%s223 + $0x158] sm:$0xff] %vm954, %v1197
          %1262 = vst.msk [vmem:[%s223 + $0x160] sm:$0xff] %vm954, %v1198
          %1263 = vst.msk [vmem:[%s223 + $0x168] sm:$0xff] %vm954, %v1199
          %1264 = vst.msk [vmem:[%s223 + $0x170] sm:$0xff] %vm954, %v1200
          %1265 = vst.msk [vmem:[%s223 + $0x178] sm:$0xff] %vm954, %v1201
          %1266 = vst.msk [vmem:[%s223 + $0x180] sm:$0xff] %vm954, %v1202
          %1267 = vst.msk [vmem:[%s223 + $0x188] sm:$0xff] %vm954, %v1203
          %1268 = vst.msk [vmem:[%s223 + $0x190] sm:$0xff] %vm954, %v1204
          %1269 = vst.msk [vmem:[%s223 + $0x198] sm:$0xff] %vm954, %v1205
          %1270 = vst.msk [vmem:[%s223 + $0x1a0] sm:$0xff] %vm954, %v1206
          %1271 = vst.msk [vmem:[%s223 + $0x1a8] sm:$0xff] %vm954, %v1207
          %1272 = vst.msk [vmem:[%s223 + $0x1b0] sm:$0xff] %vm954, %v1208
          %1273 = vst.msk [vmem:[%s223 + $0x1b8] sm:$0xff] %vm954, %v1209
          %1274 = vst.msk [vmem:[%s223 + $0x1c0] sm:$0xff] %vm954, %v1210
          %1275 = vst.msk [vmem:[%s223 + $0x1c8] sm:$0xff] %vm954, %v1211
          %1276 = vst.msk [vmem:[%s223 + $0x1d0] sm:$0xff] %vm954, %v1212
          %1277 = vst.msk [vmem:[%s223 + $0x1d8] sm:$0xff] %vm954, %v1213
          %1278 = vst.msk [vmem:[%s223 + $0x1e0] sm:$0xff] %vm954, %v1214
          %1279 = vst.msk [vmem:[%s223 + $0x1e8] sm:$0xff] %vm954, %v1215
          %1280 = vst.msk [vmem:[%s223 + $0x1f0] sm:$0xff] %vm954, %v1216
          %1281 = vst.msk [vmem:[%s223 + $0x1f8] sm:$0xff] %vm954, %v1217
        $region44: #{net_forward.4} parent=31 // pred_fallthru
          _
        %s1282 = sand.u32 %s110, 1
        %s1283 = sand.u32 %s110, 1
        %s1284 = smul.addr %s1283, 512
        %s1285 = scalar_lea.vmem [#allocation5], %s1284
        // Predicated region
        $region45: #{net_forward.4} parent=31 // pred_check
          %p1286 = pneg %p120
        $region46: #{net_forward.4} parent=31 // pred_check_branch
          %1288 = sbr.rel (%p1286) target = $region48
        $region47: #{net_forward.4} parent=31 // pred_region
          %s1289 = smul.u32 64, %s19
          %s1290 = ssub.s32 169, %s1289
          %p1291 = scmp.lt.s32.totalorder %s1290, 64
          %s1292 = scalar_select %p1291, %s1290, 64
          %s1293 = smul.u32 8, %s1292
          %p1294 = scmp.ne.s32.totalorder 0, %s1293
          %s1295 = smul.addr %s1289, 8
          %s1296 = scalar_lea.vmem %s3, %s1295
          // Predicated region
          $region49: #{net_forward.4} parent=47 // pred_check
            %p1297 = pneg %p1294
          $region50: #{net_forward.4} parent=47 // pred_check_branch
            %1299 = sbr.rel (%p1297) target = $region52
          $region51: #{net_forward.4} parent=47 // pred_region
            // Predicated region
            $region53: #{net_forward.4} parent=51 // pred_check
              _
            $region54: #{net_forward.4} parent=51 // pred_check_branch
              %1301 = sbr.rel (0) target = $region56
            $region55: #{net_forward.4} parent=51 // pred_region
              // Predicated region
              $region75: #{net_forward.4} parent=55 // pred_check
                _
              $region76: #{net_forward.4} parent=55 // pred_check_branch
                %1413 = sbr.rel (0) target = $region78
              $region77: #{net_forward.4} parent=55 // pred_region
                %s1414 = sshrl.u32 %s1292, 5
                // While loop
                $region79: #{net_forward.4} parent=77 // loop_pre_header
                  _
                $region80: #{net_forward.4} parent=77 // loop_header
                  %s1416 = sphi 0, %s1418
                  %p1417 = scmp.ge.s32.totalorder %s1416, %s1414
                  %s1421 = sphi 0, %s1490
                  %s1422 = sphi %s1285, %s1493
                  %s1423 = sphi %s1296, %s1494
                $region81: #{net_forward.4} parent=77 // loop_header_branch
                  %1420 = sbr.rel (%p1417) target = $region85
                $region82: #{net_forward.4} parent=77 // loop_body
                  %v1424 = vld [vmem:[%s1422] sm:$0xff]
                  %1425 = vst [vmem:[%s1423] sm:$0xff] %v1424
                  %v1426 = vld [vmem:[%s1422 + $0x8] sm:$0xff]
                  %1427 = vst [vmem:[%s1423 + $0x8] sm:$0xff] %v1426
                  %v1428 = vld [vmem:[%s1422 + $0x10] sm:$0xff]
                  %1429 = vst [vmem:[%s1423 + $0x10] sm:$0xff] %v1428
                  %v1430 = vld [vmem:[%s1422 + $0x18] sm:$0xff]
                  %1431 = vst [vmem:[%s1423 + $0x18] sm:$0xff] %v1430
                  %v1432 = vld [vmem:[%s1422 + $0x20] sm:$0xff]
                  %1433 = vst [vmem:[%s1423 + $0x20] sm:$0xff] %v1432
                  %v1434 = vld [vmem:[%s1422 + $0x28] sm:$0xff]
                  %1435 = vst [vmem:[%s1423 + $0x28] sm:$0xff] %v1434
                  %v1436 = vld [vmem:[%s1422 + $0x30] sm:$0xff]
                  %1437 = vst [vmem:[%s1423 + $0x30] sm:$0xff] %v1436
                  %v1438 = vld [vmem:[%s1422 + $0x38] sm:$0xff]
                  %1439 = vst [vmem:[%s1423 + $0x38] sm:$0xff] %v1438
                  %v1440 = vld [vmem:[%s1422 + $0x40] sm:$0xff]
                  %1441 = vst [vmem:[%s1423 + $0x40] sm:$0xff] %v1440
                  %v1442 = vld [vmem:[%s1422 + $0x48] sm:$0xff]
                  %1443 = vst [vmem:[%s1423 + $0x48] sm:$0xff] %v1442
                  %v1444 = vld [vmem:[%s1422 + $0x50] sm:$0xff]
                  %1445 = vst [vmem:[%s1423 + $0x50] sm:$0xff] %v1444
                  %v1446 = vld [vmem:[%s1422 + $0x58] sm:$0xff]
                  %1447 = vst [vmem:[%s1423 + $0x58] sm:$0xff] %v1446
                  %v1448 = vld [vmem:[%s1422 + $0x60] sm:$0xff]
                  %1449 = vst [vmem:[%s1423 + $0x60] sm:$0xff] %v1448
                  %v1450 = vld [vmem:[%s1422 + $0x68] sm:$0xff]
                  %1451 = vst [vmem:[%s1423 + $0x68] sm:$0xff] %v1450
                  %v1452 = vld [vmem:[%s1422 + $0x70] sm:$0xff]
                  %1453 = vst [vmem:[%s1423 + $0x70] sm:$0xff] %v1452
                  %v1454 = vld [vmem:[%s1422 + $0x78] sm:$0xff]
                  %1455 = vst [vmem:[%s1423 + $0x78] sm:$0xff] %v1454
                  %v1456 = vld [vmem:[%s1422 + $0x80] sm:$0xff]
                  %1457 = vst [vmem:[%s1423 + $0x80] sm:$0xff] %v1456
                  %v1458 = vld [vmem:[%s1422 + $0x88] sm:$0xff]
                  %1459 = vst [vmem:[%s1423 + $0x88] sm:$0xff] %v1458
                  %v1460 = vld [vmem:[%s1422 + $0x90] sm:$0xff]
                  %1461 = vst [vmem:[%s1423 + $0x90] sm:$0xff] %v1460
                  %v1462 = vld [vmem:[%s1422 + $0x98] sm:$0xff]
                  %1463 = vst [vmem:[%s1423 + $0x98] sm:$0xff] %v1462
                  %v1464 = vld [vmem:[%s1422 + $0xa0] sm:$0xff]
                  %1465 = vst [vmem:[%s1423 + $0xa0] sm:$0xff] %v1464
                  %v1466 = vld [vmem:[%s1422 + $0xa8] sm:$0xff]
                  %1467 = vst [vmem:[%s1423 + $0xa8] sm:$0xff] %v1466
                  %v1468 = vld [vmem:[%s1422 + $0xb0] sm:$0xff]
                  %1469 = vst [vmem:[%s1423 + $0xb0] sm:$0xff] %v1468
                  %v1470 = vld [vmem:[%s1422 + $0xb8] sm:$0xff]
                  %1471 = vst [vmem:[%s1423 + $0xb8] sm:$0xff] %v1470
                  %v1472 = vld [vmem:[%s1422 + $0xc0] sm:$0xff]
                  %1473 = vst [vmem:[%s1423 + $0xc0] sm:$0xff] %v1472
                  %v1474 = vld [vmem:[%s1422 + $0xc8] sm:$0xff]
                  %1475 = vst [vmem:[%s1423 + $0xc8] sm:$0xff] %v1474
                  %v1476 = vld [vmem:[%s1422 + $0xd0] sm:$0xff]
                  %1477 = vst [vmem:[%s1423 + $0xd0] sm:$0xff] %v1476
                  %v1478 = vld [vmem:[%s1422 + $0xd8] sm:$0xff]
                  %1479 = vst [vmem:[%s1423 + $0xd8] sm:$0xff] %v1478
                  %v1480 = vld [vmem:[%s1422 + $0xe0] sm:$0xff]
                  %1481 = vst [vmem:[%s1423 + $0xe0] sm:$0xff] %v1480
                  %v1482 = vld [vmem:[%s1422 + $0xe8] sm:$0xff]
                  %1483 = vst [vmem:[%s1423 + $0xe8] sm:$0xff] %v1482
                  %v1484 = vld [vmem:[%s1422 + $0xf0] sm:$0xff]
                  %1485 = vst [vmem:[%s1423 + $0xf0] sm:$0xff] %v1484
                  %v1486 = vld [vmem:[%s1422 + $0xf8] sm:$0xff]
                  %1487 = vst [vmem:[%s1423 + $0xf8] sm:$0xff] %v1486
                  %s1488 = sadd.s32 1, %s1421
                  %p1489 = scmp.ge.s32.totalorder %s1488, %s1414
                  %s1490 = scalar_select %p1489, 0, %s1488
                  %s1491 = smul.u32 %s1490, 256
                  %s1492 = smul.u32 %s1490, 256
                  %s1493 = scalar_lea.vmem %s1285, %s1491 [#allocation5]
                  %s1494 = scalar_lea.vmem %s1296, %s1492
                $region83: #{net_forward.4} parent=77 // loop_footer
                  %s1418 = sadd.s32 %s1416, 1
                $region84: #{net_forward.4} parent=77 // loop_footer_branch
                  %1415 = sbr.rel target = $region80
                $region85: #{net_forward.4} parent=77 // loop_exit
                  _
                %s1495 = sshrl.u32 %s1292, 5
                %s1496 = sand.u32 %s1292, 31
                %s1497 = smul.u32 %s1495, 32
                %s1498 = smul.u32 8, %s1497
                %s1499 = scalar_lea.vmem %s1285, %s1498 [#allocation5]
                %s1500 = smul.u32 8, %s1497
                %s1501 = scalar_lea.vmem %s1296, %s1500
                // While loop
                $region86: #{net_forward.4} parent=77 // loop_pre_header
                  _
                $region87: #{net_forward.4} parent=77 // loop_header
                  %s1503 = sphi 0, %s1505
                  %p1504 = scmp.ge.s32.totalorder %s1503, %s1496
                  %s1508 = sphi 0, %s1515
                  %s1509 = sphi %s1499, %s1518
                  %s1510 = sphi %s1501, %s1519
                $region88: #{net_forward.4} parent=77 // loop_header_branch
                  %1507 = sbr.rel (%p1504) target = $region92
                $region89: #{net_forward.4} parent=77 // loop_body
                  %v1511 = vld [vmem:[%s1509] sm:$0xff]
                  %1512 = vst [vmem:[%s1510] sm:$0xff] %v1511
                  %s1513 = sadd.s32 1, %s1508
                  %p1514 = scmp.ge.s32.totalorder %s1513, %s1496
                  %s1515 = scalar_select %p1514, 0, %s1513
                  %s1516 = smul.u32 %s1515, 8
                  %s1517 = smul.u32 %s1515, 8
                  %s1518 = scalar_lea.vmem %s1499, %s1516 [#allocation5]
                  %s1519 = scalar_lea.vmem %s1501, %s1517
                $region90: #{net_forward.4} parent=77 // loop_footer
                  %s1505 = sadd.s32 %s1503, 1
                $region91: #{net_forward.4} parent=77 // loop_footer_branch
                  %1502 = sbr.rel target = $region87
                $region92: #{net_forward.4} parent=77 // loop_exit
                  _
              $region78: #{net_forward.4} parent=55 // pred_fallthru
                _
              // Predicated region
              $region93: #{net_forward.4} parent=55 // pred_check
                _
              $region94: #{net_forward.4} parent=55 // pred_check_branch
                %1521 = sbr.rel target = $region96
              $region95: #{net_forward.4} parent=55 // pred_region
                _
              $region96: #{net_forward.4} parent=55 // pred_fallthru
                _
            $region56: #{net_forward.4} parent=51 // pred_fallthru
              _
            // Predicated region
            $region57: #{net_forward.4} parent=51 // pred_check
              _
            $region58: #{net_forward.4} parent=51 // pred_check_branch
              %1303 = sbr.rel target = $region60
            $region59: #{net_forward.4} parent=51 // pred_region
              %s1305 = ssub.s32 256, 1
              %s1306 = sshrl.u32 %s1292, 5
              // While loop
              $region61: #{net_forward.4} parent=59 // loop_pre_header
                _
              $region62: #{net_forward.4} parent=59 // loop_header
                %s1308 = sphi 0, %s1310
                %p1309 = scmp.ge.s32.totalorder %s1308, %s1306
                %s1313 = sphi 0, %s1382
                %s1314 = sphi %s1285, %s1385
                %s1315 = sphi %s1296, %s1386
              $region63: #{net_forward.4} parent=59 // loop_header_branch
                %1312 = sbr.rel (%p1309) target = $region67
              $region64: #{net_forward.4} parent=59 // loop_body
                %v1316 = vld [vmem:[%s1314] sm:%s1305]
                %1317 = vst [vmem:[%s1315] sm:%s1305] %v1316
                %v1318 = vld [vmem:[%s1314 + $0x8] sm:%s1305]
                %1319 = vst [vmem:[%s1315 + $0x8] sm:%s1305] %v1318
                %v1320 = vld [vmem:[%s1314 + $0x10] sm:%s1305]
                %1321 = vst [vmem:[%s1315 + $0x10] sm:%s1305] %v1320
                %v1322 = vld [vmem:[%s1314 + $0x18] sm:%s1305]
                %1323 = vst [vmem:[%s1315 + $0x18] sm:%s1305] %v1322
                %v1324 = vld [vmem:[%s1314 + $0x20] sm:%s1305]
                %1325 = vst [vmem:[%s1315 + $0x20] sm:%s1305] %v1324
                %v1326 = vld [vmem:[%s1314 + $0x28] sm:%s1305]
                %1327 = vst [vmem:[%s1315 + $0x28] sm:%s1305] %v1326
                %v1328 = vld [vmem:[%s1314 + $0x30] sm:%s1305]
                %1329 = vst [vmem:[%s1315 + $0x30] sm:%s1305] %v1328
                %v1330 = vld [vmem:[%s1314 + $0x38] sm:%s1305]
                %1331 = vst [vmem:[%s1315 + $0x38] sm:%s1305] %v1330
                %v1332 = vld [vmem:[%s1314 + $0x40] sm:%s1305]
                %1333 = vst [vmem:[%s1315 + $0x40] sm:%s1305] %v1332
                %v1334 = vld [vmem:[%s1314 + $0x48] sm:%s1305]
                %1335 = vst [vmem:[%s1315 + $0x48] sm:%s1305] %v1334
                %v1336 = vld [vmem:[%s1314 + $0x50] sm:%s1305]
                %1337 = vst [vmem:[%s1315 + $0x50] sm:%s1305] %v1336
                %v1338 = vld [vmem:[%s1314 + $0x58] sm:%s1305]
                %1339 = vst [vmem:[%s1315 + $0x58] sm:%s1305] %v1338
                %v1340 = vld [vmem:[%s1314 + $0x60] sm:%s1305]
                %1341 = vst [vmem:[%s1315 + $0x60] sm:%s1305] %v1340
                %v1342 = vld [vmem:[%s1314 + $0x68] sm:%s1305]
                %1343 = vst [vmem:[%s1315 + $0x68] sm:%s1305] %v1342
                %v1344 = vld [vmem:[%s1314 + $0x70] sm:%s1305]
                %1345 = vst [vmem:[%s1315 + $0x70] sm:%s1305] %v1344
                %v1346 = vld [vmem:[%s1314 + $0x78] sm:%s1305]
                %1347 = vst [vmem:[%s1315 + $0x78] sm:%s1305] %v1346
                %v1348 = vld [vmem:[%s1314 + $0x80] sm:%s1305]
                %1349 = vst [vmem:[%s1315 + $0x80] sm:%s1305] %v1348
                %v1350 = vld [vmem:[%s1314 + $0x88] sm:%s1305]
                %1351 = vst [vmem:[%s1315 + $0x88] sm:%s1305] %v1350
                %v1352 = vld [vmem:[%s1314 + $0x90] sm:%s1305]
                %1353 = vst [vmem:[%s1315 + $0x90] sm:%s1305] %v1352
                %v1354 = vld [vmem:[%s1314 + $0x98] sm:%s1305]
                %1355 = vst [vmem:[%s1315 + $0x98] sm:%s1305] %v1354
                %v1356 = vld [vmem:[%s1314 + $0xa0] sm:%s1305]
                %1357 = vst [vmem:[%s1315 + $0xa0] sm:%s1305] %v1356
                %v1358 = vld [vmem:[%s1314 + $0xa8] sm:%s1305]
                %1359 = vst [vmem:[%s1315 + $0xa8] sm:%s1305] %v1358
                %v1360 = vld [vmem:[%s1314 + $0xb0] sm:%s1305]
                %1361 = vst [vmem:[%s1315 + $0xb0] sm:%s1305] %v1360
                %v1362 = vld [vmem:[%s1314 + $0xb8] sm:%s1305]
                %1363 = vst [vmem:[%s1315 + $0xb8] sm:%s1305] %v1362
                %v1364 = vld [vmem:[%s1314 + $0xc0] sm:%s1305]
                %1365 = vst [vmem:[%s1315 + $0xc0] sm:%s1305] %v1364
                %v1366 = vld [vmem:[%s1314 + $0xc8] sm:%s1305]
                %1367 = vst [vmem:[%s1315 + $0xc8] sm:%s1305] %v1366
                %v1368 = vld [vmem:[%s1314 + $0xd0] sm:%s1305]
                %1369 = vst [vmem:[%s1315 + $0xd0] sm:%s1305] %v1368
                %v1370 = vld [vmem:[%s1314 + $0xd8] sm:%s1305]
                %1371 = vst [vmem:[%s1315 + $0xd8] sm:%s1305] %v1370
                %v1372 = vld [vmem:[%s1314 + $0xe0] sm:%s1305]
                %1373 = vst [vmem:[%s1315 + $0xe0] sm:%s1305] %v1372
                %v1374 = vld [vmem:[%s1314 + $0xe8] sm:%s1305]
                %1375 = vst [vmem:[%s1315 + $0xe8] sm:%s1305] %v1374
                %v1376 = vld [vmem:[%s1314 + $0xf0] sm:%s1305]
                %1377 = vst [vmem:[%s1315 + $0xf0] sm:%s1305] %v1376
                %v1378 = vld [vmem:[%s1314 + $0xf8] sm:%s1305]
                %1379 = vst [vmem:[%s1315 + $0xf8] sm:%s1305] %v1378
                %s1380 = sadd.s32 1, %s1313
                %p1381 = scmp.ge.s32.totalorder %s1380, %s1306
                %s1382 = scalar_select %p1381, 0, %s1380
                %s1383 = smul.u32 %s1382, 256
                %s1384 = smul.u32 %s1382, 256
                %s1385 = scalar_lea.vmem %s1285, %s1383 [#allocation5]
                %s1386 = scalar_lea.vmem %s1296, %s1384
              $region65: #{net_forward.4} parent=59 // loop_footer
                %s1310 = sadd.s32 %s1308, 1
              $region66: #{net_forward.4} parent=59 // loop_footer_branch
                %1307 = sbr.rel target = $region62
              $region67: #{net_forward.4} parent=59 // loop_exit
                _
              %s1387 = sshrl.u32 %s1292, 5
              %s1388 = sand.u32 %s1292, 31
              %s1389 = smul.u32 %s1387, 32
              %s1390 = smul.u32 8, %s1389
              %s1391 = scalar_lea.vmem %s1285, %s1390 [#allocation5]
              %s1392 = smul.u32 8, %s1389
              %s1393 = scalar_lea.vmem %s1296, %s1392
              // While loop
              $region68: #{net_forward.4} parent=59 // loop_pre_header
                _
              $region69: #{net_forward.4} parent=59 // loop_header
                %s1395 = sphi 0, %s1397
                %p1396 = scmp.ge.s32.totalorder %s1395, %s1388
                %s1400 = sphi 0, %s1407
                %s1401 = sphi %s1391, %s1410
                %s1402 = sphi %s1393, %s1411
              $region70: #{net_forward.4} parent=59 // loop_header_branch
                %1399 = sbr.rel (%p1396) target = $region74
              $region71: #{net_forward.4} parent=59 // loop_body
                %v1403 = vld [vmem:[%s1401] sm:%s1305]
                %1404 = vst [vmem:[%s1402] sm:%s1305] %v1403
                %s1405 = sadd.s32 1, %s1400
                %p1406 = scmp.ge.s32.totalorder %s1405, %s1388
                %s1407 = scalar_select %p1406, 0, %s1405
                %s1408 = smul.u32 %s1407, 8
                %s1409 = smul.u32 %s1407, 8
                %s1410 = scalar_lea.vmem %s1391, %s1408 [#allocation5]
                %s1411 = scalar_lea.vmem %s1393, %s1409
              $region72: #{net_forward.4} parent=59 // loop_footer
                %s1397 = sadd.s32 %s1395, 1
              $region73: #{net_forward.4} parent=59 // loop_footer_branch
                %1394 = sbr.rel target = $region69
              $region74: #{net_forward.4} parent=59 // loop_exit
                _
            $region60: #{net_forward.4} parent=51 // pred_fallthru
              _
          $region52: #{net_forward.4} parent=47 // pred_fallthru
            _
          %1522 = vnop
        $region48: #{net_forward.4} parent=31 // pred_fallthru
          _
      $region32: #{net_forward.4} parent=5 // pred_fallthru
        _
      %p1523 = scmp.le.s32.totalorder 2, %s10
      // Predicated region
      $region97: #{net_forward.4} parent=5 // pred_check
        %p1524 = pneg %p1523
      $region98: #{net_forward.4} parent=5 // pred_check_branch
        %1526 = sbr.rel (%p1524) target = $region100
      $region99: #{net_forward.4} parent=5 // pred_region
        %s1527 = ssub.s32 %s10, 2
        // Predicated region
        $region101: #{net_forward.4} parent=99 // pred_check
          %p1528 = pneg %p126
        $region102: #{net_forward.4} parent=99 // pred_check_branch
          %1530 = sbr.rel (%p1528) target = $region104
        $region103: #{net_forward.4} parent=99 // pred_region
          %s1531 = sand.u32 %s111, 1
          %s1532 = sand.u32 %s111, 1
          %s1533 = smul.addr %s1532, 512
          %s1534 = scalar_lea.vmem [#allocation5], %s1533
        $region104: #{net_forward.4} parent=99 // pred_fallthru
          _
      $region100: #{net_forward.4} parent=5 // pred_fallthru
        _
    $region6: #{net_forward.4} parent=1 // loop_footer
      %s14 = sadd.s32 1, %s10
    $region7: #{net_forward.4} parent=1 // loop_footer_branch
      %9 = sbr.rel target = $region3
    $region8: #{net_forward.4} parent=1 // loop_exit
      _
    %1535 = vsyncpa [#allocation4], 1
    %s1536 = scalar_lea.sflag [#allocation4], 1
    %1537 = vsyncpa %s1536, 1

// kernel: net_forward.6
$region0: #{net_forward.6}
  #allocation0 [shape = 'u32[]', space=smem, size = 0x4, offset = 0x4, fixed_abs, tag = 'smem constant byte address 0x4 - core index']
  #allocation1 [shape = 'u32[72,128]{1,0:T(1,128)}', space=vmem, size = 0x9000, scoped, tag = 'internal scratch']
  #allocation2 [shape = 'f32[2,128]{1,0:T(2,128)}', space=vmem, size = 0x400, scoped, tag = 'scratch operand']
  %s0 = inlined_call_operand.vmem [shape: bf16[2,9216], index: 0, kind: input, shape index: {}]
  %s1 = inlined_call_operand.vmem [shape: bf16[9216,128], index: 1, kind: input, shape index: {}]
  %s2 = inlined_call_operand.vmem [shape: f32[1,128], index: 2, kind: input, shape index: {}]
  %s3 = inlined_call_operand.vmem [shape: f32[2,128], index: 3, kind: output, shape index: {}]
  %s4 = sld [smem:[#allocation0]]
  $region53: #{net_forward.6} parent=0
    _
  %s6 = ssub.s32 1, %s4
  %s7 = scalar_select 0, %s6, %s4
  loop: start=0, step=1, limit=10
  $region2: #{net_forward.6} parent=0 // loop_pre_header
    _
  $region3: #{net_forward.6} parent=0 // loop_header
    %s9 = sphi 0, %s13
    %p10 = scmp.ge.s32.totalorder %s9, 10
    %s16 = sphi 0, %s28
    %s17 = sphi 0, %s24
    %s18 = sphi 0, %s16
    %s19 = sphi 0, %s17
    %s20 = sphi 0, %s18
    %s21 = sphi 0, %s19
    %s33 = sphi 0, %s35
    %s36 = sphi 0, %s33
    %s37 = sphi 0, %s36
    %s53 = sphi 0, %s37
    %s59 = sphi 0, %s61
    %s62 = sphi 0, %s59
    %s63 = sphi 0, %s62
    %s79 = sphi 0, %s63
    %s83 = sphi 0, %s83
    %s85 = sphi 0, %s83
    %s86 = sphi 0, %s85
    %s100 = sphi 0, %s86
    %s106 = sphi 0, %s108
    %s109 = sphi 0, %s106
    %s110 = sphi 0, %s109
    %s126 = sphi 0, %s110
  $region4: #{net_forward.6} parent=0 // loop_header_branch
    %12 = sbr.rel (%p10) target = $region8
  $region5: #{net_forward.6} parent=0 // loop_body
    %s14 = ssub.s32 %s9, 1
    %s15 = ssub.s32 %s9, 2
    %s22 = sadd.s32 1, %s17
    %p23 = scmp.ge.s32.totalorder %s22, 8
    %s24 = scalar_select %p23, 0, %s22
    %s25 = sadd.s32 1, %s16
    %s26 = scalar_select %p23, %s25, %s16
    %p27 = scmp.ge.s32.totalorder %s26, 1
    %s28 = scalar_select %p27, 0, %s26
    %s29 = ssub.s32 %s16, %s28
    %s30 = ssub.s32 %s17, %s24
    %s31 = sor.u32 %s29, %s30
    %p32 = scmp.eq.s32.totalorder %s31, 0
    %s34 = sadd.s32 %s33, 1
    %s35 = scalar_select %p32, %s33, %s34
    %p38 = pneg %p32
    %p39 = scmp.eq.s32.totalorder %s9, 7
    %p40 = por %p38, %p39
    %p41 = scmp.ne.s32.totalorder %s33, %s36
    %p42 = scmp.eq.s32.totalorder %s9, 0
    %p43 = por %p41, %p42
    %p44 = scmp.ne.s32.totalorder %s33, %s36
    %p45 = scmp.eq.s32.totalorder %s14, 7
    %p46 = por %p44, %p45
    %p47 = scmp.ne.s32.totalorder %s36, %s37
    %p48 = scmp.eq.s32.totalorder %s14, 0
    %p49 = por %p47, %p48
    %p50 = scmp.ne.s32.totalorder %s36, %s37
    %p51 = scmp.eq.s32.totalorder %s15, 7
    %p52 = por %p50, %p51
    %p54 = scmp.ne.s32.totalorder %s37, %s53
    %p55 = scmp.eq.s32.totalorder %s15, 0
    %p56 = por %p54, %p55
    %s57 = ssub.s32 %s17, %s24
    %p58 = scmp.eq.s32.totalorder %s57, 0
    %s60 = sadd.s32 %s59, 1
    %s61 = scalar_select %p58, %s59, %s60
    %p64 = pneg %p58
    %p65 = scmp.eq.s32.totalorder %s9, 7
    %p66 = por %p64, %p65
    %p67 = scmp.ne.s32.totalorder %s59, %s62
    %p68 = scmp.eq.s32.totalorder %s9, 0
    %p69 = por %p67, %p68
    %p70 = scmp.ne.s32.totalorder %s59, %s62
    %p71 = scmp.eq.s32.totalorder %s14, 7
    %p72 = por %p70, %p71
    %p73 = scmp.ne.s32.totalorder %s62, %s63
    %p74 = scmp.eq.s32.totalorder %s14, 0
    %p75 = por %p73, %p74
    %p76 = scmp.ne.s32.totalorder %s62, %s63
    %p77 = scmp.eq.s32.totalorder %s15, 7
    %p78 = por %p76, %p77
    %p80 = scmp.ne.s32.totalorder %s63, %s79
    %p81 = scmp.eq.s32.totalorder %s15, 0
    %p82 = por %p80, %p81
    %s84 = sadd.s32 %s83, 1
    %p87 = scmp.eq.s32.totalorder %s9, 7
    %p88 = scmp.ne.s32.totalorder %s83, %s85
    %p89 = scmp.eq.s32.totalorder %s9, 0
    %p90 = por %p88, %p89
    %p91 = scmp.ne.s32.totalorder %s83, %s85
    %p92 = scmp.eq.s32.totalorder %s14, 7
    %p93 = por %p91, %p92
    %p94 = scmp.ne.s32.totalorder %s85, %s86
    %p95 = scmp.eq.s32.totalorder %s14, 0
    %p96 = por %p94, %p95
    %p97 = scmp.ne.s32.totalorder %s85, %s86
    %p98 = scmp.eq.s32.totalorder %s15, 7
    %p99 = por %p97, %p98
    %p101 = scmp.ne.s32.totalorder %s86, %s100
    %p102 = scmp.eq.s32.totalorder %s15, 0
    %p103 = por %p101, %p102
    %s104 = ssub.s32 %s16, %s28
    %p105 = scmp.eq.s32.totalorder %s104, 0
    %s107 = sadd.s32 %s106, 1
    %s108 = scalar_select %p105, %s106, %s107
    %p111 = pneg %p105
    %p112 = scmp.eq.s32.totalorder %s9, 7
    %p113 = por %p111, %p112
    %p114 = scmp.ne.s32.totalorder %s106, %s109
    %p115 = scmp.eq.s32.totalorder %s9, 0
    %p116 = por %p114, %p115
    %p117 = scmp.ne.s32.totalorder %s106, %s109
    %p118 = scmp.eq.s32.totalorder %s14, 7
    %p119 = por %p117, %p118
    %p120 = scmp.ne.s32.totalorder %s109, %s110
    %p121 = scmp.eq.s32.totalorder %s14, 0
    %p122 = por %p120, %p121
    %p123 = scmp.ne.s32.totalorder %s109, %s110
    %p124 = scmp.eq.s32.totalorder %s15, 7
    %p125 = por %p123, %p124
    %p127 = scmp.ne.s32.totalorder %s110, %s126
    %p128 = scmp.eq.s32.totalorder %s15, 0
    %p129 = por %p127, %p128
    %p130 = scmp.le.s32.totalorder 1, %s9
    %p131 = scmp.lt.s32.totalorder %s9, 9
    %p132 = pnand %p130, %p131
    %p133 = pneg %p132
    // Predicated region
    $region9: #{net_forward.6} parent=5 // pred_check
      _
    $region10: #{net_forward.6} parent=5 // pred_check_branch
      %135 = sbr.rel (%p132) target = $region12
    $region11: #{net_forward.6} parent=5 // pred_region
      %s136 = ssub.s32 %s9, 1
      // Predicated region
      $region13: #{net_forward.6} parent=11 // pred_check
        %p137 = pneg %p96
      $region14: #{net_forward.6} parent=11 // pred_check_branch
        %139 = sbr.rel (%p137) target = $region16
      $region15: #{net_forward.6} parent=11 // pred_region
        _
      $region16: #{net_forward.6} parent=11 // pred_fallthru
        _
    $region12: #{net_forward.6} parent=5 // pred_fallthru
      _
    %p140 = scmp.lt.s32.totalorder %s9, 8
    // Predicated region
    $region17: #{net_forward.6} parent=5 // pred_check
      %p141 = pneg %p140
    $region18: #{net_forward.6} parent=5 // pred_check_branch
      %143 = sbr.rel (%p141) target = $region20
    $region19: #{net_forward.6} parent=5 // pred_region
      // Predicated region
      $region21: #{net_forward.6} parent=19 // pred_check
        %p144 = pneg %p43
      $region22: #{net_forward.6} parent=19 // pred_check_branch
        %146 = sbr.rel (%p144) target = $region24
      $region23: #{net_forward.6} parent=19 // pred_region
        %s147 = smul.u32 9, %s17
        %p148 = scmp.lt.s32.totalorder %s16, 0
        %s149 = scalar_select %p148, %s16, 0
        %p150 = scmp.lt.s32.totalorder %s147, 71
        %s151 = scalar_select %p150, %s147, 71
        %s152 = smul.addr %s149, 72
        %s153 = sadd.s32 %s151, %s152
        %s154 = scalar_lea.vmem %s0, %s153
        %s155 = smul.u32 9, %s17
      $region24: #{net_forward.6} parent=19 // pred_fallthru
        _
      // Predicated region
      $region25: #{net_forward.6} parent=19 // pred_check
        %p156 = pneg %p69
      $region26: #{net_forward.6} parent=19 // pred_check_branch
        %158 = sbr.rel (%p156) target = $region28
      $region27: #{net_forward.6} parent=19 // pred_region
        %s159 = smul.u32 144, %s17
        %p160 = scmp.lt.s32.totalorder %s159, 1151
        %s161 = scalar_select %p160, %s159, 1151
        %s162 = smul.addr %s161, 4
        %s163 = scalar_lea.vmem %s1, %s162
        %s164 = smul.u32 144, %s17
      $region28: #{net_forward.6} parent=19 // pred_fallthru
        _
    $region20: #{net_forward.6} parent=5 // pred_fallthru
      _
    %p165 = scmp.le.s32.totalorder 1, %s9
    %p166 = scmp.lt.s32.totalorder %s9, 9
    %p167 = pnand %p165, %p166
    %p168 = pneg %p167
    // Predicated region
    $region29: #{net_forward.6} parent=5 // pred_check
      _
    $region30: #{net_forward.6} parent=5 // pred_check_branch
      %170 = sbr.rel (%p167) target = $region32
    $region31: #{net_forward.6} parent=5 // pred_region
      %s171 = ssub.s32 %s9, 1
      %s172 = smul.u32 9, %s19
      %p173 = scmp.lt.s32.totalorder %s18, 0
      %s174 = scalar_select %p173, %s18, 0
      %p175 = scmp.lt.s32.totalorder %s172, 71
      %s176 = scalar_select %p175, %s172, 71
      %s177 = smul.addr %s174, 72
      %s178 = sadd.s32 %s176, %s177
      %s179 = scalar_lea.vmem %s0, %s178
      %p180 = pneg %p49
      %p181 = pneg %p46
      %s182 = smul.u32 144, %s19
      %p183 = scmp.lt.s32.totalorder %s182, 1151
      %s184 = scalar_select %p183, %s182, 1151
      %s185 = smul.addr %s184, 4
      %s186 = scalar_lea.vmem %s1, %s185
      %p187 = pneg %p75
      %p188 = pneg %p72
      %p189 = pneg %p96
      %p190 = pneg %p93
      %p191 = pneg %p122
      %p192 = pneg %p119
      %p193 = scmp.lt.s32.totalorder %s18, 0
      %s194 = scalar_select %p193, %s18, 0
      %s195 = smul.addr %s194, 2
      %s196 = scalar_lea.vmem %s3, %s195
      %s197 = smul.u32 9, %s19
      %p198 = scmp.lt.s32.totalorder %s18, 0
      %s199 = scalar_select %p198, %s18, 0
      %p200 = scmp.lt.s32.totalorder %s197, 71
      %s201 = scalar_select %p200, %s197, 71
      %s202 = smul.addr %s199, 72
      %s203 = sadd.s32 %s201, %s202
      %s204 = scalar_lea.vmem %s0, %s203
      %s205 = smul.u32 9, %s19
      %s206 = smul.u32 144, %s19
      %p207 = scmp.lt.s32.totalorder %s206, 1151
      %s208 = scalar_select %p207, %s206, 1151
      %s209 = smul.addr %s208, 4
      %s210 = scalar_lea.vmem %s1, %s209
      %s211 = smul.u32 144, %s19
      %p212 = scmp.lt.s32.totalorder %s18, 0
      %s213 = scalar_select %p212, %s18, 0
      %s214 = smul.addr %s213, 2
      %s215 = scalar_lea.vmem %s3, %s214
      %p216 = scmp.eq.s32.totalorder %s19, 0
      // Predicated region
      $region33: #{net_forward.6} parent=31 // pred_check
        %p217 = pneg %p216
      $region34: #{net_forward.6} parent=31 // pred_check_branch
        %219 = sbr.rel (%p217) target = $region36
      $region35: #{net_forward.6} parent=31 // pred_region
        %220 = vst [vmem:[#allocation2] sm:$0x3] 0.0
      $region36: #{net_forward.6} parent=31 // pred_fallthru
        _
      %v221 = vld [vmem:[#allocation2] sm:$0x3]
      %v222 = vld [vmem:[%s204] sm:$0xff]
      %v223 = vld [vmem:[%s204 + $0x8] sm:$0x1]
      %v224 = vld [vmem:[%s210] sm:$0xf]
      %v225 = vld [vmem:[%s210 + $0x4] sm:$0xf]
      %v226 = vld [vmem:[%s210 + $0x8] sm:$0xf]
      %v227 = vld [vmem:[%s210 + $0xc] sm:$0xf]
      %v228 = vld [vmem:[%s210 + $0x10] sm:$0xf]
      %v229 = vld [vmem:[%s210 + $0x14] sm:$0xf]
      %v230 = vld [vmem:[%s210 + $0x18] sm:$0xf]
      %v231 = vld [vmem:[%s210 + $0x1c] sm:$0xf]
      %v232 = vld [vmem:[%s210 + $0x20] sm:$0xf]
      %v233 = vld [vmem:[%s210 + $0x24] sm:$0xf]
      %v234 = vld [vmem:[%s210 + $0x28] sm:$0xf]
      %v235 = vld [vmem:[%s210 + $0x2c] sm:$0xf]
      %v236 = vld [vmem:[%s210 + $0x30] sm:$0xf]
      %v237 = vld [vmem:[%s210 + $0x34] sm:$0xf]
      %v238 = vld [vmem:[%s210 + $0x38] sm:$0xf]
      %v239 = vld [vmem:[%s210 + $0x3c] sm:$0xf]
      %v240 = vld [vmem:[%s210 + $0x40] sm:$0xf]
      %v241 = vld [vmem:[%s210 + $0x44] sm:$0xf]
      %v242 = vld [vmem:[%s210 + $0x48] sm:$0xf]
      %v243 = vld [vmem:[%s210 + $0x4c] sm:$0xf]
      %v244 = vld [vmem:[%s210 + $0x50] sm:$0xf]
      %v245 = vld [vmem:[%s210 + $0x54] sm:$0xf]
      %v246 = vld [vmem:[%s210 + $0x58] sm:$0xf]
      %v247 = vld [vmem:[%s210 + $0x5c] sm:$0xf]
      %v248 = vld [vmem:[%s210 + $0x60] sm:$0xf]
      %v249 = vld [vmem:[%s210 + $0x64] sm:$0xf]
      %v250 = vld [vmem:[%s210 + $0x68] sm:$0xf]
      %v251 = vld [vmem:[%s210 + $0x6c] sm:$0xf]
      %v252 = vld [vmem:[%s210 + $0x70] sm:$0xf]
      %v253 = vld [vmem:[%s210 + $0x74] sm:$0xf]
      %v254 = vld [vmem:[%s210 + $0x78] sm:$0xf]
      %v255 = vld [vmem:[%s210 + $0x7c] sm:$0xf]
      %v256 = vld [vmem:[%s210 + $0x80] sm:$0xf]
      %v257 = vld [vmem:[%s210 + $0x84] sm:$0xf]
      %v258 = vld [vmem:[%s210 + $0x88] sm:$0xf]
      %v259 = vld [vmem:[%s210 + $0x8c] sm:$0xf]
      %v260 = vld [vmem:[%s210 + $0x90] sm:$0xf]
      %v261 = vld [vmem:[%s210 + $0x94] sm:$0xf]
      %v262 = vld [vmem:[%s210 + $0x98] sm:$0xf]
      %v263 = vld [vmem:[%s210 + $0x9c] sm:$0xf]
      %v264 = vld [vmem:[%s210 + $0xa0] sm:$0xf]
      %v265 = vld [vmem:[%s210 + $0xa4] sm:$0xf]
      %v266 = vld [vmem:[%s210 + $0xa8] sm:$0xf]
      %v267 = vld [vmem:[%s210 + $0xac] sm:$0xf]
      %v268 = vld [vmem:[%s210 + $0xb0] sm:$0xf]
      %v269 = vld [vmem:[%s210 + $0xb4] sm:$0xf]
      %v270 = vld [vmem:[%s210 + $0xb8] sm:$0xf]
      %v271 = vld [vmem:[%s210 + $0xbc] sm:$0xf]
      %v272 = vld [vmem:[%s210 + $0xc0] sm:$0xf]
      %v273 = vld [vmem:[%s210 + $0xc4] sm:$0xf]
      %v274 = vld [vmem:[%s210 + $0xc8] sm:$0xf]
      %v275 = vld [vmem:[%s210 + $0xcc] sm:$0xf]
      %v276 = vld [vmem:[%s210 + $0xd0] sm:$0xf]
      %v277 = vld [vmem:[%s210 + $0xd4] sm:$0xf]
      %v278 = vld [vmem:[%s210 + $0xd8] sm:$0xf]
      %v279 = vld [vmem:[%s210 + $0xdc] sm:$0xf]
      %v280 = vld [vmem:[%s210 + $0xe0] sm:$0xf]
      %v281 = vld [vmem:[%s210 + $0xe4] sm:$0xf]
      %v282 = vld [vmem:[%s210 + $0xe8] sm:$0xf]
      %v283 = vld [vmem:[%s210 + $0xec] sm:$0xf]
      %v284 = vld [vmem:[%s210 + $0xf0] sm:$0xf]
      %v285 = vld [vmem:[%s210 + $0xf4] sm:$0xf]
      %v286 = vld [vmem:[%s210 + $0xf8] sm:$0xf]
      %v287 = vld [vmem:[%s210 + $0xfc] sm:$0xf]
      %v288 = vld [vmem:[%s210 + $0x100] sm:$0xf]
      %v289 = vld [vmem:[%s210 + $0x104] sm:$0xf]
      %v290 = vld [vmem:[%s210 + $0x108] sm:$0xf]
      %v291 = vld [vmem:[%s210 + $0x10c] sm:$0xf]
      %v292 = vld [vmem:[%s210 + $0x110] sm:$0xf]
      %v293 = vld [vmem:[%s210 + $0x114] sm:$0xf]
      %v294 = vld [vmem:[%s210 + $0x118] sm:$0xf]
      %v295 = vld [vmem:[%s210 + $0x11c] sm:$0xf]
      %v296 = vld [vmem:[%s210 + $0x120] sm:$0xf]
      %v297 = vld [vmem:[%s210 + $0x124] sm:$0xf]
      %v298 = vld [vmem:[%s210 + $0x128] sm:$0xf]
      %v299 = vld [vmem:[%s210 + $0x12c] sm:$0xf]
      %v300 = vld [vmem:[%s210 + $0x130] sm:$0xf]
      %v301 = vld [vmem:[%s210 + $0x134] sm:$0xf]
      %v302 = vld [vmem:[%s210 + $0x138] sm:$0xf]
      %v303 = vld [vmem:[%s210 + $0x13c] sm:$0xf]
      %v304 = vld [vmem:[%s210 + $0x140] sm:$0xf]
      %v305 = vld [vmem:[%s210 + $0x144] sm:$0xf]
      %v306 = vld [vmem:[%s210 + $0x148] sm:$0xf]
      %v307 = vld [vmem:[%s210 + $0x14c] sm:$0xf]
      %v308 = vld [vmem:[%s210 + $0x150] sm:$0xf]
      %v309 = vld [vmem:[%s210 + $0x154] sm:$0xf]
      %v310 = vld [vmem:[%s210 + $0x158] sm:$0xf]
      %v311 = vld [vmem:[%s210 + $0x15c] sm:$0xf]
      %v312 = vld [vmem:[%s210 + $0x160] sm:$0xf]
      %v313 = vld [vmem:[%s210 + $0x164] sm:$0xf]
      %v314 = vld [vmem:[%s210 + $0x168] sm:$0xf]
      %v315 = vld [vmem:[%s210 + $0x16c] sm:$0xf]
      %v316 = vld [vmem:[%s210 + $0x170] sm:$0xf]
      %v317 = vld [vmem:[%s210 + $0x174] sm:$0xf]
      %v318 = vld [vmem:[%s210 + $0x178] sm:$0xf]
      %v319 = vld [vmem:[%s210 + $0x17c] sm:$0xf]
      %v320 = vld [vmem:[%s210 + $0x180] sm:$0xf]
      %v321 = vld [vmem:[%s210 + $0x184] sm:$0xf]
      %v322 = vld [vmem:[%s210 + $0x188] sm:$0xf]
      %v323 = vld [vmem:[%s210 + $0x18c] sm:$0xf]
      %v324 = vld [vmem:[%s210 + $0x190] sm:$0xf]
      %v325 = vld [vmem:[%s210 + $0x194] sm:$0xf]
      %v326 = vld [vmem:[%s210 + $0x198] sm:$0xf]
      %v327 = vld [vmem:[%s210 + $0x19c] sm:$0xf]
      %v328 = vld [vmem:[%s210 + $0x1a0] sm:$0xf]
      %v329 = vld [vmem:[%s210 + $0x1a4] sm:$0xf]
      %v330 = vld [vmem:[%s210 + $0x1a8] sm:$0xf]
      %v331 = vld [vmem:[%s210 + $0x1ac] sm:$0xf]
      %v332 = vld [vmem:[%s210 + $0x1b0] sm:$0xf]
      %v333 = vld [vmem:[%s210 + $0x1b4] sm:$0xf]
      %v334 = vld [vmem:[%s210 + $0x1b8] sm:$0xf]
      %v335 = vld [vmem:[%s210 + $0x1bc] sm:$0xf]
      %v336 = vld [vmem:[%s210 + $0x1c0] sm:$0xf]
      %v337 = vld [vmem:[%s210 + $0x1c4] sm:$0xf]
      %v338 = vld [vmem:[%s210 + $0x1c8] sm:$0xf]
      %v339 = vld [vmem:[%s210 + $0x1cc] sm:$0xf]
      %v340 = vld [vmem:[%s210 + $0x1d0] sm:$0xf]
      %v341 = vld [vmem:[%s210 + $0x1d4] sm:$0xf]
      %v342 = vld [vmem:[%s210 + $0x1d8] sm:$0xf]
      %v343 = vld [vmem:[%s210 + $0x1dc] sm:$0xf]
      %v344 = vld [vmem:[%s210 + $0x1e0] sm:$0xf]
      %v345 = vld [vmem:[%s210 + $0x1e4] sm:$0xf]
      %v346 = vld [vmem:[%s210 + $0x1e8] sm:$0xf]
      %v347 = vld [vmem:[%s210 + $0x1ec] sm:$0xf]
      %v348 = vld [vmem:[%s210 + $0x1f0] sm:$0xf]
      %v349 = vld [vmem:[%s210 + $0x1f4] sm:$0xf]
      %v350 = vld [vmem:[%s210 + $0x1f8] sm:$0xf]
      %v351 = vld [vmem:[%s210 + $0x1fc] sm:$0xf]
      %v352 = vld [vmem:[%s210 + $0x200] sm:$0xf]
      %v353 = vld [vmem:[%s210 + $0x204] sm:$0xf]
      %v354 = vld [vmem:[%s210 + $0x208] sm:$0xf]
      %v355 = vld [vmem:[%s210 + $0x20c] sm:$0xf]
      %v356 = vld [vmem:[%s210 + $0x210] sm:$0xf]
      %v357 = vld [vmem:[%s210 + $0x214] sm:$0xf]
      %v358 = vld [vmem:[%s210 + $0x218] sm:$0xf]
      %v359 = vld [vmem:[%s210 + $0x21c] sm:$0xf]
      %v360 = vld [vmem:[%s210 + $0x220] sm:$0xf]
      %v361 = vld [vmem:[%s210 + $0x224] sm:$0xf]
      %v362 = vld [vmem:[%s210 + $0x228] sm:$0xf]
      %v363 = vld [vmem:[%s210 + $0x22c] sm:$0xf]
      %v364 = vld [vmem:[%s210 + $0x230] sm:$0xf]
      %v365 = vld [vmem:[%s210 + $0x234] sm:$0xf]
      %v366 = vld [vmem:[%s210 + $0x238] sm:$0xf]
      %v367 = vld [vmem:[%s210 + $0x23c] sm:$0xf]
      %369 = vst [vmem:[#allocation1] ss:$9 sm:$0xff] %v222
      %v370 = vld [vmem:[#allocation1] sm:$0xff]
      %v371 = vld [vmem:[#allocation1 + $0x9] sm:$0xff]
      %v372 = vld [vmem:[#allocation1 + $0x12] sm:$0xff]
      %v373 = vld [vmem:[#allocation1 + $0x1b] sm:$0xff]
      %v374 = vld [vmem:[#allocation1 + $0x24] sm:$0xff]
      %v375 = vld [vmem:[#allocation1 + $0x2d] sm:$0xff]
      %v376 = vld [vmem:[#allocation1 + $0x36] sm:$0xff]
      %v377 = vld [vmem:[#allocation1 + $0x3f] sm:$0xff]
      %379 = vst [vmem:[#allocation1] ss:$9 sm:$0xff] %v223
      %v380 = vld [vmem:[#allocation1] sm:$0xff]
      %v534 = vunpack.c.l.b16 %v224
      %v535 = vunpack.c.l.b16 %v225
      %v536 = vunpack.c.l.b16 %v226
      %v537 = vunpack.c.l.b16 %v227
      %v538 = vunpack.c.l.b16 %v228
      %v539 = vunpack.c.l.b16 %v229
      %v540 = vunpack.c.l.b16 %v230
      %v541 = vunpack.c.l.b16 %v231
      %v542 = vunpack.c.l.b16 %v232
      %v543 = vunpack.c.l.b16 %v233
      %v544 = vunpack.c.l.b16 %v234
      %v545 = vunpack.c.l.b16 %v235
      %v546 = vunpack.c.l.b16 %v236
      %v547 = vunpack.c.l.b16 %v237
      %v548 = vunpack.c.l.b16 %v238
      %v549 = vunpack.c.l.b16 %v239
      %v550 = vunpack.c.l.b16 %v240
      %v551 = vunpack.c.l.b16 %v241
      %v552 = vunpack.c.l.b16 %v242
      %v553 = vunpack.c.l.b16 %v243
      %v554 = vunpack.c.l.b16 %v244
      %v555 = vunpack.c.l.b16 %v245
      %v556 = vunpack.c.l.b16 %v246
      %v557 = vunpack.c.l.b16 %v247
      %v558 = vunpack.c.l.b16 %v248
      %v559 = vunpack.c.l.b16 %v249
      %v560 = vunpack.c.l.b16 %v250
      %v561 = vunpack.c.l.b16 %v251
      %v562 = vunpack.c.l.b16 %v252
      %v563 = vunpack.c.l.b16 %v253
      %v564 = vunpack.c.l.b16 %v254
      %v565 = vunpack.c.l.b16 %v255
      %v566 = vunpack.c.l.b16 %v256
      %v567 = vunpack.c.l.b16 %v257
      %v568 = vunpack.c.l.b16 %v258
      %v569 = vunpack.c.l.b16 %v259
      %v570 = vunpack.c.l.b16 %v260
      %v571 = vunpack.c.l.b16 %v261
      %v572 = vunpack.c.l.b16 %v262
      %v573 = vunpack.c.l.b16 %v263
      %v574 = vunpack.c.l.b16 %v264
      %v575 = vunpack.c.l.b16 %v265
      %v576 = vunpack.c.l.b16 %v266
      %v577 = vunpack.c.l.b16 %v267
      %v578 = vunpack.c.l.b16 %v268
      %v579 = vunpack.c.l.b16 %v269
      %v580 = vunpack.c.l.b16 %v270
      %v581 = vunpack.c.l.b16 %v271
      %v582 = vunpack.c.l.b16 %v272
      %v583 = vunpack.c.l.b16 %v273
      %v584 = vunpack.c.l.b16 %v274
      %v585 = vunpack.c.l.b16 %v275
      %v586 = vunpack.c.l.b16 %v276
      %v587 = vunpack.c.l.b16 %v277
      %v588 = vunpack.c.l.b16 %v278
      %v589 = vunpack.c.l.b16 %v279
      %v590 = vunpack.c.l.b16 %v280
      %v591 = vunpack.c.l.b16 %v281
      %v592 = vunpack.c.l.b16 %v282
      %v593 = vunpack.c.l.b16 %v283
      %v594 = vunpack.c.l.b16 %v284
      %v595 = vunpack.c.l.b16 %v285
      %v596 = vunpack.c.l.b16 %v286
      %v597 = vunpack.c.l.b16 %v287
      %v598 = vunpack.c.l.b16 %v288
      %v599 = vunpack.c.l.b16 %v289
      %v600 = vunpack.c.l.b16 %v290
      %v601 = vunpack.c.l.b16 %v291
      %v602 = vunpack.c.l.b16 %v292
      %v603 = vunpack.c.l.b16 %v293
      %v604 = vunpack.c.l.b16 %v294
      %v605 = vunpack.c.l.b16 %v295
      %v606 = vunpack.c.l.b16 %v296
      %v607 = vunpack.c.l.b16 %v297
      %v608 = vunpack.c.l.b16 %v298
      %v609 = vunpack.c.l.b16 %v299
      %v610 = vunpack.c.l.b16 %v300
      %v611 = vunpack.c.l.b16 %v301
      %v612 = vunpack.c.l.b16 %v302
      %v613 = vunpack.c.l.b16 %v303
      %v614 = vunpack.c.l.b16 %v304
      %v615 = vunpack.c.l.b16 %v305
      %v616 = vunpack.c.l.b16 %v306
      %v617 = vunpack.c.l.b16 %v307
      %v618 = vunpack.c.l.b16 %v308
      %v619 = vunpack.c.l.b16 %v309
      %v620 = vunpack.c.l.b16 %v310
      %v621 = vunpack.c.l.b16 %v311
      %v622 = vunpack.c.l.b16 %v312
      %v623 = vunpack.c.l.b16 %v313
      %v624 = vunpack.c.l.b16 %v314
      %v625 = vunpack.c.l.b16 %v315
      %v626 = vunpack.c.l.b16 %v316
      %v627 = vunpack.c.l.b16 %v317
      %v628 = vunpack.c.l.b16 %v318
      %v629 = vunpack.c.l.b16 %v319
      %v630 = vunpack.c.l.b16 %v320
      %v631 = vunpack.c.l.b16 %v321
      %v632 = vunpack.c.l.b16 %v322
      %v633 = vunpack.c.l.b16 %v323
      %v634 = vunpack.c.l.b16 %v324
      %v635 = vunpack.c.l.b16 %v325
      %v636 = vunpack.c.l.b16 %v326
      %v637 = vunpack.c.l.b16 %v327
      %v638 = vunpack.c.l.b16 %v328
      %v639 = vunpack.c.l.b16 %v329
      %v640 = vunpack.c.l.b16 %v330
      %v641 = vunpack.c.l.b16 %v331
      %v642 = vunpack.c.l.b16 %v332
      %v643 = vunpack.c.l.b16 %v333
      %v644 = vunpack.c.l.b16 %v334
      %v645 = vunpack.c.l.b16 %v335
      %v646 = vunpack.c.l.b16 %v336
      %v647 = vunpack.c.l.b16 %v337
      %v648 = vunpack.c.l.b16 %v338
      %v649 = vunpack.c.l.b16 %v339
      %v650 = vunpack.c.l.b16 %v340
      %v651 = vunpack.c.l.b16 %v341
      %v652 = vunpack.c.l.b16 %v342
      %v653 = vunpack.c.l.b16 %v343
      %v654 = vunpack.c.l.b16 %v344
      %v655 = vunpack.c.l.b16 %v345
      %v656 = vunpack.c.l.b16 %v346
      %v657 = vunpack.c.l.b16 %v347
      %v658 = vunpack.c.l.b16 %v348
      %v659 = vunpack.c.l.b16 %v349
      %v660 = vunpack.c.l.b16 %v350
      %v661 = vunpack.c.l.b16 %v351
      %v662 = vunpack.c.l.b16 %v352
      %v663 = vunpack.c.l.b16 %v353
      %v664 = vunpack.c.l.b16 %v354
      %v665 = vunpack.c.l.b16 %v355
      %v666 = vunpack.c.l.b16 %v356
      %v667 = vunpack.c.l.b16 %v357
      %v668 = vunpack.c.l.b16 %v358
      %v669 = vunpack.c.l.b16 %v359
      %v670 = vunpack.c.l.b16 %v360
      %v671 = vunpack.c.l.b16 %v361
      %v672 = vunpack.c.l.b16 %v362
      %v673 = vunpack.c.l.b16 %v363
      %v674 = vunpack.c.l.b16 %v364
      %v675 = vunpack.c.l.b16 %v365
      %v676 = vunpack.c.l.b16 %v366
      %v677 = vunpack.c.l.b16 %v367
      %v678 = vpack.c.b16 %v535, %v534
      %v679 = vpack.c.b16 %v537, %v536
      %v680 = vpack.c.b16 %v539, %v538
      %v681 = vpack.c.b16 %v541, %v540
      %v682 = vpack.c.b16 %v543, %v542
      %v683 = vpack.c.b16 %v545, %v544
      %v684 = vpack.c.b16 %v547, %v546
      %v685 = vpack.c.b16 %v549, %v548
      %v686 = vpack.c.b16 %v551, %v550
      %v687 = vpack.c.b16 %v553, %v552
      %v688 = vpack.c.b16 %v555, %v554
      %v689 = vpack.c.b16 %v557, %v556
      %v690 = vpack.c.b16 %v559, %v558
      %v691 = vpack.c.b16 %v561, %v560
      %v692 = vpack.c.b16 %v563, %v562
      %v693 = vpack.c.b16 %v565, %v564
      %v694 = vpack.c.b16 %v567, %v566
      %v695 = vpack.c.b16 %v569, %v568
      %v696 = vpack.c.b16 %v571, %v570
      %v697 = vpack.c.b16 %v573, %v572
      %v698 = vpack.c.b16 %v575, %v574
      %v699 = vpack.c.b16 %v577, %v576
      %v700 = vpack.c.b16 %v579, %v578
      %v701 = vpack.c.b16 %v581, %v580
      %v702 = vpack.c.b16 %v583, %v582
      %v703 = vpack.c.b16 %v585, %v584
      %v704 = vpack.c.b16 %v587, %v586
      %v705 = vpack.c.b16 %v589, %v588
      %v706 = vpack.c.b16 %v591, %v590
      %v707 = vpack.c.b16 %v593, %v592
      %v708 = vpack.c.b16 %v595, %v594
      %v709 = vpack.c.b16 %v597, %v596
      %v710 = vpack.c.b16 %v599, %v598
      %v711 = vpack.c.b16 %v601, %v600
      %v712 = vpack.c.b16 %v603, %v602
      %v713 = vpack.c.b16 %v605, %v604
      %v714 = vpack.c.b16 %v607, %v606
      %v715 = vpack.c.b16 %v609, %v608
      %v716 = vpack.c.b16 %v611, %v610
      %v717 = vpack.c.b16 %v613, %v612
      %v718 = vpack.c.b16 %v615, %v614
      %v719 = vpack.c.b16 %v617, %v616
      %v720 = vpack.c.b16 %v619, %v618
      %v721 = vpack.c.b16 %v621, %v620
      %v722 = vpack.c.b16 %v623, %v622
      %v723 = vpack.c.b16 %v625, %v624
      %v724 = vpack.c.b16 %v627, %v626
      %v725 = vpack.c.b16 %v629, %v628
      %v726 = vpack.c.b16 %v631, %v630
      %v727 = vpack.c.b16 %v633, %v632
      %v728 = vpack.c.b16 %v635, %v634
      %v729 = vpack.c.b16 %v637, %v636
      %v730 = vpack.c.b16 %v639, %v638
      %v731 = vpack.c.b16 %v641, %v640
      %v732 = vpack.c.b16 %v643, %v642
      %v733 = vpack.c.b16 %v645, %v644
      %v734 = vpack.c.b16 %v647, %v646
      %v735 = vpack.c.b16 %v649, %v648
      %v736 = vpack.c.b16 %v651, %v650
      %v737 = vpack.c.b16 %v653, %v652
      %v738 = vpack.c.b16 %v655, %v654
      %v739 = vpack.c.b16 %v657, %v656
      %v740 = vpack.c.b16 %v659, %v658
      %v741 = vpack.c.b16 %v661, %v660
      %v742 = vpack.c.b16 %v663, %v662
      %v743 = vpack.c.b16 %v665, %v664
      %v744 = vpack.c.b16 %v667, %v666
      %v745 = vpack.c.b16 %v669, %v668
      %v746 = vpack.c.b16 %v671, %v670
      %v747 = vpack.c.b16 %v673, %v672
      %v748 = vpack.c.b16 %v675, %v674
      %v749 = vpack.c.b16 %v677, %v676
      %822 = vmatpush.bf16.msra.mxu0 %v685
      %823 = vmatpush.bf16.msra.mxu0 %v684
      %824 = vmatpush.bf16.msra.mxu0 %v683
      %825 = vmatpush.bf16.msra.mxu0 %v682
      %826 = vmatpush.bf16.msra.mxu0 %v681
      %827 = vmatpush.bf16.msra.mxu0 %v680
      %828 = vmatpush.bf16.msra.mxu0 %v679
      %829 = vmatpush.bf16.msra.mxu0 %v678
      %830 = vmatmul.bf16.gmra.mxu0 %v370
      %v831 = vpop.f32.mrf.mxu0
      %v832 = vadd.f32 0.0, %v831
      %v833 = vpop.f32.mrf.mxu0
      %834 = vdwg.mxu0
      %835 = vmatpush.bf16.msra.mxu0 %v693
      %836 = vmatpush.bf16.msra.mxu0 %v692
      %837 = vmatpush.bf16.msra.mxu0 %v691
      %838 = vmatpush.bf16.msra.mxu0 %v690
      %839 = vmatpush.bf16.msra.mxu0 %v689
      %840 = vmatpush.bf16.msra.mxu0 %v688
      %841 = vmatpush.bf16.msra.mxu0 %v687
      %842 = vmatpush.bf16.msra.mxu0 %v686
      %843 = vmatmul.bf16.gmra.mxu0 %v371
      %v844 = vpop.f32.mrf.mxu0
      %v845 = vadd.f32 %v832, %v844
      %v846 = vpop.f32.mrf.mxu0
      %847 = vdwg.mxu0
      %848 = vmatpush.bf16.msra.mxu0 %v701
      %849 = vmatpush.bf16.msra.mxu0 %v700
      %850 = vmatpush.bf16.msra.mxu0 %v699
      %851 = vmatpush.bf16.msra.mxu0 %v698
      %852 = vmatpush.bf16.msra.mxu0 %v697
      %853 = vmatpush.bf16.msra.mxu0 %v696
      %854 = vmatpush.bf16.msra.mxu0 %v695
      %855 = vmatpush.bf16.msra.mxu0 %v694
      %856 = vmatmul.bf16.gmra.mxu0 %v372
      %v857 = vpop.f32.mrf.mxu0
      %v858 = vadd.f32 %v845, %v857
      %v859 = vpop.f32.mrf.mxu0
      %860 = vdwg.mxu0
      %861 = vmatpush.bf16.msra.mxu0 %v709
      %862 = vmatpush.bf16.msra.mxu0 %v708
      %863 = vmatpush.bf16.msra.mxu0 %v707
      %864 = vmatpush.bf16.msra.mxu0 %v706
      %865 = vmatpush.bf16.msra.mxu0 %v705
      %866 = vmatpush.bf16.msra.mxu0 %v704
      %867 = vmatpush.bf16.msra.mxu0 %v703
      %868 = vmatpush.bf16.msra.mxu0 %v702
      %869 = vmatmul.bf16.gmra.mxu0 %v373
      %v870 = vpop.f32.mrf.mxu0
      %v871 = vadd.f32 %v858, %v870
      %v872 = vpop.f32.mrf.mxu0
      %873 = vdwg.mxu0
      %874 = vmatpush.bf16.msra.mxu0 %v717
      %875 = vmatpush.bf16.msra.mxu0 %v716
      %876 = vmatpush.bf16.msra.mxu0 %v715
      %877 = vmatpush.bf16.msra.mxu0 %v714
      %878 = vmatpush.bf16.msra.mxu0 %v713
      %879 = vmatpush.bf16.msra.mxu0 %v712
      %880 = vmatpush.bf16.msra.mxu0 %v711
      %881 = vmatpush.bf16.msra.mxu0 %v710
      %882 = vmatmul.bf16.gmra.mxu0 %v374
      %v883 = vpop.f32.mrf.mxu0
      %v884 = vadd.f32 %v871, %v883
      %v885 = vpop.f32.mrf.mxu0
      %886 = vdwg.mxu0
      %887 = vmatpush.bf16.msra.mxu0 %v725
      %888 = vmatpush.bf16.msra.mxu0 %v724
      %889 = vmatpush.bf16.msra.mxu0 %v723
      %890 = vmatpush.bf16.msra.mxu0 %v722
      %891 = vmatpush.bf16.msra.mxu0 %v721
      %892 = vmatpush.bf16.msra.mxu0 %v720
      %893 = vmatpush.bf16.msra.mxu0 %v719
      %894 = vmatpush.bf16.msra.mxu0 %v718
      %895 = vmatmul.bf16.gmra.mxu0 %v375
      %v896 = vpop.f32.mrf.mxu0
      %v897 = vadd.f32 %v884, %v896
      %v898 = vpop.f32.mrf.mxu0
      %899 = vdwg.mxu0
      %900 = vmatpush.bf16.msra.mxu0 %v733
      %901 = vmatpush.bf16.msra.mxu0 %v732
      %902 = vmatpush.bf16.msra.mxu0 %v731
      %903 = vmatpush.bf16.msra.mxu0 %v730
      %904 = vmatpush.bf16.msra.mxu0 %v729
      %905 = vmatpush.bf16.msra.mxu0 %v728
      %906 = vmatpush.bf16.msra.mxu0 %v727
      %907 = vmatpush.bf16.msra.mxu0 %v726
      %908 = vmatmul.bf16.gmra.mxu0 %v376
      %v909 = vpop.f32.mrf.mxu0
      %v910 = vadd.f32 %v897, %v909
      %v911 = vpop.f32.mrf.mxu0
      %912 = vdwg.mxu0
      %913 = vmatpush.bf16.msra.mxu0 %v741
      %914 = vmatpush.bf16.msra.mxu0 %v740
      %915 = vmatpush.bf16.msra.mxu0 %v739
      %916 = vmatpush.bf16.msra.mxu0 %v738
      %917 = vmatpush.bf16.msra.mxu0 %v737
      %918 = vmatpush.bf16.msra.mxu0 %v736
      %919 = vmatpush.bf16.msra.mxu0 %v735
      %920 = vmatpush.bf16.msra.mxu0 %v734
      %921 = vmatmul.bf16.gmra.mxu0 %v377
      %v922 = vpop.f32.mrf.mxu0
      %v923 = vadd.f32 %v910, %v922
      %v924 = vpop.f32.mrf.mxu0
      %925 = vdwg.mxu0
      %926 = vmatpush.bf16.msra.mxu0 %v749
      %927 = vmatpush.bf16.msra.mxu0 %v748
      %928 = vmatpush.bf16.msra.mxu0 %v747
      %929 = vmatpush.bf16.msra.mxu0 %v746
      %930 = vmatpush.bf16.msra.mxu0 %v745
      %931 = vmatpush.bf16.msra.mxu0 %v744
      %932 = vmatpush.bf16.msra.mxu0 %v743
      %933 = vmatpush.bf16.msra.mxu0 %v742
      %934 = vmatmul.bf16.gmra.mxu0 %v380
      %v935 = vpop.f32.mrf.mxu0
      %v936 = vadd.f32 %v923, %v935
      %v937 = vpop.f32.mrf.mxu0
      %938 = vdwg.mxu0
      %v939 = vadd.f32 %v221, %v936
      %940 = vst [vmem:[#allocation2] sm:$0x3] %v939
      %p941 = scmp.eq.s32.totalorder %s19, 7
      // Predicated region
      $region37: #{net_forward.6} parent=31 // pred_check
        %p942 = pneg %p941
      $region38: #{net_forward.6} parent=31 // pred_check_branch
        %944 = sbr.rel (%p942) target = $region40
      $region39: #{net_forward.6} parent=31 // pred_region
        %v945 = vld [vmem:[#allocation2] sm:$0x3]
        %v946 = vld [vmem:[%s2] sm:$0x1]
        %v948 = vperm.slane %v946, 0
        %v950 = vadd.f32 %v945, %v948
        %v951 = vmax.f32 %v950, 0.0
        %952 = vst [vmem:[%s215] sm:$0x3] %v951
      $region40: #{net_forward.6} parent=31 // pred_fallthru
        _
      %p953 = scmp.lt.s32.totalorder %s18, 0
      %s954 = scalar_select %p953, %s18, 0
      %s955 = smul.addr %s954, 2
      %s956 = scalar_lea.vmem %s3, %s955
      // Predicated region
      $region41: #{net_forward.6} parent=31 // pred_check
        %p957 = pneg %p119
      $region42: #{net_forward.6} parent=31 // pred_check_branch
        %959 = sbr.rel (%p957) target = $region44
      $region43: #{net_forward.6} parent=31 // pred_region
        _
      $region44: #{net_forward.6} parent=31 // pred_fallthru
        _
      // Predicated region
      $region45: #{net_forward.6} parent=31 // pred_check
        %p960 = pneg %p119
      $region46: #{net_forward.6} parent=31 // pred_check_branch
        %962 = sbr.rel (%p960) target = $region48
      $region47: #{net_forward.6} parent=31 // pred_region
        %p963 = scmp.lt.s32.totalorder %s18, 0
        %s964 = scalar_select %p963, %s18, 0
        %s965 = smul.addr %s964, 2
        %s966 = scalar_lea.vmem %s3, %s965
      $region48: #{net_forward.6} parent=31 // pred_fallthru
        _
    $region32: #{net_forward.6} parent=5 // pred_fallthru
      _
    %p967 = scmp.le.s32.totalorder 2, %s9
    // Predicated region
    $region49: #{net_forward.6} parent=5 // pred_check
      %p968 = pneg %p967
    $region50: #{net_forward.6} parent=5 // pred_check_branch
      %970 = sbr.rel (%p968) target = $region52
    $region51: #{net_forward.6} parent=5 // pred_region
      %s971 = ssub.s32 %s9, 2
    $region52: #{net_forward.6} parent=5 // pred_fallthru
      _
  $region6: #{net_forward.6} parent=0 // loop_footer
    %s13 = sadd.s32 1, %s9
  $region7: #{net_forward.6} parent=0 // loop_footer_branch
    %8 = sbr.rel target = $region3
  $region8: #{net_forward.6} parent=0 // loop_exit
    _

// kernel: net_forward.7
$region0: #{net_forward.7}
  #allocation0 [shape = 'u32[]', space=smem, size = 0x4, offset = 0x4, fixed_abs, tag = 'smem constant byte address 0x4 - core index']
  #allocation1 [shape = 'u32[72,128]{1,0:T(1,128)}', space=vmem, size = 0x9000, scoped, tag = 'internal scratch']
  %s0 = inlined_call_operand.vmem [shape: bf16[2,128], index: 0, kind: input, shape index: {}]
  %s1 = inlined_call_operand.vmem [shape: bf16[128,10], index: 1, kind: input, shape index: {}]
  %s2 = inlined_call_operand.vmem [shape: f32[1,10], index: 2, kind: input, shape index: {}]
  %s3 = inlined_call_operand.hbm [shape: f32[2,10], index: 3, kind: output, shape index: {}]
  %s4 = sld [smem:[#allocation0]]
  $region22: #{net_forward.7} parent=0
    _
  %s6 = ssub.s32 1, %s4
  %s7 = scalar_select 0, %s6, %s4
  $region1: #{net_forward.7} parent=0
    #allocation2 [shape = 'u8[1024]{0}', space=vmem, size = 0x400, scoped, tag = 'output window, operand 0, single buffered']
    #allocation3 [shape = 's32[1]{0}', space=sflag, size = 0x4, scoped, tag = 'scoped memory for net_forward.7']
    %8 = vsyncpa [#allocation3], 0
    // Predicated region
    $region2: #{net_forward.7} parent=1 // pred_check
      _
    $region3: #{net_forward.7} parent=1 // pred_check_branch
      %10 = sbr.rel (0) target = $region5
    $region4: #{net_forward.7} parent=1 // pred_region
      _
    $region5: #{net_forward.7} parent=1 // pred_fallthru
      _
    // Predicated region
    $region6: #{net_forward.7} parent=1 // pred_check
      _
    $region7: #{net_forward.7} parent=1 // pred_check_branch
      %12 = sbr.rel (0) target = $region9
    $region8: #{net_forward.7} parent=1 // pred_region
      _
    $region9: #{net_forward.7} parent=1 // pred_fallthru
      _
    // Predicated region
    $region10: #{net_forward.7} parent=1 // pred_check
      _
    $region11: #{net_forward.7} parent=1 // pred_check_branch
      %14 = sbr.rel (0) target = $region13
    $region12: #{net_forward.7} parent=1 // pred_region
      _
    $region13: #{net_forward.7} parent=1 // pred_fallthru
      _
    %v15 = vld [vmem:[%s0] sm:$0x1]
    %v16 = vld [vmem:[%s1] sm:$0xf]
    %v17 = vld [vmem:[%s1 + $0x4] sm:$0xf]
    %v18 = vld [vmem:[%s1 + $0x8] sm:$0xf]
    %v19 = vld [vmem:[%s1 + $0xc] sm:$0xf]
    %v20 = vld [vmem:[%s1 + $0x10] sm:$0xf]
    %v21 = vld [vmem:[%s1 + $0x14] sm:$0xf]
    %v22 = vld [vmem:[%s1 + $0x18] sm:$0xf]
    %v23 = vld [vmem:[%s1 + $0x1c] sm:$0xf]
    %v24 = vld [vmem:[%s1 + $0x20] sm:$0xf]
    %v25 = vld [vmem:[%s1 + $0x24] sm:$0xf]
    %v26 = vld [vmem:[%s1 + $0x28] sm:$0xf]
    %v27 = vld [vmem:[%s1 + $0x2c] sm:$0xf]
    %v28 = vld [vmem:[%s1 + $0x30] sm:$0xf]
    %v29 = vld [vmem:[%s1 + $0x34] sm:$0xf]
    %v30 = vld [vmem:[%s1 + $0x38] sm:$0xf]
    %v31 = vld [vmem:[%s1 + $0x3c] sm:$0xf]
    %v32 = vld [vmem:[%s2] sm:$0x1]
    %v34 = vperm.slane %v32, 0
    %v52 = vunpack.c.l.b16 %v16
    %v53 = vunpack.c.l.b16 %v17
    %v54 = vunpack.c.l.b16 %v18
    %v55 = vunpack.c.l.b16 %v19
    %v56 = vunpack.c.l.b16 %v20
    %v57 = vunpack.c.l.b16 %v21
    %v58 = vunpack.c.l.b16 %v22
    %v59 = vunpack.c.l.b16 %v23
    %v60 = vunpack.c.l.b16 %v24
    %v61 = vunpack.c.l.b16 %v25
    %v62 = vunpack.c.l.b16 %v26
    %v63 = vunpack.c.l.b16 %v27
    %v64 = vunpack.c.l.b16 %v28
    %v65 = vunpack.c.l.b16 %v29
    %v66 = vunpack.c.l.b16 %v30
    %v67 = vunpack.c.l.b16 %v31
    %v68 = vpack.c.b16 %v53, %v52
    %v69 = vpack.c.b16 %v55, %v54
    %v70 = vpack.c.b16 %v57, %v56
    %v71 = vpack.c.b16 %v59, %v58
    %v72 = vpack.c.b16 %v61, %v60
    %v73 = vpack.c.b16 %v63, %v62
    %v74 = vpack.c.b16 %v65, %v64
    %v75 = vpack.c.b16 %v67, %v66
    %84 = vmatpush.bf16.msra.mxu0 %v75
    %85 = vmatpush.bf16.msra.mxu0 %v74
    %86 = vmatpush.bf16.msra.mxu0 %v73
    %87 = vmatpush.bf16.msra.mxu0 %v72
    %88 = vmatpush.bf16.msra.mxu0 %v71
    %89 = vmatpush.bf16.msra.mxu0 %v70
    %90 = vmatpush.bf16.msra.mxu0 %v69
    %91 = vmatpush.bf16.msra.mxu0 %v68
    %92 = vmatmul.bf16.gmra.mxu0 %v15
    %v93 = vpop.f32.mrf.mxu0
    %v94 = vadd.f32 %v34, %v93
    %v95 = vpop.f32.mrf.mxu0
    %96 = vdwg.mxu0
    %vm97 = vcmask 74752
    %v98 = vsel %vm97, %v94, -inf
    %99 = vmax.xlane.f32.xlu0 %v98
    %v100 = vpop.xlane.xlu0 %99
    %v101 = vsub.f32 %v94, %v100
    %v102 = vmul.f32 %v101, 1.442695
    %v103 = vpow.pop %v102
    %v104 = vsel %vm97, %v103, 0.0
    %105 = vadd.xlane.f32.xlu0 %v104
    %v106 = vpop.xlane.xlu0 %105
    %v107 = vlog2.pop %v106
    %v108 = vmul.f32 %v107, 0.6931472
    %v109 = vsub.f32 %v101, %v108
    %110 = vst.msk [vmem:[#allocation2] sm:$0x3] %vm97, %v109
    // Predicated region
    $region14: #{net_forward.7} parent=1 // pred_check
      _
    $region15: #{net_forward.7} parent=1 // pred_check_branch
      %112 = sbr.rel (0) target = $region17
    $region16: #{net_forward.7} parent=1 // pred_region
      %114 = vsyncadd [#allocation3], 0
      %s116 = sshll.u32 [#allocation2], 4
      %s117 = int_to_ptr.vmem [resolvable:$true] %s116
      %s118 = sshll.u32 %s3, 4
      %s119 = int_to_ptr.hbm [resolvable:$true] %s118
      %121 = dma.vmem_to_hbm [thread:$0]  %s117, 32, %s119, [#allocation3]
    $region17: #{net_forward.7} parent=1 // pred_fallthru
      _
    // Predicated region
    $region18: #{net_forward.7} parent=1 // pred_check
      _
    $region19: #{net_forward.7} parent=1 // pred_check_branch
      %123 = sbr.rel (0) target = $region21
    $region20: #{net_forward.7} parent=1 // pred_region
      %125 = dma.done [#allocation3], 32
    $region21: #{net_forward.7} parent=1 // pred_fallthru
      _
    %126 = vsyncpa [#allocation3], 1

// kernel: net_forward.5
$region0: #{net_forward.5}
  #allocation0 [shape = 'u32[]', space=smem, size = 0x4, offset = 0x4, fixed_abs, tag = 'smem constant byte address 0x4 - core index']
  #allocation1 [shape = 'u32[72,128]{1,0:T(1,128)}', space=vmem, size = 0x9000, scoped, tag = 'internal scratch']
  %s0 = inlined_call_operand.vmem [shape: f32[2,26,26,32], index: 0, kind: input, shape index: {}]
  %s1 = inlined_call_operand.vmem [shape: bf16[9,32,64], index: 1, kind: input, shape index: {}]
  %s2 = inlined_call_operand.hbm [shape: f32[1,64], index: 2, kind: input, shape index: {}]
  %s3 = inlined_call_operand.vmem [shape: bf16[2,12,24,64], index: 3, kind: output, shape index: {}]
  %s4 = sld [smem:[#allocation0]]
  $region49: #{net_forward.5} parent=0
    _
  %s6 = ssub.s32 1, %s4
  %s7 = scalar_select 0, %s6, %s4
  $region1: #{net_forward.5} parent=0
    #allocation2 [shape = 'u8[512]{0}', space=vmem, size = 0x400, scoped, tag = 'input window, operand 2, single buffered']
    #allocation3 [shape = 's32[2]{0}', space=sflag, size = 0x8, scoped, tag = 'scoped memory for net_forward.5']
    %8 = vsyncpa [#allocation3], 0
    loop: start=0, step=1, limit=4
    $region2: #{net_forward.5} parent=1 // loop_pre_header
      _
    $region3: #{net_forward.5} parent=1 // loop_header
      %s10 = sphi 0, %s14
      %p11 = scmp.ge.s32.totalorder %s10, 4
      %s20 = sphi 0, %s22
      %s23 = sphi 0, %s20
      %s24 = sphi 0, %s23
      %s40 = sphi 0, %s24
      %s44 = sphi 0, %s44
      %s46 = sphi 0, %s44
      %s47 = sphi 0, %s46
      %s61 = sphi 0, %s47
      %s65 = sphi 0, %s65
      %s67 = sphi 0, %s65
      %s68 = sphi 0, %s67
      %s82 = sphi 0, %s68
      %s88 = sphi 0, %s90
      %s91 = sphi 0, %s88
      %s92 = sphi 0, %s91
      %s108 = sphi 0, %s92
    $region4: #{net_forward.5} parent=1 // loop_header_branch
      %13 = sbr.rel (%p11) target = $region8
    $region5: #{net_forward.5} parent=1 // loop_body
      %s15 = ssub.s32 %s10, 1
      %s16 = ssub.s32 %s10, 2
      %s17 = sadd.s32 %s10, 1
      %s18 = ssub.s32 %s10, %s17
      %p19 = scmp.eq.s32.totalorder %s18, 0
      %s21 = sadd.s32 %s20, 1
      %s22 = scalar_select %p19, %s20, %s21
      %p25 = pneg %p19
      %p26 = scmp.eq.s32.totalorder %s10, 1
      %p27 = por %p25, %p26
      %p28 = scmp.ne.s32.totalorder %s20, %s23
      %p29 = scmp.eq.s32.totalorder %s10, 0
      %p30 = por %p28, %p29
      %p31 = scmp.ne.s32.totalorder %s20, %s23
      %p32 = scmp.eq.s32.totalorder %s15, 1
      %p33 = por %p31, %p32
      %p34 = scmp.ne.s32.totalorder %s23, %s24
      %p35 = scmp.eq.s32.totalorder %s15, 0
      %p36 = por %p34, %p35
      %p37 = scmp.ne.s32.totalorder %s23, %s24
      %p38 = scmp.eq.s32.totalorder %s16, 1
      %p39 = por %p37, %p38
      %p41 = scmp.ne.s32.totalorder %s24, %s40
      %p42 = scmp.eq.s32.totalorder %s16, 0
      %p43 = por %p41, %p42
      %s45 = sadd.s32 %s44, 1
      %p48 = scmp.eq.s32.totalorder %s10, 1
      %p49 = scmp.ne.s32.totalorder %s44, %s46
      %p50 = scmp.eq.s32.totalorder %s10, 0
      %p51 = por %p49, %p50
      %p52 = scmp.ne.s32.totalorder %s44, %s46
      %p53 = scmp.eq.s32.totalorder %s15, 1
      %p54 = por %p52, %p53
      %p55 = scmp.ne.s32.totalorder %s46, %s47
      %p56 = scmp.eq.s32.totalorder %s15, 0
      %p57 = por %p55, %p56
      %p58 = scmp.ne.s32.totalorder %s46, %s47
      %p59 = scmp.eq.s32.totalorder %s16, 1
      %p60 = por %p58, %p59
      %p62 = scmp.ne.s32.totalorder %s47, %s61
      %p63 = scmp.eq.s32.totalorder %s16, 0
      %p64 = por %p62, %p63
      %s66 = sadd.s32 %s65, 1
      %p69 = scmp.eq.s32.totalorder %s10, 1
      %p70 = scmp.ne.s32.totalorder %s65, %s67
      %p71 = scmp.eq.s32.totalorder %s10, 0
      %p72 = por %p70, %p71
      %p73 = scmp.ne.s32.totalorder %s65, %s67
      %p74 = scmp.eq.s32.totalorder %s15, 1
      %p75 = por %p73, %p74
      %p76 = scmp.ne.s32.totalorder %s67, %s68
      %p77 = scmp.eq.s32.totalorder %s15, 0
      %p78 = por %p76, %p77
      %p79 = scmp.ne.s32.totalorder %s67, %s68
      %p80 = scmp.eq.s32.totalorder %s16, 1
      %p81 = por %p79, %p80
      %p83 = scmp.ne.s32.totalorder %s68, %s82
      %p84 = scmp.eq.s32.totalorder %s16, 0
      %p85 = por %p83, %p84
      %s86 = ssub.s32 %s10, %s17
      %p87 = scmp.eq.s32.totalorder %s86, 0
      %s89 = sadd.s32 %s88, 1
      %s90 = scalar_select %p87, %s88, %s89
      %p93 = pneg %p87
      %p94 = scmp.eq.s32.totalorder %s10, 1
      %p95 = por %p93, %p94
      %p96 = scmp.ne.s32.totalorder %s88, %s91
      %p97 = scmp.eq.s32.totalorder %s10, 0
      %p98 = por %p96, %p97
      %p99 = scmp.ne.s32.totalorder %s88, %s91
      %p100 = scmp.eq.s32.totalorder %s15, 1
      %p101 = por %p99, %p100
      %p102 = scmp.ne.s32.totalorder %s91, %s92
      %p103 = scmp.eq.s32.totalorder %s15, 0
      %p104 = por %p102, %p103
      %p105 = scmp.ne.s32.totalorder %s91, %s92
      %p106 = scmp.eq.s32.totalorder %s16, 1
      %p107 = por %p105, %p106
      %p109 = scmp.ne.s32.totalorder %s92, %s108
      %p110 = scmp.eq.s32.totalorder %s16, 0
      %p111 = por %p109, %p110
      %p112 = scmp.le.s32.totalorder 1, %s10
      %p113 = scmp.lt.s32.totalorder %s10, 3
      %p114 = pnand %p112, %p113
      %p115 = pneg %p114
      // Predicated region
      $region9: #{net_forward.5} parent=5 // pred_check
        _
      $region10: #{net_forward.5} parent=5 // pred_check_branch
        %117 = sbr.rel (%p114) target = $region12
      $region11: #{net_forward.5} parent=5 // pred_region
        %s118 = ssub.s32 %s10, 1
        // Predicated region
        $region13: #{net_forward.5} parent=11 // pred_check
          %p119 = pneg %p57
        $region14: #{net_forward.5} parent=11 // pred_check_branch
          %121 = sbr.rel (%p119) target = $region16
        $region15: #{net_forward.5} parent=11 // pred_region
          _
        $region16: #{net_forward.5} parent=11 // pred_fallthru
          _
        // Predicated region
        $region17: #{net_forward.5} parent=11 // pred_check
          %p122 = pneg %p78
        $region18: #{net_forward.5} parent=11 // pred_check_branch
          %124 = sbr.rel (%p122) target = $region20
        $region19: #{net_forward.5} parent=11 // pred_region
          %126 = vsyncadd [#allocation3], 0
          %s128 = sshll.u32 %s2, 4
          %s129 = int_to_ptr.hbm [resolvable:$true] %s128
          %s130 = sshll.u32 [#allocation2], 4
          %s131 = int_to_ptr.vmem [resolvable:$true] %s130
          %133 = dma.hbm_to_vmem [thread:$0]  %s129, 16, %s131, [#allocation3]
        $region20: #{net_forward.5} parent=11 // pred_fallthru
          _
      $region12: #{net_forward.5} parent=5 // pred_fallthru
        _
      %p134 = scmp.lt.s32.totalorder %s10, 2
      // Predicated region
      $region21: #{net_forward.5} parent=5 // pred_check
        %p135 = pneg %p134
      $region22: #{net_forward.5} parent=5 // pred_check_branch
        %137 = sbr.rel (%p135) target = $region24
      $region23: #{net_forward.5} parent=5 // pred_region
        // Predicated region
        $region25: #{net_forward.5} parent=23 // pred_check
          %p138 = pneg %p30
        $region26: #{net_forward.5} parent=23 // pred_check_branch
          %140 = sbr.rel (%p138) target = $region28
        $region27: #{net_forward.5} parent=23 // pred_region
          %p141 = scmp.lt.s32.totalorder %s10, 1
          %s142 = scalar_select %p141, %s10, 1
          %s143 = smul.addr %s142, 104
          %s144 = smul.addr %s143, 8
          %s145 = scalar_lea.vmem %s0, %s144
        $region28: #{net_forward.5} parent=23 // pred_fallthru
          _
      $region24: #{net_forward.5} parent=5 // pred_fallthru
        _
      %p146 = scmp.le.s32.totalorder 1, %s10
      %p147 = scmp.lt.s32.totalorder %s10, 3
      %p148 = pnand %p146, %p147
      %p149 = pneg %p148
      // Predicated region
      $region29: #{net_forward.5} parent=5 // pred_check
        _
      $region30: #{net_forward.5} parent=5 // pred_check_branch
        %151 = sbr.rel (%p148) target = $region32
      $region31: #{net_forward.5} parent=5 // pred_region
        %s152 = ssub.s32 %s10, 1
        // Predicated region
        $region33: #{net_forward.5} parent=31 // pred_check
          %p153 = pneg %p78
        $region34: #{net_forward.5} parent=31 // pred_check_branch
          %155 = sbr.rel (%p153) target = $region36
        $region35: #{net_forward.5} parent=31 // pred_region
          %157 = dma.done [#allocation3], 16
        $region36: #{net_forward.5} parent=31 // pred_fallthru
          _
        %p158 = scmp.lt.s32.totalorder %s15, 1
        %s159 = scalar_select %p158, %s15, 1
        %s160 = smul.addr %s159, 104
        %s161 = smul.addr %s160, 8
        %s162 = scalar_lea.vmem %s0, %s161
        %p163 = pneg %p36
        %p164 = pneg %p33
        %p165 = pneg %p57
        %p166 = pneg %p54
        %p167 = pneg %p78
        %p168 = pneg %p75
        %p169 = pneg %p104
        %p170 = pneg %p101
        %p171 = scmp.lt.s32.totalorder %s15, 1
        %s172 = scalar_select %p171, %s15, 1
        %s173 = smul.addr %s172, 36
        %s174 = smul.addr %s173, 4
        %s175 = scalar_lea.vmem %s3, %s174
        %p176 = scmp.lt.s32.totalorder %s15, 1
        %s177 = scalar_select %p176, %s15, 1
        %s178 = smul.addr %s177, 104
        %s179 = smul.addr %s178, 8
        %s180 = scalar_lea.vmem %s0, %s179
        %p181 = scmp.lt.s32.totalorder %s15, 1
        %s182 = scalar_select %p181, %s15, 1
        %s183 = smul.addr %s182, 36
        %s184 = smul.addr %s183, 4
        %s185 = scalar_lea.vmem %s3, %s184
        %v187 = vld [vmem:[%s180] sm:$0xff]
        %v188 = vld [vmem:[%s180 + $0x8] sm:$0xff]
        %v189 = vld [vmem:[%s180 + $0x10] sm:$0xff]
        %v190 = vld [vmem:[%s180 + $0x18] sm:$0x3]
        %v191 = vld [vmem:[%s180 + $0x20] sm:$0xff]
        %v192 = vld [vmem:[%s180 + $0x28] sm:$0xff]
        %v193 = vld [vmem:[%s180 + $0x30] sm:$0xff]
        %v194 = vld [vmem:[%s180 + $0x38] sm:$0x3]
        %v195 = vld [vmem:[%s180 + $0x40] sm:$0xff]
        %v196 = vld [vmem:[%s180 + $0x48] sm:$0xff]
        %v197 = vld [vmem:[%s180 + $0x50] sm:$0xff]
        %v198 = vld [vmem:[%s180 + $0x58] sm:$0x3]
        %v199 = vld [vmem:[%s180 + $0x60] sm:$0xff]
        %v200 = vld [vmem:[%s180 + $0x68] sm:$0xff]
        %v201 = vld [vmem:[%s180 + $0x70] sm:$0xff]
        %v202 = vld [vmem:[%s180 + $0x78] sm:$0x3]
        %v203 = vld [vmem:[%s180 + $0x80] sm:$0xff]
        %v204 = vld [vmem:[%s180 + $0x88] sm:$0xff]
        %v205 = vld [vmem:[%s180 + $0x90] sm:$0xff]
        %v206 = vld [vmem:[%s180 + $0x98] sm:$0x3]
        %v207 = vld [vmem:[%s180 + $0xa0] sm:$0xff]
        %v208 = vld [vmem:[%s180 + $0xa8] sm:$0xff]
        %v209 = vld [vmem:[%s180 + $0xb0] sm:$0xff]
        %v210 = vld [vmem:[%s180 + $0xb8] sm:$0x3]
        %v211 = vld [vmem:[%s180 + $0xc0] sm:$0xff]
        %v212 = vld [vmem:[%s180 + $0xc8] sm:$0xff]
        %v213 = vld [vmem:[%s180 + $0xd0] sm:$0xff]
        %v214 = vld [vmem:[%s180 + $0xd8] sm:$0x3]
        %v215 = vld [vmem:[%s180 + $0xe0] sm:$0xff]
        %v216 = vld [vmem:[%s180 + $0xe8] sm:$0xff]
        %v217 = vld [vmem:[%s180 + $0xf0] sm:$0xff]
        %v218 = vld [vmem:[%s180 + $0xf8] sm:$0x3]
        %v219 = vld [vmem:[%s180 + $0x100] sm:$0xff]
        %v220 = vld [vmem:[%s180 + $0x108] sm:$0xff]
        %v221 = vld [vmem:[%s180 + $0x110] sm:$0xff]
        %v222 = vld [vmem:[%s180 + $0x118] sm:$0x3]
        %v223 = vld [vmem:[%s180 + $0x120] sm:$0xff]
        %v224 = vld [vmem:[%s180 + $0x128] sm:$0xff]
        %v225 = vld [vmem:[%s180 + $0x130] sm:$0xff]
        %v226 = vld [vmem:[%s180 + $0x138] sm:$0x3]
        %v227 = vld [vmem:[%s180 + $0x140] sm:$0xff]
        %v228 = vld [vmem:[%s180 + $0x148] sm:$0xff]
        %v229 = vld [vmem:[%s180 + $0x150] sm:$0xff]
        %v230 = vld [vmem:[%s180 + $0x158] sm:$0x3]
        %v231 = vld [vmem:[%s180 + $0x160] sm:$0xff]
        %v232 = vld [vmem:[%s180 + $0x168] sm:$0xff]
        %v233 = vld [vmem:[%s180 + $0x170] sm:$0xff]
        %v234 = vld [vmem:[%s180 + $0x178] sm:$0x3]
        %v235 = vld [vmem:[%s180 + $0x180] sm:$0xff]
        %v236 = vld [vmem:[%s180 + $0x188] sm:$0xff]
        %v237 = vld [vmem:[%s180 + $0x190] sm:$0xff]
        %v238 = vld [vmem:[%s180 + $0x198] sm:$0x3]
        %v239 = vld [vmem:[%s180 + $0x1a0] sm:$0xff]
        %v240 = vld [vmem:[%s180 + $0x1a8] sm:$0xff]
        %v241 = vld [vmem:[%s180 + $0x1b0] sm:$0xff]
        %v242 = vld [vmem:[%s180 + $0x1b8] sm:$0x3]
        %v243 = vld [vmem:[%s180 + $0x1c0] sm:$0xff]
        %v244 = vld [vmem:[%s180 + $0x1c8] sm:$0xff]
        %v245 = vld [vmem:[%s180 + $0x1d0] sm:$0xff]
        %v246 = vld [vmem:[%s180 + $0x1d8] sm:$0x3]
        %v247 = vld [vmem:[%s180 + $0x1e0] sm:$0xff]
        %v248 = vld [vmem:[%s180 + $0x1e8] sm:$0xff]
        %v249 = vld [vmem:[%s180 + $0x1f0] sm:$0xff]
        %v250 = vld [vmem:[%s180 + $0x1f8] sm:$0x3]
        %v251 = vld [vmem:[%s180 + $0x200] sm:$0xff]
        %v252 = vld [vmem:[%s180 + $0x208] sm:$0xff]
        %v253 = vld [vmem:[%s180 + $0x210] sm:$0xff]
        %v254 = vld [vmem:[%s180 + $0x218] sm:$0x3]
        %v255 = vld [vmem:[%s180 + $0x220] sm:$0xff]
        %v256 = vld [vmem:[%s180 + $0x228] sm:$0xff]
        %v257 = vld [vmem:[%s180 + $0x230] sm:$0xff]
        %v258 = vld [vmem:[%s180 + $0x238] sm:$0x3]
        %v259 = vld [vmem:[%s180 + $0x240] sm:$0xff]
        %v260 = vld [vmem:[%s180 + $0x248] sm:$0xff]
        %v261 = vld [vmem:[%s180 + $0x250] sm:$0xff]
        %v262 = vld [vmem:[%s180 + $0x258] sm:$0x3]
        %v263 = vld [vmem:[%s180 + $0x260] sm:$0xff]
        %v264 = vld [vmem:[%s180 + $0x268] sm:$0xff]
        %v265 = vld [vmem:[%s180 + $0x270] sm:$0xff]
        %v266 = vld [vmem:[%s180 + $0x278] sm:$0x3]
        %v267 = vld [vmem:[%s180 + $0x280] sm:$0xff]
        %v268 = vld [vmem:[%s180 + $0x288] sm:$0xff]
        %v269 = vld [vmem:[%s180 + $0x290] sm:$0xff]
        %v270 = vld [vmem:[%s180 + $0x298] sm:$0x3]
        %v271 = vld [vmem:[%s180 + $0x2a0] sm:$0xff]
        %v272 = vld [vmem:[%s180 + $0x2a8] sm:$0xff]
        %v273 = vld [vmem:[%s180 + $0x2b0] sm:$0xff]
        %v274 = vld [vmem:[%s180 + $0x2b8] sm:$0x3]
        %v275 = vld [vmem:[%s180 + $0x2c0] sm:$0xff]
        %v276 = vld [vmem:[%s180 + $0x2c8] sm:$0xff]
        %v277 = vld [vmem:[%s180 + $0x2d0] sm:$0xff]
        %v278 = vld [vmem:[%s180 + $0x2d8] sm:$0x3]
        %v279 = vld [vmem:[%s180 + $0x2e0] sm:$0xff]
        %v280 = vld [vmem:[%s180 + $0x2e8] sm:$0xff]
        %v281 = vld [vmem:[%s180 + $0x2f0] sm:$0xff]
        %v282 = vld [vmem:[%s180 + $0x2f8] sm:$0x3]
        %v283 = vld [vmem:[%s180 + $0x300] sm:$0xff]
        %v284 = vld [vmem:[%s180 + $0x308] sm:$0xff]
        %v285 = vld [vmem:[%s180 + $0x310] sm:$0xff]
        %v286 = vld [vmem:[%s180 + $0x318] sm:$0x3]
        %v287 = vld [vmem:[%s180 + $0x320] sm:$0xff]
        %v288 = vld [vmem:[%s180 + $0x328] sm:$0xff]
        %v289 = vld [vmem:[%s180 + $0x330] sm:$0xff]
        %v290 = vld [vmem:[%s180 + $0x338] sm:$0x3]
        %v291 = vpack.c.bf16 %v188, %v187
        %v292 = vpack.c.bf16 %v191, %v189
        %v293 = vpack.c.bf16 %v193, %v192
        %v294 = vpack.c.bf16 %v196, %v195
        %v295 = vpack.c.bf16 %v199, %v197
        %v296 = vpack.c.bf16 %v201, %v200
        %v297 = vpack.c.bf16 %v204, %v203
        %v298 = vpack.c.bf16 %v207, %v205
        %v299 = vpack.c.bf16 %v209, %v208
        %v300 = vpack.c.bf16 %v212, %v211
        %v301 = vpack.c.bf16 %v215, %v213
        %v302 = vpack.c.bf16 %v217, %v216
        %v303 = vpack.c.bf16 %v220, %v219
        %v304 = vpack.c.bf16 %v223, %v221
        %v305 = vpack.c.bf16 %v225, %v224
        %v306 = vpack.c.bf16 %v228, %v227
        %v307 = vpack.c.bf16 %v231, %v229
        %v308 = vpack.c.bf16 %v233, %v232
        %v309 = vpack.c.bf16 %v236, %v235
        %v310 = vpack.c.bf16 %v239, %v237
        %v311 = vpack.c.bf16 %v241, %v240
        %v312 = vpack.c.bf16 %v244, %v243
        %v313 = vpack.c.bf16 %v247, %v245
        %v314 = vpack.c.bf16 %v249, %v248
        %v315 = vpack.c.bf16 %v252, %v251
        %v316 = vpack.c.bf16 %v255, %v253
        %v317 = vpack.c.bf16 %v257, %v256
        %v318 = vpack.c.bf16 %v260, %v259
        %v319 = vpack.c.bf16 %v263, %v261
        %v320 = vpack.c.bf16 %v265, %v264
        %v321 = vpack.c.bf16 %v268, %v267
        %v322 = vpack.c.bf16 %v271, %v269
        %v323 = vpack.c.bf16 %v273, %v272
        %v324 = vpack.c.bf16 %v276, %v275
        %v325 = vpack.c.bf16 %v279, %v277
        %v326 = vpack.c.bf16 %v281, %v280
        %v327 = vld [vmem:[%s1] sm:$0xf]
        %v328 = vld [vmem:[%s1 + $0x4] sm:$0xf]
        %v329 = vld [vmem:[%s1 + $0x8] sm:$0xf]
        %v330 = vld [vmem:[%s1 + $0xc] sm:$0xf]
        %vm427 = vcmask 1046528
        %v428 = vrot.slane %v187, 1
        %v429 = vrot.slane %v188, 1
        %v430 = vsel %vm427, %v428, %v429
        %v431 = vrot.slane %v189, 1
        %v432 = vsel %vm427, %v429, %v431
        %v433 = vrot.slane %v190, 1
        %v434 = vsel %vm427, %v431, %v433
        %v435 = vrot.slane %v191, 1
        %v436 = vrot.slane %v192, 1
        %v437 = vsel %vm427, %v435, %v436
        %v438 = vrot.slane %v193, 1
        %v439 = vsel %vm427, %v436, %v438
        %v440 = vrot.slane %v194, 1
        %v441 = vsel %vm427, %v438, %v440
        %v442 = vrot.slane %v195, 1
        %v443 = vrot.slane %v196, 1
        %v444 = vsel %vm427, %v442, %v443
        %v445 = vrot.slane %v197, 1
        %v446 = vsel %vm427, %v443, %v445
        %v447 = vrot.slane %v198, 1
        %v448 = vsel %vm427, %v445, %v447
        %v449 = vrot.slane %v199, 1
        %v450 = vrot.slane %v200, 1
        %v451 = vsel %vm427, %v449, %v450
        %v452 = vrot.slane %v201, 1
        %v453 = vsel %vm427, %v450, %v452
        %v454 = vrot.slane %v202, 1
        %v455 = vsel %vm427, %v452, %v454
        %v456 = vrot.slane %v203, 1
        %v457 = vrot.slane %v204, 1
        %v458 = vsel %vm427, %v456, %v457
        %v459 = vrot.slane %v205, 1
        %v460 = vsel %vm427, %v457, %v459
        %v461 = vrot.slane %v206, 1
        %v462 = vsel %vm427, %v459, %v461
        %v463 = vrot.slane %v207, 1
        %v464 = vrot.slane %v208, 1
        %v465 = vsel %vm427, %v463, %v464
        %v466 = vrot.slane %v209, 1
        %v467 = vsel %vm427, %v464, %v466
        %v468 = vrot.slane %v210, 1
        %v469 = vsel %vm427, %v466, %v468
        %v470 = vrot.slane %v211, 1
        %v471 = vrot.slane %v212, 1
        %v472 = vsel %vm427, %v470, %v471
        %v473 = vrot.slane %v213, 1
        %v474 = vsel %vm427, %v471, %v473
        %v475 = vrot.slane %v214, 1
        %v476 = vsel %vm427, %v473, %v475
        %v477 = vrot.slane %v215, 1
        %v478 = vrot.slane %v216, 1
        %v479 = vsel %vm427, %v477, %v478
        %v480 = vrot.slane %v217, 1
        %v481 = vsel %vm427, %v478, %v480
        %v482 = vrot.slane %v218, 1
        %v483 = vsel %vm427, %v480, %v482
        %v484 = vrot.slane %v219, 1
        %v485 = vrot.slane %v220, 1
        %v486 = vsel %vm427, %v484, %v485
        %v487 = vrot.slane %v221, 1
        %v488 = vsel %vm427, %v485, %v487
        %v489 = vrot.slane %v222, 1
        %v490 = vsel %vm427, %v487, %v489
        %v491 = vrot.slane %v223, 1
        %v492 = vrot.slane %v224, 1
        %v493 = vsel %vm427, %v491, %v492
        %v494 = vrot.slane %v225, 1
        %v495 = vsel %vm427, %v492, %v494
        %v496 = vrot.slane %v226, 1
        %v497 = vsel %vm427, %v494, %v496
        %v498 = vrot.slane %v227, 1
        %v499 = vrot.slane %v228, 1
        %v500 = vsel %vm427, %v498, %v499
        %v501 = vrot.slane %v229, 1
        %v502 = vsel %vm427, %v499, %v501
        %v503 = vrot.slane %v230, 1
        %v504 = vsel %vm427, %v501, %v503
        %v505 = vrot.slane %v231, 1
        %v506 = vrot.slane %v232, 1
        %v507 = vsel %vm427, %v505, %v506
        %v508 = vrot.slane %v233, 1
        %v509 = vsel %vm427, %v506, %v508
        %v510 = vrot.slane %v234, 1
        %v511 = vsel %vm427, %v508, %v510
        %v512 = vrot.slane %v235, 1
        %v513 = vrot.slane %v236, 1
        %v514 = vsel %vm427, %v512, %v513
        %v515 = vrot.slane %v237, 1
        %v516 = vsel %vm427, %v513, %v515
        %v517 = vrot.slane %v238, 1
        %v518 = vsel %vm427, %v515, %v517
        %v519 = vrot.slane %v239, 1
        %v520 = vrot.slane %v240, 1
        %v521 = vsel %vm427, %v519, %v520
        %v522 = vrot.slane %v241, 1
        %v523 = vsel %vm427, %v520, %v522
        %v524 = vrot.slane %v242, 1
        %v525 = vsel %vm427, %v522, %v524
        %v526 = vrot.slane %v243, 1
        %v527 = vrot.slane %v244, 1
        %v528 = vsel %vm427, %v526, %v527
        %v529 = vrot.slane %v245, 1
        %v530 = vsel %vm427, %v527, %v529
        %v531 = vrot.slane %v246, 1
        %v532 = vsel %vm427, %v529, %v531
        %v533 = vrot.slane %v247, 1
        %v534 = vrot.slane %v248, 1
        %v535 = vsel %vm427, %v533, %v534
        %v536 = vrot.slane %v249, 1
        %v537 = vsel %vm427, %v534, %v536
        %v538 = vrot.slane %v250, 1
        %v539 = vsel %vm427, %v536, %v538
        %v540 = vrot.slane %v251, 1
        %v541 = vrot.slane %v252, 1
        %v542 = vsel %vm427, %v540, %v541
        %v543 = vrot.slane %v253, 1
        %v544 = vsel %vm427, %v541, %v543
        %v545 = vrot.slane %v254, 1
        %v546 = vsel %vm427, %v543, %v545
        %v547 = vrot.slane %v255, 1
        %v548 = vrot.slane %v256, 1
        %v549 = vsel %vm427, %v547, %v548
        %v550 = vrot.slane %v257, 1
        %v551 = vsel %vm427, %v548, %v550
        %v552 = vrot.slane %v258, 1
        %v553 = vsel %vm427, %v550, %v552
        %v554 = vrot.slane %v259, 1
        %v555 = vrot.slane %v260, 1
        %v556 = vsel %vm427, %v554, %v555
        %v557 = vrot.slane %v261, 1
        %v558 = vsel %vm427, %v555, %v557
        %v559 = vrot.slane %v262, 1
        %v560 = vsel %vm427, %v557, %v559
        %v561 = vrot.slane %v263, 1
        %v562 = vrot.slane %v264, 1
        %v563 = vsel %vm427, %v561, %v562
        %v564 = vrot.slane %v265, 1
        %v565 = vsel %vm427, %v562, %v564
        %v566 = vrot.slane %v266, 1
        %v567 = vsel %vm427, %v564, %v566
        %v568 = vrot.slane %v267, 1
        %v569 = vrot.slane %v268, 1
        %v570 = vsel %vm427, %v568, %v569
        %v571 = vrot.slane %v269, 1
        %v572 = vsel %vm427, %v569, %v571
        %v573 = vrot.slane %v270, 1
        %v574 = vsel %vm427, %v571, %v573
        %v575 = vrot.slane %v271, 1
        %v576 = vrot.slane %v272, 1
        %v577 = vsel %vm427, %v575, %v576
        %v578 = vrot.slane %v273, 1
        %v579 = vsel %vm427, %v576, %v578
        %v580 = vrot.slane %v274, 1
        %v581 = vsel %vm427, %v578, %v580
        %v582 = vrot.slane %v275, 1
        %v583 = vrot.slane %v276, 1
        %v584 = vsel %vm427, %v582, %v583
        %v585 = vrot.slane %v277, 1
        %v586 = vsel %vm427, %v583, %v585
        %v587 = vrot.slane %v278, 1
        %v588 = vsel %vm427, %v585, %v587
        %v589 = vrot.slane %v279, 1
        %v590 = vrot.slane %v280, 1
        %v591 = vsel %vm427, %v589, %v590
        %v592 = vrot.slane %v281, 1
        %v593 = vsel %vm427, %v590, %v592
        %v594 = vrot.slane %v282, 1
        %v595 = vsel %vm427, %v592, %v594
        %v668 = vpack.c.bf16 %v432, %v430
        %v669 = vpack.c.bf16 %v437, %v434
        %v670 = vpack.c.bf16 %v441, %v439
        %v671 = vpack.c.bf16 %v446, %v444
        %v672 = vpack.c.bf16 %v451, %v448
        %v673 = vpack.c.bf16 %v455, %v453
        %v674 = vpack.c.bf16 %v460, %v458
        %v675 = vpack.c.bf16 %v465, %v462
        %v676 = vpack.c.bf16 %v469, %v467
        %v677 = vpack.c.bf16 %v474, %v472
        %v678 = vpack.c.bf16 %v479, %v476
        %v679 = vpack.c.bf16 %v483, %v481
        %v680 = vpack.c.bf16 %v488, %v486
        %v681 = vpack.c.bf16 %v493, %v490
        %v682 = vpack.c.bf16 %v497, %v495
        %v683 = vpack.c.bf16 %v502, %v500
        %v684 = vpack.c.bf16 %v507, %v504
        %v685 = vpack.c.bf16 %v511, %v509
        %v686 = vpack.c.bf16 %v516, %v514
        %v687 = vpack.c.bf16 %v521, %v518
        %v688 = vpack.c.bf16 %v525, %v523
        %v689 = vpack.c.bf16 %v530, %v528
        %v690 = vpack.c.bf16 %v535, %v532
        %v691 = vpack.c.bf16 %v539, %v537
        %v692 = vpack.c.bf16 %v544, %v542
        %v693 = vpack.c.bf16 %v549, %v546
        %v694 = vpack.c.bf16 %v553, %v551
        %v695 = vpack.c.bf16 %v558, %v556
        %v696 = vpack.c.bf16 %v563, %v560
        %v697 = vpack.c.bf16 %v567, %v565
        %v698 = vpack.c.bf16 %v572, %v570
        %v699 = vpack.c.bf16 %v577, %v574
        %v700 = vpack.c.bf16 %v581, %v579
        %v701 = vpack.c.bf16 %v586, %v584
        %v702 = vpack.c.bf16 %v591, %v588
        %v703 = vpack.c.bf16 %v595, %v593
        %s704 = scalar_lea.vmem %s1, 16
        %v705 = vld [vmem:[%s704] sm:$0xf]
        %v706 = vld [vmem:[%s704 + $0x4] sm:$0xf]
        %v707 = vld [vmem:[%s704 + $0x8] sm:$0xf]
        %v708 = vld [vmem:[%s704 + $0xc] sm:$0xf]
        %v713 = vunpack.c.l.b16 %v705
        %v714 = vunpack.c.l.b16 %v706
        %v715 = vunpack.c.l.b16 %v707
        %v716 = vunpack.c.l.b16 %v708
        %v717 = vpack.c.b16 %v714, %v713
        %v718 = vpack.c.b16 %v716, %v715
        %vm721 = vcmask 261120
        %v723 = vsel %vm721, %v668, 0
        %v726 = vsel %vm721, %v669, 0
        %v729 = vsel %vm721, %v670, 0
        %v732 = vsel %vm721, %v671, 0
        %v735 = vsel %vm721, %v672, 0
        %v738 = vsel %vm721, %v673, 0
        %v741 = vsel %vm721, %v674, 0
        %v744 = vsel %vm721, %v675, 0
        %v747 = vsel %vm721, %v676, 0
        %v750 = vsel %vm721, %v677, 0
        %v753 = vsel %vm721, %v678, 0
        %v756 = vsel %vm721, %v679, 0
        %v759 = vsel %vm721, %v680, 0
        %v762 = vsel %vm721, %v681, 0
        %v765 = vsel %vm721, %v682, 0
        %v768 = vsel %vm721, %v683, 0
        %v771 = vsel %vm721, %v684, 0
        %v774 = vsel %vm721, %v685, 0
        %v777 = vsel %vm721, %v686, 0
        %v780 = vsel %vm721, %v687, 0
        %v783 = vsel %vm721, %v688, 0
        %v786 = vsel %vm721, %v689, 0
        %v789 = vsel %vm721, %v690, 0
        %v792 = vsel %vm721, %v691, 0
        %v795 = vsel %vm721, %v692, 0
        %v798 = vsel %vm721, %v693, 0
        %v801 = vsel %vm721, %v694, 0
        %v804 = vsel %vm721, %v695, 0
        %v807 = vsel %vm721, %v696, 0
        %v810 = vsel %vm721, %v697, 0
        %v813 = vsel %vm721, %v698, 0
        %v816 = vsel %vm721, %v699, 0
        %v819 = vsel %vm721, %v700, 0
        %v822 = vsel %vm721, %v701, 0
        %v825 = vsel %vm721, %v702, 0
        %v828 = vsel %vm721, %v703, 0
        %830 = vmatpush.bf16.msra.mxu0 0
        %831 = vmatpush.bf16.msra.mxu0 0
        %832 = vmatpush.bf16.msra.mxu0 0
        %833 = vmatpush.bf16.msra.mxu0 0
        %834 = vmatpush.bf16.msra.mxu0 0
        %835 = vmatpush.bf16.msra.mxu0 0
        %836 = vmatpush.bf16.msra.mxu0 %v718
        %837 = vmatpush.bf16.msra.mxu0 %v717
        %838 = vmatmul.bf16.gmra.mxu0 %v723
        %v839 = vpop.f32.mrf.mxu0
        %v840 = vadd.f32 0.0, %v839
        %v841 = vpop.f32.mrf.mxu0
        %v842 = vadd.f32 0.0, %v841
        %843 = vmatmul.bf16.gmra.mxu0 %v726
        %v844 = vpop.f32.mrf.mxu0
        %v845 = vadd.f32 0.0, %v844
        %v846 = vpop.f32.mrf.mxu0
        %v847 = vadd.f32 0.0, %v846
        %848 = vmatmul.bf16.gmra.mxu0 %v729
        %v849 = vpop.f32.mrf.mxu0
        %v850 = vadd.f32 0.0, %v849
        %v851 = vpop.f32.mrf.mxu0
        %v852 = vadd.f32 0.0, %v851
        %853 = vmatmul.bf16.gmra.mxu0 %v732
        %v854 = vpop.f32.mrf.mxu0
        %v855 = vadd.f32 0.0, %v854
        %v856 = vpop.f32.mrf.mxu0
        %v857 = vadd.f32 0.0, %v856
        %858 = vmatmul.bf16.gmra.mxu0 %v735
        %v859 = vpop.f32.mrf.mxu0
        %v860 = vadd.f32 0.0, %v859
        %v861 = vpop.f32.mrf.mxu0
        %v862 = vadd.f32 0.0, %v861
        %863 = vmatmul.bf16.gmra.mxu0 %v738
        %v864 = vpop.f32.mrf.mxu0
        %v865 = vadd.f32 0.0, %v864
        %v866 = vpop.f32.mrf.mxu0
        %v867 = vadd.f32 0.0, %v866
        %868 = vmatmul.bf16.gmra.mxu0 %v741
        %v869 = vpop.f32.mrf.mxu0
        %v870 = vadd.f32 0.0, %v869
        %v871 = vpop.f32.mrf.mxu0
        %v872 = vadd.f32 0.0, %v871
        %873 = vmatmul.bf16.gmra.mxu0 %v744
        %v874 = vpop.f32.mrf.mxu0
        %v875 = vadd.f32 0.0, %v874
        %v876 = vpop.f32.mrf.mxu0
        %v877 = vadd.f32 0.0, %v876
        %878 = vmatmul.bf16.gmra.mxu0 %v747
        %v879 = vpop.f32.mrf.mxu0
        %v880 = vadd.f32 0.0, %v879
        %v881 = vpop.f32.mrf.mxu0
        %v882 = vadd.f32 0.0, %v881
        %883 = vmatmul.bf16.gmra.mxu0 %v750
        %v884 = vpop.f32.mrf.mxu0
        %v885 = vadd.f32 0.0, %v884
        %v886 = vpop.f32.mrf.mxu0
        %v887 = vadd.f32 0.0, %v886
        %888 = vmatmul.bf16.gmra.mxu0 %v753
        %v889 = vpop.f32.mrf.mxu0
        %v890 = vadd.f32 0.0, %v889
        %v891 = vpop.f32.mrf.mxu0
        %v892 = vadd.f32 0.0, %v891
        %893 = vmatmul.bf16.gmra.mxu0 %v756
        %v894 = vpop.f32.mrf.mxu0
        %v895 = vadd.f32 0.0, %v894
        %v896 = vpop.f32.mrf.mxu0
        %v897 = vadd.f32 0.0, %v896
        %898 = vmatmul.bf16.gmra.mxu0 %v759
        %v899 = vpop.f32.mrf.mxu0
        %v900 = vadd.f32 0.0, %v899
        %v901 = vpop.f32.mrf.mxu0
        %v902 = vadd.f32 0.0, %v901
        %903 = vmatmul.bf16.gmra.mxu0 %v762
        %v904 = vpop.f32.mrf.mxu0
        %v905 = vadd.f32 0.0, %v904
        %v906 = vpop.f32.mrf.mxu0
        %v907 = vadd.f32 0.0, %v906
        %908 = vmatmul.bf16.gmra.mxu0 %v765
        %v909 = vpop.f32.mrf.mxu0
        %v910 = vadd.f32 0.0, %v909
        %v911 = vpop.f32.mrf.mxu0
        %v912 = vadd.f32 0.0, %v911
        %913 = vmatmul.bf16.gmra.mxu0 %v768
        %v914 = vpop.f32.mrf.mxu0
        %v915 = vadd.f32 0.0, %v914
        %v916 = vpop.f32.mrf.mxu0
        %v917 = vadd.f32 0.0, %v916
        %918 = vmatmul.bf16.gmra.mxu0 %v771
        %v919 = vpop.f32.mrf.mxu0
        %v920 = vadd.f32 0.0, %v919
        %v921 = vpop.f32.mrf.mxu0
        %v922 = vadd.f32 0.0, %v921
        %923 = vmatmul.bf16.gmra.mxu0 %v774
        %v924 = vpop.f32.mrf.mxu0
        %v925 = vadd.f32 0.0, %v924
        %v926 = vpop.f32.mrf.mxu0
        %v927 = vadd.f32 0.0, %v926
        %928 = vmatmul.bf16.gmra.mxu0 %v777
        %v929 = vpop.f32.mrf.mxu0
        %v930 = vadd.f32 0.0, %v929
        %v931 = vpop.f32.mrf.mxu0
        %v932 = vadd.f32 0.0, %v931
        %933 = vmatmul.bf16.gmra.mxu0 %v780
        %v934 = vpop.f32.mrf.mxu0
        %v935 = vadd.f32 0.0, %v934
        %v936 = vpop.f32.mrf.mxu0
        %v937 = vadd.f32 0.0, %v936
        %938 = vmatmul.bf16.gmra.mxu0 %v783
        %v939 = vpop.f32.mrf.mxu0
        %v940 = vadd.f32 0.0, %v939
        %v941 = vpop.f32.mrf.mxu0
        %v942 = vadd.f32 0.0, %v941
        %943 = vmatmul.bf16.gmra.mxu0 %v786
        %v944 = vpop.f32.mrf.mxu0
        %v945 = vadd.f32 0.0, %v944
        %v946 = vpop.f32.mrf.mxu0
        %v947 = vadd.f32 0.0, %v946
        %948 = vmatmul.bf16.gmra.mxu0 %v789
        %v949 = vpop.f32.mrf.mxu0
        %v950 = vadd.f32 0.0, %v949
        %v951 = vpop.f32.mrf.mxu0
        %v952 = vadd.f32 0.0, %v951
        %953 = vmatmul.bf16.gmra.mxu0 %v792
        %v954 = vpop.f32.mrf.mxu0
        %v955 = vadd.f32 0.0, %v954
        %v956 = vpop.f32.mrf.mxu0
        %v957 = vadd.f32 0.0, %v956
        %958 = vmatmul.bf16.gmra.mxu0 %v795
        %v959 = vpop.f32.mrf.mxu0
        %v960 = vadd.f32 0.0, %v959
        %v961 = vpop.f32.mrf.mxu0
        %v962 = vadd.f32 0.0, %v961
        %963 = vmatmul.bf16.gmra.mxu0 %v798
        %v964 = vpop.f32.mrf.mxu0
        %v965 = vadd.f32 0.0, %v964
        %v966 = vpop.f32.mrf.mxu0
        %v967 = vadd.f32 0.0, %v966
        %968 = vmatmul.bf16.gmra.mxu0 %v801
        %v969 = vpop.f32.mrf.mxu0
        %v970 = vadd.f32 0.0, %v969
        %v971 = vpop.f32.mrf.mxu0
        %v972 = vadd.f32 0.0, %v971
        %973 = vmatmul.bf16.gmra.mxu0 %v804
        %v974 = vpop.f32.mrf.mxu0
        %v975 = vadd.f32 0.0, %v974
        %v976 = vpop.f32.mrf.mxu0
        %v977 = vadd.f32 0.0, %v976
        %978 = vmatmul.bf16.gmra.mxu0 %v807
        %v979 = vpop.f32.mrf.mxu0
        %v980 = vadd.f32 0.0, %v979
        %v981 = vpop.f32.mrf.mxu0
        %v982 = vadd.f32 0.0, %v981
        %983 = vmatmul.bf16.gmra.mxu0 %v810
        %v984 = vpop.f32.mrf.mxu0
        %v985 = vadd.f32 0.0, %v984
        %v986 = vpop.f32.mrf.mxu0
        %v987 = vadd.f32 0.0, %v986
        %988 = vmatmul.bf16.gmra.mxu0 %v813
        %v989 = vpop.f32.mrf.mxu0
        %v990 = vadd.f32 0.0, %v989
        %v991 = vpop.f32.mrf.mxu0
        %v992 = vadd.f32 0.0, %v991
        %993 = vmatmul.bf16.gmra.mxu0 %v816
        %v994 = vpop.f32.mrf.mxu0
        %v995 = vadd.f32 0.0, %v994
        %v996 = vpop.f32.mrf.mxu0
        %v997 = vadd.f32 0.0, %v996
        %998 = vmatmul.bf16.gmra.mxu0 %v819
        %v999 = vpop.f32.mrf.mxu0
        %v1000 = vadd.f32 0.0, %v999
        %v1001 = vpop.f32.mrf.mxu0
        %v1002 = vadd.f32 0.0, %v1001
        %1003 = vmatmul.bf16.gmra.mxu0 %v822
        %v1004 = vpop.f32.mrf.mxu0
        %v1005 = vadd.f32 0.0, %v1004
        %v1006 = vpop.f32.mrf.mxu0
        %v1007 = vadd.f32 0.0, %v1006
        %1008 = vmatmul.bf16.gmra.mxu0 %v825
        %v1009 = vpop.f32.mrf.mxu0
        %v1010 = vadd.f32 0.0, %v1009
        %v1011 = vpop.f32.mrf.mxu0
        %v1012 = vadd.f32 0.0, %v1011
        %1013 = vmatmul.bf16.gmra.mxu0 %v828
        %v1014 = vpop.f32.mrf.mxu0
        %v1015 = vadd.f32 0.0, %v1014
        %v1016 = vpop.f32.mrf.mxu0
        %v1017 = vadd.f32 0.0, %v1016
        %1018 = vdwg.mxu0
        %v1023 = vunpack.c.l.b16 %v327
        %v1024 = vunpack.c.l.b16 %v328
        %v1025 = vunpack.c.l.b16 %v329
        %v1026 = vunpack.c.l.b16 %v330
        %v1027 = vpack.c.b16 %v1024, %v1023
        %v1028 = vpack.c.b16 %v1026, %v1025
        %v1032 = vsel %vm721, %v291, 0
        %v1035 = vsel %vm721, %v292, 0
        %v1038 = vsel %vm721, %v293, 0
        %v1041 = vsel %vm721, %v294, 0
        %v1044 = vsel %vm721, %v295, 0
        %v1047 = vsel %vm721, %v296, 0
        %v1050 = vsel %vm721, %v297, 0
        %v1053 = vsel %vm721, %v298, 0
        %v1056 = vsel %vm721, %v299, 0
        %v1059 = vsel %vm721, %v300, 0
        %v1062 = vsel %vm721, %v301, 0
        %v1065 = vsel %vm721, %v302, 0
        %v1068 = vsel %vm721, %v303, 0
        %v1071 = vsel %vm721, %v304, 0
        %v1074 = vsel %vm721, %v305, 0
        %v1077 = vsel %vm721, %v306, 0
        %v1080 = vsel %vm721, %v307, 0
        %v1083 = vsel %vm721, %v308, 0
        %v1086 = vsel %vm721, %v309, 0
        %v1089 = vsel %vm721, %v310, 0
        %v1092 = vsel %vm721, %v311, 0
        %v1095 = vsel %vm721, %v312, 0
        %v1098 = vsel %vm721, %v313, 0
        %v1101 = vsel %vm721, %v314, 0
        %v1104 = vsel %vm721, %v315, 0
        %v1107 = vsel %vm721, %v316, 0
        %v1110 = vsel %vm721, %v317, 0
        %v1113 = vsel %vm721, %v318, 0
        %v1116 = vsel %vm721, %v319, 0
        %v1119 = vsel %vm721, %v320, 0
        %v1122 = vsel %vm721, %v321, 0
        %v1125 = vsel %vm721, %v322, 0
        %v1128 = vsel %vm721, %v323, 0
        %v1131 = vsel %vm721, %v324, 0
        %v1134 = vsel %vm721, %v325, 0
        %v1137 = vsel %vm721, %v326, 0
        %1139 = vmatpush.bf16.msra.mxu0 0
        %1140 = vmatpush.bf16.msra.mxu0 0
        %1141 = vmatpush.bf16.msra.mxu0 0
        %1142 = vmatpush.bf16.msra.mxu0 0
        %1143 = vmatpush.bf16.msra.mxu0 0
        %1144 = vmatpush.bf16.msra.mxu0 0
        %1145 = vmatpush.bf16.msra.mxu0 %v1028
        %1146 = vmatpush.bf16.msra.mxu0 %v1027
        %1147 = vmatmul.bf16.gmra.mxu0 %v1032
        %v1148 = vpop.f32.mrf.mxu0
        %v1149 = vadd.f32 %v840, %v1148
        %v1150 = vpop.f32.mrf.mxu0
        %v1151 = vadd.f32 %v842, %v1150
        %1152 = vmatmul.bf16.gmra.mxu0 %v1035
        %v1153 = vpop.f32.mrf.mxu0
        %v1154 = vadd.f32 %v845, %v1153
        %v1155 = vpop.f32.mrf.mxu0
        %v1156 = vadd.f32 %v847, %v1155
        %1157 = vmatmul.bf16.gmra.mxu0 %v1038
        %v1158 = vpop.f32.mrf.mxu0
        %v1159 = vadd.f32 %v850, %v1158
        %v1160 = vpop.f32.mrf.mxu0
        %v1161 = vadd.f32 %v852, %v1160
        %1162 = vmatmul.bf16.gmra.mxu0 %v1041
        %v1163 = vpop.f32.mrf.mxu0
        %v1164 = vadd.f32 %v855, %v1163
        %v1165 = vpop.f32.mrf.mxu0
        %v1166 = vadd.f32 %v857, %v1165
        %1167 = vmatmul.bf16.gmra.mxu0 %v1044
        %v1168 = vpop.f32.mrf.mxu0
        %v1169 = vadd.f32 %v860, %v1168
        %v1170 = vpop.f32.mrf.mxu0
        %v1171 = vadd.f32 %v862, %v1170
        %1172 = vmatmul.bf16.gmra.mxu0 %v1047
        %v1173 = vpop.f32.mrf.mxu0
        %v1174 = vadd.f32 %v865, %v1173
        %v1175 = vpop.f32.mrf.mxu0
        %v1176 = vadd.f32 %v867, %v1175
        %1177 = vmatmul.bf16.gmra.mxu0 %v1050
        %v1178 = vpop.f32.mrf.mxu0
        %v1179 = vadd.f32 %v870, %v1178
        %v1180 = vpop.f32.mrf.mxu0
        %v1181 = vadd.f32 %v872, %v1180
        %1182 = vmatmul.bf16.gmra.mxu0 %v1053
        %v1183 = vpop.f32.mrf.mxu0
        %v1184 = vadd.f32 %v875, %v1183
        %v1185 = vpop.f32.mrf.mxu0
        %v1186 = vadd.f32 %v877, %v1185
        %1187 = vmatmul.bf16.gmra.mxu0 %v1056
        %v1188 = vpop.f32.mrf.mxu0
        %v1189 = vadd.f32 %v880, %v1188
        %v1190 = vpop.f32.mrf.mxu0
        %v1191 = vadd.f32 %v882, %v1190
        %1192 = vmatmul.bf16.gmra.mxu0 %v1059
        %v1193 = vpop.f32.mrf.mxu0
        %v1194 = vadd.f32 %v885, %v1193
        %v1195 = vpop.f32.mrf.mxu0
        %v1196 = vadd.f32 %v887, %v1195
        %1197 = vmatmul.bf16.gmra.mxu0 %v1062
        %v1198 = vpop.f32.mrf.mxu0
        %v1199 = vadd.f32 %v890, %v1198
        %v1200 = vpop.f32.mrf.mxu0
        %v1201 = vadd.f32 %v892, %v1200
        %1202 = vmatmul.bf16.gmra.mxu0 %v1065
        %v1203 = vpop.f32.mrf.mxu0
        %v1204 = vadd.f32 %v895, %v1203
        %v1205 = vpop.f32.mrf.mxu0
        %v1206 = vadd.f32 %v897, %v1205
        %1207 = vmatmul.bf16.gmra.mxu0 %v1068
        %v1208 = vpop.f32.mrf.mxu0
        %v1209 = vadd.f32 %v900, %v1208
        %v1210 = vpop.f32.mrf.mxu0
        %v1211 = vadd.f32 %v902, %v1210
        %1212 = vmatmul.bf16.gmra.mxu0 %v1071
        %v1213 = vpop.f32.mrf.mxu0
        %v1214 = vadd.f32 %v905, %v1213
        %v1215 = vpop.f32.mrf.mxu0
        %v1216 = vadd.f32 %v907, %v1215
        %1217 = vmatmul.bf16.gmra.mxu0 %v1074
        %v1218 = vpop.f32.mrf.mxu0
        %v1219 = vadd.f32 %v910, %v1218
        %v1220 = vpop.f32.mrf.mxu0
        %v1221 = vadd.f32 %v912, %v1220
        %1222 = vmatmul.bf16.gmra.mxu0 %v1077
        %v1223 = vpop.f32.mrf.mxu0
        %v1224 = vadd.f32 %v915, %v1223
        %v1225 = vpop.f32.mrf.mxu0
        %v1226 = vadd.f32 %v917, %v1225
        %1227 = vmatmul.bf16.gmra.mxu0 %v1080
        %v1228 = vpop.f32.mrf.mxu0
        %v1229 = vadd.f32 %v920, %v1228
        %v1230 = vpop.f32.mrf.mxu0
        %v1231 = vadd.f32 %v922, %v1230
        %1232 = vmatmul.bf16.gmra.mxu0 %v1083
        %v1233 = vpop.f32.mrf.mxu0
        %v1234 = vadd.f32 %v925, %v1233
        %v1235 = vpop.f32.mrf.mxu0
        %v1236 = vadd.f32 %v927, %v1235
        %1237 = vmatmul.bf16.gmra.mxu0 %v1086
        %v1238 = vpop.f32.mrf.mxu0
        %v1239 = vadd.f32 %v930, %v1238
        %v1240 = vpop.f32.mrf.mxu0
        %v1241 = vadd.f32 %v932, %v1240
        %1242 = vmatmul.bf16.gmra.mxu0 %v1089
        %v1243 = vpop.f32.mrf.mxu0
        %v1244 = vadd.f32 %v935, %v1243
        %v1245 = vpop.f32.mrf.mxu0
        %v1246 = vadd.f32 %v937, %v1245
        %1247 = vmatmul.bf16.gmra.mxu0 %v1092
        %v1248 = vpop.f32.mrf.mxu0
        %v1249 = vadd.f32 %v940, %v1248
        %v1250 = vpop.f32.mrf.mxu0
        %v1251 = vadd.f32 %v942, %v1250
        %1252 = vmatmul.bf16.gmra.mxu0 %v1095
        %v1253 = vpop.f32.mrf.mxu0
        %v1254 = vadd.f32 %v945, %v1253
        %v1255 = vpop.f32.mrf.mxu0
        %v1256 = vadd.f32 %v947, %v1255
        %1257 = vmatmul.bf16.gmra.mxu0 %v1098
        %v1258 = vpop.f32.mrf.mxu0
        %v1259 = vadd.f32 %v950, %v1258
        %v1260 = vpop.f32.mrf.mxu0
        %v1261 = vadd.f32 %v952, %v1260
        %1262 = vmatmul.bf16.gmra.mxu0 %v1101
        %v1263 = vpop.f32.mrf.mxu0
        %v1264 = vadd.f32 %v955, %v1263
        %v1265 = vpop.f32.mrf.mxu0
        %v1266 = vadd.f32 %v957, %v1265
        %1267 = vmatmul.bf16.gmra.mxu0 %v1104
        %v1268 = vpop.f32.mrf.mxu0
        %v1269 = vadd.f32 %v960, %v1268
        %v1270 = vpop.f32.mrf.mxu0
        %v1271 = vadd.f32 %v962, %v1270
        %1272 = vmatmul.bf16.gmra.mxu0 %v1107
        %v1273 = vpop.f32.mrf.mxu0
        %v1274 = vadd.f32 %v965, %v1273
        %v1275 = vpop.f32.mrf.mxu0
        %v1276 = vadd.f32 %v967, %v1275
        %1277 = vmatmul.bf16.gmra.mxu0 %v1110
        %v1278 = vpop.f32.mrf.mxu0
        %v1279 = vadd.f32 %v970, %v1278
        %v1280 = vpop.f32.mrf.mxu0
        %v1281 = vadd.f32 %v972, %v1280
        %1282 = vmatmul.bf16.gmra.mxu0 %v1113
        %v1283 = vpop.f32.mrf.mxu0
        %v1284 = vadd.f32 %v975, %v1283
        %v1285 = vpop.f32.mrf.mxu0
        %v1286 = vadd.f32 %v977, %v1285
        %1287 = vmatmul.bf16.gmra.mxu0 %v1116
        %v1288 = vpop.f32.mrf.mxu0
        %v1289 = vadd.f32 %v980, %v1288
        %v1290 = vpop.f32.mrf.mxu0
        %v1291 = vadd.f32 %v982, %v1290
        %1292 = vmatmul.bf16.gmra.mxu0 %v1119
        %v1293 = vpop.f32.mrf.mxu0
        %v1294 = vadd.f32 %v985, %v1293
        %v1295 = vpop.f32.mrf.mxu0
        %v1296 = vadd.f32 %v987, %v1295
        %1297 = vmatmul.bf16.gmra.mxu0 %v1122
        %v1298 = vpop.f32.mrf.mxu0
        %v1299 = vadd.f32 %v990, %v1298
        %v1300 = vpop.f32.mrf.mxu0
        %v1301 = vadd.f32 %v992, %v1300
        %1302 = vmatmul.bf16.gmra.mxu0 %v1125
        %v1303 = vpop.f32.mrf.mxu0
        %v1304 = vadd.f32 %v995, %v1303
        %v1305 = vpop.f32.mrf.mxu0
        %v1306 = vadd.f32 %v997, %v1305
        %1307 = vmatmul.bf16.gmra.mxu0 %v1128
        %v1308 = vpop.f32.mrf.mxu0
        %v1309 = vadd.f32 %v1000, %v1308
        %v1310 = vpop.f32.mrf.mxu0
        %v1311 = vadd.f32 %v1002, %v1310
        %1312 = vmatmul.bf16.gmra.mxu0 %v1131
        %v1313 = vpop.f32.mrf.mxu0
        %v1314 = vadd.f32 %v1005, %v1313
        %v1315 = vpop.f32.mrf.mxu0
        %v1316 = vadd.f32 %v1007, %v1315
        %1317 = vmatmul.bf16.gmra.mxu0 %v1134
        %v1318 = vpop.f32.mrf.mxu0
        %v1319 = vadd.f32 %v1010, %v1318
        %v1320 = vpop.f32.mrf.mxu0
        %v1321 = vadd.f32 %v1012, %v1320
        %1322 = vmatmul.bf16.gmra.mxu0 %v1137
        %v1323 = vpop.f32.mrf.mxu0
        %v1324 = vadd.f32 %v1015, %v1323
        %v1325 = vpop.f32.mrf.mxu0
        %v1326 = vadd.f32 %v1017, %v1325
        %1327 = vdwg.mxu0
        %vm1328 = vcmask 1045504
        %v1329 = vrot.slane %v187, 2
        %v1330 = vrot.slane %v188, 2
        %v1331 = vsel %vm1328, %v1329, %v1330
        %v1332 = vrot.slane %v189, 2
        %v1333 = vsel %vm1328, %v1330, %v1332
        %v1334 = vrot.slane %v190, 2
        %v1335 = vsel %vm1328, %v1332, %v1334
        %v1336 = vrot.slane %v191, 2
        %v1337 = vrot.slane %v192, 2
        %v1338 = vsel %vm1328, %v1336, %v1337
        %v1339 = vrot.slane %v193, 2
        %v1340 = vsel %vm1328, %v1337, %v1339
        %v1341 = vrot.slane %v194, 2
        %v1342 = vsel %vm1328, %v1339, %v1341
        %v1343 = vrot.slane %v195, 2
        %v1344 = vrot.slane %v196, 2
        %v1345 = vsel %vm1328, %v1343, %v1344
        %v1346 = vrot.slane %v197, 2
        %v1347 = vsel %vm1328, %v1344, %v1346
        %v1348 = vrot.slane %v198, 2
        %v1349 = vsel %vm1328, %v1346, %v1348
        %v1350 = vrot.slane %v199, 2
        %v1351 = vrot.slane %v200, 2
        %v1352 = vsel %vm1328, %v1350, %v1351
        %v1353 = vrot.slane %v201, 2
        %v1354 = vsel %vm1328, %v1351, %v1353
        %v1355 = vrot.slane %v202, 2
        %v1356 = vsel %vm1328, %v1353, %v1355
        %v1357 = vrot.slane %v203, 2
        %v1358 = vrot.slane %v204, 2
        %v1359 = vsel %vm1328, %v1357, %v1358
        %v1360 = vrot.slane %v205, 2
        %v1361 = vsel %vm1328, %v1358, %v1360
        %v1362 = vrot.slane %v206, 2
        %v1363 = vsel %vm1328, %v1360, %v1362
        %v1364 = vrot.slane %v207, 2
        %v1365 = vrot.slane %v208, 2
        %v1366 = vsel %vm1328, %v1364, %v1365
        %v1367 = vrot.slane %v209, 2
        %v1368 = vsel %vm1328, %v1365, %v1367
        %v1369 = vrot.slane %v210, 2
        %v1370 = vsel %vm1328, %v1367, %v1369
        %v1371 = vrot.slane %v211, 2
        %v1372 = vrot.slane %v212, 2
        %v1373 = vsel %vm1328, %v1371, %v1372
        %v1374 = vrot.slane %v213, 2
        %v1375 = vsel %vm1328, %v1372, %v1374
        %v1376 = vrot.slane %v214, 2
        %v1377 = vsel %vm1328, %v1374, %v1376
        %v1378 = vrot.slane %v215, 2
        %v1379 = vrot.slane %v216, 2
        %v1380 = vsel %vm1328, %v1378, %v1379
        %v1381 = vrot.slane %v217, 2
        %v1382 = vsel %vm1328, %v1379, %v1381
        %v1383 = vrot.slane %v218, 2
        %v1384 = vsel %vm1328, %v1381, %v1383
        %v1385 = vrot.slane %v219, 2
        %v1386 = vrot.slane %v220, 2
        %v1387 = vsel %vm1328, %v1385, %v1386
        %v1388 = vrot.slane %v221, 2
        %v1389 = vsel %vm1328, %v1386, %v1388
        %v1390 = vrot.slane %v222, 2
        %v1391 = vsel %vm1328, %v1388, %v1390
        %v1392 = vrot.slane %v223, 2
        %v1393 = vrot.slane %v224, 2
        %v1394 = vsel %vm1328, %v1392, %v1393
        %v1395 = vrot.slane %v225, 2
        %v1396 = vsel %vm1328, %v1393, %v1395
        %v1397 = vrot.slane %v226, 2
        %v1398 = vsel %vm1328, %v1395, %v1397
        %v1399 = vrot.slane %v227, 2
        %v1400 = vrot.slane %v228, 2
        %v1401 = vsel %vm1328, %v1399, %v1400
        %v1402 = vrot.slane %v229, 2
        %v1403 = vsel %vm1328, %v1400, %v1402
        %v1404 = vrot.slane %v230, 2
        %v1405 = vsel %vm1328, %v1402, %v1404
        %v1406 = vrot.slane %v231, 2
        %v1407 = vrot.slane %v232, 2
        %v1408 = vsel %vm1328, %v1406, %v1407
        %v1409 = vrot.slane %v233, 2
        %v1410 = vsel %vm1328, %v1407, %v1409
        %v1411 = vrot.slane %v234, 2
        %v1412 = vsel %vm1328, %v1409, %v1411
        %v1413 = vrot.slane %v235, 2
        %v1414 = vrot.slane %v236, 2
        %v1415 = vsel %vm1328, %v1413, %v1414
        %v1416 = vrot.slane %v237, 2
        %v1417 = vsel %vm1328, %v1414, %v1416
        %v1418 = vrot.slane %v238, 2
        %v1419 = vsel %vm1328, %v1416, %v1418
        %v1420 = vrot.slane %v239, 2
        %v1421 = vrot.slane %v240, 2
        %v1422 = vsel %vm1328, %v1420, %v1421
        %v1423 = vrot.slane %v241, 2
        %v1424 = vsel %vm1328, %v1421, %v1423
        %v1425 = vrot.slane %v242, 2
        %v1426 = vsel %vm1328, %v1423, %v1425
        %v1427 = vrot.slane %v243, 2
        %v1428 = vrot.slane %v244, 2
        %v1429 = vsel %vm1328, %v1427, %v1428
        %v1430 = vrot.slane %v245, 2
        %v1431 = vsel %vm1328, %v1428, %v1430
        %v1432 = vrot.slane %v246, 2
        %v1433 = vsel %vm1328, %v1430, %v1432
        %v1434 = vrot.slane %v247, 2
        %v1435 = vrot.slane %v248, 2
        %v1436 = vsel %vm1328, %v1434, %v1435
        %v1437 = vrot.slane %v249, 2
        %v1438 = vsel %vm1328, %v1435, %v1437
        %v1439 = vrot.slane %v250, 2
        %v1440 = vsel %vm1328, %v1437, %v1439
        %v1441 = vrot.slane %v251, 2
        %v1442 = vrot.slane %v252, 2
        %v1443 = vsel %vm1328, %v1441, %v1442
        %v1444 = vrot.slane %v253, 2
        %v1445 = vsel %vm1328, %v1442, %v1444
        %v1446 = vrot.slane %v254, 2
        %v1447 = vsel %vm1328, %v1444, %v1446
        %v1448 = vrot.slane %v255, 2
        %v1449 = vrot.slane %v256, 2
        %v1450 = vsel %vm1328, %v1448, %v1449
        %v1451 = vrot.slane %v257, 2
        %v1452 = vsel %vm1328, %v1449, %v1451
        %v1453 = vrot.slane %v258, 2
        %v1454 = vsel %vm1328, %v1451, %v1453
        %v1455 = vrot.slane %v259, 2
        %v1456 = vrot.slane %v260, 2
        %v1457 = vsel %vm1328, %v1455, %v1456
        %v1458 = vrot.slane %v261, 2
        %v1459 = vsel %vm1328, %v1456, %v1458
        %v1460 = vrot.slane %v262, 2
        %v1461 = vsel %vm1328, %v1458, %v1460
        %v1462 = vrot.slane %v263, 2
        %v1463 = vrot.slane %v264, 2
        %v1464 = vsel %vm1328, %v1462, %v1463
        %v1465 = vrot.slane %v265, 2
        %v1466 = vsel %vm1328, %v1463, %v1465
        %v1467 = vrot.slane %v266, 2
        %v1468 = vsel %vm1328, %v1465, %v1467
        %v1469 = vrot.slane %v267, 2
        %v1470 = vrot.slane %v268, 2
        %v1471 = vsel %vm1328, %v1469, %v1470
        %v1472 = vrot.slane %v269, 2
        %v1473 = vsel %vm1328, %v1470, %v1472
        %v1474 = vrot.slane %v270, 2
        %v1475 = vsel %vm1328, %v1472, %v1474
        %v1476 = vrot.slane %v271, 2
        %v1477 = vrot.slane %v272, 2
        %v1478 = vsel %vm1328, %v1476, %v1477
        %v1479 = vrot.slane %v273, 2
        %v1480 = vsel %vm1328, %v1477, %v1479
        %v1481 = vrot.slane %v274, 2
        %v1482 = vsel %vm1328, %v1479, %v1481
        %v1483 = vrot.slane %v275, 2
        %v1484 = vrot.slane %v276, 2
        %v1485 = vsel %vm1328, %v1483, %v1484
        %v1486 = vrot.slane %v277, 2
        %v1487 = vsel %vm1328, %v1484, %v1486
        %v1488 = vrot.slane %v278, 2
        %v1489 = vsel %vm1328, %v1486, %v1488
        %v1490 = vrot.slane %v279, 2
        %v1491 = vrot.slane %v280, 2
        %v1492 = vsel %vm1328, %v1490, %v1491
        %v1493 = vrot.slane %v281, 2
        %v1494 = vsel %vm1328, %v1491, %v1493
        %v1495 = vrot.slane %v282, 2
        %v1496 = vsel %vm1328, %v1493, %v1495
        %v1569 = vpack.c.bf16 %v1333, %v1331
        %v1570 = vpack.c.bf16 %v1338, %v1335
        %v1571 = vpack.c.bf16 %v1342, %v1340
        %v1572 = vpack.c.bf16 %v1347, %v1345
        %v1573 = vpack.c.bf16 %v1352, %v1349
        %v1574 = vpack.c.bf16 %v1356, %v1354
        %v1575 = vpack.c.bf16 %v1361, %v1359
        %v1576 = vpack.c.bf16 %v1366, %v1363
        %v1577 = vpack.c.bf16 %v1370, %v1368
        %v1578 = vpack.c.bf16 %v1375, %v1373
        %v1579 = vpack.c.bf16 %v1380, %v1377
        %v1580 = vpack.c.bf16 %v1384, %v1382
        %v1581 = vpack.c.bf16 %v1389, %v1387
        %v1582 = vpack.c.bf16 %v1394, %v1391
        %v1583 = vpack.c.bf16 %v1398, %v1396
        %v1584 = vpack.c.bf16 %v1403, %v1401
        %v1585 = vpack.c.bf16 %v1408, %v1405
        %v1586 = vpack.c.bf16 %v1412, %v1410
        %v1587 = vpack.c.bf16 %v1417, %v1415
        %v1588 = vpack.c.bf16 %v1422, %v1419
        %v1589 = vpack.c.bf16 %v1426, %v1424
        %v1590 = vpack.c.bf16 %v1431, %v1429
        %v1591 = vpack.c.bf16 %v1436, %v1433
        %v1592 = vpack.c.bf16 %v1440, %v1438
        %v1593 = vpack.c.bf16 %v1445, %v1443
        %v1594 = vpack.c.bf16 %v1450, %v1447
        %v1595 = vpack.c.bf16 %v1454, %v1452
        %v1596 = vpack.c.bf16 %v1459, %v1457
        %v1597 = vpack.c.bf16 %v1464, %v1461
        %v1598 = vpack.c.bf16 %v1468, %v1466
        %v1599 = vpack.c.bf16 %v1473, %v1471
        %v1600 = vpack.c.bf16 %v1478, %v1475
        %v1601 = vpack.c.bf16 %v1482, %v1480
        %v1602 = vpack.c.bf16 %v1487, %v1485
        %v1603 = vpack.c.bf16 %v1492, %v1489
        %v1604 = vpack.c.bf16 %v1496, %v1494
        %s1605 = scalar_lea.vmem %s1, 32
        %v1606 = vld [vmem:[%s1605] sm:$0xf]
        %v1607 = vld [vmem:[%s1605 + $0x4] sm:$0xf]
        %v1608 = vld [vmem:[%s1605 + $0x8] sm:$0xf]
        %v1609 = vld [vmem:[%s1605 + $0xc] sm:$0xf]
        %v1614 = vunpack.c.l.b16 %v1606
        %v1615 = vunpack.c.l.b16 %v1607
        %v1616 = vunpack.c.l.b16 %v1608
        %v1617 = vunpack.c.l.b16 %v1609
        %v1618 = vpack.c.b16 %v1615, %v1614
        %v1619 = vpack.c.b16 %v1617, %v1616
        %v1623 = vsel %vm721, %v1569, 0
        %v1626 = vsel %vm721, %v1570, 0
        %v1629 = vsel %vm721, %v1571, 0
        %v1632 = vsel %vm721, %v1572, 0
        %v1635 = vsel %vm721, %v1573, 0
        %v1638 = vsel %vm721, %v1574, 0
        %v1641 = vsel %vm721, %v1575, 0
        %v1644 = vsel %vm721, %v1576, 0
        %v1647 = vsel %vm721, %v1577, 0
        %v1650 = vsel %vm721, %v1578, 0
        %v1653 = vsel %vm721, %v1579, 0
        %v1656 = vsel %vm721, %v1580, 0
        %v1659 = vsel %vm721, %v1581, 0
        %v1662 = vsel %vm721, %v1582, 0
        %v1665 = vsel %vm721, %v1583, 0
        %v1668 = vsel %vm721, %v1584, 0
        %v1671 = vsel %vm721, %v1585, 0
        %v1674 = vsel %vm721, %v1586, 0
        %v1677 = vsel %vm721, %v1587, 0
        %v1680 = vsel %vm721, %v1588, 0
        %v1683 = vsel %vm721, %v1589, 0
        %v1686 = vsel %vm721, %v1590, 0
        %v1689 = vsel %vm721, %v1591, 0
        %v1692 = vsel %vm721, %v1592, 0
        %v1695 = vsel %vm721, %v1593, 0
        %v1698 = vsel %vm721, %v1594, 0
        %v1701 = vsel %vm721, %v1595, 0
        %v1704 = vsel %vm721, %v1596, 0
        %v1707 = vsel %vm721, %v1597, 0
        %v1710 = vsel %vm721, %v1598, 0
        %v1713 = vsel %vm721, %v1599, 0
        %v1716 = vsel %vm721, %v1600, 0
        %v1719 = vsel %vm721, %v1601, 0
        %v1722 = vsel %vm721, %v1602, 0
        %v1725 = vsel %vm721, %v1603, 0
        %v1728 = vsel %vm721, %v1604, 0
        %1730 = vmatpush.bf16.msra.mxu0 0
        %1731 = vmatpush.bf16.msra.mxu0 0
        %1732 = vmatpush.bf16.msra.mxu0 0
        %1733 = vmatpush.bf16.msra.mxu0 0
        %1734 = vmatpush.bf16.msra.mxu0 0
        %1735 = vmatpush.bf16.msra.mxu0 0
        %1736 = vmatpush.bf16.msra.mxu0 %v1619
        %1737 = vmatpush.bf16.msra.mxu0 %v1618
        %1738 = vmatmul.bf16.gmra.mxu0 %v1623
        %v1739 = vpop.f32.mrf.mxu0
        %v1740 = vadd.f32 0.0, %v1739
        %v1741 = vpop.f32.mrf.mxu0
        %v1742 = vadd.f32 0.0, %v1741
        %1743 = vmatmul.bf16.gmra.mxu0 %v1626
        %v1744 = vpop.f32.mrf.mxu0
        %v1745 = vadd.f32 0.0, %v1744
        %v1746 = vpop.f32.mrf.mxu0
        %v1747 = vadd.f32 0.0, %v1746
        %1748 = vmatmul.bf16.gmra.mxu0 %v1629
        %v1749 = vpop.f32.mrf.mxu0
        %v1750 = vadd.f32 0.0, %v1749
        %v1751 = vpop.f32.mrf.mxu0
        %v1752 = vadd.f32 0.0, %v1751
        %1753 = vmatmul.bf16.gmra.mxu0 %v1632
        %v1754 = vpop.f32.mrf.mxu0
        %v1755 = vadd.f32 0.0, %v1754
        %v1756 = vpop.f32.mrf.mxu0
        %v1757 = vadd.f32 0.0, %v1756
        %1758 = vmatmul.bf16.gmra.mxu0 %v1635
        %v1759 = vpop.f32.mrf.mxu0
        %v1760 = vadd.f32 0.0, %v1759
        %v1761 = vpop.f32.mrf.mxu0
        %v1762 = vadd.f32 0.0, %v1761
        %1763 = vmatmul.bf16.gmra.mxu0 %v1638
        %v1764 = vpop.f32.mrf.mxu0
        %v1765 = vadd.f32 0.0, %v1764
        %v1766 = vpop.f32.mrf.mxu0
        %v1767 = vadd.f32 0.0, %v1766
        %1768 = vmatmul.bf16.gmra.mxu0 %v1641
        %v1769 = vpop.f32.mrf.mxu0
        %v1770 = vadd.f32 0.0, %v1769
        %v1771 = vpop.f32.mrf.mxu0
        %v1772 = vadd.f32 0.0, %v1771
        %1773 = vmatmul.bf16.gmra.mxu0 %v1644
        %v1774 = vpop.f32.mrf.mxu0
        %v1775 = vadd.f32 0.0, %v1774
        %v1776 = vpop.f32.mrf.mxu0
        %v1777 = vadd.f32 0.0, %v1776
        %1778 = vmatmul.bf16.gmra.mxu0 %v1647
        %v1779 = vpop.f32.mrf.mxu0
        %v1780 = vadd.f32 0.0, %v1779
        %v1781 = vpop.f32.mrf.mxu0
        %v1782 = vadd.f32 0.0, %v1781
        %1783 = vmatmul.bf16.gmra.mxu0 %v1650
        %v1784 = vpop.f32.mrf.mxu0
        %v1785 = vadd.f32 0.0, %v1784
        %v1786 = vpop.f32.mrf.mxu0
        %v1787 = vadd.f32 0.0, %v1786
        %1788 = vmatmul.bf16.gmra.mxu0 %v1653
        %v1789 = vpop.f32.mrf.mxu0
        %v1790 = vadd.f32 0.0, %v1789
        %v1791 = vpop.f32.mrf.mxu0
        %v1792 = vadd.f32 0.0, %v1791
        %1793 = vmatmul.bf16.gmra.mxu0 %v1656
        %v1794 = vpop.f32.mrf.mxu0
        %v1795 = vadd.f32 0.0, %v1794
        %v1796 = vpop.f32.mrf.mxu0
        %v1797 = vadd.f32 0.0, %v1796
        %1798 = vmatmul.bf16.gmra.mxu0 %v1659
        %v1799 = vpop.f32.mrf.mxu0
        %v1800 = vadd.f32 0.0, %v1799
        %v1801 = vpop.f32.mrf.mxu0
        %v1802 = vadd.f32 0.0, %v1801
        %1803 = vmatmul.bf16.gmra.mxu0 %v1662
        %v1804 = vpop.f32.mrf.mxu0
        %v1805 = vadd.f32 0.0, %v1804
        %v1806 = vpop.f32.mrf.mxu0
        %v1807 = vadd.f32 0.0, %v1806
        %1808 = vmatmul.bf16.gmra.mxu0 %v1665
        %v1809 = vpop.f32.mrf.mxu0
        %v1810 = vadd.f32 0.0, %v1809
        %v1811 = vpop.f32.mrf.mxu0
        %v1812 = vadd.f32 0.0, %v1811
        %1813 = vmatmul.bf16.gmra.mxu0 %v1668
        %v1814 = vpop.f32.mrf.mxu0
        %v1815 = vadd.f32 0.0, %v1814
        %v1816 = vpop.f32.mrf.mxu0
        %v1817 = vadd.f32 0.0, %v1816
        %1818 = vmatmul.bf16.gmra.mxu0 %v1671
        %v1819 = vpop.f32.mrf.mxu0
        %v1820 = vadd.f32 0.0, %v1819
        %v1821 = vpop.f32.mrf.mxu0
        %v1822 = vadd.f32 0.0, %v1821
        %1823 = vmatmul.bf16.gmra.mxu0 %v1674
        %v1824 = vpop.f32.mrf.mxu0
        %v1825 = vadd.f32 0.0, %v1824
        %v1826 = vpop.f32.mrf.mxu0
        %v1827 = vadd.f32 0.0, %v1826
        %1828 = vmatmul.bf16.gmra.mxu0 %v1677
        %v1829 = vpop.f32.mrf.mxu0
        %v1830 = vadd.f32 0.0, %v1829
        %v1831 = vpop.f32.mrf.mxu0
        %v1832 = vadd.f32 0.0, %v1831
        %1833 = vmatmul.bf16.gmra.mxu0 %v1680
        %v1834 = vpop.f32.mrf.mxu0
        %v1835 = vadd.f32 0.0, %v1834
        %v1836 = vpop.f32.mrf.mxu0
        %v1837 = vadd.f32 0.0, %v1836
        %1838 = vmatmul.bf16.gmra.mxu0 %v1683
        %v1839 = vpop.f32.mrf.mxu0
        %v1840 = vadd.f32 0.0, %v1839
        %v1841 = vpop.f32.mrf.mxu0
        %v1842 = vadd.f32 0.0, %v1841
        %1843 = vmatmul.bf16.gmra.mxu0 %v1686
        %v1844 = vpop.f32.mrf.mxu0
        %v1845 = vadd.f32 0.0, %v1844
        %v1846 = vpop.f32.mrf.mxu0
        %v1847 = vadd.f32 0.0, %v1846
        %1848 = vmatmul.bf16.gmra.mxu0 %v1689
        %v1849 = vpop.f32.mrf.mxu0
        %v1850 = vadd.f32 0.0, %v1849
        %v1851 = vpop.f32.mrf.mxu0
        %v1852 = vadd.f32 0.0, %v1851
        %1853 = vmatmul.bf16.gmra.mxu0 %v1692
        %v1854 = vpop.f32.mrf.mxu0
        %v1855 = vadd.f32 0.0, %v1854
        %v1856 = vpop.f32.mrf.mxu0
        %v1857 = vadd.f32 0.0, %v1856
        %1858 = vmatmul.bf16.gmra.mxu0 %v1695
        %v1859 = vpop.f32.mrf.mxu0
        %v1860 = vadd.f32 0.0, %v1859
        %v1861 = vpop.f32.mrf.mxu0
        %v1862 = vadd.f32 0.0, %v1861
        %1863 = vmatmul.bf16.gmra.mxu0 %v1698
        %v1864 = vpop.f32.mrf.mxu0
        %v1865 = vadd.f32 0.0, %v1864
        %v1866 = vpop.f32.mrf.mxu0
        %v1867 = vadd.f32 0.0, %v1866
        %1868 = vmatmul.bf16.gmra.mxu0 %v1701
        %v1869 = vpop.f32.mrf.mxu0
        %v1870 = vadd.f32 0.0, %v1869
        %v1871 = vpop.f32.mrf.mxu0
        %v1872 = vadd.f32 0.0, %v1871
        %1873 = vmatmul.bf16.gmra.mxu0 %v1704
        %v1874 = vpop.f32.mrf.mxu0
        %v1875 = vadd.f32 0.0, %v1874
        %v1876 = vpop.f32.mrf.mxu0
        %v1877 = vadd.f32 0.0, %v1876
        %1878 = vmatmul.bf16.gmra.mxu0 %v1707
        %v1879 = vpop.f32.mrf.mxu0
        %v1880 = vadd.f32 0.0, %v1879
        %v1881 = vpop.f32.mrf.mxu0
        %v1882 = vadd.f32 0.0, %v1881
        %1883 = vmatmul.bf16.gmra.mxu0 %v1710
        %v1884 = vpop.f32.mrf.mxu0
        %v1885 = vadd.f32 0.0, %v1884
        %v1886 = vpop.f32.mrf.mxu0
        %v1887 = vadd.f32 0.0, %v1886
        %1888 = vmatmul.bf16.gmra.mxu0 %v1713
        %v1889 = vpop.f32.mrf.mxu0
        %v1890 = vadd.f32 0.0, %v1889
        %v1891 = vpop.f32.mrf.mxu0
        %v1892 = vadd.f32 0.0, %v1891
        %1893 = vmatmul.bf16.gmra.mxu0 %v1716
        %v1894 = vpop.f32.mrf.mxu0
        %v1895 = vadd.f32 0.0, %v1894
        %v1896 = vpop.f32.mrf.mxu0
        %v1897 = vadd.f32 0.0, %v1896
        %1898 = vmatmul.bf16.gmra.mxu0 %v1719
        %v1899 = vpop.f32.mrf.mxu0
        %v1900 = vadd.f32 0.0, %v1899
        %v1901 = vpop.f32.mrf.mxu0
        %v1902 = vadd.f32 0.0, %v1901
        %1903 = vmatmul.bf16.gmra.mxu0 %v1722
        %v1904 = vpop.f32.mrf.mxu0
        %v1905 = vadd.f32 0.0, %v1904
        %v1906 = vpop.f32.mrf.mxu0
        %v1907 = vadd.f32 0.0, %v1906
        %1908 = vmatmul.bf16.gmra.mxu0 %v1725
        %v1909 = vpop.f32.mrf.mxu0
        %v1910 = vadd.f32 0.0, %v1909
        %v1911 = vpop.f32.mrf.mxu0
        %v1912 = vadd.f32 0.0, %v1911
        %1913 = vmatmul.bf16.gmra.mxu0 %v1728
        %v1914 = vpop.f32.mrf.mxu0
        %v1915 = vadd.f32 0.0, %v1914
        %v1916 = vpop.f32.mrf.mxu0
        %v1917 = vadd.f32 0.0, %v1916
        %1918 = vdwg.mxu0
        %v1919 = vadd.f32 %v1149, %v1740
        %v1920 = vadd.f32 %v1151, %v1742
        %v1921 = vadd.f32 %v1154, %v1745
        %v1922 = vadd.f32 %v1156, %v1747
        %v1923 = vadd.f32 %v1159, %v1750
        %v1924 = vadd.f32 %v1161, %v1752
        %v1925 = vadd.f32 %v1164, %v1755
        %v1926 = vadd.f32 %v1166, %v1757
        %v1927 = vadd.f32 %v1169, %v1760
        %v1928 = vadd.f32 %v1171, %v1762
        %v1929 = vadd.f32 %v1174, %v1765
        %v1930 = vadd.f32 %v1176, %v1767
        %v1931 = vadd.f32 %v1179, %v1770
        %v1932 = vadd.f32 %v1181, %v1772
        %v1933 = vadd.f32 %v1184, %v1775
        %v1934 = vadd.f32 %v1186, %v1777
        %v1935 = vadd.f32 %v1189, %v1780
        %v1936 = vadd.f32 %v1191, %v1782
        %v1937 = vadd.f32 %v1194, %v1785
        %v1938 = vadd.f32 %v1196, %v1787
        %v1939 = vadd.f32 %v1199, %v1790
        %v1940 = vadd.f32 %v1201, %v1792
        %v1941 = vadd.f32 %v1204, %v1795
        %v1942 = vadd.f32 %v1206, %v1797
        %v1943 = vadd.f32 %v1209, %v1800
        %v1944 = vadd.f32 %v1211, %v1802
        %v1945 = vadd.f32 %v1214, %v1805
        %v1946 = vadd.f32 %v1216, %v1807
        %v1947 = vadd.f32 %v1219, %v1810
        %v1948 = vadd.f32 %v1221, %v1812
        %v1949 = vadd.f32 %v1224, %v1815
        %v1950 = vadd.f32 %v1226, %v1817
        %v1951 = vadd.f32 %v1229, %v1820
        %v1952 = vadd.f32 %v1231, %v1822
        %v1953 = vadd.f32 %v1234, %v1825
        %v1954 = vadd.f32 %v1236, %v1827
        %v1955 = vadd.f32 %v1239, %v1830
        %v1956 = vadd.f32 %v1241, %v1832
        %v1957 = vadd.f32 %v1244, %v1835
        %v1958 = vadd.f32 %v1246, %v1837
        %v1959 = vadd.f32 %v1249, %v1840
        %v1960 = vadd.f32 %v1251, %v1842
        %v1961 = vadd.f32 %v1254, %v1845
        %v1962 = vadd.f32 %v1256, %v1847
        %v1963 = vadd.f32 %v1259, %v1850
        %v1964 = vadd.f32 %v1261, %v1852
        %v1965 = vadd.f32 %v1264, %v1855
        %v1966 = vadd.f32 %v1266, %v1857
        %v1967 = vadd.f32 %v1269, %v1860
        %v1968 = vadd.f32 %v1271, %v1862
        %v1969 = vadd.f32 %v1274, %v1865
        %v1970 = vadd.f32 %v1276, %v1867
        %v1971 = vadd.f32 %v1279, %v1870
        %v1972 = vadd.f32 %v1281, %v1872
        %v1973 = vadd.f32 %v1284, %v1875
        %v1974 = vadd.f32 %v1286, %v1877
        %v1975 = vadd.f32 %v1289, %v1880
        %v1976 = vadd.f32 %v1291, %v1882
        %v1977 = vadd.f32 %v1294, %v1885
        %v1978 = vadd.f32 %v1296, %v1887
        %v1979 = vadd.f32 %v1299, %v1890
        %v1980 = vadd.f32 %v1301, %v1892
        %v1981 = vadd.f32 %v1304, %v1895
        %v1982 = vadd.f32 %v1306, %v1897
        %v1983 = vadd.f32 %v1309, %v1900
        %v1984 = vadd.f32 %v1311, %v1902
        %v1985 = vadd.f32 %v1314, %v1905
        %v1986 = vadd.f32 %v1316, %v1907
        %v1987 = vadd.f32 %v1319, %v1910
        %v1988 = vadd.f32 %v1321, %v1912
        %v1989 = vadd.f32 %v1324, %v1915
        %v1990 = vadd.f32 %v1326, %v1917
        %v1991 = vpack.c.bf16 %v192, %v191
        %v1992 = vpack.c.bf16 %v195, %v193
        %v1993 = vpack.c.bf16 %v197, %v196
        %v1994 = vpack.c.bf16 %v200, %v199
        %v1995 = vpack.c.bf16 %v203, %v201
        %v1996 = vpack.c.bf16 %v205, %v204
        %v1997 = vpack.c.bf16 %v208, %v207
        %v1998 = vpack.c.bf16 %v211, %v209
        %v1999 = vpack.c.bf16 %v213, %v212
        %v2000 = vpack.c.bf16 %v216, %v215
        %v2001 = vpack.c.bf16 %v219, %v217
        %v2002 = vpack.c.bf16 %v221, %v220
        %v2003 = vpack.c.bf16 %v224, %v223
        %v2004 = vpack.c.bf16 %v227, %v225
        %v2005 = vpack.c.bf16 %v229, %v228
        %v2006 = vpack.c.bf16 %v232, %v231
        %v2007 = vpack.c.bf16 %v235, %v233
        %v2008 = vpack.c.bf16 %v237, %v236
        %v2009 = vpack.c.bf16 %v240, %v239
        %v2010 = vpack.c.bf16 %v243, %v241
        %v2011 = vpack.c.bf16 %v245, %v244
        %v2012 = vpack.c.bf16 %v248, %v247
        %v2013 = vpack.c.bf16 %v251, %v249
        %v2014 = vpack.c.bf16 %v253, %v252
        %v2015 = vpack.c.bf16 %v256, %v255
        %v2016 = vpack.c.bf16 %v259, %v257
        %v2017 = vpack.c.bf16 %v261, %v260
        %v2018 = vpack.c.bf16 %v264, %v263
        %v2019 = vpack.c.bf16 %v267, %v265
        %v2020 = vpack.c.bf16 %v269, %v268
        %v2021 = vpack.c.bf16 %v272, %v271
        %v2022 = vpack.c.bf16 %v275, %v273
        %v2023 = vpack.c.bf16 %v277, %v276
        %v2024 = vpack.c.bf16 %v280, %v279
        %v2025 = vpack.c.bf16 %v283, %v281
        %v2026 = vpack.c.bf16 %v285, %v284
        %s2027 = scalar_lea.vmem %s1, 48
        %v2028 = vld [vmem:[%s2027] sm:$0xf]
        %v2029 = vld [vmem:[%s2027 + $0x4] sm:$0xf]
        %v2030 = vld [vmem:[%s2027 + $0x8] sm:$0xf]
        %v2031 = vld [vmem:[%s2027 + $0xc] sm:$0xf]
        %v2036 = vunpack.c.l.b16 %v2028
        %v2037 = vunpack.c.l.b16 %v2029
        %v2038 = vunpack.c.l.b16 %v2030
        %v2039 = vunpack.c.l.b16 %v2031
        %v2040 = vpack.c.b16 %v2037, %v2036
        %v2041 = vpack.c.b16 %v2039, %v2038
        %v2045 = vsel %vm721, %v1991, 0
        %v2048 = vsel %vm721, %v1992, 0
        %v2051 = vsel %vm721, %v1993, 0
        %v2054 = vsel %vm721, %v1994, 0
        %v2057 = vsel %vm721, %v1995, 0
        %v2060 = vsel %vm721, %v1996, 0
        %v2063 = vsel %vm721, %v1997, 0
        %v2066 = vsel %vm721, %v1998, 0
        %v2069 = vsel %vm721, %v1999, 0
        %v2072 = vsel %vm721, %v2000, 0
        %v2075 = vsel %vm721, %v2001, 0
        %v2078 = vsel %vm721, %v2002, 0
        %v2081 = vsel %vm721, %v2003, 0
        %v2084 = vsel %vm721, %v2004, 0
        %v2087 = vsel %vm721, %v2005, 0
        %v2090 = vsel %vm721, %v2006, 0
        %v2093 = vsel %vm721, %v2007, 0
        %v2096 = vsel %vm721, %v2008, 0
        %v2099 = vsel %vm721, %v2009, 0
        %v2102 = vsel %vm721, %v2010, 0
        %v2105 = vsel %vm721, %v2011, 0
        %v2108 = vsel %vm721, %v2012, 0
        %v2111 = vsel %vm721, %v2013, 0
        %v2114 = vsel %vm721, %v2014, 0
        %v2117 = vsel %vm721, %v2015, 0
        %v2120 = vsel %vm721, %v2016, 0
        %v2123 = vsel %vm721, %v2017, 0
        %v2126 = vsel %vm721, %v2018, 0
        %v2129 = vsel %vm721, %v2019, 0
        %v2132 = vsel %vm721, %v2020, 0
        %v2135 = vsel %vm721, %v2021, 0
        %v2138 = vsel %vm721, %v2022, 0
        %v2141 = vsel %vm721, %v2023, 0
        %v2144 = vsel %vm721, %v2024, 0
        %v2147 = vsel %vm721, %v2025, 0
        %v2150 = vsel %vm721, %v2026, 0
        %2152 = vmatpush.bf16.msra.mxu0 0
        %2153 = vmatpush.bf16.msra.mxu0 0
        %2154 = vmatpush.bf16.msra.mxu0 0
        %2155 = vmatpush.bf16.msra.mxu0 0
        %2156 = vmatpush.bf16.msra.mxu0 0
        %2157 = vmatpush.bf16.msra.mxu0 0
        %2158 = vmatpush.bf16.msra.mxu0 %v2041
        %2159 = vmatpush.bf16.msra.mxu0 %v2040
        %2160 = vmatmul.bf16.gmra.mxu0 %v2045
        %v2161 = vpop.f32.mrf.mxu0
        %v2162 = vadd.f32 0.0, %v2161
        %v2163 = vpop.f32.mrf.mxu0
        %v2164 = vadd.f32 0.0, %v2163
        %2165 = vmatmul.bf16.gmra.mxu0 %v2048
        %v2166 = vpop.f32.mrf.mxu0
        %v2167 = vadd.f32 0.0, %v2166
        %v2168 = vpop.f32.mrf.mxu0
        %v2169 = vadd.f32 0.0, %v2168
        %2170 = vmatmul.bf16.gmra.mxu0 %v2051
        %v2171 = vpop.f32.mrf.mxu0
        %v2172 = vadd.f32 0.0, %v2171
        %v2173 = vpop.f32.mrf.mxu0
        %v2174 = vadd.f32 0.0, %v2173
        %2175 = vmatmul.bf16.gmra.mxu0 %v2054
        %v2176 = vpop.f32.mrf.mxu0
        %v2177 = vadd.f32 0.0, %v2176
        %v2178 = vpop.f32.mrf.mxu0
        %v2179 = vadd.f32 0.0, %v2178
        %2180 = vmatmul.bf16.gmra.mxu0 %v2057
        %v2181 = vpop.f32.mrf.mxu0
        %v2182 = vadd.f32 0.0, %v2181
        %v2183 = vpop.f32.mrf.mxu0
        %v2184 = vadd.f32 0.0, %v2183
        %2185 = vmatmul.bf16.gmra.mxu0 %v2060
        %v2186 = vpop.f32.mrf.mxu0
        %v2187 = vadd.f32 0.0, %v2186
        %v2188 = vpop.f32.mrf.mxu0
        %v2189 = vadd.f32 0.0, %v2188
        %2190 = vmatmul.bf16.gmra.mxu0 %v2063
        %v2191 = vpop.f32.mrf.mxu0
        %v2192 = vadd.f32 0.0, %v2191
        %v2193 = vpop.f32.mrf.mxu0
        %v2194 = vadd.f32 0.0, %v2193
        %2195 = vmatmul.bf16.gmra.mxu0 %v2066
        %v2196 = vpop.f32.mrf.mxu0
        %v2197 = vadd.f32 0.0, %v2196
        %v2198 = vpop.f32.mrf.mxu0
        %v2199 = vadd.f32 0.0, %v2198
        %2200 = vmatmul.bf16.gmra.mxu0 %v2069
        %v2201 = vpop.f32.mrf.mxu0
        %v2202 = vadd.f32 0.0, %v2201
        %v2203 = vpop.f32.mrf.mxu0
        %v2204 = vadd.f32 0.0, %v2203
        %2205 = vmatmul.bf16.gmra.mxu0 %v2072
        %v2206 = vpop.f32.mrf.mxu0
        %v2207 = vadd.f32 0.0, %v2206
        %v2208 = vpop.f32.mrf.mxu0
        %v2209 = vadd.f32 0.0, %v2208
        %2210 = vmatmul.bf16.gmra.mxu0 %v2075
        %v2211 = vpop.f32.mrf.mxu0
        %v2212 = vadd.f32 0.0, %v2211
        %v2213 = vpop.f32.mrf.mxu0
        %v2214 = vadd.f32 0.0, %v2213
        %2215 = vmatmul.bf16.gmra.mxu0 %v2078
        %v2216 = vpop.f32.mrf.mxu0
        %v2217 = vadd.f32 0.0, %v2216
        %v2218 = vpop.f32.mrf.mxu0
        %v2219 = vadd.f32 0.0, %v2218
        %2220 = vmatmul.bf16.gmra.mxu0 %v2081
        %v2221 = vpop.f32.mrf.mxu0
        %v2222 = vadd.f32 0.0, %v2221
        %v2223 = vpop.f32.mrf.mxu0
        %v2224 = vadd.f32 0.0, %v2223
        %2225 = vmatmul.bf16.gmra.mxu0 %v2084
        %v2226 = vpop.f32.mrf.mxu0
        %v2227 = vadd.f32 0.0, %v2226
        %v2228 = vpop.f32.mrf.mxu0
        %v2229 = vadd.f32 0.0, %v2228
        %2230 = vmatmul.bf16.gmra.mxu0 %v2087
        %v2231 = vpop.f32.mrf.mxu0
        %v2232 = vadd.f32 0.0, %v2231
        %v2233 = vpop.f32.mrf.mxu0
        %v2234 = vadd.f32 0.0, %v2233
        %2235 = vmatmul.bf16.gmra.mxu0 %v2090
        %v2236 = vpop.f32.mrf.mxu0
        %v2237 = vadd.f32 0.0, %v2236
        %v2238 = vpop.f32.mrf.mxu0
        %v2239 = vadd.f32 0.0, %v2238
        %2240 = vmatmul.bf16.gmra.mxu0 %v2093
        %v2241 = vpop.f32.mrf.mxu0
        %v2242 = vadd.f32 0.0, %v2241
        %v2243 = vpop.f32.mrf.mxu0
        %v2244 = vadd.f32 0.0, %v2243
        %2245 = vmatmul.bf16.gmra.mxu0 %v2096
        %v2246 = vpop.f32.mrf.mxu0
        %v2247 = vadd.f32 0.0, %v2246
        %v2248 = vpop.f32.mrf.mxu0
        %v2249 = vadd.f32 0.0, %v2248
        %2250 = vmatmul.bf16.gmra.mxu0 %v2099
        %v2251 = vpop.f32.mrf.mxu0
        %v2252 = vadd.f32 0.0, %v2251
        %v2253 = vpop.f32.mrf.mxu0
        %v2254 = vadd.f32 0.0, %v2253
        %2255 = vmatmul.bf16.gmra.mxu0 %v2102
        %v2256 = vpop.f32.mrf.mxu0
        %v2257 = vadd.f32 0.0, %v2256
        %v2258 = vpop.f32.mrf.mxu0
        %v2259 = vadd.f32 0.0, %v2258
        %2260 = vmatmul.bf16.gmra.mxu0 %v2105
        %v2261 = vpop.f32.mrf.mxu0
        %v2262 = vadd.f32 0.0, %v2261
        %v2263 = vpop.f32.mrf.mxu0
        %v2264 = vadd.f32 0.0, %v2263
        %2265 = vmatmul.bf16.gmra.mxu0 %v2108
        %v2266 = vpop.f32.mrf.mxu0
        %v2267 = vadd.f32 0.0, %v2266
        %v2268 = vpop.f32.mrf.mxu0
        %v2269 = vadd.f32 0.0, %v2268
        %2270 = vmatmul.bf16.gmra.mxu0 %v2111
        %v2271 = vpop.f32.mrf.mxu0
        %v2272 = vadd.f32 0.0, %v2271
        %v2273 = vpop.f32.mrf.mxu0
        %v2274 = vadd.f32 0.0, %v2273
        %2275 = vmatmul.bf16.gmra.mxu0 %v2114
        %v2276 = vpop.f32.mrf.mxu0
        %v2277 = vadd.f32 0.0, %v2276
        %v2278 = vpop.f32.mrf.mxu0
        %v2279 = vadd.f32 0.0, %v2278
        %2280 = vmatmul.bf16.gmra.mxu0 %v2117
        %v2281 = vpop.f32.mrf.mxu0
        %v2282 = vadd.f32 0.0, %v2281
        %v2283 = vpop.f32.mrf.mxu0
        %v2284 = vadd.f32 0.0, %v2283
        %2285 = vmatmul.bf16.gmra.mxu0 %v2120
        %v2286 = vpop.f32.mrf.mxu0
        %v2287 = vadd.f32 0.0, %v2286
        %v2288 = vpop.f32.mrf.mxu0
        %v2289 = vadd.f32 0.0, %v2288
        %2290 = vmatmul.bf16.gmra.mxu0 %v2123
        %v2291 = vpop.f32.mrf.mxu0
        %v2292 = vadd.f32 0.0, %v2291
        %v2293 = vpop.f32.mrf.mxu0
        %v2294 = vadd.f32 0.0, %v2293
        %2295 = vmatmul.bf16.gmra.mxu0 %v2126
        %v2296 = vpop.f32.mrf.mxu0
        %v2297 = vadd.f32 0.0, %v2296
        %v2298 = vpop.f32.mrf.mxu0
        %v2299 = vadd.f32 0.0, %v2298
        %2300 = vmatmul.bf16.gmra.mxu0 %v2129
        %v2301 = vpop.f32.mrf.mxu0
        %v2302 = vadd.f32 0.0, %v2301
        %v2303 = vpop.f32.mrf.mxu0
        %v2304 = vadd.f32 0.0, %v2303
        %2305 = vmatmul.bf16.gmra.mxu0 %v2132
        %v2306 = vpop.f32.mrf.mxu0
        %v2307 = vadd.f32 0.0, %v2306
        %v2308 = vpop.f32.mrf.mxu0
        %v2309 = vadd.f32 0.0, %v2308
        %2310 = vmatmul.bf16.gmra.mxu0 %v2135
        %v2311 = vpop.f32.mrf.mxu0
        %v2312 = vadd.f32 0.0, %v2311
        %v2313 = vpop.f32.mrf.mxu0
        %v2314 = vadd.f32 0.0, %v2313
        %2315 = vmatmul.bf16.gmra.mxu0 %v2138
        %v2316 = vpop.f32.mrf.mxu0
        %v2317 = vadd.f32 0.0, %v2316
        %v2318 = vpop.f32.mrf.mxu0
        %v2319 = vadd.f32 0.0, %v2318
        %2320 = vmatmul.bf16.gmra.mxu0 %v2141
        %v2321 = vpop.f32.mrf.mxu0
        %v2322 = vadd.f32 0.0, %v2321
        %v2323 = vpop.f32.mrf.mxu0
        %v2324 = vadd.f32 0.0, %v2323
        %2325 = vmatmul.bf16.gmra.mxu0 %v2144
        %v2326 = vpop.f32.mrf.mxu0
        %v2327 = vadd.f32 0.0, %v2326
        %v2328 = vpop.f32.mrf.mxu0
        %v2329 = vadd.f32 0.0, %v2328
        %2330 = vmatmul.bf16.gmra.mxu0 %v2147
        %v2331 = vpop.f32.mrf.mxu0
        %v2332 = vadd.f32 0.0, %v2331
        %v2333 = vpop.f32.mrf.mxu0
        %v2334 = vadd.f32 0.0, %v2333
        %2335 = vmatmul.bf16.gmra.mxu0 %v2150
        %v2336 = vpop.f32.mrf.mxu0
        %v2337 = vadd.f32 0.0, %v2336
        %v2338 = vpop.f32.mrf.mxu0
        %v2339 = vadd.f32 0.0, %v2338
        %2340 = vdwg.mxu0
        %v2341 = vadd.f32 %v1919, %v2162
        %v2342 = vadd.f32 %v1920, %v2164
        %v2343 = vadd.f32 %v1921, %v2167
        %v2344 = vadd.f32 %v1922, %v2169
        %v2345 = vadd.f32 %v1923, %v2172
        %v2346 = vadd.f32 %v1924, %v2174
        %v2347 = vadd.f32 %v1925, %v2177
        %v2348 = vadd.f32 %v1926, %v2179
        %v2349 = vadd.f32 %v1927, %v2182
        %v2350 = vadd.f32 %v1928, %v2184
        %v2351 = vadd.f32 %v1929, %v2187
        %v2352 = vadd.f32 %v1930, %v2189
        %v2353 = vadd.f32 %v1931, %v2192
        %v2354 = vadd.f32 %v1932, %v2194
        %v2355 = vadd.f32 %v1933, %v2197
        %v2356 = vadd.f32 %v1934, %v2199
        %v2357 = vadd.f32 %v1935, %v2202
        %v2358 = vadd.f32 %v1936, %v2204
        %v2359 = vadd.f32 %v1937, %v2207
        %v2360 = vadd.f32 %v1938, %v2209
        %v2361 = vadd.f32 %v1939, %v2212
        %v2362 = vadd.f32 %v1940, %v2214
        %v2363 = vadd.f32 %v1941, %v2217
        %v2364 = vadd.f32 %v1942, %v2219
        %v2365 = vadd.f32 %v1943, %v2222
        %v2366 = vadd.f32 %v1944, %v2224
        %v2367 = vadd.f32 %v1945, %v2227
        %v2368 = vadd.f32 %v1946, %v2229
        %v2369 = vadd.f32 %v1947, %v2232
        %v2370 = vadd.f32 %v1948, %v2234
        %v2371 = vadd.f32 %v1949, %v2237
        %v2372 = vadd.f32 %v1950, %v2239
        %v2373 = vadd.f32 %v1951, %v2242
        %v2374 = vadd.f32 %v1952, %v2244
        %v2375 = vadd.f32 %v1953, %v2247
        %v2376 = vadd.f32 %v1954, %v2249
        %v2377 = vadd.f32 %v1955, %v2252
        %v2378 = vadd.f32 %v1956, %v2254
        %v2379 = vadd.f32 %v1957, %v2257
        %v2380 = vadd.f32 %v1958, %v2259
        %v2381 = vadd.f32 %v1959, %v2262
        %v2382 = vadd.f32 %v1960, %v2264
        %v2383 = vadd.f32 %v1961, %v2267
        %v2384 = vadd.f32 %v1962, %v2269
        %v2385 = vadd.f32 %v1963, %v2272
        %v2386 = vadd.f32 %v1964, %v2274
        %v2387 = vadd.f32 %v1965, %v2277
        %v2388 = vadd.f32 %v1966, %v2279
        %v2389 = vadd.f32 %v1967, %v2282
        %v2390 = vadd.f32 %v1968, %v2284
        %v2391 = vadd.f32 %v1969, %v2287
        %v2392 = vadd.f32 %v1970, %v2289
        %v2393 = vadd.f32 %v1971, %v2292
        %v2394 = vadd.f32 %v1972, %v2294
        %v2395 = vadd.f32 %v1973, %v2297
        %v2396 = vadd.f32 %v1974, %v2299
        %v2397 = vadd.f32 %v1975, %v2302
        %v2398 = vadd.f32 %v1976, %v2304
        %v2399 = vadd.f32 %v1977, %v2307
        %v2400 = vadd.f32 %v1978, %v2309
        %v2401 = vadd.f32 %v1979, %v2312
        %v2402 = vadd.f32 %v1980, %v2314
        %v2403 = vadd.f32 %v1981, %v2317
        %v2404 = vadd.f32 %v1982, %v2319
        %v2405 = vadd.f32 %v1983, %v2322
        %v2406 = vadd.f32 %v1984, %v2324
        %v2407 = vadd.f32 %v1985, %v2327
        %v2408 = vadd.f32 %v1986, %v2329
        %v2409 = vadd.f32 %v1987, %v2332
        %v2410 = vadd.f32 %v1988, %v2334
        %v2411 = vadd.f32 %v1989, %v2337
        %v2412 = vadd.f32 %v1990, %v2339
        %v2417 = vrot.slane %v283, 1
        %v2418 = vrot.slane %v284, 1
        %v2419 = vsel %vm427, %v2417, %v2418
        %v2420 = vrot.slane %v285, 1
        %v2421 = vsel %vm427, %v2418, %v2420
        %v2422 = vrot.slane %v286, 1
        %v2423 = vsel %vm427, %v2420, %v2422
        %v2427 = vpack.c.bf16 %v439, %v437
        %v2428 = vpack.c.bf16 %v444, %v441
        %v2429 = vpack.c.bf16 %v448, %v446
        %v2430 = vpack.c.bf16 %v453, %v451
        %v2431 = vpack.c.bf16 %v458, %v455
        %v2432 = vpack.c.bf16 %v462, %v460
        %v2433 = vpack.c.bf16 %v467, %v465
        %v2434 = vpack.c.bf16 %v472, %v469
        %v2435 = vpack.c.bf16 %v476, %v474
        %v2436 = vpack.c.bf16 %v481, %v479
        %v2437 = vpack.c.bf16 %v486, %v483
        %v2438 = vpack.c.bf16 %v490, %v488
        %v2439 = vpack.c.bf16 %v495, %v493
        %v2440 = vpack.c.bf16 %v500, %v497
        %v2441 = vpack.c.bf16 %v504, %v502
        %v2442 = vpack.c.bf16 %v509, %v507
        %v2443 = vpack.c.bf16 %v514, %v511
        %v2444 = vpack.c.bf16 %v518, %v516
        %v2445 = vpack.c.bf16 %v523, %v521
        %v2446 = vpack.c.bf16 %v528, %v525
        %v2447 = vpack.c.bf16 %v532, %v530
        %v2448 = vpack.c.bf16 %v537, %v535
        %v2449 = vpack.c.bf16 %v542, %v539
        %v2450 = vpack.c.bf16 %v546, %v544
        %v2451 = vpack.c.bf16 %v551, %v549
        %v2452 = vpack.c.bf16 %v556, %v553
        %v2453 = vpack.c.bf16 %v560, %v558
        %v2454 = vpack.c.bf16 %v565, %v563
        %v2455 = vpack.c.bf16 %v570, %v567
        %v2456 = vpack.c.bf16 %v574, %v572
        %v2457 = vpack.c.bf16 %v579, %v577
        %v2458 = vpack.c.bf16 %v584, %v581
        %v2459 = vpack.c.bf16 %v588, %v586
        %v2460 = vpack.c.bf16 %v593, %v591
        %v2461 = vpack.c.bf16 %v2419, %v595
        %v2462 = vpack.c.bf16 %v2423, %v2421
        %s2463 = scalar_lea.vmem %s1, 64
        %v2464 = vld [vmem:[%s2463] sm:$0xf]
        %v2465 = vld [vmem:[%s2463 + $0x4] sm:$0xf]
        %v2466 = vld [vmem:[%s2463 + $0x8] sm:$0xf]
        %v2467 = vld [vmem:[%s2463 + $0xc] sm:$0xf]
        %v2472 = vunpack.c.l.b16 %v2464
        %v2473 = vunpack.c.l.b16 %v2465
        %v2474 = vunpack.c.l.b16 %v2466
        %v2475 = vunpack.c.l.b16 %v2467
        %v2476 = vpack.c.b16 %v2473, %v2472
        %v2477 = vpack.c.b16 %v2475, %v2474
        %v2481 = vsel %vm721, %v2427, 0
        %v2484 = vsel %vm721, %v2428, 0
        %v2487 = vsel %vm721, %v2429, 0
        %v2490 = vsel %vm721, %v2430, 0
        %v2493 = vsel %vm721, %v2431, 0
        %v2496 = vsel %vm721, %v2432, 0
        %v2499 = vsel %vm721, %v2433, 0
        %v2502 = vsel %vm721, %v2434, 0
        %v2505 = vsel %vm721, %v2435, 0
        %v2508 = vsel %vm721, %v2436, 0
        %v2511 = vsel %vm721, %v2437, 0
        %v2514 = vsel %vm721, %v2438, 0
        %v2517 = vsel %vm721, %v2439, 0
        %v2520 = vsel %vm721, %v2440, 0
        %v2523 = vsel %vm721, %v2441, 0
        %v2526 = vsel %vm721, %v2442, 0
        %v2529 = vsel %vm721, %v2443, 0
        %v2532 = vsel %vm721, %v2444, 0
        %v2535 = vsel %vm721, %v2445, 0
        %v2538 = vsel %vm721, %v2446, 0
        %v2541 = vsel %vm721, %v2447, 0
        %v2544 = vsel %vm721, %v2448, 0
        %v2547 = vsel %vm721, %v2449, 0
        %v2550 = vsel %vm721, %v2450, 0
        %v2553 = vsel %vm721, %v2451, 0
        %v2556 = vsel %vm721, %v2452, 0
        %v2559 = vsel %vm721, %v2453, 0
        %v2562 = vsel %vm721, %v2454, 0
        %v2565 = vsel %vm721, %v2455, 0
        %v2568 = vsel %vm721, %v2456, 0
        %v2571 = vsel %vm721, %v2457, 0
        %v2574 = vsel %vm721, %v2458, 0
        %v2577 = vsel %vm721, %v2459, 0
        %v2580 = vsel %vm721, %v2460, 0
        %v2583 = vsel %vm721, %v2461, 0
        %v2586 = vsel %vm721, %v2462, 0
        %2588 = vmatpush.bf16.msra.mxu0 0
        %2589 = vmatpush.bf16.msra.mxu0 0
        %2590 = vmatpush.bf16.msra.mxu0 0
        %2591 = vmatpush.bf16.msra.mxu0 0
        %2592 = vmatpush.bf16.msra.mxu0 0
        %2593 = vmatpush.bf16.msra.mxu0 0
        %2594 = vmatpush.bf16.msra.mxu0 %v2477
        %2595 = vmatpush.bf16.msra.mxu0 %v2476
        %2596 = vmatmul.bf16.gmra.mxu0 %v2481
        %v2597 = vpop.f32.mrf.mxu0
        %v2598 = vadd.f32 0.0, %v2597
        %v2599 = vpop.f32.mrf.mxu0
        %v2600 = vadd.f32 0.0, %v2599
        %2601 = vmatmul.bf16.gmra.mxu0 %v2484
        %v2602 = vpop.f32.mrf.mxu0
        %v2603 = vadd.f32 0.0, %v2602
        %v2604 = vpop.f32.mrf.mxu0
        %v2605 = vadd.f32 0.0, %v2604
        %2606 = vmatmul.bf16.gmra.mxu0 %v2487
        %v2607 = vpop.f32.mrf.mxu0
        %v2608 = vadd.f32 0.0, %v2607
        %v2609 = vpop.f32.mrf.mxu0
        %v2610 = vadd.f32 0.0, %v2609
        %2611 = vmatmul.bf16.gmra.mxu0 %v2490
        %v2612 = vpop.f32.mrf.mxu0
        %v2613 = vadd.f32 0.0, %v2612
        %v2614 = vpop.f32.mrf.mxu0
        %v2615 = vadd.f32 0.0, %v2614
        %2616 = vmatmul.bf16.gmra.mxu0 %v2493
        %v2617 = vpop.f32.mrf.mxu0
        %v2618 = vadd.f32 0.0, %v2617
        %v2619 = vpop.f32.mrf.mxu0
        %v2620 = vadd.f32 0.0, %v2619
        %2621 = vmatmul.bf16.gmra.mxu0 %v2496
        %v2622 = vpop.f32.mrf.mxu0
        %v2623 = vadd.f32 0.0, %v2622
        %v2624 = vpop.f32.mrf.mxu0
        %v2625 = vadd.f32 0.0, %v2624
        %2626 = vmatmul.bf16.gmra.mxu0 %v2499
        %v2627 = vpop.f32.mrf.mxu0
        %v2628 = vadd.f32 0.0, %v2627
        %v2629 = vpop.f32.mrf.mxu0
        %v2630 = vadd.f32 0.0, %v2629
        %2631 = vmatmul.bf16.gmra.mxu0 %v2502
        %v2632 = vpop.f32.mrf.mxu0
        %v2633 = vadd.f32 0.0, %v2632
        %v2634 = vpop.f32.mrf.mxu0
        %v2635 = vadd.f32 0.0, %v2634
        %2636 = vmatmul.bf16.gmra.mxu0 %v2505
        %v2637 = vpop.f32.mrf.mxu0
        %v2638 = vadd.f32 0.0, %v2637
        %v2639 = vpop.f32.mrf.mxu0
        %v2640 = vadd.f32 0.0, %v2639
        %2641 = vmatmul.bf16.gmra.mxu0 %v2508
        %v2642 = vpop.f32.mrf.mxu0
        %v2643 = vadd.f32 0.0, %v2642
        %v2644 = vpop.f32.mrf.mxu0
        %v2645 = vadd.f32 0.0, %v2644
        %2646 = vmatmul.bf16.gmra.mxu0 %v2511
        %v2647 = vpop.f32.mrf.mxu0
        %v2648 = vadd.f32 0.0, %v2647
        %v2649 = vpop.f32.mrf.mxu0
        %v2650 = vadd.f32 0.0, %v2649
        %2651 = vmatmul.bf16.gmra.mxu0 %v2514
        %v2652 = vpop.f32.mrf.mxu0
        %v2653 = vadd.f32 0.0, %v2652
        %v2654 = vpop.f32.mrf.mxu0
        %v2655 = vadd.f32 0.0, %v2654
        %2656 = vmatmul.bf16.gmra.mxu0 %v2517
        %v2657 = vpop.f32.mrf.mxu0
        %v2658 = vadd.f32 0.0, %v2657
        %v2659 = vpop.f32.mrf.mxu0
        %v2660 = vadd.f32 0.0, %v2659
        %2661 = vmatmul.bf16.gmra.mxu0 %v2520
        %v2662 = vpop.f32.mrf.mxu0
        %v2663 = vadd.f32 0.0, %v2662
        %v2664 = vpop.f32.mrf.mxu0
        %v2665 = vadd.f32 0.0, %v2664
        %2666 = vmatmul.bf16.gmra.mxu0 %v2523
        %v2667 = vpop.f32.mrf.mxu0
        %v2668 = vadd.f32 0.0, %v2667
        %v2669 = vpop.f32.mrf.mxu0
        %v2670 = vadd.f32 0.0, %v2669
        %2671 = vmatmul.bf16.gmra.mxu0 %v2526
        %v2672 = vpop.f32.mrf.mxu0
        %v2673 = vadd.f32 0.0, %v2672
        %v2674 = vpop.f32.mrf.mxu0
        %v2675 = vadd.f32 0.0, %v2674
        %2676 = vmatmul.bf16.gmra.mxu0 %v2529
        %v2677 = vpop.f32.mrf.mxu0
        %v2678 = vadd.f32 0.0, %v2677
        %v2679 = vpop.f32.mrf.mxu0
        %v2680 = vadd.f32 0.0, %v2679
        %2681 = vmatmul.bf16.gmra.mxu0 %v2532
        %v2682 = vpop.f32.mrf.mxu0
        %v2683 = vadd.f32 0.0, %v2682
        %v2684 = vpop.f32.mrf.mxu0
        %v2685 = vadd.f32 0.0, %v2684
        %2686 = vmatmul.bf16.gmra.mxu0 %v2535
        %v2687 = vpop.f32.mrf.mxu0
        %v2688 = vadd.f32 0.0, %v2687
        %v2689 = vpop.f32.mrf.mxu0
        %v2690 = vadd.f32 0.0, %v2689
        %2691 = vmatmul.bf16.gmra.mxu0 %v2538
        %v2692 = vpop.f32.mrf.mxu0
        %v2693 = vadd.f32 0.0, %v2692
        %v2694 = vpop.f32.mrf.mxu0
        %v2695 = vadd.f32 0.0, %v2694
        %2696 = vmatmul.bf16.gmra.mxu0 %v2541
        %v2697 = vpop.f32.mrf.mxu0
        %v2698 = vadd.f32 0.0, %v2697
        %v2699 = vpop.f32.mrf.mxu0
        %v2700 = vadd.f32 0.0, %v2699
        %2701 = vmatmul.bf16.gmra.mxu0 %v2544
        %v2702 = vpop.f32.mrf.mxu0
        %v2703 = vadd.f32 0.0, %v2702
        %v2704 = vpop.f32.mrf.mxu0
        %v2705 = vadd.f32 0.0, %v2704
        %2706 = vmatmul.bf16.gmra.mxu0 %v2547
        %v2707 = vpop.f32.mrf.mxu0
        %v2708 = vadd.f32 0.0, %v2707
        %v2709 = vpop.f32.mrf.mxu0
        %v2710 = vadd.f32 0.0, %v2709
        %2711 = vmatmul.bf16.gmra.mxu0 %v2550
        %v2712 = vpop.f32.mrf.mxu0
        %v2713 = vadd.f32 0.0, %v2712
        %v2714 = vpop.f32.mrf.mxu0
        %v2715 = vadd.f32 0.0, %v2714
        %2716 = vmatmul.bf16.gmra.mxu0 %v2553
        %v2717 = vpop.f32.mrf.mxu0
        %v2718 = vadd.f32 0.0, %v2717
        %v2719 = vpop.f32.mrf.mxu0
        %v2720 = vadd.f32 0.0, %v2719
        %2721 = vmatmul.bf16.gmra.mxu0 %v2556
        %v2722 = vpop.f32.mrf.mxu0
        %v2723 = vadd.f32 0.0, %v2722
        %v2724 = vpop.f32.mrf.mxu0
        %v2725 = vadd.f32 0.0, %v2724
        %2726 = vmatmul.bf16.gmra.mxu0 %v2559
        %v2727 = vpop.f32.mrf.mxu0
        %v2728 = vadd.f32 0.0, %v2727
        %v2729 = vpop.f32.mrf.mxu0
        %v2730 = vadd.f32 0.0, %v2729
        %2731 = vmatmul.bf16.gmra.mxu0 %v2562
        %v2732 = vpop.f32.mrf.mxu0
        %v2733 = vadd.f32 0.0, %v2732
        %v2734 = vpop.f32.mrf.mxu0
        %v2735 = vadd.f32 0.0, %v2734
        %2736 = vmatmul.bf16.gmra.mxu0 %v2565
        %v2737 = vpop.f32.mrf.mxu0
        %v2738 = vadd.f32 0.0, %v2737
        %v2739 = vpop.f32.mrf.mxu0
        %v2740 = vadd.f32 0.0, %v2739
        %2741 = vmatmul.bf16.gmra.mxu0 %v2568
        %v2742 = vpop.f32.mrf.mxu0
        %v2743 = vadd.f32 0.0, %v2742
        %v2744 = vpop.f32.mrf.mxu0
        %v2745 = vadd.f32 0.0, %v2744
        %2746 = vmatmul.bf16.gmra.mxu0 %v2571
        %v2747 = vpop.f32.mrf.mxu0
        %v2748 = vadd.f32 0.0, %v2747
        %v2749 = vpop.f32.mrf.mxu0
        %v2750 = vadd.f32 0.0, %v2749
        %2751 = vmatmul.bf16.gmra.mxu0 %v2574
        %v2752 = vpop.f32.mrf.mxu0
        %v2753 = vadd.f32 0.0, %v2752
        %v2754 = vpop.f32.mrf.mxu0
        %v2755 = vadd.f32 0.0, %v2754
        %2756 = vmatmul.bf16.gmra.mxu0 %v2577
        %v2757 = vpop.f32.mrf.mxu0
        %v2758 = vadd.f32 0.0, %v2757
        %v2759 = vpop.f32.mrf.mxu0
        %v2760 = vadd.f32 0.0, %v2759
        %2761 = vmatmul.bf16.gmra.mxu0 %v2580
        %v2762 = vpop.f32.mrf.mxu0
        %v2763 = vadd.f32 0.0, %v2762
        %v2764 = vpop.f32.mrf.mxu0
        %v2765 = vadd.f32 0.0, %v2764
        %2766 = vmatmul.bf16.gmra.mxu0 %v2583
        %v2767 = vpop.f32.mrf.mxu0
        %v2768 = vadd.f32 0.0, %v2767
        %v2769 = vpop.f32.mrf.mxu0
        %v2770 = vadd.f32 0.0, %v2769
        %2771 = vmatmul.bf16.gmra.mxu0 %v2586
        %v2772 = vpop.f32.mrf.mxu0
        %v2773 = vadd.f32 0.0, %v2772
        %v2774 = vpop.f32.mrf.mxu0
        %v2775 = vadd.f32 0.0, %v2774
        %2776 = vdwg.mxu0
        %v2777 = vadd.f32 %v2341, %v2598
        %v2778 = vadd.f32 %v2342, %v2600
        %v2779 = vadd.f32 %v2343, %v2603
        %v2780 = vadd.f32 %v2344, %v2605
        %v2781 = vadd.f32 %v2345, %v2608
        %v2782 = vadd.f32 %v2346, %v2610
        %v2783 = vadd.f32 %v2347, %v2613
        %v2784 = vadd.f32 %v2348, %v2615
        %v2785 = vadd.f32 %v2349, %v2618
        %v2786 = vadd.f32 %v2350, %v2620
        %v2787 = vadd.f32 %v2351, %v2623
        %v2788 = vadd.f32 %v2352, %v2625
        %v2789 = vadd.f32 %v2353, %v2628
        %v2790 = vadd.f32 %v2354, %v2630
        %v2791 = vadd.f32 %v2355, %v2633
        %v2792 = vadd.f32 %v2356, %v2635
        %v2793 = vadd.f32 %v2357, %v2638
        %v2794 = vadd.f32 %v2358, %v2640
        %v2795 = vadd.f32 %v2359, %v2643
        %v2796 = vadd.f32 %v2360, %v2645
        %v2797 = vadd.f32 %v2361, %v2648
        %v2798 = vadd.f32 %v2362, %v2650
        %v2799 = vadd.f32 %v2363, %v2653
        %v2800 = vadd.f32 %v2364, %v2655
        %v2801 = vadd.f32 %v2365, %v2658
        %v2802 = vadd.f32 %v2366, %v2660
        %v2803 = vadd.f32 %v2367, %v2663
        %v2804 = vadd.f32 %v2368, %v2665
        %v2805 = vadd.f32 %v2369, %v2668
        %v2806 = vadd.f32 %v2370, %v2670
        %v2807 = vadd.f32 %v2371, %v2673
        %v2808 = vadd.f32 %v2372, %v2675
        %v2809 = vadd.f32 %v2373, %v2678
        %v2810 = vadd.f32 %v2374, %v2680
        %v2811 = vadd.f32 %v2375, %v2683
        %v2812 = vadd.f32 %v2376, %v2685
        %v2813 = vadd.f32 %v2377, %v2688
        %v2814 = vadd.f32 %v2378, %v2690
        %v2815 = vadd.f32 %v2379, %v2693
        %v2816 = vadd.f32 %v2380, %v2695
        %v2817 = vadd.f32 %v2381, %v2698
        %v2818 = vadd.f32 %v2382, %v2700
        %v2819 = vadd.f32 %v2383, %v2703
        %v2820 = vadd.f32 %v2384, %v2705
        %v2821 = vadd.f32 %v2385, %v2708
        %v2822 = vadd.f32 %v2386, %v2710
        %v2823 = vadd.f32 %v2387, %v2713
        %v2824 = vadd.f32 %v2388, %v2715
        %v2825 = vadd.f32 %v2389, %v2718
        %v2826 = vadd.f32 %v2390, %v2720
        %v2827 = vadd.f32 %v2391, %v2723
        %v2828 = vadd.f32 %v2392, %v2725
        %v2829 = vadd.f32 %v2393, %v2728
        %v2830 = vadd.f32 %v2394, %v2730
        %v2831 = vadd.f32 %v2395, %v2733
        %v2832 = vadd.f32 %v2396, %v2735
        %v2833 = vadd.f32 %v2397, %v2738
        %v2834 = vadd.f32 %v2398, %v2740
        %v2835 = vadd.f32 %v2399, %v2743
        %v2836 = vadd.f32 %v2400, %v2745
        %v2837 = vadd.f32 %v2401, %v2748
        %v2838 = vadd.f32 %v2402, %v2750
        %v2839 = vadd.f32 %v2403, %v2753
        %v2840 = vadd.f32 %v2404, %v2755
        %v2841 = vadd.f32 %v2405, %v2758
        %v2842 = vadd.f32 %v2406, %v2760
        %v2843 = vadd.f32 %v2407, %v2763
        %v2844 = vadd.f32 %v2408, %v2765
        %v2845 = vadd.f32 %v2409, %v2768
        %v2846 = vadd.f32 %v2410, %v2770
        %v2847 = vadd.f32 %v2411, %v2773
        %v2848 = vadd.f32 %v2412, %v2775
        %v2849 = vrot.slane %v283, 2
        %v2850 = vrot.slane %v284, 2
        %v2851 = vsel %vm1328, %v2849, %v2850
        %v2852 = vrot.slane %v285, 2
        %v2853 = vsel %vm1328, %v2850, %v2852
        %v2854 = vrot.slane %v286, 2
        %v2855 = vsel %vm1328, %v2852, %v2854
        %v2859 = vpack.c.bf16 %v1340, %v1338
        %v2860 = vpack.c.bf16 %v1345, %v1342
        %v2861 = vpack.c.bf16 %v1349, %v1347
        %v2862 = vpack.c.bf16 %v1354, %v1352
        %v2863 = vpack.c.bf16 %v1359, %v1356
        %v2864 = vpack.c.bf16 %v1363, %v1361
        %v2865 = vpack.c.bf16 %v1368, %v1366
        %v2866 = vpack.c.bf16 %v1373, %v1370
        %v2867 = vpack.c.bf16 %v1377, %v1375
        %v2868 = vpack.c.bf16 %v1382, %v1380
        %v2869 = vpack.c.bf16 %v1387, %v1384
        %v2870 = vpack.c.bf16 %v1391, %v1389
        %v2871 = vpack.c.bf16 %v1396, %v1394
        %v2872 = vpack.c.bf16 %v1401, %v1398
        %v2873 = vpack.c.bf16 %v1405, %v1403
        %v2874 = vpack.c.bf16 %v1410, %v1408
        %v2875 = vpack.c.bf16 %v1415, %v1412
        %v2876 = vpack.c.bf16 %v1419, %v1417
        %v2877 = vpack.c.bf16 %v1424, %v1422
        %v2878 = vpack.c.bf16 %v1429, %v1426
        %v2879 = vpack.c.bf16 %v1433, %v1431
        %v2880 = vpack.c.bf16 %v1438, %v1436
        %v2881 = vpack.c.bf16 %v1443, %v1440
        %v2882 = vpack.c.bf16 %v1447, %v1445
        %v2883 = vpack.c.bf16 %v1452, %v1450
        %v2884 = vpack.c.bf16 %v1457, %v1454
        %v2885 = vpack.c.bf16 %v1461, %v1459
        %v2886 = vpack.c.bf16 %v1466, %v1464
        %v2887 = vpack.c.bf16 %v1471, %v1468
        %v2888 = vpack.c.bf16 %v1475, %v1473
        %v2889 = vpack.c.bf16 %v1480, %v1478
        %v2890 = vpack.c.bf16 %v1485, %v1482
        %v2891 = vpack.c.bf16 %v1489, %v1487
        %v2892 = vpack.c.bf16 %v1494, %v1492
        %v2893 = vpack.c.bf16 %v2851, %v1496
        %v2894 = vpack.c.bf16 %v2855, %v2853
        %s2895 = scalar_lea.vmem %s1, 80
        %v2896 = vld [vmem:[%s2895] sm:$0xf]
        %v2897 = vld [vmem:[%s2895 + $0x4] sm:$0xf]
        %v2898 = vld [vmem:[%s2895 + $0x8] sm:$0xf]
        %v2899 = vld [vmem:[%s2895 + $0xc] sm:$0xf]
        %v2904 = vunpack.c.l.b16 %v2896
        %v2905 = vunpack.c.l.b16 %v2897
        %v2906 = vunpack.c.l.b16 %v2898
        %v2907 = vunpack.c.l.b16 %v2899
        %v2908 = vpack.c.b16 %v2905, %v2904
        %v2909 = vpack.c.b16 %v2907, %v2906
        %v2913 = vsel %vm721, %v2859, 0
        %v2916 = vsel %vm721, %v2860, 0
        %v2919 = vsel %vm721, %v2861, 0
        %v2922 = vsel %vm721, %v2862, 0
        %v2925 = vsel %vm721, %v2863, 0
        %v2928 = vsel %vm721, %v2864, 0
        %v2931 = vsel %vm721, %v2865, 0
        %v2934 = vsel %vm721, %v2866, 0
        %v2937 = vsel %vm721, %v2867, 0
        %v2940 = vsel %vm721, %v2868, 0
        %v2943 = vsel %vm721, %v2869, 0
        %v2946 = vsel %vm721, %v2870, 0
        %v2949 = vsel %vm721, %v2871, 0
        %v2952 = vsel %vm721, %v2872, 0
        %v2955 = vsel %vm721, %v2873, 0
        %v2958 = vsel %vm721, %v2874, 0
        %v2961 = vsel %vm721, %v2875, 0
        %v2964 = vsel %vm721, %v2876, 0
        %v2967 = vsel %vm721, %v2877, 0
        %v2970 = vsel %vm721, %v2878, 0
        %v2973 = vsel %vm721, %v2879, 0
        %v2976 = vsel %vm721, %v2880, 0
        %v2979 = vsel %vm721, %v2881, 0
        %v2982 = vsel %vm721, %v2882, 0
        %v2985 = vsel %vm721, %v2883, 0
        %v2988 = vsel %vm721, %v2884, 0
        %v2991 = vsel %vm721, %v2885, 0
        %v2994 = vsel %vm721, %v2886, 0
        %v2997 = vsel %vm721, %v2887, 0
        %v3000 = vsel %vm721, %v2888, 0
        %v3003 = vsel %vm721, %v2889, 0
        %v3006 = vsel %vm721, %v2890, 0
        %v3009 = vsel %vm721, %v2891, 0
        %v3012 = vsel %vm721, %v2892, 0
        %v3015 = vsel %vm721, %v2893, 0
        %v3018 = vsel %vm721, %v2894, 0
        %3020 = vmatpush.bf16.msra.mxu0 0
        %3021 = vmatpush.bf16.msra.mxu0 0
        %3022 = vmatpush.bf16.msra.mxu0 0
        %3023 = vmatpush.bf16.msra.mxu0 0
        %3024 = vmatpush.bf16.msra.mxu0 0
        %3025 = vmatpush.bf16.msra.mxu0 0
        %3026 = vmatpush.bf16.msra.mxu0 %v2909
        %3027 = vmatpush.bf16.msra.mxu0 %v2908
        %3028 = vmatmul.bf16.gmra.mxu0 %v2913
        %v3029 = vpop.f32.mrf.mxu0
        %v3030 = vadd.f32 0.0, %v3029
        %v3031 = vpop.f32.mrf.mxu0
        %v3032 = vadd.f32 0.0, %v3031
        %3033 = vmatmul.bf16.gmra.mxu0 %v2916
        %v3034 = vpop.f32.mrf.mxu0
        %v3035 = vadd.f32 0.0, %v3034
        %v3036 = vpop.f32.mrf.mxu0
        %v3037 = vadd.f32 0.0, %v3036
        %3038 = vmatmul.bf16.gmra.mxu0 %v2919
        %v3039 = vpop.f32.mrf.mxu0
        %v3040 = vadd.f32 0.0, %v3039
        %v3041 = vpop.f32.mrf.mxu0
        %v3042 = vadd.f32 0.0, %v3041
        %3043 = vmatmul.bf16.gmra.mxu0 %v2922
        %v3044 = vpop.f32.mrf.mxu0
        %v3045 = vadd.f32 0.0, %v3044
        %v3046 = vpop.f32.mrf.mxu0
        %v3047 = vadd.f32 0.0, %v3046
        %3048 = vmatmul.bf16.gmra.mxu0 %v2925
        %v3049 = vpop.f32.mrf.mxu0
        %v3050 = vadd.f32 0.0, %v3049
        %v3051 = vpop.f32.mrf.mxu0
        %v3052 = vadd.f32 0.0, %v3051
        %3053 = vmatmul.bf16.gmra.mxu0 %v2928
        %v3054 = vpop.f32.mrf.mxu0
        %v3055 = vadd.f32 0.0, %v3054
        %v3056 = vpop.f32.mrf.mxu0
        %v3057 = vadd.f32 0.0, %v3056
        %3058 = vmatmul.bf16.gmra.mxu0 %v2931
        %v3059 = vpop.f32.mrf.mxu0
        %v3060 = vadd.f32 0.0, %v3059
        %v3061 = vpop.f32.mrf.mxu0
        %v3062 = vadd.f32 0.0, %v3061
        %3063 = vmatmul.bf16.gmra.mxu0 %v2934
        %v3064 = vpop.f32.mrf.mxu0
        %v3065 = vadd.f32 0.0, %v3064
        %v3066 = vpop.f32.mrf.mxu0
        %v3067 = vadd.f32 0.0, %v3066
        %3068 = vmatmul.bf16.gmra.mxu0 %v2937
        %v3069 = vpop.f32.mrf.mxu0
        %v3070 = vadd.f32 0.0, %v3069
        %v3071 = vpop.f32.mrf.mxu0
        %v3072 = vadd.f32 0.0, %v3071
        %3073 = vmatmul.bf16.gmra.mxu0 %v2940
        %v3074 = vpop.f32.mrf.mxu0
        %v3075 = vadd.f32 0.0, %v3074
        %v3076 = vpop.f32.mrf.mxu0
        %v3077 = vadd.f32 0.0, %v3076
        %3078 = vmatmul.bf16.gmra.mxu0 %v2943
        %v3079 = vpop.f32.mrf.mxu0
        %v3080 = vadd.f32 0.0, %v3079
        %v3081 = vpop.f32.mrf.mxu0
        %v3082 = vadd.f32 0.0, %v3081
        %3083 = vmatmul.bf16.gmra.mxu0 %v2946
        %v3084 = vpop.f32.mrf.mxu0
        %v3085 = vadd.f32 0.0, %v3084
        %v3086 = vpop.f32.mrf.mxu0
        %v3087 = vadd.f32 0.0, %v3086
        %3088 = vmatmul.bf16.gmra.mxu0 %v2949
        %v3089 = vpop.f32.mrf.mxu0
        %v3090 = vadd.f32 0.0, %v3089
        %v3091 = vpop.f32.mrf.mxu0
        %v3092 = vadd.f32 0.0, %v3091
        %3093 = vmatmul.bf16.gmra.mxu0 %v2952
        %v3094 = vpop.f32.mrf.mxu0
        %v3095 = vadd.f32 0.0, %v3094
        %v3096 = vpop.f32.mrf.mxu0
        %v3097 = vadd.f32 0.0, %v3096
        %3098 = vmatmul.bf16.gmra.mxu0 %v2955
        %v3099 = vpop.f32.mrf.mxu0
        %v3100 = vadd.f32 0.0, %v3099
        %v3101 = vpop.f32.mrf.mxu0
        %v3102 = vadd.f32 0.0, %v3101
        %3103 = vmatmul.bf16.gmra.mxu0 %v2958
        %v3104 = vpop.f32.mrf.mxu0
        %v3105 = vadd.f32 0.0, %v3104
        %v3106 = vpop.f32.mrf.mxu0
        %v3107 = vadd.f32 0.0, %v3106
        %3108 = vmatmul.bf16.gmra.mxu0 %v2961
        %v3109 = vpop.f32.mrf.mxu0
        %v3110 = vadd.f32 0.0, %v3109
        %v3111 = vpop.f32.mrf.mxu0
        %v3112 = vadd.f32 0.0, %v3111
        %3113 = vmatmul.bf16.gmra.mxu0 %v2964
        %v3114 = vpop.f32.mrf.mxu0
        %v3115 = vadd.f32 0.0, %v3114
        %v3116 = vpop.f32.mrf.mxu0
        %v3117 = vadd.f32 0.0, %v3116
        %3118 = vmatmul.bf16.gmra.mxu0 %v2967
        %v3119 = vpop.f32.mrf.mxu0
        %v3120 = vadd.f32 0.0, %v3119
        %v3121 = vpop.f32.mrf.mxu0
        %v3122 = vadd.f32 0.0, %v3121
        %3123 = vmatmul.bf16.gmra.mxu0 %v2970
        %v3124 = vpop.f32.mrf.mxu0
        %v3125 = vadd.f32 0.0, %v3124
        %v3126 = vpop.f32.mrf.mxu0
        %v3127 = vadd.f32 0.0, %v3126
        %3128 = vmatmul.bf16.gmra.mxu0 %v2973
        %v3129 = vpop.f32.mrf.mxu0
        %v3130 = vadd.f32 0.0, %v3129
        %v3131 = vpop.f32.mrf.mxu0
        %v3132 = vadd.f32 0.0, %v3131
        %3133 = vmatmul.bf16.gmra.mxu0 %v2976
        %v3134 = vpop.f32.mrf.mxu0
        %v3135 = vadd.f32 0.0, %v3134
        %v3136 = vpop.f32.mrf.mxu0
        %v3137 = vadd.f32 0.0, %v3136
        %3138 = vmatmul.bf16.gmra.mxu0 %v2979
        %v3139 = vpop.f32.mrf.mxu0
        %v3140 = vadd.f32 0.0, %v3139
        %v3141 = vpop.f32.mrf.mxu0
        %v3142 = vadd.f32 0.0, %v3141
        %3143 = vmatmul.bf16.gmra.mxu0 %v2982
        %v3144 = vpop.f32.mrf.mxu0
        %v3145 = vadd.f32 0.0, %v3144
        %v3146 = vpop.f32.mrf.mxu0
        %v3147 = vadd.f32 0.0, %v3146
        %3148 = vmatmul.bf16.gmra.mxu0 %v2985
        %v3149 = vpop.f32.mrf.mxu0
        %v3150 = vadd.f32 0.0, %v3149
        %v3151 = vpop.f32.mrf.mxu0
        %v3152 = vadd.f32 0.0, %v3151
        %3153 = vmatmul.bf16.gmra.mxu0 %v2988
        %v3154 = vpop.f32.mrf.mxu0
        %v3155 = vadd.f32 0.0, %v3154
        %v3156 = vpop.f32.mrf.mxu0
        %v3157 = vadd.f32 0.0, %v3156
        %3158 = vmatmul.bf16.gmra.mxu0 %v2991
        %v3159 = vpop.f32.mrf.mxu0
        %v3160 = vadd.f32 0.0, %v3159
        %v3161 = vpop.f32.mrf.mxu0
        %v3162 = vadd.f32 0.0, %v3161
        %3163 = vmatmul.bf16.gmra.mxu0 %v2994
        %v3164 = vpop.f32.mrf.mxu0
        %v3165 = vadd.f32 0.0, %v3164
        %v3166 = vpop.f32.mrf.mxu0
        %v3167 = vadd.f32 0.0, %v3166
        %3168 = vmatmul.bf16.gmra.mxu0 %v2997
        %v3169 = vpop.f32.mrf.mxu0
        %v3170 = vadd.f32 0.0, %v3169
        %v3171 = vpop.f32.mrf.mxu0
        %v3172 = vadd.f32 0.0, %v3171
        %3173 = vmatmul.bf16.gmra.mxu0 %v3000
        %v3174 = vpop.f32.mrf.mxu0
        %v3175 = vadd.f32 0.0, %v3174
        %v3176 = vpop.f32.mrf.mxu0
        %v3177 = vadd.f32 0.0, %v3176
        %3178 = vmatmul.bf16.gmra.mxu0 %v3003
        %v3179 = vpop.f32.mrf.mxu0
        %v3180 = vadd.f32 0.0, %v3179
        %v3181 = vpop.f32.mrf.mxu0
        %v3182 = vadd.f32 0.0, %v3181
        %3183 = vmatmul.bf16.gmra.mxu0 %v3006
        %v3184 = vpop.f32.mrf.mxu0
        %v3185 = vadd.f32 0.0, %v3184
        %v3186 = vpop.f32.mrf.mxu0
        %v3187 = vadd.f32 0.0, %v3186
        %3188 = vmatmul.bf16.gmra.mxu0 %v3009
        %v3189 = vpop.f32.mrf.mxu0
        %v3190 = vadd.f32 0.0, %v3189
        %v3191 = vpop.f32.mrf.mxu0
        %v3192 = vadd.f32 0.0, %v3191
        %3193 = vmatmul.bf16.gmra.mxu0 %v3012
        %v3194 = vpop.f32.mrf.mxu0
        %v3195 = vadd.f32 0.0, %v3194
        %v3196 = vpop.f32.mrf.mxu0
        %v3197 = vadd.f32 0.0, %v3196
        %3198 = vmatmul.bf16.gmra.mxu0 %v3015
        %v3199 = vpop.f32.mrf.mxu0
        %v3200 = vadd.f32 0.0, %v3199
        %v3201 = vpop.f32.mrf.mxu0
        %v3202 = vadd.f32 0.0, %v3201
        %3203 = vmatmul.bf16.gmra.mxu0 %v3018
        %v3204 = vpop.f32.mrf.mxu0
        %v3205 = vadd.f32 0.0, %v3204
        %v3206 = vpop.f32.mrf.mxu0
        %v3207 = vadd.f32 0.0, %v3206
        %3208 = vdwg.mxu0
        %v3209 = vadd.f32 %v2777, %v3030
        %v3210 = vadd.f32 %v2778, %v3032
        %v3211 = vadd.f32 %v2779, %v3035
        %v3212 = vadd.f32 %v2780, %v3037
        %v3213 = vadd.f32 %v2781, %v3040
        %v3214 = vadd.f32 %v2782, %v3042
        %v3215 = vadd.f32 %v2783, %v3045
        %v3216 = vadd.f32 %v2784, %v3047
        %v3217 = vadd.f32 %v2785, %v3050
        %v3218 = vadd.f32 %v2786, %v3052
        %v3219 = vadd.f32 %v2787, %v3055
        %v3220 = vadd.f32 %v2788, %v3057
        %v3221 = vadd.f32 %v2789, %v3060
        %v3222 = vadd.f32 %v2790, %v3062
        %v3223 = vadd.f32 %v2791, %v3065
        %v3224 = vadd.f32 %v2792, %v3067
        %v3225 = vadd.f32 %v2793, %v3070
        %v3226 = vadd.f32 %v2794, %v3072
        %v3227 = vadd.f32 %v2795, %v3075
        %v3228 = vadd.f32 %v2796, %v3077
        %v3229 = vadd.f32 %v2797, %v3080
        %v3230 = vadd.f32 %v2798, %v3082
        %v3231 = vadd.f32 %v2799, %v3085
        %v3232 = vadd.f32 %v2800, %v3087
        %v3233 = vadd.f32 %v2801, %v3090
        %v3234 = vadd.f32 %v2802, %v3092
        %v3235 = vadd.f32 %v2803, %v3095
        %v3236 = vadd.f32 %v2804, %v3097
        %v3237 = vadd.f32 %v2805, %v3100
        %v3238 = vadd.f32 %v2806, %v3102
        %v3239 = vadd.f32 %v2807, %v3105
        %v3240 = vadd.f32 %v2808, %v3107
        %v3241 = vadd.f32 %v2809, %v3110
        %v3242 = vadd.f32 %v2810, %v3112
        %v3243 = vadd.f32 %v2811, %v3115
        %v3244 = vadd.f32 %v2812, %v3117
        %v3245 = vadd.f32 %v2813, %v3120
        %v3246 = vadd.f32 %v2814, %v3122
        %v3247 = vadd.f32 %v2815, %v3125
        %v3248 = vadd.f32 %v2816, %v3127
        %v3249 = vadd.f32 %v2817, %v3130
        %v3250 = vadd.f32 %v2818, %v3132
        %v3251 = vadd.f32 %v2819, %v3135
        %v3252 = vadd.f32 %v2820, %v3137
        %v3253 = vadd.f32 %v2821, %v3140
        %v3254 = vadd.f32 %v2822, %v3142
        %v3255 = vadd.f32 %v2823, %v3145
        %v3256 = vadd.f32 %v2824, %v3147
        %v3257 = vadd.f32 %v2825, %v3150
        %v3258 = vadd.f32 %v2826, %v3152
        %v3259 = vadd.f32 %v2827, %v3155
        %v3260 = vadd.f32 %v2828, %v3157
        %v3261 = vadd.f32 %v2829, %v3160
        %v3262 = vadd.f32 %v2830, %v3162
        %v3263 = vadd.f32 %v2831, %v3165
        %v3264 = vadd.f32 %v2832, %v3167
        %v3265 = vadd.f32 %v2833, %v3170
        %v3266 = vadd.f32 %v2834, %v3172
        %v3267 = vadd.f32 %v2835, %v3175
        %v3268 = vadd.f32 %v2836, %v3177
        %v3269 = vadd.f32 %v2837, %v3180
        %v3270 = vadd.f32 %v2838, %v3182
        %v3271 = vadd.f32 %v2839, %v3185
        %v3272 = vadd.f32 %v2840, %v3187
        %v3273 = vadd.f32 %v2841, %v3190
        %v3274 = vadd.f32 %v2842, %v3192
        %v3275 = vadd.f32 %v2843, %v3195
        %v3276 = vadd.f32 %v2844, %v3197
        %v3277 = vadd.f32 %v2845, %v3200
        %v3278 = vadd.f32 %v2846, %v3202
        %v3279 = vadd.f32 %v2847, %v3205
        %v3280 = vadd.f32 %v2848, %v3207
        %v3281 = vpack.c.bf16 %v284, %v283
        %v3282 = vpack.c.bf16 %v287, %v285
        %v3283 = vpack.c.bf16 %v289, %v288
        %s3284 = scalar_lea.vmem %s1, 96
        %v3285 = vld [vmem:[%s3284] sm:$0xf]
        %v3286 = vld [vmem:[%s3284 + $0x4] sm:$0xf]
        %v3287 = vld [vmem:[%s3284 + $0x8] sm:$0xf]
        %v3288 = vld [vmem:[%s3284 + $0xc] sm:$0xf]
        %v3293 = vunpack.c.l.b16 %v3285
        %v3294 = vunpack.c.l.b16 %v3286
        %v3295 = vunpack.c.l.b16 %v3287
        %v3296 = vunpack.c.l.b16 %v3288
        %v3297 = vpack.c.b16 %v3294, %v3293
        %v3298 = vpack.c.b16 %v3296, %v3295
        %v3302 = vsel %vm721, %v3281, 0
        %v3305 = vsel %vm721, %v3282, 0
        %v3308 = vsel %vm721, %v3283, 0
        %3310 = vmatpush.bf16.msra.mxu0 0
        %3311 = vmatpush.bf16.msra.mxu0 0
        %3312 = vmatpush.bf16.msra.mxu0 0
        %3313 = vmatpush.bf16.msra.mxu0 0
        %3314 = vmatpush.bf16.msra.mxu0 0
        %3315 = vmatpush.bf16.msra.mxu0 0
        %3316 = vmatpush.bf16.msra.mxu0 %v3298
        %3317 = vmatpush.bf16.msra.mxu0 %v3297
        %3318 = vmatmul.bf16.gmra.mxu0 %v1041
        %v3319 = vpop.f32.mrf.mxu0
        %v3320 = vadd.f32 0.0, %v3319
        %v3321 = vpop.f32.mrf.mxu0
        %v3322 = vadd.f32 0.0, %v3321
        %3323 = vmatmul.bf16.gmra.mxu0 %v1044
        %v3324 = vpop.f32.mrf.mxu0
        %v3325 = vadd.f32 0.0, %v3324
        %v3326 = vpop.f32.mrf.mxu0
        %v3327 = vadd.f32 0.0, %v3326
        %3328 = vmatmul.bf16.gmra.mxu0 %v1047
        %v3329 = vpop.f32.mrf.mxu0
        %v3330 = vadd.f32 0.0, %v3329
        %v3331 = vpop.f32.mrf.mxu0
        %v3332 = vadd.f32 0.0, %v3331
        %3333 = vmatmul.bf16.gmra.mxu0 %v1050
        %v3334 = vpop.f32.mrf.mxu0
        %v3335 = vadd.f32 0.0, %v3334
        %v3336 = vpop.f32.mrf.mxu0
        %v3337 = vadd.f32 0.0, %v3336
        %3338 = vmatmul.bf16.gmra.mxu0 %v1053
        %v3339 = vpop.f32.mrf.mxu0
        %v3340 = vadd.f32 0.0, %v3339
        %v3341 = vpop.f32.mrf.mxu0
        %v3342 = vadd.f32 0.0, %v3341
        %3343 = vmatmul.bf16.gmra.mxu0 %v1056
        %v3344 = vpop.f32.mrf.mxu0
        %v3345 = vadd.f32 0.0, %v3344
        %v3346 = vpop.f32.mrf.mxu0
        %v3347 = vadd.f32 0.0, %v3346
        %3348 = vmatmul.bf16.gmra.mxu0 %v1059
        %v3349 = vpop.f32.mrf.mxu0
        %v3350 = vadd.f32 0.0, %v3349
        %v3351 = vpop.f32.mrf.mxu0
        %v3352 = vadd.f32 0.0, %v3351
        %3353 = vmatmul.bf16.gmra.mxu0 %v1062
        %v3354 = vpop.f32.mrf.mxu0
        %v3355 = vadd.f32 0.0, %v3354
        %v3356 = vpop.f32.mrf.mxu0
        %v3357 = vadd.f32 0.0, %v3356
        %3358 = vmatmul.bf16.gmra.mxu0 %v1065
        %v3359 = vpop.f32.mrf.mxu0
        %v3360 = vadd.f32 0.0, %v3359
        %v3361 = vpop.f32.mrf.mxu0
        %v3362 = vadd.f32 0.0, %v3361
        %3363 = vmatmul.bf16.gmra.mxu0 %v1068
        %v3364 = vpop.f32.mrf.mxu0
        %v3365 = vadd.f32 0.0, %v3364
        %v3366 = vpop.f32.mrf.mxu0
        %v3367 = vadd.f32 0.0, %v3366
        %3368 = vmatmul.bf16.gmra.mxu0 %v1071
        %v3369 = vpop.f32.mrf.mxu0
        %v3370 = vadd.f32 0.0, %v3369
        %v3371 = vpop.f32.mrf.mxu0
        %v3372 = vadd.f32 0.0, %v3371
        %3373 = vmatmul.bf16.gmra.mxu0 %v1074
        %v3374 = vpop.f32.mrf.mxu0
        %v3375 = vadd.f32 0.0, %v3374
        %v3376 = vpop.f32.mrf.mxu0
        %v3377 = vadd.f32 0.0, %v3376
        %3378 = vmatmul.bf16.gmra.mxu0 %v1077
        %v3379 = vpop.f32.mrf.mxu0
        %v3380 = vadd.f32 0.0, %v3379
        %v3381 = vpop.f32.mrf.mxu0
        %v3382 = vadd.f32 0.0, %v3381
        %3383 = vmatmul.bf16.gmra.mxu0 %v1080
        %v3384 = vpop.f32.mrf.mxu0
        %v3385 = vadd.f32 0.0, %v3384
        %v3386 = vpop.f32.mrf.mxu0
        %v3387 = vadd.f32 0.0, %v3386
        %3388 = vmatmul.bf16.gmra.mxu0 %v1083
        %v3389 = vpop.f32.mrf.mxu0
        %v3390 = vadd.f32 0.0, %v3389
        %v3391 = vpop.f32.mrf.mxu0
        %v3392 = vadd.f32 0.0, %v3391
        %3393 = vmatmul.bf16.gmra.mxu0 %v1086
        %v3394 = vpop.f32.mrf.mxu0
        %v3395 = vadd.f32 0.0, %v3394
        %v3396 = vpop.f32.mrf.mxu0
        %v3397 = vadd.f32 0.0, %v3396
        %3398 = vmatmul.bf16.gmra.mxu0 %v1089
        %v3399 = vpop.f32.mrf.mxu0
        %v3400 = vadd.f32 0.0, %v3399
        %v3401 = vpop.f32.mrf.mxu0
        %v3402 = vadd.f32 0.0, %v3401
        %3403 = vmatmul.bf16.gmra.mxu0 %v1092
        %v3404 = vpop.f32.mrf.mxu0
        %v3405 = vadd.f32 0.0, %v3404
        %v3406 = vpop.f32.mrf.mxu0
        %v3407 = vadd.f32 0.0, %v3406
        %3408 = vmatmul.bf16.gmra.mxu0 %v1095
        %v3409 = vpop.f32.mrf.mxu0
        %v3410 = vadd.f32 0.0, %v3409
        %v3411 = vpop.f32.mrf.mxu0
        %v3412 = vadd.f32 0.0, %v3411
        %3413 = vmatmul.bf16.gmra.mxu0 %v1098
        %v3414 = vpop.f32.mrf.mxu0
        %v3415 = vadd.f32 0.0, %v3414
        %v3416 = vpop.f32.mrf.mxu0
        %v3417 = vadd.f32 0.0, %v3416
        %3418 = vmatmul.bf16.gmra.mxu0 %v1101
        %v3419 = vpop.f32.mrf.mxu0
        %v3420 = vadd.f32 0.0, %v3419
        %v3421 = vpop.f32.mrf.mxu0
        %v3422 = vadd.f32 0.0, %v3421
        %3423 = vmatmul.bf16.gmra.mxu0 %v1104
        %v3424 = vpop.f32.mrf.mxu0
        %v3425 = vadd.f32 0.0, %v3424
        %v3426 = vpop.f32.mrf.mxu0
        %v3427 = vadd.f32 0.0, %v3426
        %3428 = vmatmul.bf16.gmra.mxu0 %v1107
        %v3429 = vpop.f32.mrf.mxu0
        %v3430 = vadd.f32 0.0, %v3429
        %v3431 = vpop.f32.mrf.mxu0
        %v3432 = vadd.f32 0.0, %v3431
        %3433 = vmatmul.bf16.gmra.mxu0 %v1110
        %v3434 = vpop.f32.mrf.mxu0
        %v3435 = vadd.f32 0.0, %v3434
        %v3436 = vpop.f32.mrf.mxu0
        %v3437 = vadd.f32 0.0, %v3436
        %3438 = vmatmul.bf16.gmra.mxu0 %v1113
        %v3439 = vpop.f32.mrf.mxu0
        %v3440 = vadd.f32 0.0, %v3439
        %v3441 = vpop.f32.mrf.mxu0
        %v3442 = vadd.f32 0.0, %v3441
        %3443 = vmatmul.bf16.gmra.mxu0 %v1116
        %v3444 = vpop.f32.mrf.mxu0
        %v3445 = vadd.f32 0.0, %v3444
        %v3446 = vpop.f32.mrf.mxu0
        %v3447 = vadd.f32 0.0, %v3446
        %3448 = vmatmul.bf16.gmra.mxu0 %v1119
        %v3449 = vpop.f32.mrf.mxu0
        %v3450 = vadd.f32 0.0, %v3449
        %v3451 = vpop.f32.mrf.mxu0
        %v3452 = vadd.f32 0.0, %v3451
        %3453 = vmatmul.bf16.gmra.mxu0 %v1122
        %v3454 = vpop.f32.mrf.mxu0
        %v3455 = vadd.f32 0.0, %v3454
        %v3456 = vpop.f32.mrf.mxu0
        %v3457 = vadd.f32 0.0, %v3456
        %3458 = vmatmul.bf16.gmra.mxu0 %v1125
        %v3459 = vpop.f32.mrf.mxu0
        %v3460 = vadd.f32 0.0, %v3459
        %v3461 = vpop.f32.mrf.mxu0
        %v3462 = vadd.f32 0.0, %v3461
        %3463 = vmatmul.bf16.gmra.mxu0 %v1128
        %v3464 = vpop.f32.mrf.mxu0
        %v3465 = vadd.f32 0.0, %v3464
        %v3466 = vpop.f32.mrf.mxu0
        %v3467 = vadd.f32 0.0, %v3466
        %3468 = vmatmul.bf16.gmra.mxu0 %v1131
        %v3469 = vpop.f32.mrf.mxu0
        %v3470 = vadd.f32 0.0, %v3469
        %v3471 = vpop.f32.mrf.mxu0
        %v3472 = vadd.f32 0.0, %v3471
        %3473 = vmatmul.bf16.gmra.mxu0 %v1134
        %v3474 = vpop.f32.mrf.mxu0
        %v3475 = vadd.f32 0.0, %v3474
        %v3476 = vpop.f32.mrf.mxu0
        %v3477 = vadd.f32 0.0, %v3476
        %3478 = vmatmul.bf16.gmra.mxu0 %v1137
        %v3479 = vpop.f32.mrf.mxu0
        %v3480 = vadd.f32 0.0, %v3479
        %v3481 = vpop.f32.mrf.mxu0
        %v3482 = vadd.f32 0.0, %v3481
        %3483 = vmatmul.bf16.gmra.mxu0 %v3302
        %v3484 = vpop.f32.mrf.mxu0
        %v3485 = vadd.f32 0.0, %v3484
        %v3486 = vpop.f32.mrf.mxu0
        %v3487 = vadd.f32 0.0, %v3486
        %3488 = vmatmul.bf16.gmra.mxu0 %v3305
        %v3489 = vpop.f32.mrf.mxu0
        %v3490 = vadd.f32 0.0, %v3489
        %v3491 = vpop.f32.mrf.mxu0
        %v3492 = vadd.f32 0.0, %v3491
        %3493 = vmatmul.bf16.gmra.mxu0 %v3308
        %v3494 = vpop.f32.mrf.mxu0
        %v3495 = vadd.f32 0.0, %v3494
        %v3496 = vpop.f32.mrf.mxu0
        %v3497 = vadd.f32 0.0, %v3496
        %3498 = vdwg.mxu0
        %v3499 = vadd.f32 %v3209, %v3320
        %v3500 = vadd.f32 %v3210, %v3322
        %v3501 = vadd.f32 %v3211, %v3325
        %v3502 = vadd.f32 %v3212, %v3327
        %v3503 = vadd.f32 %v3213, %v3330
        %v3504 = vadd.f32 %v3214, %v3332
        %v3505 = vadd.f32 %v3215, %v3335
        %v3506 = vadd.f32 %v3216, %v3337
        %v3507 = vadd.f32 %v3217, %v3340
        %v3508 = vadd.f32 %v3218, %v3342
        %v3509 = vadd.f32 %v3219, %v3345
        %v3510 = vadd.f32 %v3220, %v3347
        %v3511 = vadd.f32 %v3221, %v3350
        %v3512 = vadd.f32 %v3222, %v3352
        %v3513 = vadd.f32 %v3223, %v3355
        %v3514 = vadd.f32 %v3224, %v3357
        %v3515 = vadd.f32 %v3225, %v3360
        %v3516 = vadd.f32 %v3226, %v3362
        %v3517 = vadd.f32 %v3227, %v3365
        %v3518 = vadd.f32 %v3228, %v3367
        %v3519 = vadd.f32 %v3229, %v3370
        %v3520 = vadd.f32 %v3230, %v3372
        %v3521 = vadd.f32 %v3231, %v3375
        %v3522 = vadd.f32 %v3232, %v3377
        %v3523 = vadd.f32 %v3233, %v3380
        %v3524 = vadd.f32 %v3234, %v3382
        %v3525 = vadd.f32 %v3235, %v3385
        %v3526 = vadd.f32 %v3236, %v3387
        %v3527 = vadd.f32 %v3237, %v3390
        %v3528 = vadd.f32 %v3238, %v3392
        %v3529 = vadd.f32 %v3239, %v3395
        %v3530 = vadd.f32 %v3240, %v3397
        %v3531 = vadd.f32 %v3241, %v3400
        %v3532 = vadd.f32 %v3242, %v3402
        %v3533 = vadd.f32 %v3243, %v3405
        %v3534 = vadd.f32 %v3244, %v3407
        %v3535 = vadd.f32 %v3245, %v3410
        %v3536 = vadd.f32 %v3246, %v3412
        %v3537 = vadd.f32 %v3247, %v3415
        %v3538 = vadd.f32 %v3248, %v3417
        %v3539 = vadd.f32 %v3249, %v3420
        %v3540 = vadd.f32 %v3250, %v3422
        %v3541 = vadd.f32 %v3251, %v3425
        %v3542 = vadd.f32 %v3252, %v3427
        %v3543 = vadd.f32 %v3253, %v3430
        %v3544 = vadd.f32 %v3254, %v3432
        %v3545 = vadd.f32 %v3255, %v3435
        %v3546 = vadd.f32 %v3256, %v3437
        %v3547 = vadd.f32 %v3257, %v3440
        %v3548 = vadd.f32 %v3258, %v3442
        %v3549 = vadd.f32 %v3259, %v3445
        %v3550 = vadd.f32 %v3260, %v3447
        %v3551 = vadd.f32 %v3261, %v3450
        %v3552 = vadd.f32 %v3262, %v3452
        %v3553 = vadd.f32 %v3263, %v3455
        %v3554 = vadd.f32 %v3264, %v3457
        %v3555 = vadd.f32 %v3265, %v3460
        %v3556 = vadd.f32 %v3266, %v3462
        %v3557 = vadd.f32 %v3267, %v3465
        %v3558 = vadd.f32 %v3268, %v3467
        %v3559 = vadd.f32 %v3269, %v3470
        %v3560 = vadd.f32 %v3270, %v3472
        %v3561 = vadd.f32 %v3271, %v3475
        %v3562 = vadd.f32 %v3272, %v3477
        %v3563 = vadd.f32 %v3273, %v3480
        %v3564 = vadd.f32 %v3274, %v3482
        %v3565 = vadd.f32 %v3275, %v3485
        %v3566 = vadd.f32 %v3276, %v3487
        %v3567 = vadd.f32 %v3277, %v3490
        %v3568 = vadd.f32 %v3278, %v3492
        %v3569 = vadd.f32 %v3279, %v3495
        %v3570 = vadd.f32 %v3280, %v3497
        %v3575 = vrot.slane %v287, 1
        %v3576 = vrot.slane %v288, 1
        %v3577 = vsel %vm427, %v3575, %v3576
        %v3578 = vrot.slane %v289, 1
        %v3579 = vsel %vm427, %v3576, %v3578
        %v3580 = vrot.slane %v290, 1
        %v3581 = vsel %vm427, %v3578, %v3580
        %v3585 = vpack.c.bf16 %v2421, %v2419
        %v3586 = vpack.c.bf16 %v3577, %v2423
        %v3587 = vpack.c.bf16 %v3581, %v3579
        %s3588 = scalar_lea.vmem %s1, 112
        %v3589 = vld [vmem:[%s3588] sm:$0xf]
        %v3590 = vld [vmem:[%s3588 + $0x4] sm:$0xf]
        %v3591 = vld [vmem:[%s3588 + $0x8] sm:$0xf]
        %v3592 = vld [vmem:[%s3588 + $0xc] sm:$0xf]
        %v3597 = vunpack.c.l.b16 %v3589
        %v3598 = vunpack.c.l.b16 %v3590
        %v3599 = vunpack.c.l.b16 %v3591
        %v3600 = vunpack.c.l.b16 %v3592
        %v3601 = vpack.c.b16 %v3598, %v3597
        %v3602 = vpack.c.b16 %v3600, %v3599
        %v3606 = vsel %vm721, %v3585, 0
        %v3609 = vsel %vm721, %v3586, 0
        %v3612 = vsel %vm721, %v3587, 0
        %3614 = vmatpush.bf16.msra.mxu0 0
        %3615 = vmatpush.bf16.msra.mxu0 0
        %3616 = vmatpush.bf16.msra.mxu0 0
        %3617 = vmatpush.bf16.msra.mxu0 0
        %3618 = vmatpush.bf16.msra.mxu0 0
        %3619 = vmatpush.bf16.msra.mxu0 0
        %3620 = vmatpush.bf16.msra.mxu0 %v3602
        %3621 = vmatpush.bf16.msra.mxu0 %v3601
        %3622 = vmatmul.bf16.gmra.mxu0 %v732
        %v3623 = vpop.f32.mrf.mxu0
        %v3624 = vadd.f32 0.0, %v3623
        %v3625 = vpop.f32.mrf.mxu0
        %v3626 = vadd.f32 0.0, %v3625
        %3627 = vmatmul.bf16.gmra.mxu0 %v735
        %v3628 = vpop.f32.mrf.mxu0
        %v3629 = vadd.f32 0.0, %v3628
        %v3630 = vpop.f32.mrf.mxu0
        %v3631 = vadd.f32 0.0, %v3630
        %3632 = vmatmul.bf16.gmra.mxu0 %v738
        %v3633 = vpop.f32.mrf.mxu0
        %v3634 = vadd.f32 0.0, %v3633
        %v3635 = vpop.f32.mrf.mxu0
        %v3636 = vadd.f32 0.0, %v3635
        %3637 = vmatmul.bf16.gmra.mxu0 %v741
        %v3638 = vpop.f32.mrf.mxu0
        %v3639 = vadd.f32 0.0, %v3638
        %v3640 = vpop.f32.mrf.mxu0
        %v3641 = vadd.f32 0.0, %v3640
        %3642 = vmatmul.bf16.gmra.mxu0 %v744
        %v3643 = vpop.f32.mrf.mxu0
        %v3644 = vadd.f32 0.0, %v3643
        %v3645 = vpop.f32.mrf.mxu0
        %v3646 = vadd.f32 0.0, %v3645
        %3647 = vmatmul.bf16.gmra.mxu0 %v747
        %v3648 = vpop.f32.mrf.mxu0
        %v3649 = vadd.f32 0.0, %v3648
        %v3650 = vpop.f32.mrf.mxu0
        %v3651 = vadd.f32 0.0, %v3650
        %3652 = vmatmul.bf16.gmra.mxu0 %v750
        %v3653 = vpop.f32.mrf.mxu0
        %v3654 = vadd.f32 0.0, %v3653
        %v3655 = vpop.f32.mrf.mxu0
        %v3656 = vadd.f32 0.0, %v3655
        %3657 = vmatmul.bf16.gmra.mxu0 %v753
        %v3658 = vpop.f32.mrf.mxu0
        %v3659 = vadd.f32 0.0, %v3658
        %v3660 = vpop.f32.mrf.mxu0
        %v3661 = vadd.f32 0.0, %v3660
        %3662 = vmatmul.bf16.gmra.mxu0 %v756
        %v3663 = vpop.f32.mrf.mxu0
        %v3664 = vadd.f32 0.0, %v3663
        %v3665 = vpop.f32.mrf.mxu0
        %v3666 = vadd.f32 0.0, %v3665
        %3667 = vmatmul.bf16.gmra.mxu0 %v759
        %v3668 = vpop.f32.mrf.mxu0
        %v3669 = vadd.f32 0.0, %v3668
        %v3670 = vpop.f32.mrf.mxu0
        %v3671 = vadd.f32 0.0, %v3670
        %3672 = vmatmul.bf16.gmra.mxu0 %v762
        %v3673 = vpop.f32.mrf.mxu0
        %v3674 = vadd.f32 0.0, %v3673
        %v3675 = vpop.f32.mrf.mxu0
        %v3676 = vadd.f32 0.0, %v3675
        %3677 = vmatmul.bf16.gmra.mxu0 %v765
        %v3678 = vpop.f32.mrf.mxu0
        %v3679 = vadd.f32 0.0, %v3678
        %v3680 = vpop.f32.mrf.mxu0
        %v3681 = vadd.f32 0.0, %v3680
        %3682 = vmatmul.bf16.gmra.mxu0 %v768
        %v3683 = vpop.f32.mrf.mxu0
        %v3684 = vadd.f32 0.0, %v3683
        %v3685 = vpop.f32.mrf.mxu0
        %v3686 = vadd.f32 0.0, %v3685
        %3687 = vmatmul.bf16.gmra.mxu0 %v771
        %v3688 = vpop.f32.mrf.mxu0
        %v3689 = vadd.f32 0.0, %v3688
        %v3690 = vpop.f32.mrf.mxu0
        %v3691 = vadd.f32 0.0, %v3690
        %3692 = vmatmul.bf16.gmra.mxu0 %v774
        %v3693 = vpop.f32.mrf.mxu0
        %v3694 = vadd.f32 0.0, %v3693
        %v3695 = vpop.f32.mrf.mxu0
        %v3696 = vadd.f32 0.0, %v3695
        %3697 = vmatmul.bf16.gmra.mxu0 %v777
        %v3698 = vpop.f32.mrf.mxu0
        %v3699 = vadd.f32 0.0, %v3698
        %v3700 = vpop.f32.mrf.mxu0
        %v3701 = vadd.f32 0.0, %v3700
        %3702 = vmatmul.bf16.gmra.mxu0 %v780
        %v3703 = vpop.f32.mrf.mxu0
        %v3704 = vadd.f32 0.0, %v3703
        %v3705 = vpop.f32.mrf.mxu0
        %v3706 = vadd.f32 0.0, %v3705
        %3707 = vmatmul.bf16.gmra.mxu0 %v783
        %v3708 = vpop.f32.mrf.mxu0
        %v3709 = vadd.f32 0.0, %v3708
        %v3710 = vpop.f32.mrf.mxu0
        %v3711 = vadd.f32 0.0, %v3710
        %3712 = vmatmul.bf16.gmra.mxu0 %v786
        %v3713 = vpop.f32.mrf.mxu0
        %v3714 = vadd.f32 0.0, %v3713
        %v3715 = vpop.f32.mrf.mxu0
        %v3716 = vadd.f32 0.0, %v3715
        %3717 = vmatmul.bf16.gmra.mxu0 %v789
        %v3718 = vpop.f32.mrf.mxu0
        %v3719 = vadd.f32 0.0, %v3718
        %v3720 = vpop.f32.mrf.mxu0
        %v3721 = vadd.f32 0.0, %v3720
        %3722 = vmatmul.bf16.gmra.mxu0 %v792
        %v3723 = vpop.f32.mrf.mxu0
        %v3724 = vadd.f32 0.0, %v3723
        %v3725 = vpop.f32.mrf.mxu0
        %v3726 = vadd.f32 0.0, %v3725
        %3727 = vmatmul.bf16.gmra.mxu0 %v795
        %v3728 = vpop.f32.mrf.mxu0
        %v3729 = vadd.f32 0.0, %v3728
        %v3730 = vpop.f32.mrf.mxu0
        %v3731 = vadd.f32 0.0, %v3730
        %3732 = vmatmul.bf16.gmra.mxu0 %v798
        %v3733 = vpop.f32.mrf.mxu0
        %v3734 = vadd.f32 0.0, %v3733
        %v3735 = vpop.f32.mrf.mxu0
        %v3736 = vadd.f32 0.0, %v3735
        %3737 = vmatmul.bf16.gmra.mxu0 %v801
        %v3738 = vpop.f32.mrf.mxu0
        %v3739 = vadd.f32 0.0, %v3738
        %v3740 = vpop.f32.mrf.mxu0
        %v3741 = vadd.f32 0.0, %v3740
        %3742 = vmatmul.bf16.gmra.mxu0 %v804
        %v3743 = vpop.f32.mrf.mxu0
        %v3744 = vadd.f32 0.0, %v3743
        %v3745 = vpop.f32.mrf.mxu0
        %v3746 = vadd.f32 0.0, %v3745
        %3747 = vmatmul.bf16.gmra.mxu0 %v807
        %v3748 = vpop.f32.mrf.mxu0
        %v3749 = vadd.f32 0.0, %v3748
        %v3750 = vpop.f32.mrf.mxu0
        %v3751 = vadd.f32 0.0, %v3750
        %3752 = vmatmul.bf16.gmra.mxu0 %v810
        %v3753 = vpop.f32.mrf.mxu0
        %v3754 = vadd.f32 0.0, %v3753
        %v3755 = vpop.f32.mrf.mxu0
        %v3756 = vadd.f32 0.0, %v3755
        %3757 = vmatmul.bf16.gmra.mxu0 %v813
        %v3758 = vpop.f32.mrf.mxu0
        %v3759 = vadd.f32 0.0, %v3758
        %v3760 = vpop.f32.mrf.mxu0
        %v3761 = vadd.f32 0.0, %v3760
        %3762 = vmatmul.bf16.gmra.mxu0 %v816
        %v3763 = vpop.f32.mrf.mxu0
        %v3764 = vadd.f32 0.0, %v3763
        %v3765 = vpop.f32.mrf.mxu0
        %v3766 = vadd.f32 0.0, %v3765
        %3767 = vmatmul.bf16.gmra.mxu0 %v819
        %v3768 = vpop.f32.mrf.mxu0
        %v3769 = vadd.f32 0.0, %v3768
        %v3770 = vpop.f32.mrf.mxu0
        %v3771 = vadd.f32 0.0, %v3770
        %3772 = vmatmul.bf16.gmra.mxu0 %v822
        %v3773 = vpop.f32.mrf.mxu0
        %v3774 = vadd.f32 0.0, %v3773
        %v3775 = vpop.f32.mrf.mxu0
        %v3776 = vadd.f32 0.0, %v3775
        %3777 = vmatmul.bf16.gmra.mxu0 %v825
        %v3778 = vpop.f32.mrf.mxu0
        %v3779 = vadd.f32 0.0, %v3778
        %v3780 = vpop.f32.mrf.mxu0
        %v3781 = vadd.f32 0.0, %v3780
        %3782 = vmatmul.bf16.gmra.mxu0 %v828
        %v3783 = vpop.f32.mrf.mxu0
        %v3784 = vadd.f32 0.0, %v3783
        %v3785 = vpop.f32.mrf.mxu0
        %v3786 = vadd.f32 0.0, %v3785
        %3787 = vmatmul.bf16.gmra.mxu0 %v3606
        %v3788 = vpop.f32.mrf.mxu0
        %v3789 = vadd.f32 0.0, %v3788
        %v3790 = vpop.f32.mrf.mxu0
        %v3791 = vadd.f32 0.0, %v3790
        %3792 = vmatmul.bf16.gmra.mxu0 %v3609
        %v3793 = vpop.f32.mrf.mxu0
        %v3794 = vadd.f32 0.0, %v3793
        %v3795 = vpop.f32.mrf.mxu0
        %v3796 = vadd.f32 0.0, %v3795
        %3797 = vmatmul.bf16.gmra.mxu0 %v3612
        %v3798 = vpop.f32.mrf.mxu0
        %v3799 = vadd.f32 0.0, %v3798
        %v3800 = vpop.f32.mrf.mxu0
        %v3801 = vadd.f32 0.0, %v3800
        %3802 = vdwg.mxu0
        %v3803 = vadd.f32 %v3499, %v3624
        %v3804 = vadd.f32 %v3500, %v3626
        %v3805 = vadd.f32 %v3501, %v3629
        %v3806 = vadd.f32 %v3502, %v3631
        %v3807 = vadd.f32 %v3503, %v3634
        %v3808 = vadd.f32 %v3504, %v3636
        %v3809 = vadd.f32 %v3505, %v3639
        %v3810 = vadd.f32 %v3506, %v3641
        %v3811 = vadd.f32 %v3507, %v3644
        %v3812 = vadd.f32 %v3508, %v3646
        %v3813 = vadd.f32 %v3509, %v3649
        %v3814 = vadd.f32 %v3510, %v3651
        %v3815 = vadd.f32 %v3511, %v3654
        %v3816 = vadd.f32 %v3512, %v3656
        %v3817 = vadd.f32 %v3513, %v3659
        %v3818 = vadd.f32 %v3514, %v3661
        %v3819 = vadd.f32 %v3515, %v3664
        %v3820 = vadd.f32 %v3516, %v3666
        %v3821 = vadd.f32 %v3517, %v3669
        %v3822 = vadd.f32 %v3518, %v3671
        %v3823 = vadd.f32 %v3519, %v3674
        %v3824 = vadd.f32 %v3520, %v3676
        %v3825 = vadd.f32 %v3521, %v3679
        %v3826 = vadd.f32 %v3522, %v3681
        %v3827 = vadd.f32 %v3523, %v3684
        %v3828 = vadd.f32 %v3524, %v3686
        %v3829 = vadd.f32 %v3525, %v3689
        %v3830 = vadd.f32 %v3526, %v3691
        %v3831 = vadd.f32 %v3527, %v3694
        %v3832 = vadd.f32 %v3528, %v3696
        %v3833 = vadd.f32 %v3529, %v3699
        %v3834 = vadd.f32 %v3530, %v3701
        %v3835 = vadd.f32 %v3531, %v3704
        %v3836 = vadd.f32 %v3532, %v3706
        %v3837 = vadd.f32 %v3533, %v3709
        %v3838 = vadd.f32 %v3534, %v3711
        %v3839 = vadd.f32 %v3535, %v3714
        %v3840 = vadd.f32 %v3536, %v3716
        %v3841 = vadd.f32 %v3537, %v3719
        %v3842 = vadd.f32 %v3538, %v3721
        %v3843 = vadd.f32 %v3539, %v3724
        %v3844 = vadd.f32 %v3540, %v3726
        %v3845 = vadd.f32 %v3541, %v3729
        %v3846 = vadd.f32 %v3542, %v3731
        %v3847 = vadd.f32 %v3543, %v3734
        %v3848 = vadd.f32 %v3544, %v3736
        %v3849 = vadd.f32 %v3545, %v3739
        %v3850 = vadd.f32 %v3546, %v3741
        %v3851 = vadd.f32 %v3547, %v3744
        %v3852 = vadd.f32 %v3548, %v3746
        %v3853 = vadd.f32 %v3549, %v3749
        %v3854 = vadd.f32 %v3550, %v3751
        %v3855 = vadd.f32 %v3551, %v3754
        %v3856 = vadd.f32 %v3552, %v3756
        %v3857 = vadd.f32 %v3553, %v3759
        %v3858 = vadd.f32 %v3554, %v3761
        %v3859 = vadd.f32 %v3555, %v3764
        %v3860 = vadd.f32 %v3556, %v3766
        %v3861 = vadd.f32 %v3557, %v3769
        %v3862 = vadd.f32 %v3558, %v3771
        %v3863 = vadd.f32 %v3559, %v3774
        %v3864 = vadd.f32 %v3560, %v3776
        %v3865 = vadd.f32 %v3561, %v3779
        %v3866 = vadd.f32 %v3562, %v3781
        %v3867 = vadd.f32 %v3563, %v3784
        %v3868 = vadd.f32 %v3564, %v3786
        %v3869 = vadd.f32 %v3565, %v3789
        %v3870 = vadd.f32 %v3566, %v3791
        %v3871 = vadd.f32 %v3567, %v3794
        %v3872 = vadd.f32 %v3568, %v3796
        %v3873 = vadd.f32 %v3569, %v3799
        %v3874 = vadd.f32 %v3570, %v3801
        %v3875 = vrot.slane %v287, 2
        %v3876 = vrot.slane %v288, 2
        %v3877 = vsel %vm1328, %v3875, %v3876
        %v3878 = vrot.slane %v289, 2
        %v3879 = vsel %vm1328, %v3876, %v3878
        %v3880 = vrot.slane %v290, 2
        %v3881 = vsel %vm1328, %v3878, %v3880
        %v3885 = vpack.c.bf16 %v2853, %v2851
        %v3886 = vpack.c.bf16 %v3877, %v2855
        %v3887 = vpack.c.bf16 %v3881, %v3879
        %s3888 = scalar_lea.vmem %s1, 128
        %v3889 = vld [vmem:[%s3888] sm:$0xf]
        %v3890 = vld [vmem:[%s3888 + $0x4] sm:$0xf]
        %v3891 = vld [vmem:[%s3888 + $0x8] sm:$0xf]
        %v3892 = vld [vmem:[%s3888 + $0xc] sm:$0xf]
        %v3897 = vunpack.c.l.b16 %v3889
        %v3898 = vunpack.c.l.b16 %v3890
        %v3899 = vunpack.c.l.b16 %v3891
        %v3900 = vunpack.c.l.b16 %v3892
        %v3901 = vpack.c.b16 %v3898, %v3897
        %v3902 = vpack.c.b16 %v3900, %v3899
        %v3906 = vsel %vm721, %v3885, 0
        %v3909 = vsel %vm721, %v3886, 0
        %v3912 = vsel %vm721, %v3887, 0
        %3914 = vmatpush.bf16.msra.mxu0 0
        %3915 = vmatpush.bf16.msra.mxu0 0
        %3916 = vmatpush.bf16.msra.mxu0 0
        %3917 = vmatpush.bf16.msra.mxu0 0
        %3918 = vmatpush.bf16.msra.mxu0 0
        %3919 = vmatpush.bf16.msra.mxu0 0
        %3920 = vmatpush.bf16.msra.mxu0 %v3902
        %3921 = vmatpush.bf16.msra.mxu0 %v3901
        %3922 = vmatmul.bf16.gmra.mxu0 %v1632
        %v3923 = vpop.f32.mrf.mxu0
        %v3924 = vadd.f32 0.0, %v3923
        %v3925 = vpop.f32.mrf.mxu0
        %v3926 = vadd.f32 0.0, %v3925
        %3927 = vmatmul.bf16.gmra.mxu0 %v1635
        %v3928 = vpop.f32.mrf.mxu0
        %v3929 = vadd.f32 0.0, %v3928
        %v3930 = vpop.f32.mrf.mxu0
        %v3931 = vadd.f32 0.0, %v3930
        %3932 = vmatmul.bf16.gmra.mxu0 %v1638
        %v3933 = vpop.f32.mrf.mxu0
        %v3934 = vadd.f32 0.0, %v3933
        %v3935 = vpop.f32.mrf.mxu0
        %v3936 = vadd.f32 0.0, %v3935
        %3937 = vmatmul.bf16.gmra.mxu0 %v1641
        %v3938 = vpop.f32.mrf.mxu0
        %v3939 = vadd.f32 0.0, %v3938
        %v3940 = vpop.f32.mrf.mxu0
        %v3941 = vadd.f32 0.0, %v3940
        %3942 = vmatmul.bf16.gmra.mxu0 %v1644
        %v3943 = vpop.f32.mrf.mxu0
        %v3944 = vadd.f32 0.0, %v3943
        %v3945 = vpop.f32.mrf.mxu0
        %v3946 = vadd.f32 0.0, %v3945
        %3947 = vmatmul.bf16.gmra.mxu0 %v1647
        %v3948 = vpop.f32.mrf.mxu0
        %v3949 = vadd.f32 0.0, %v3948
        %v3950 = vpop.f32.mrf.mxu0
        %v3951 = vadd.f32 0.0, %v3950
        %3952 = vmatmul.bf16.gmra.mxu0 %v1650
        %v3953 = vpop.f32.mrf.mxu0
        %v3954 = vadd.f32 0.0, %v3953
        %v3955 = vpop.f32.mrf.mxu0
        %v3956 = vadd.f32 0.0, %v3955
        %3957 = vmatmul.bf16.gmra.mxu0 %v1653
        %v3958 = vpop.f32.mrf.mxu0
        %v3959 = vadd.f32 0.0, %v3958
        %v3960 = vpop.f32.mrf.mxu0
        %v3961 = vadd.f32 0.0, %v3960
        %3962 = vmatmul.bf16.gmra.mxu0 %v1656
        %v3963 = vpop.f32.mrf.mxu0
        %v3964 = vadd.f32 0.0, %v3963
        %v3965 = vpop.f32.mrf.mxu0
        %v3966 = vadd.f32 0.0, %v3965
        %3967 = vmatmul.bf16.gmra.mxu0 %v1659
        %v3968 = vpop.f32.mrf.mxu0
        %v3969 = vadd.f32 0.0, %v3968
        %v3970 = vpop.f32.mrf.mxu0
        %v3971 = vadd.f32 0.0, %v3970
        %3972 = vmatmul.bf16.gmra.mxu0 %v1662
        %v3973 = vpop.f32.mrf.mxu0
        %v3974 = vadd.f32 0.0, %v3973
        %v3975 = vpop.f32.mrf.mxu0
        %v3976 = vadd.f32 0.0, %v3975
        %3977 = vmatmul.bf16.gmra.mxu0 %v1665
        %v3978 = vpop.f32.mrf.mxu0
        %v3979 = vadd.f32 0.0, %v3978
        %v3980 = vpop.f32.mrf.mxu0
        %v3981 = vadd.f32 0.0, %v3980
        %3982 = vmatmul.bf16.gmra.mxu0 %v1668
        %v3983 = vpop.f32.mrf.mxu0
        %v3984 = vadd.f32 0.0, %v3983
        %v3985 = vpop.f32.mrf.mxu0
        %v3986 = vadd.f32 0.0, %v3985
        %3987 = vmatmul.bf16.gmra.mxu0 %v1671
        %v3988 = vpop.f32.mrf.mxu0
        %v3989 = vadd.f32 0.0, %v3988
        %v3990 = vpop.f32.mrf.mxu0
        %v3991 = vadd.f32 0.0, %v3990
        %3992 = vmatmul.bf16.gmra.mxu0 %v1674
        %v3993 = vpop.f32.mrf.mxu0
        %v3994 = vadd.f32 0.0, %v3993
        %v3995 = vpop.f32.mrf.mxu0
        %v3996 = vadd.f32 0.0, %v3995
        %3997 = vmatmul.bf16.gmra.mxu0 %v1677
        %v3998 = vpop.f32.mrf.mxu0
        %v3999 = vadd.f32 0.0, %v3998
        %v4000 = vpop.f32.mrf.mxu0
        %v4001 = vadd.f32 0.0, %v4000
        %4002 = vmatmul.bf16.gmra.mxu0 %v1680
        %v4003 = vpop.f32.mrf.mxu0
        %v4004 = vadd.f32 0.0, %v4003
        %v4005 = vpop.f32.mrf.mxu0
        %v4006 = vadd.f32 0.0, %v4005
        %4007 = vmatmul.bf16.gmra.mxu0 %v1683
        %v4008 = vpop.f32.mrf.mxu0
        %v4009 = vadd.f32 0.0, %v4008
        %v4010 = vpop.f32.mrf.mxu0
        %v4011 = vadd.f32 0.0, %v4010
        %4012 = vmatmul.bf16.gmra.mxu0 %v1686
        %v4013 = vpop.f32.mrf.mxu0
        %v4014 = vadd.f32 0.0, %v4013
        %v4015 = vpop.f32.mrf.mxu0
        %v4016 = vadd.f32 0.0, %v4015
        %4017 = vmatmul.bf16.gmra.mxu0 %v1689
        %v4018 = vpop.f32.mrf.mxu0
        %v4019 = vadd.f32 0.0, %v4018
        %v4020 = vpop.f32.mrf.mxu0
        %v4021 = vadd.f32 0.0, %v4020
        %4022 = vmatmul.bf16.gmra.mxu0 %v1692
        %v4023 = vpop.f32.mrf.mxu0
        %v4024 = vadd.f32 0.0, %v4023
        %v4025 = vpop.f32.mrf.mxu0
        %v4026 = vadd.f32 0.0, %v4025
        %4027 = vmatmul.bf16.gmra.mxu0 %v1695
        %v4028 = vpop.f32.mrf.mxu0
        %v4029 = vadd.f32 0.0, %v4028
        %v4030 = vpop.f32.mrf.mxu0
        %v4031 = vadd.f32 0.0, %v4030
        %4032 = vmatmul.bf16.gmra.mxu0 %v1698
        %v4033 = vpop.f32.mrf.mxu0
        %v4034 = vadd.f32 0.0, %v4033
        %v4035 = vpop.f32.mrf.mxu0
        %v4036 = vadd.f32 0.0, %v4035
        %4037 = vmatmul.bf16.gmra.mxu0 %v1701
        %v4038 = vpop.f32.mrf.mxu0
        %v4039 = vadd.f32 0.0, %v4038
        %v4040 = vpop.f32.mrf.mxu0
        %v4041 = vadd.f32 0.0, %v4040
        %4042 = vmatmul.bf16.gmra.mxu0 %v1704
        %v4043 = vpop.f32.mrf.mxu0
        %v4044 = vadd.f32 0.0, %v4043
        %v4045 = vpop.f32.mrf.mxu0
        %v4046 = vadd.f32 0.0, %v4045
        %4047 = vmatmul.bf16.gmra.mxu0 %v1707
        %v4048 = vpop.f32.mrf.mxu0
        %v4049 = vadd.f32 0.0, %v4048
        %v4050 = vpop.f32.mrf.mxu0
        %v4051 = vadd.f32 0.0, %v4050
        %4052 = vmatmul.bf16.gmra.mxu0 %v1710
        %v4053 = vpop.f32.mrf.mxu0
        %v4054 = vadd.f32 0.0, %v4053
        %v4055 = vpop.f32.mrf.mxu0
        %v4056 = vadd.f32 0.0, %v4055
        %4057 = vmatmul.bf16.gmra.mxu0 %v1713
        %v4058 = vpop.f32.mrf.mxu0
        %v4059 = vadd.f32 0.0, %v4058
        %v4060 = vpop.f32.mrf.mxu0
        %v4061 = vadd.f32 0.0, %v4060
        %4062 = vmatmul.bf16.gmra.mxu0 %v1716
        %v4063 = vpop.f32.mrf.mxu0
        %v4064 = vadd.f32 0.0, %v4063
        %v4065 = vpop.f32.mrf.mxu0
        %v4066 = vadd.f32 0.0, %v4065
        %4067 = vmatmul.bf16.gmra.mxu0 %v1719
        %v4068 = vpop.f32.mrf.mxu0
        %v4069 = vadd.f32 0.0, %v4068
        %v4070 = vpop.f32.mrf.mxu0
        %v4071 = vadd.f32 0.0, %v4070
        %4072 = vmatmul.bf16.gmra.mxu0 %v1722
        %v4073 = vpop.f32.mrf.mxu0
        %v4074 = vadd.f32 0.0, %v4073
        %v4075 = vpop.f32.mrf.mxu0
        %v4076 = vadd.f32 0.0, %v4075
        %4077 = vmatmul.bf16.gmra.mxu0 %v1725
        %v4078 = vpop.f32.mrf.mxu0
        %v4079 = vadd.f32 0.0, %v4078
        %v4080 = vpop.f32.mrf.mxu0
        %v4081 = vadd.f32 0.0, %v4080
        %4082 = vmatmul.bf16.gmra.mxu0 %v1728
        %v4083 = vpop.f32.mrf.mxu0
        %v4084 = vadd.f32 0.0, %v4083
        %v4085 = vpop.f32.mrf.mxu0
        %v4086 = vadd.f32 0.0, %v4085
        %4087 = vmatmul.bf16.gmra.mxu0 %v3906
        %v4088 = vpop.f32.mrf.mxu0
        %v4089 = vadd.f32 0.0, %v4088
        %v4090 = vpop.f32.mrf.mxu0
        %v4091 = vadd.f32 0.0, %v4090
        %4092 = vmatmul.bf16.gmra.mxu0 %v3909
        %v4093 = vpop.f32.mrf.mxu0
        %v4094 = vadd.f32 0.0, %v4093
        %v4095 = vpop.f32.mrf.mxu0
        %v4096 = vadd.f32 0.0, %v4095
        %4097 = vmatmul.bf16.gmra.mxu0 %v3912
        %v4098 = vpop.f32.mrf.mxu0
        %v4099 = vadd.f32 0.0, %v4098
        %v4100 = vpop.f32.mrf.mxu0
        %v4101 = vadd.f32 0.0, %v4100
        %4102 = vdwg.mxu0
        %v4103 = vadd.f32 %v3803, %v3924
        %v4104 = vadd.f32 %v3804, %v3926
        %v4105 = vadd.f32 %v3805, %v3929
        %v4106 = vadd.f32 %v3806, %v3931
        %v4107 = vadd.f32 %v3807, %v3934
        %v4108 = vadd.f32 %v3808, %v3936
        %v4109 = vadd.f32 %v3809, %v3939
        %v4110 = vadd.f32 %v3810, %v3941
        %v4111 = vadd.f32 %v3811, %v3944
        %v4112 = vadd.f32 %v3812, %v3946
        %v4113 = vadd.f32 %v3813, %v3949
        %v4114 = vadd.f32 %v3814, %v3951
        %v4115 = vadd.f32 %v3815, %v3954
        %v4116 = vadd.f32 %v3816, %v3956
        %v4117 = vadd.f32 %v3817, %v3959
        %v4118 = vadd.f32 %v3818, %v3961
        %v4119 = vadd.f32 %v3819, %v3964
        %v4120 = vadd.f32 %v3820, %v3966
        %v4121 = vadd.f32 %v3821, %v3969
        %v4122 = vadd.f32 %v3822, %v3971
        %v4123 = vadd.f32 %v3823, %v3974
        %v4124 = vadd.f32 %v3824, %v3976
        %v4125 = vadd.f32 %v3825, %v3979
        %v4126 = vadd.f32 %v3826, %v3981
        %v4127 = vadd.f32 %v3827, %v3984
        %v4128 = vadd.f32 %v3828, %v3986
        %v4129 = vadd.f32 %v3829, %v3989
        %v4130 = vadd.f32 %v3830, %v3991
        %v4131 = vadd.f32 %v3831, %v3994
        %v4132 = vadd.f32 %v3832, %v3996
        %v4133 = vadd.f32 %v3833, %v3999
        %v4134 = vadd.f32 %v3834, %v4001
        %v4135 = vadd.f32 %v3835, %v4004
        %v4136 = vadd.f32 %v3836, %v4006
        %v4137 = vadd.f32 %v3837, %v4009
        %v4138 = vadd.f32 %v3838, %v4011
        %v4139 = vadd.f32 %v3839, %v4014
        %v4140 = vadd.f32 %v3840, %v4016
        %v4141 = vadd.f32 %v3841, %v4019
        %v4142 = vadd.f32 %v3842, %v4021
        %v4143 = vadd.f32 %v3843, %v4024
        %v4144 = vadd.f32 %v3844, %v4026
        %v4145 = vadd.f32 %v3845, %v4029
        %v4146 = vadd.f32 %v3846, %v4031
        %v4147 = vadd.f32 %v3847, %v4034
        %v4148 = vadd.f32 %v3848, %v4036
        %v4149 = vadd.f32 %v3849, %v4039
        %v4150 = vadd.f32 %v3850, %v4041
        %v4151 = vadd.f32 %v3851, %v4044
        %v4152 = vadd.f32 %v3852, %v4046
        %v4153 = vadd.f32 %v3853, %v4049
        %v4154 = vadd.f32 %v3854, %v4051
        %v4155 = vadd.f32 %v3855, %v4054
        %v4156 = vadd.f32 %v3856, %v4056
        %v4157 = vadd.f32 %v3857, %v4059
        %v4158 = vadd.f32 %v3858, %v4061
        %v4159 = vadd.f32 %v3859, %v4064
        %v4160 = vadd.f32 %v3860, %v4066
        %v4161 = vadd.f32 %v3861, %v4069
        %v4162 = vadd.f32 %v3862, %v4071
        %v4163 = vadd.f32 %v3863, %v4074
        %v4164 = vadd.f32 %v3864, %v4076
        %v4165 = vadd.f32 %v3865, %v4079
        %v4166 = vadd.f32 %v3866, %v4081
        %v4167 = vadd.f32 %v3867, %v4084
        %v4168 = vadd.f32 %v3868, %v4086
        %v4169 = vadd.f32 %v3869, %v4089
        %v4170 = vadd.f32 %v3870, %v4091
        %v4171 = vadd.f32 %v3871, %v4094
        %v4172 = vadd.f32 %v3872, %v4096
        %v4173 = vadd.f32 %v3873, %v4099
        %v4174 = vadd.f32 %v3874, %v4101
        %v4175 = vld [vmem:[#allocation2] sm:$0x1]
        %v4177 = vperm.slane %v4175, 0
        %v4179 = vadd.f32 %v4103, %v4177
        %v4180 = vadd.f32 %v4104, %v4177
        %v4181 = vadd.f32 %v4105, %v4177
        %v4182 = vadd.f32 %v4106, %v4177
        %v4183 = vadd.f32 %v4107, %v4177
        %v4184 = vadd.f32 %v4108, %v4177
        %v4185 = vadd.f32 %v4109, %v4177
        %v4186 = vadd.f32 %v4110, %v4177
        %v4187 = vadd.f32 %v4111, %v4177
        %v4188 = vadd.f32 %v4112, %v4177
        %v4189 = vadd.f32 %v4113, %v4177
        %v4190 = vadd.f32 %v4114, %v4177
        %v4191 = vadd.f32 %v4115, %v4177
        %v4192 = vadd.f32 %v4116, %v4177
        %v4193 = vadd.f32 %v4117, %v4177
        %v4194 = vadd.f32 %v4118, %v4177
        %v4195 = vadd.f32 %v4119, %v4177
        %v4196 = vadd.f32 %v4120, %v4177
        %v4197 = vadd.f32 %v4121, %v4177
        %v4198 = vadd.f32 %v4122, %v4177
        %v4199 = vadd.f32 %v4123, %v4177
        %v4200 = vadd.f32 %v4124, %v4177
        %v4201 = vadd.f32 %v4125, %v4177
        %v4202 = vadd.f32 %v4126, %v4177
        %v4203 = vadd.f32 %v4127, %v4177
        %v4204 = vadd.f32 %v4128, %v4177
        %v4205 = vadd.f32 %v4129, %v4177
        %v4206 = vadd.f32 %v4130, %v4177
        %v4207 = vadd.f32 %v4131, %v4177
        %v4208 = vadd.f32 %v4132, %v4177
        %v4209 = vadd.f32 %v4133, %v4177
        %v4210 = vadd.f32 %v4134, %v4177
        %v4211 = vadd.f32 %v4135, %v4177
        %v4212 = vadd.f32 %v4136, %v4177
        %v4213 = vadd.f32 %v4137, %v4177
        %v4214 = vadd.f32 %v4138, %v4177
        %v4215 = vadd.f32 %v4139, %v4177
        %v4216 = vadd.f32 %v4140, %v4177
        %v4217 = vadd.f32 %v4141, %v4177
        %v4218 = vadd.f32 %v4142, %v4177
        %v4219 = vadd.f32 %v4143, %v4177
        %v4220 = vadd.f32 %v4144, %v4177
        %v4221 = vadd.f32 %v4145, %v4177
        %v4222 = vadd.f32 %v4146, %v4177
        %v4223 = vadd.f32 %v4147, %v4177
        %v4224 = vadd.f32 %v4148, %v4177
        %v4225 = vadd.f32 %v4149, %v4177
        %v4226 = vadd.f32 %v4150, %v4177
        %v4227 = vadd.f32 %v4151, %v4177
        %v4228 = vadd.f32 %v4152, %v4177
        %v4229 = vadd.f32 %v4153, %v4177
        %v4230 = vadd.f32 %v4154, %v4177
        %v4231 = vadd.f32 %v4155, %v4177
        %v4232 = vadd.f32 %v4156, %v4177
        %v4233 = vadd.f32 %v4157, %v4177
        %v4234 = vadd.f32 %v4158, %v4177
        %v4235 = vadd.f32 %v4159, %v4177
        %v4236 = vadd.f32 %v4160, %v4177
        %v4237 = vadd.f32 %v4161, %v4177
        %v4238 = vadd.f32 %v4162, %v4177
        %v4239 = vadd.f32 %v4163, %v4177
        %v4240 = vadd.f32 %v4164, %v4177
        %v4241 = vadd.f32 %v4165, %v4177
        %v4242 = vadd.f32 %v4166, %v4177
        %v4243 = vadd.f32 %v4167, %v4177
        %v4244 = vadd.f32 %v4168, %v4177
        %v4245 = vadd.f32 %v4169, %v4177
        %v4246 = vadd.f32 %v4170, %v4177
        %v4247 = vadd.f32 %v4171, %v4177
        %v4248 = vadd.f32 %v4172, %v4177
        %v4249 = vadd.f32 %v4173, %v4177
        %v4250 = vadd.f32 %v4174, %v4177
        %v4251 = vmax.f32 %v4179, 0.0
        %v4252 = vmax.f32 %v4180, 0.0
        %v4253 = vmax.f32 %v4181, 0.0
        %v4254 = vmax.f32 %v4182, 0.0
        %v4255 = vmax.f32 %v4183, 0.0
        %v4256 = vmax.f32 %v4184, 0.0
        %v4257 = vmax.f32 %v4185, 0.0
        %v4258 = vmax.f32 %v4186, 0.0
        %v4259 = vmax.f32 %v4187, 0.0
        %v4260 = vmax.f32 %v4188, 0.0
        %v4261 = vmax.f32 %v4189, 0.0
        %v4262 = vmax.f32 %v4190, 0.0
        %v4263 = vmax.f32 %v4191, 0.0
        %v4264 = vmax.f32 %v4192, 0.0
        %v4265 = vmax.f32 %v4193, 0.0
        %v4266 = vmax.f32 %v4194, 0.0
        %v4267 = vmax.f32 %v4195, 0.0
        %v4268 = vmax.f32 %v4196, 0.0
        %v4269 = vmax.f32 %v4197, 0.0
        %v4270 = vmax.f32 %v4198, 0.0
        %v4271 = vmax.f32 %v4199, 0.0
        %v4272 = vmax.f32 %v4200, 0.0
        %v4273 = vmax.f32 %v4201, 0.0
        %v4274 = vmax.f32 %v4202, 0.0
        %v4275 = vmax.f32 %v4203, 0.0
        %v4276 = vmax.f32 %v4204, 0.0
        %v4277 = vmax.f32 %v4205, 0.0
        %v4278 = vmax.f32 %v4206, 0.0
        %v4279 = vmax.f32 %v4207, 0.0
        %v4280 = vmax.f32 %v4208, 0.0
        %v4281 = vmax.f32 %v4209, 0.0
        %v4282 = vmax.f32 %v4210, 0.0
        %v4283 = vmax.f32 %v4211, 0.0
        %v4284 = vmax.f32 %v4212, 0.0
        %v4285 = vmax.f32 %v4213, 0.0
        %v4286 = vmax.f32 %v4214, 0.0
        %v4287 = vmax.f32 %v4215, 0.0
        %v4288 = vmax.f32 %v4216, 0.0
        %v4289 = vmax.f32 %v4217, 0.0
        %v4290 = vmax.f32 %v4218, 0.0
        %v4291 = vmax.f32 %v4219, 0.0
        %v4292 = vmax.f32 %v4220, 0.0
        %v4293 = vmax.f32 %v4221, 0.0
        %v4294 = vmax.f32 %v4222, 0.0
        %v4295 = vmax.f32 %v4223, 0.0
        %v4296 = vmax.f32 %v4224, 0.0
        %v4297 = vmax.f32 %v4225, 0.0
        %v4298 = vmax.f32 %v4226, 0.0
        %v4299 = vmax.f32 %v4227, 0.0
        %v4300 = vmax.f32 %v4228, 0.0
        %v4301 = vmax.f32 %v4229, 0.0
        %v4302 = vmax.f32 %v4230, 0.0
        %v4303 = vmax.f32 %v4231, 0.0
        %v4304 = vmax.f32 %v4232, 0.0
        %v4305 = vmax.f32 %v4233, 0.0
        %v4306 = vmax.f32 %v4234, 0.0
        %v4307 = vmax.f32 %v4235, 0.0
        %v4308 = vmax.f32 %v4236, 0.0
        %v4309 = vmax.f32 %v4237, 0.0
        %v4310 = vmax.f32 %v4238, 0.0
        %v4311 = vmax.f32 %v4239, 0.0
        %v4312 = vmax.f32 %v4240, 0.0
        %v4313 = vmax.f32 %v4241, 0.0
        %v4314 = vmax.f32 %v4242, 0.0
        %v4315 = vmax.f32 %v4243, 0.0
        %v4316 = vmax.f32 %v4244, 0.0
        %v4317 = vmax.f32 %v4245, 0.0
        %v4318 = vmax.f32 %v4246, 0.0
        %v4319 = vmax.f32 %v4247, 0.0
        %v4320 = vmax.f32 %v4248, 0.0
        %v4321 = vmax.f32 %v4249, 0.0
        %v4322 = vmax.f32 %v4250, 0.0
        %vm4323 = vcmask 523264
        %v4324 = vsel %vm4323, %v4251, -inf
        %v4325 = vsel %vm4323, %v4254, -inf
        %v4326 = vmax.f32 %v4324, %v4325
        %v4327 = vsel %vm4323, %v4252, -inf
        %v4328 = vsel %vm4323, %v4255, -inf
        %v4329 = vmax.f32 %v4327, %v4328
        %v4330 = vsel %vm4323, %v4253, -inf
        %v4331 = vsel %vm4323, %v4256, -inf
        %v4332 = vmax.f32 %v4330, %v4331
        %v4333 = vsel %vm4323, %v4257, -inf
        %v4334 = vsel %vm4323, %v4260, -inf
        %v4335 = vmax.f32 %v4333, %v4334
        %v4336 = vsel %vm4323, %v4258, -inf
        %v4337 = vsel %vm4323, %v4261, -inf
        %v4338 = vmax.f32 %v4336, %v4337
        %v4339 = vsel %vm4323, %v4259, -inf
        %v4340 = vsel %vm4323, %v4262, -inf
        %v4341 = vmax.f32 %v4339, %v4340
        %v4342 = vsel %vm4323, %v4263, -inf
        %v4343 = vsel %vm4323, %v4266, -inf
        %v4344 = vmax.f32 %v4342, %v4343
        %v4345 = vsel %vm4323, %v4264, -inf
        %v4346 = vsel %vm4323, %v4267, -inf
        %v4347 = vmax.f32 %v4345, %v4346
        %v4348 = vsel %vm4323, %v4265, -inf
        %v4349 = vsel %vm4323, %v4268, -inf
        %v4350 = vmax.f32 %v4348, %v4349
        %v4351 = vsel %vm4323, %v4269, -inf
        %v4352 = vsel %vm4323, %v4272, -inf
        %v4353 = vmax.f32 %v4351, %v4352
        %v4354 = vsel %vm4323, %v4270, -inf
        %v4355 = vsel %vm4323, %v4273, -inf
        %v4356 = vmax.f32 %v4354, %v4355
        %v4357 = vsel %vm4323, %v4271, -inf
        %v4358 = vsel %vm4323, %v4274, -inf
        %v4359 = vmax.f32 %v4357, %v4358
        %v4360 = vsel %vm4323, %v4275, -inf
        %v4361 = vsel %vm4323, %v4278, -inf
        %v4362 = vmax.f32 %v4360, %v4361
        %v4363 = vsel %vm4323, %v4276, -inf
        %v4364 = vsel %vm4323, %v4279, -inf
        %v4365 = vmax.f32 %v4363, %v4364
        %v4366 = vsel %vm4323, %v4277, -inf
        %v4367 = vsel %vm4323, %v4280, -inf
        %v4368 = vmax.f32 %v4366, %v4367
        %v4369 = vsel %vm4323, %v4281, -inf
        %v4370 = vsel %vm4323, %v4284, -inf
        %v4371 = vmax.f32 %v4369, %v4370
        %v4372 = vsel %vm4323, %v4282, -inf
        %v4373 = vsel %vm4323, %v4285, -inf
        %v4374 = vmax.f32 %v4372, %v4373
        %v4375 = vsel %vm4323, %v4283, -inf
        %v4376 = vsel %vm4323, %v4286, -inf
        %v4377 = vmax.f32 %v4375, %v4376
        %v4378 = vsel %vm4323, %v4287, -inf
        %v4379 = vsel %vm4323, %v4290, -inf
        %v4380 = vmax.f32 %v4378, %v4379
        %v4381 = vsel %vm4323, %v4288, -inf
        %v4382 = vsel %vm4323, %v4291, -inf
        %v4383 = vmax.f32 %v4381, %v4382
        %v4384 = vsel %vm4323, %v4289, -inf
        %v4385 = vsel %vm4323, %v4292, -inf
        %v4386 = vmax.f32 %v4384, %v4385
        %v4387 = vsel %vm4323, %v4293, -inf
        %v4388 = vsel %vm4323, %v4296, -inf
        %v4389 = vmax.f32 %v4387, %v4388
        %v4390 = vsel %vm4323, %v4294, -inf
        %v4391 = vsel %vm4323, %v4297, -inf
        %v4392 = vmax.f32 %v4390, %v4391
        %v4393 = vsel %vm4323, %v4295, -inf
        %v4394 = vsel %vm4323, %v4298, -inf
        %v4395 = vmax.f32 %v4393, %v4394
        %v4396 = vsel %vm4323, %v4299, -inf
        %v4397 = vsel %vm4323, %v4302, -inf
        %v4398 = vmax.f32 %v4396, %v4397
        %v4399 = vsel %vm4323, %v4300, -inf
        %v4400 = vsel %vm4323, %v4303, -inf
        %v4401 = vmax.f32 %v4399, %v4400
        %v4402 = vsel %vm4323, %v4301, -inf
        %v4403 = vsel %vm4323, %v4304, -inf
        %v4404 = vmax.f32 %v4402, %v4403
        %v4405 = vsel %vm4323, %v4305, -inf
        %v4406 = vsel %vm4323, %v4308, -inf
        %v4407 = vmax.f32 %v4405, %v4406
        %v4408 = vsel %vm4323, %v4306, -inf
        %v4409 = vsel %vm4323, %v4309, -inf
        %v4410 = vmax.f32 %v4408, %v4409
        %v4411 = vsel %vm4323, %v4307, -inf
        %v4412 = vsel %vm4323, %v4310, -inf
        %v4413 = vmax.f32 %v4411, %v4412
        %v4414 = vsel %vm4323, %v4311, -inf
        %v4415 = vsel %vm4323, %v4314, -inf
        %v4416 = vmax.f32 %v4414, %v4415
        %v4417 = vsel %vm4323, %v4312, -inf
        %v4418 = vsel %vm4323, %v4315, -inf
        %v4419 = vmax.f32 %v4417, %v4418
        %v4420 = vsel %vm4323, %v4313, -inf
        %v4421 = vsel %vm4323, %v4316, -inf
        %v4422 = vmax.f32 %v4420, %v4421
        %v4423 = vsel %vm4323, %v4317, -inf
        %v4424 = vsel %vm4323, %v4320, -inf
        %v4425 = vmax.f32 %v4423, %v4424
        %v4426 = vsel %vm4323, %v4318, -inf
        %v4427 = vsel %vm4323, %v4321, -inf
        %v4428 = vmax.f32 %v4426, %v4427
        %v4429 = vsel %vm4323, %v4319, -inf
        %v4430 = vsel %vm4323, %v4322, -inf
        %v4431 = vmax.f32 %v4429, %v4430
        %v4432 = vpack.c.bf16 %v4326, %v4326
        %v4433 = vpack.c.bf16 %v4329, %v4329
        %v4434 = vpack.c.bf16 %v4332, %v4332
        %v4435 = vpack.c.bf16 %v4335, %v4335
        %v4436 = vpack.c.bf16 %v4338, %v4338
        %v4437 = vpack.c.bf16 %v4341, %v4341
        %v4438 = vpack.c.bf16 %v4344, %v4344
        %v4439 = vpack.c.bf16 %v4347, %v4347
        %v4440 = vpack.c.bf16 %v4350, %v4350
        %v4441 = vpack.c.bf16 %v4353, %v4353
        %v4442 = vpack.c.bf16 %v4356, %v4356
        %v4443 = vpack.c.bf16 %v4359, %v4359
        %v4444 = vpack.c.bf16 %v4362, %v4362
        %v4445 = vpack.c.bf16 %v4365, %v4365
        %v4446 = vpack.c.bf16 %v4368, %v4368
        %v4447 = vpack.c.bf16 %v4371, %v4371
        %v4448 = vpack.c.bf16 %v4374, %v4374
        %v4449 = vpack.c.bf16 %v4377, %v4377
        %v4450 = vpack.c.bf16 %v4380, %v4380
        %v4451 = vpack.c.bf16 %v4383, %v4383
        %v4452 = vpack.c.bf16 %v4386, %v4386
        %v4453 = vpack.c.bf16 %v4389, %v4389
        %v4454 = vpack.c.bf16 %v4392, %v4392
        %v4455 = vpack.c.bf16 %v4395, %v4395
        %v4456 = vpack.c.bf16 %v4398, %v4398
        %v4457 = vpack.c.bf16 %v4401, %v4401
        %v4458 = vpack.c.bf16 %v4404, %v4404
        %v4459 = vpack.c.bf16 %v4407, %v4407
        %v4460 = vpack.c.bf16 %v4410, %v4410
        %v4461 = vpack.c.bf16 %v4413, %v4413
        %v4462 = vpack.c.bf16 %v4416, %v4416
        %v4463 = vpack.c.bf16 %v4419, %v4419
        %v4464 = vpack.c.bf16 %v4422, %v4422
        %v4465 = vpack.c.bf16 %v4425, %v4425
        %v4466 = vpack.c.bf16 %v4428, %v4428
        %v4467 = vpack.c.bf16 %v4431, %v4431
        %vm4468 = vcmask 519168
        %4469 = vst.msk [vmem:[%s185] sm:$0xf] %vm4468, %v4432
        %4470 = vst.msk [vmem:[%s185 + $0x4] sm:$0xf] %vm4468, %v4433
        %4471 = vst.msk [vmem:[%s185 + $0x8] sm:$0xf] %vm4468, %v4434
        %4472 = vst.msk [vmem:[%s185 + $0xc] sm:$0xf] %vm4468, %v4435
        %4473 = vst.msk [vmem:[%s185 + $0x10] sm:$0xf] %vm4468, %v4436
        %4474 = vst.msk [vmem:[%s185 + $0x14] sm:$0xf] %vm4468, %v4437
        %4475 = vst.msk [vmem:[%s185 + $0x18] sm:$0xf] %vm4468, %v4438
        %4476 = vst.msk [vmem:[%s185 + $0x1c] sm:$0xf] %vm4468, %v4439
        %4477 = vst.msk [vmem:[%s185 + $0x20] sm:$0xf] %vm4468, %v4440
        %4478 = vst.msk [vmem:[%s185 + $0x24] sm:$0xf] %vm4468, %v4441
        %4479 = vst.msk [vmem:[%s185 + $0x28] sm:$0xf] %vm4468, %v4442
        %4480 = vst.msk [vmem:[%s185 + $0x2c] sm:$0xf] %vm4468, %v4443
        %4481 = vst.msk [vmem:[%s185 + $0x30] sm:$0xf] %vm4468, %v4444
        %4482 = vst.msk [vmem:[%s185 + $0x34] sm:$0xf] %vm4468, %v4445
        %4483 = vst.msk [vmem:[%s185 + $0x38] sm:$0xf] %vm4468, %v4446
        %4484 = vst.msk [vmem:[%s185 + $0x3c] sm:$0xf] %vm4468, %v4447
        %4485 = vst.msk [vmem:[%s185 + $0x40] sm:$0xf] %vm4468, %v4448
        %4486 = vst.msk [vmem:[%s185 + $0x44] sm:$0xf] %vm4468, %v4449
        %4487 = vst.msk [vmem:[%s185 + $0x48] sm:$0xf] %vm4468, %v4450
        %4488 = vst.msk [vmem:[%s185 + $0x4c] sm:$0xf] %vm4468, %v4451
        %4489 = vst.msk [vmem:[%s185 + $0x50] sm:$0xf] %vm4468, %v4452
        %4490 = vst.msk [vmem:[%s185 + $0x54] sm:$0xf] %vm4468, %v4453
        %4491 = vst.msk [vmem:[%s185 + $0x58] sm:$0xf] %vm4468, %v4454
        %4492 = vst.msk [vmem:[%s185 + $0x5c] sm:$0xf] %vm4468, %v4455
        %4493 = vst.msk [vmem:[%s185 + $0x60] sm:$0xf] %vm4468, %v4456
        %4494 = vst.msk [vmem:[%s185 + $0x64] sm:$0xf] %vm4468, %v4457
        %4495 = vst.msk [vmem:[%s185 + $0x68] sm:$0xf] %vm4468, %v4458
        %4496 = vst.msk [vmem:[%s185 + $0x6c] sm:$0xf] %vm4468, %v4459
        %4497 = vst.msk [vmem:[%s185 + $0x70] sm:$0xf] %vm4468, %v4460
        %4498 = vst.msk [vmem:[%s185 + $0x74] sm:$0xf] %vm4468, %v4461
        %4499 = vst.msk [vmem:[%s185 + $0x78] sm:$0xf] %vm4468, %v4462
        %4500 = vst.msk [vmem:[%s185 + $0x7c] sm:$0xf] %vm4468, %v4463
        %4501 = vst.msk [vmem:[%s185 + $0x80] sm:$0xf] %vm4468, %v4464
        %4502 = vst.msk [vmem:[%s185 + $0x84] sm:$0xf] %vm4468, %v4465
        %4503 = vst.msk [vmem:[%s185 + $0x88] sm:$0xf] %vm4468, %v4466
        %4504 = vst.msk [vmem:[%s185 + $0x8c] sm:$0xf] %vm4468, %v4467
        %p4505 = scmp.lt.s32.totalorder %s15, 1
        %s4506 = scalar_select %p4505, %s15, 1
        %s4507 = smul.addr %s4506, 36
        %s4508 = smul.addr %s4507, 4
        %s4509 = scalar_lea.vmem %s3, %s4508
        // Predicated region
        $region37: #{net_forward.5} parent=31 // pred_check
          %p4510 = pneg %p101
        $region38: #{net_forward.5} parent=31 // pred_check_branch
          %4512 = sbr.rel (%p4510) target = $region40
        $region39: #{net_forward.5} parent=31 // pred_region
          _
        $region40: #{net_forward.5} parent=31 // pred_fallthru
          _
      $region32: #{net_forward.5} parent=5 // pred_fallthru
        _
      %p4513 = scmp.le.s32.totalorder 2, %s10
      // Predicated region
      $region41: #{net_forward.5} parent=5 // pred_check
        %p4514 = pneg %p4513
      $region42: #{net_forward.5} parent=5 // pred_check_branch
        %4516 = sbr.rel (%p4514) target = $region44
      $region43: #{net_forward.5} parent=5 // pred_region
        %s4517 = ssub.s32 %s10, 2
        // Predicated region
        $region45: #{net_forward.5} parent=43 // pred_check
          %p4518 = pneg %p107
        $region46: #{net_forward.5} parent=43 // pred_check_branch
          %4520 = sbr.rel (%p4518) target = $region48
        $region47: #{net_forward.5} parent=43 // pred_region
          %p4521 = scmp.lt.s32.totalorder %s16, 1
          %s4522 = scalar_select %p4521, %s16, 1
          %s4523 = smul.addr %s4522, 36
          %s4524 = smul.addr %s4523, 4
          %s4525 = scalar_lea.vmem %s3, %s4524
        $region48: #{net_forward.5} parent=43 // pred_fallthru
          _
      $region44: #{net_forward.5} parent=5 // pred_fallthru
        _
    $region6: #{net_forward.5} parent=1 // loop_footer
      %s14 = sadd.s32 1, %s10
    $region7: #{net_forward.5} parent=1 // loop_footer_branch
      %9 = sbr.rel target = $region3
    $region8: #{net_forward.5} parent=1 // loop_exit
      _
    %4526 = vsyncpa [#allocation3], 1
    %s4527 = scalar_lea.sflag [#allocation3], 1
    %4528 = vsyncpa %s4527, 1

</llo_original>
